<compile_context>
chip_gen: v7x
topology: tpu7x:2x2x1
jax: 0.10.0
libtpu: 0.0.40
codegen_flags: <defaults>
</compile_context>

<pallas_src>
import jax
import jax.numpy as jnp
import numpy as np
from jax.experimental import pallas as pl
from jax.experimental.pallas import tpu as pltpu

EPS = 1e-5
_PREC = jax.lax.Precision.HIGHEST   # keep f32 accuracy for the correctness test


# ------------------------------ fused Pallas kernel -------------------------------

def _make_unit_kernel(H, W, stride, with_pool):
    """Builds the fused ShuffleNetUnit kernel body for one (H, W, stride) config."""
    Wp = W + 2                       # padded row width
    Lw = (H - 1) * Wp + W            # flat window length covering all output rows

    def kernel(*refs):
        if with_pool:
            (x_ref, w1_ref, b1_ref, e_ref, w2_ref, b2_ref, w3_ref, b3_ref,
             g_ref, p_ref, o_ref, ypf_ref) = refs
        else:
            (x_ref, w1_ref, b1_ref, e_ref, w2_ref, b2_ref, w3_ref, b3_ref,
             g_ref, o_ref, ypf_ref) = refs
            p_ref = None

        Cb = w2_ref.shape[0]
        x = x_ref[0].astype(jnp.float32)                         # (Cin, H*W)

        # -- conv1 (grouped 1x1; channel shuffle + BN1 folded into w1/b1) + ReLU ---
        y = jnp.dot(w1_ref[...], x, precision=_PREC,
                    preferred_element_type=jnp.float32) + b1_ref[...]
        y = jnp.maximum(y, 0.0)                                  # (Cb, H*W)

        # -- scatter into the zero-padded flat (H+2, W+2) grid with one 0/1 dot;
        #    padding positions come out exactly 0, so the scratch needs no zeroing
        #    and the store below is a single dense, aligned, offset-0 store. -------
        ypf_ref[...] = jnp.dot(y, e_ref[...], precision=_PREC,
                               preferred_element_type=jnp.float32)   # (Cb, Hp*Wp)

        # -- depthwise 3x3 (+BN2): 9 dense shifted windows of the padded slab,
        #    3 independent accumulator chains (one per kernel row). ----------------
        w2 = w2_ref[...]                                         # (Cb, 9)
        rows = []
        for kh in range(3):
            acc = jnp.zeros((Cb, Lw), jnp.float32)
            for kw in range(3):
                k = kh * 3 + kw
                tap = ypf_ref[:, pl.ds(kh * Wp + kw, Lw)]        # (Cb, Lw)
                acc = acc + tap * w2[:, k:k + 1]
            rows.append(acc)
        u = rows[0] + rows[1] + rows[2] + b2_ref[...]            # (Cb, Lw)

        # -- conv3 (grouped 1x1, BN3 folded) on the MXU -----------------------------
        z = jnp.dot(w3_ref[...], u, precision=_PREC,
                    preferred_element_type=jnp.float32) + b3_ref[...]   # (Cout, Lw)

        # -- one selection dot drops the padded garbage columns and applies the
        #    stride-2 subsample (no strided reads). --------------------------------
        zo = jnp.dot(z, g_ref[...], precision=_PREC,
                     preferred_element_type=jnp.float32)         # (Cout, Ho*Wo)

        if with_pool:
            # avg_pool2d(k=3, s=2, p=1, count_include_pad=True) of the identity as
            # one pooling-matrix dot; concat built in a register -> ONE full store.
            pooled = jnp.dot(x, p_ref[...], precision=_PREC,
                             preferred_element_type=jnp.float32)  # (Cin, Ho*Wo)
            out = jnp.concatenate([zo, pooled], axis=0)          # (Cout+Cin, Ho*Wo)
        else:
            out = zo + x                                         # residual (Cin==Cout)
        o_ref[0] = jnp.maximum(out, 0.0).astype(o_ref.dtype)

    return kernel


def _selection_matrices(H, W, stride):
    """Constant 0/1 (and 1/9) matrices: pad-scatter E, extract/stride G, avg-pool P."""
    Hp, Wp = H + 2, W + 2
    Npix, Lp = H * W, Hp * Wp
    Lw = (H - 1) * Wp + W
    Ho, Wo = H // stride, W // stride
    Npo = Ho * Wo

    # E: unpadded pixel (i, j) -> padded flat position (i+1)*Wp + (j+1).
    E = np.zeros((Npix, Lp), np.float32)
    idx_in = np.arange(H)[:, None] * W + np.arange(W)[None, :]
    idx_pad = (np.arange(H)[:, None] + 1) * Wp + (np.arange(W)[None, :] + 1)
    E[idx_in.ravel(), idx_pad.ravel()] = 1.0

    # G: pick the depthwise output at padded-flat row (s*io)*Wp + (s*jo) for output
    #    pixel (io, jo) - drops garbage columns and applies the stride in one dot.
    G = np.zeros((Lw, Npo), np.float32)
    io = np.arange(Ho)[:, None]
    jo = np.arange(Wo)[None, :]
    G[(stride * io * Wp + stride * jo).ravel(), (io * Wo + jo).ravel()] = 1.0

    if stride == 1:
        return jnp.asarray(E), jnp.asarray(G), None

    # P: avg_pool2d(kernel=3, stride=2, padding=1, count_include_pad=True).
    P = np.zeros((Npix, Npo), np.float32)
    for io_ in range(Ho):
        for jo_ in range(Wo):
            for kh in range(3):
                for kw in range(3):
                    i_, j_ = 2 * io_ + kh - 1, 2 * jo_ + kw - 1
                    if 0 <= i_ < H and 0 <= j_ < W:
                        P[i_ * W + j_, io_ * Wo + jo_] = 1.0 / 9.0
    return jnp.asarray(E), jnp.asarray(G), jnp.asarray(P)


def _unit_pallas_call(x_flat, w1f, b1f, E, w2f, b2f, w3f, b3f, G, P, *, H, W, stride):
    N, Cin, Npix = x_flat.shape
    Cb = w2f.shape[0]
    Cout = w3f.shape[0]
    Hp, Wp = H + 2, W + 2
    Lp = Hp * Wp
    Lw = (H - 1) * Wp + W
    Ho, Wo = H // stride, W // stride
    Npo = Ho * Wo
    Ct = Cout if stride == 1 else Cout + Cin
    with_pool = stride != 1

    const2 = lambda n: (0, 0)
    in_specs = [
        pl.BlockSpec((1, Cin, Npix), lambda n: (n, 0, 0)),
        pl.BlockSpec((Cb, Cin), const2),
        pl.BlockSpec((Cb, 1), const2),
        pl.BlockSpec((Npix, Lp), const2),
        pl.BlockSpec((Cb, 9), const2),
        pl.BlockSpec((Cb, 1), const2),
        pl.BlockSpec((Cout, Cb), const2),
        pl.BlockSpec((Cout, 1), const2),
        pl.BlockSpec((Lw, Npo), const2),
    ]
    args = [x_flat, w1f, b1f, E, w2f, b2f, w3f, b3f, G]
    if with_pool:
        in_specs.append(pl.BlockSpec((Npix, Npo), const2))
        args.append(P)

    # NOTE: Npo = Ho*Wo is the lane dim of the output block (256 lanes for the
    # stride=1 example -> single unmasked full-block store).  For very small
    # feature maps fold channels into the lane dim instead.
    # TODO(synk): fold several images per block (Nb>1) when N is large to amortize
    #             the ~0.35us per-grid-step overhead; kept Nb=1 here so grid=(N,)
    #             exposes 2 parallel steps for v7x's two TensorCores.
    return pl.pallas_call(
        _make_unit_kernel(H, W, stride, with_pool),
        out_shape=jax.ShapeDtypeStruct((N, Ct, Npo), x_flat.dtype),
        grid=(N,),
        in_specs=in_specs,
        out_specs=pl.BlockSpec((1, Ct, Npo), lambda n: (n, 0, 0)),
        scratch_shapes=[pltpu.VMEM((Cb, Lp), jnp.float32)],
        compiler_params=pltpu.CompilerParams(dimension_semantics=("parallel",)),
    )(*args)


# ------------------------------ parameter plumbing ---------------------------------

def grouped_1x1_to_dense(w, groups):
    # PyTorch grouped 1x1 conv weight (Cout, Cin/g, 1, 1) -> dense block-diagonal
    # (Cin, Cout) matrix (negligible waste at these widths).
    Cout, Cin_g = w.shape[0], w.shape[1]
    Cout_g = Cout // groups
    Cin = Cin_g * groups
    w2 = w[:, :, 0, 0]
    dense = jnp.zeros((Cin, Cout), w.dtype)
    for gi in range(groups):
        dense = dense.at[gi * Cin_g:(gi + 1) * Cin_g,
                         gi * Cout_g:(gi + 1) * Cout_g].set(
            w2[gi * Cout_g:(gi + 1) * Cout_g, :].T)
    return dense


def fold_bn(conv_bias, gamma, beta, mean, var):
    scale = gamma / jnp.sqrt(var + EPS)
    bias = (conv_bias - mean) * scale + beta
    return scale[None, :], bias[None, :]


def make_params(key, in_channels, out_channels, groups):
    Cb = out_channels // 4
    ks = jax.random.split(key, 18)

    def nrm(k, shape, s=0.1):
        return (jax.random.normal(k, shape) * s).astype(jnp.float32)

    p = {
        'w1': nrm(ks[0], (Cb, in_channels // groups, 1, 1)),
        'cb1': nrm(ks[1], (Cb,)),
        'w2': nrm(ks[2], (Cb, 1, 3, 3)),
        'cb2': nrm(ks[3], (Cb,)),
        'w3': nrm(ks[4], (out_channels, Cb // groups, 1, 1)),
        'cb3': nrm(ks[5], (out_channels,)),
    }
    for tag, c, kb in (('1', Cb, 6), ('2', Cb, 10), ('3', out_channels, 14)):
        p['g' + tag] = 1.0 + nrm(ks[kb], (c,))
        p['be' + tag] = nrm(ks[kb + 1], (c,))
        p['m' + tag] = nrm(ks[kb + 2], (c,))
        p['v' + tag] = jnp.abs(nrm(ks[kb + 3], (c,))) + 0.5
    return p


# ---------------------------------- forward pass -----------------------------------

def shufflenet_unit_forward(x_nchw, p, groups, stride):
    N, Cin, H, W = x_nchw.shape
    Cb = p['w2'].shape[0]
    Cout = p['w3'].shape[0]
    assert H % stride == 0 and W % stride == 0
    if stride == 1:
        assert Cin == Cout, "residual branch requires in_channels == out_channels"

    # trace-time folding: conv bias + BN -> per-channel scale/bias folded into the
    # weights; channel shuffle -> permutation of conv1's output channels.
    w1d = grouped_1x1_to_dense(p['w1'], groups)                      # (Cin, Cb)
    s1, b1 = fold_bn(p['cb1'], p['g1'], p['be1'], p['m1'], p['v1'])
    perm = np.arange(Cb).reshape(groups, Cb // groups).T.reshape(-1)
    w1f = (w1d * s1)[:, perm].T                                      # (Cb, Cin)
    b1f = b1[:, perm].T                                              # (Cb, 1)

    s2, b2 = fold_bn(p['cb2'], p['g2'], p['be2'], p['m2'], p['v2'])
    w2f = p['w2'][:, 0].reshape(Cb, 9) * s2[0][:, None]              # (Cb, 9)
    b2f = b2.T                                                       # (Cb, 1)

    w3d = grouped_1x1_to_dense(p['w3'], groups)                      # (Cb, Cout)
    s3, b3 = fold_bn(p['cb3'], p['g3'], p['be3'], p['m3'], p['v3'])
    w3f = (w3d * s3).T                                               # (Cout, Cb)
    b3f = b3.T                                                       # (Cout, 1)

    E, G, P = _selection_matrices(H, W, stride)

    # Native NCHW in / NCHW out: only free reshapes on the wrapper side - no
    # transpose or pad HBM passes.
    x_flat = x_nchw.reshape(N, Cin, H * W)
    out = _unit_pallas_call(x_flat, w1f, b1f, E, w2f, b2f, w3f, b3f, G, P,
                            H=H, W=W, stride=stride)
    Ho, Wo = H // stride, W // stride
    return out.reshape(N, out.shape[1], Ho, Wo)


# ------------------------------- pure-JAX reference ---------------------------------

def reference_forward(x, p, groups, stride):
    def conv(x, w, b, s=1, pad=0, fgc=1):
        y = jax.lax.conv_general_dilated(
            x, w, (s, s), [(pad, pad), (pad, pad)],
            dimension_numbers=('NCHW', 'OIHW', 'NCHW'),
            feature_group_count=fgc,
            precision=jax.lax.Precision.HIGHEST)
        return y + b[None, :, None, None]

    def bn(x, g_, b_, m_, v_):
        sc = g_ / jnp.sqrt(v_ + EPS)
        return (x - m_[None, :, None, None]) * sc[None, :, None, None] + b_[None, :, None, None]

    def shuffle(x, g):
        n, c, h, w = x.shape
        return x.reshape(n, g, c // g, h, w).transpose(0, 2, 1, 3, 4).reshape(n, c, h, w)

    identity = x
    y = jax.nn.relu(bn(conv(x, p['w1'], p['cb1'], fgc=groups),
                       p['g1'], p['be1'], p['m1'], p['v1']))
    y = shuffle(y, groups)
    y = bn(conv(y, p['w2'], p['cb2'], s=stride, pad=1, fgc=p['w2'].shape[0]),
           p['g2'], p['be2'], p['m2'], p['v2'])
    y = bn(conv(y, p['w3'], p['cb3'], fgc=groups),
           p['g3'], p['be3'], p['m3'], p['v3'])
    if stride == 1:
        y = y + identity
    else:
        pooled = jax.lax.reduce_window(
            identity, 0.0, jax.lax.add, (1, 1, 3, 3), (1, 1, 2, 2),
            [(0, 0), (0, 0), (1, 1), (1, 1)]) / 9.0
        y = jnp.concatenate([y, pooled], axis=1)
    return jax.nn.relu(y)


# --------------------------------------- main ---------------------------------------

if __name__ == "__main__":
    root = jax.random.PRNGKey(0)
    kx1, kp1, kx2, kp2 = jax.random.split(root, 4)

    # stride=1 unit (residual branch): in=out=16 channels, groups=2, NCHW input.
    x1 = jax.random.normal(kx1, (2, 16, 16, 16), jnp.float32)
    p1 = make_params(kp1, 16, 16, 2)
    out1 = jax.block_until_ready(shufflenet_unit_forward(x1, p1, groups=2, stride=1))
    ref1 = reference_forward(x1, p1, 2, 1)
    np.testing.assert_allclose(np.asarray(out1), np.asarray(ref1), rtol=1e-3, atol=1e-3)

    # stride=2 unit (avg-pool + concat branch): in=8, out=16 channels, groups=2.
    x2 = jax.random.normal(kx2, (2, 8, 16, 16), jnp.float32)
    p2 = make_params(kp2, 8, 16, 2)
    out2 = jax.block_until_ready(shufflenet_unit_forward(x2, p2, groups=2, stride=2))
    ref2 = reference_forward(x2, p2, 2, 2)
    np.testing.assert_allclose(np.asarray(out2), np.asarray(ref2), rtol=1e-3, atol=1e-3)

    print("KERNEL_OK")
</pallas_src>

<mosaic_0001>
module attributes {stable_mosaic.version = 11 : i64} {
  func.func @kernel(%arg0: i32, %arg1: memref<1x16x256xf32, #tpu.memory_space<vmem>>, %arg2: memref<4x16xf32, #tpu.memory_space<vmem>>, %arg3: memref<4x1xf32, #tpu.memory_space<vmem>>, %arg4: memref<256x324xf32, #tpu.memory_space<vmem>>, %arg5: memref<4x9xf32, #tpu.memory_space<vmem>>, %arg6: memref<4x1xf32, #tpu.memory_space<vmem>>, %arg7: memref<16x4xf32, #tpu.memory_space<vmem>>, %arg8: memref<16x1xf32, #tpu.memory_space<vmem>>, %arg9: memref<286x256xf32, #tpu.memory_space<vmem>>, %arg10: memref<1x16x256xf32, #tpu.memory_space<vmem>>, %arg11: memref<4x324xf32, #tpu.memory_space<vmem>>) attributes {dimension_semantics = [#tpu.dimension_semantics<parallel>], iteration_bounds = array<i64: 2>, scalar_prefetch = 0 : i64, scratch_operands = 1 : i64, tpu.core_type = #tpu.core_type<tc>, window_params = [{transform_indices = @transform_0, window_bounds = array<i64: 1, 16, 256>}, {pipeline_mode = #tpu.pipeline_mode<synchronous>, transform_indices = @transform_1, window_bounds = array<i64: 4, 16>}, {pipeline_mode = #tpu.pipeline_mode<synchronous>, transform_indices = @transform_2, window_bounds = array<i64: 4, 1>}, {pipeline_mode = #tpu.pipeline_mode<synchronous>, transform_indices = @transform_3, window_bounds = array<i64: 256, 324>}, {pipeline_mode = #tpu.pipeline_mode<synchronous>, transform_indices = @transform_4, window_bounds = array<i64: 4, 9>}, {pipeline_mode = #tpu.pipeline_mode<synchronous>, transform_indices = @transform_5, window_bounds = array<i64: 4, 1>}, {pipeline_mode = #tpu.pipeline_mode<synchronous>, transform_indices = @transform_6, window_bounds = array<i64: 16, 4>}, {pipeline_mode = #tpu.pipeline_mode<synchronous>, transform_indices = @transform_7, window_bounds = array<i64: 16, 1>}, {pipeline_mode = #tpu.pipeline_mode<synchronous>, transform_indices = @transform_8, window_bounds = array<i64: 286, 256>}, {transform_indices = @transform_9, window_bounds = array<i64: 1, 16, 256>}]} {
    %c0 = arith.constant 0 : index
    %c0_0 = arith.constant 0 : index
    %c0_1 = arith.constant 0 : index
    %0 = vector.load %arg1[%c0, %c0_0, %c0_1] : memref<1x16x256xf32, #tpu.memory_space<vmem>>, vector<1x16x256xf32>
    %1 = vector.shape_cast %0 : vector<1x16x256xf32> to vector<16x256xf32>
    %c0_2 = arith.constant 0 : index
    %c0_3 = arith.constant 0 : index
    %2 = vector.load %arg2[%c0_2, %c0_3] : memref<4x16xf32, #tpu.memory_space<vmem>>, vector<4x16xf32>
    %cst = arith.constant dense<0.000000e+00> : vector<4x256xf32>
    %3 = tpu.matmul %2, %1, %cst {dimension_numbers = #tpu.dot_dimension_numbers<[1], [0], [0], [1], [0, 0, 1, 1], [], []>, precision = #tpu.contract_precision<fp32>} : vector<4x16xf32>, vector<16x256xf32>, vector<4x256xf32> -> vector<4x256xf32>
    %c0_4 = arith.constant 0 : index
    %c0_5 = arith.constant 0 : index
    %4 = vector.load %arg3[%c0_4, %c0_5] : memref<4x1xf32, #tpu.memory_space<vmem>>, vector<4x1xf32>
    %5 = vector.broadcast %4 : vector<4x1xf32> to vector<4x256xf32>
    %6 = arith.addf %3, %5 : vector<4x256xf32>
    %cst_6 = arith.constant 0.000000e+00 : f32
    %7 = vector.broadcast %cst_6 : f32 to vector<4x256xf32>
    %8 = arith.maximumf %6, %7 : vector<4x256xf32>
    %c0_7 = arith.constant 0 : index
    %c0_8 = arith.constant 0 : index
    %9 = vector.load %arg4[%c0_7, %c0_8] : memref<256x324xf32, #tpu.memory_space<vmem>>, vector<256x324xf32>
    %cst_9 = arith.constant dense<0.000000e+00> : vector<4x324xf32>
    %10 = tpu.matmul %8, %9, %cst_9 {dimension_numbers = #tpu.dot_dimension_numbers<[1], [0], [0], [1], [0, 0, 1, 1], [], []>, precision = #tpu.contract_precision<fp32>} : vector<4x256xf32>, vector<256x324xf32>, vector<4x324xf32> -> vector<4x324xf32>
    %c0_10 = arith.constant 0 : index
    %c0_11 = arith.constant 0 : index
    %11 = vector.load %arg11[%c0_10, %c0_11] : memref<4x324xf32, #tpu.memory_space<vmem>>, vector<4x324xf32>
    tpu.vector_store %arg11[%c0_10, %c0_11], %10 {strides = array<i32>} : memref<4x324xf32, #tpu.memory_space<vmem>>, vector<4x324xf32>,
    %c0_12 = arith.constant 0 : index
    %c0_13 = arith.constant 0 : index
    %12 = vector.load %arg5[%c0_12, %c0_13] : memref<4x9xf32, #tpu.memory_space<vmem>>, vector<4x9xf32>
    %cst_14 = arith.constant 0.000000e+00 : f32
    %13 = vector.broadcast %cst_14 : f32 to vector<4x286xf32>
    %c0_15 = arith.constant 0 : index
    %c0_16 = arith.constant 0 : index
    %14 = vector.load %arg11[%c0_15, %c0_16] : memref<4x324xf32, #tpu.memory_space<vmem>>, vector<4x286xf32>
    %15 = vector.extract_strided_slice %12 {offsets = [0, 0], sizes = [4, 1], strides = [1, 1]} : vector<4x9xf32> to vector<4x1xf32>
    %16 = vector.broadcast %15 : vector<4x1xf32> to vector<4x286xf32>
    %17 = arith.mulf %14, %16 : vector<4x286xf32>
    %18 = arith.addf %13, %17 : vector<4x286xf32>
    %c0_17 = arith.constant 0 : index
    %c1 = arith.constant 1 : index
    %19 = vector.load %arg11[%c0_17, %c1] : memref<4x324xf32, #tpu.memory_space<vmem>>, vector<4x286xf32>
    %20 = vector.extract_strided_slice %12 {offsets = [0, 1], sizes = [4, 1], strides = [1, 1]} : vector<4x9xf32> to vector<4x1xf32>
    %21 = vector.broadcast %20 : vector<4x1xf32> to vector<4x286xf32>
    %22 = arith.mulf %19, %21 : vector<4x286xf32>
    %23 = arith.addf %18, %22 : vector<4x286xf32>
    %c0_18 = arith.constant 0 : index
    %c2 = arith.constant 2 : index
    %24 = vector.load %arg11[%c0_18, %c2] : memref<4x324xf32, #tpu.memory_space<vmem>>, vector<4x286xf32>
    %25 = vector.extract_strided_slice %12 {offsets = [0, 2], sizes = [4, 1], strides = [1, 1]} : vector<4x9xf32> to vector<4x1xf32>
    %26 = vector.broadcast %25 : vector<4x1xf32> to vector<4x286xf32>
    %27 = arith.mulf %24, %26 : vector<4x286xf32>
    %28 = arith.addf %23, %27 : vector<4x286xf32>
    %cst_19 = arith.constant 0.000000e+00 : f32
    %29 = vector.broadcast %cst_19 : f32 to vector<4x286xf32>
    %c0_20 = arith.constant 0 : index
    %c18 = arith.constant 18 : index
    %30 = vector.load %arg11[%c0_20, %c18] : memref<4x324xf32, #tpu.memory_space<vmem>>, vector<4x286xf32>
    %31 = vector.extract_strided_slice %12 {offsets = [0, 3], sizes = [4, 1], strides = [1, 1]} : vector<4x9xf32> to vector<4x1xf32>
    %32 = vector.broadcast %31 : vector<4x1xf32> to vector<4x286xf32>
    %33 = arith.mulf %30, %32 : vector<4x286xf32>
    %34 = arith.addf %29, %33 : vector<4x286xf32>
    %c0_21 = arith.constant 0 : index
    %c19 = arith.constant 19 : index
    %35 = vector.load %arg11[%c0_21, %c19] : memref<4x324xf32, #tpu.memory_space<vmem>>, vector<4x286xf32>
    %36 = vector.extract_strided_slice %12 {offsets = [0, 4], sizes = [4, 1], strides = [1, 1]} : vector<4x9xf32> to vector<4x1xf32>
    %37 = vector.broadcast %36 : vector<4x1xf32> to vector<4x286xf32>
    %38 = arith.mulf %35, %37 : vector<4x286xf32>
    %39 = arith.addf %34, %38 : vector<4x286xf32>
    %c0_22 = arith.constant 0 : index
    %c20 = arith.constant 20 : index
    %40 = vector.load %arg11[%c0_22, %c20] : memref<4x324xf32, #tpu.memory_space<vmem>>, vector<4x286xf32>
    %41 = vector.extract_strided_slice %12 {offsets = [0, 5], sizes = [4, 1], strides = [1, 1]} : vector<4x9xf32> to vector<4x1xf32>
    %42 = vector.broadcast %41 : vector<4x1xf32> to vector<4x286xf32>
    %43 = arith.mulf %40, %42 : vector<4x286xf32>
    %44 = arith.addf %39, %43 : vector<4x286xf32>
    %cst_23 = arith.constant 0.000000e+00 : f32
    %45 = vector.broadcast %cst_23 : f32 to vector<4x286xf32>
    %c0_24 = arith.constant 0 : index
    %c36 = arith.constant 36 : index
    %46 = vector.load %arg11[%c0_24, %c36] : memref<4x324xf32, #tpu.memory_space<vmem>>, vector<4x286xf32>
    %47 = vector.extract_strided_slice %12 {offsets = [0, 6], sizes = [4, 1], strides = [1, 1]} : vector<4x9xf32> to vector<4x1xf32>
    %48 = vector.broadcast %47 : vector<4x1xf32> to vector<4x286xf32>
    %49 = arith.mulf %46, %48 : vector<4x286xf32>
    %50 = arith.addf %45, %49 : vector<4x286xf32>
    %c0_25 = arith.constant 0 : index
    %c37 = arith.constant 37 : index
    %51 = vector.load %arg11[%c0_25, %c37] : memref<4x324xf32, #tpu.memory_space<vmem>>, vector<4x286xf32>
    %52 = vector.extract_strided_slice %12 {offsets = [0, 7], sizes = [4, 1], strides = [1, 1]} : vector<4x9xf32> to vector<4x1xf32>
    %53 = vector.broadcast %52 : vector<4x1xf32> to vector<4x286xf32>
    %54 = arith.mulf %51, %53 : vector<4x286xf32>
    %55 = arith.addf %50, %54 : vector<4x286xf32>
    %c0_26 = arith.constant 0 : index
    %c38 = arith.constant 38 : index
    %56 = vector.load %arg11[%c0_26, %c38] : memref<4x324xf32, #tpu.memory_space<vmem>>, vector<4x286xf32>
    %57 = vector.extract_strided_slice %12 {offsets = [0, 8], sizes = [4, 1], strides = [1, 1]} : vector<4x9xf32> to vector<4x1xf32>
    %58 = vector.broadcast %57 : vector<4x1xf32> to vector<4x286xf32>
    %59 = arith.mulf %56, %58 : vector<4x286xf32>
    %60 = arith.addf %55, %59 : vector<4x286xf32>
    %61 = arith.addf %28, %44 : vector<4x286xf32>
    %62 = arith.addf %61, %60 : vector<4x286xf32>
    %c0_27 = arith.constant 0 : index
    %c0_28 = arith.constant 0 : index
    %63 = vector.load %arg6[%c0_27, %c0_28] : memref<4x1xf32, #tpu.memory_space<vmem>>, vector<4x1xf32>
    %64 = vector.broadcast %63 : vector<4x1xf32> to vector<4x286xf32>
    %65 = arith.addf %62, %64 : vector<4x286xf32>
    %c0_29 = arith.constant 0 : index
    %c0_30 = arith.constant 0 : index
    %66 = vector.load %arg7[%c0_29, %c0_30] : memref<16x4xf32, #tpu.memory_space<vmem>>, vector<16x4xf32>
    %cst_31 = arith.constant dense<0.000000e+00> : vector<16x286xf32>
    %67 = tpu.matmul %66, %65, %cst_31 {dimension_numbers = #tpu.dot_dimension_numbers<[1], [0], [0], [1], [0, 0, 1, 1], [], []>, precision = #tpu.contract_precision<fp32>} : vector<16x4xf32>, vector<4x286xf32>, vector<16x286xf32> -> vector<16x286xf32>
    %c0_32 = arith.constant 0 : index
    %c0_33 = arith.constant 0 : index
    %68 = vector.load %arg8[%c0_32, %c0_33] : memref<16x1xf32, #tpu.memory_space<vmem>>, vector<16x1xf32>
    %69 = vector.broadcast %68 : vector<16x1xf32> to vector<16x286xf32>
    %70 = arith.addf %67, %69 : vector<16x286xf32>
    %c0_34 = arith.constant 0 : index
    %c0_35 = arith.constant 0 : index
    %71 = vector.load %arg9[%c0_34, %c0_35] : memref<286x256xf32, #tpu.memory_space<vmem>>, vector<286x256xf32>
    %cst_36 = arith.constant dense<0.000000e+00> : vector<16x256xf32>
    %72 = tpu.matmul %70, %71, %cst_36 {dimension_numbers = #tpu.dot_dimension_numbers<[1], [0], [0], [1], [0, 0, 1, 1], [], []>, precision = #tpu.contract_precision<fp32>} : vector<16x286xf32>, vector<286x256xf32>, vector<16x256xf32> -> vector<16x256xf32>
    %73 = arith.addf %72, %1 : vector<16x256xf32>
    %cst_37 = arith.constant 0.000000e+00 : f32
    %74 = vector.broadcast %cst_37 : f32 to vector<16x256xf32>
    %75 = arith.maximumf %73, %74 : vector<16x256xf32>
    %c0_38 = arith.constant 0 : index
    %c0_39 = arith.constant 0 : index
    %c0_40 = arith.constant 0 : index
    %76 = vector.load %arg10[%c0_38, %c0_39, %c0_40] : memref<1x16x256xf32, #tpu.memory_space<vmem>>, vector<1x16x256xf32>
    %77 = vector.shape_cast %76 : vector<1x16x256xf32> to vector<16x256xf32>
    %78 = vector.shape_cast %75 : vector<16x256xf32> to vector<1x16x256xf32>
    tpu.vector_store %arg10[%c0_38, %c0_39, %c0_40], %78 {strides = array<i32>} : memref<1x16x256xf32, #tpu.memory_space<vmem>>, vector<1x16x256xf32>,
    return
  }
  func.func @transform_0(%arg0: i32) -> (i32, i32, i32) {
    %c0_i32 = arith.constant 0 : i32
    %c0_i32_0 = arith.constant 0 : i32
    %c0_i32_1 = arith.constant 0 : i32
    return %arg0, %c0_i32, %c0_i32_0 : i32, i32, i32
  }
  func.func @transform_1(%arg0: i32) -> (i32, i32) {
    %c0_i32 = arith.constant 0 : i32
    %c0_i32_0 = arith.constant 0 : i32
    %c0_i32_1 = arith.constant 0 : i32
    return %c0_i32, %c0_i32_0 : i32, i32
  }
  func.func @transform_2(%arg0: i32) -> (i32, i32) {
    %c0_i32 = arith.constant 0 : i32
    %c0_i32_0 = arith.constant 0 : i32
    %c0_i32_1 = arith.constant 0 : i32
    return %c0_i32, %c0_i32_0 : i32, i32
  }
  func.func @transform_3(%arg0: i32) -> (i32, i32) {
    %c0_i32 = arith.constant 0 : i32
    %c0_i32_0 = arith.constant 0 : i32
    %c0_i32_1 = arith.constant 0 : i32
    return %c0_i32, %c0_i32_0 : i32, i32
  }
  func.func @transform_4(%arg0: i32) -> (i32, i32) {
    %c0_i32 = arith.constant 0 : i32
    %c0_i32_0 = arith.constant 0 : i32
    %c0_i32_1 = arith.constant 0 : i32
    return %c0_i32, %c0_i32_0 : i32, i32
  }
  func.func @transform_5(%arg0: i32) -> (i32, i32) {
    %c0_i32 = arith.constant 0 : i32
    %c0_i32_0 = arith.constant 0 : i32
    %c0_i32_1 = arith.constant 0 : i32
    return %c0_i32, %c0_i32_0 : i32, i32
  }
  func.func @transform_6(%arg0: i32) -> (i32, i32) {
    %c0_i32 = arith.constant 0 : i32
    %c0_i32_0 = arith.constant 0 : i32
    %c0_i32_1 = arith.constant 0 : i32
    return %c0_i32, %c0_i32_0 : i32, i32
  }
  func.func @transform_7(%arg0: i32) -> (i32, i32) {
    %c0_i32 = arith.constant 0 : i32
    %c0_i32_0 = arith.constant 0 : i32
    %c0_i32_1 = arith.constant 0 : i32
    return %c0_i32, %c0_i32_0 : i32, i32
  }
  func.func @transform_8(%arg0: i32) -> (i32, i32) {
    %c0_i32 = arith.constant 0 : i32
    %c0_i32_0 = arith.constant 0 : i32
    %c0_i32_1 = arith.constant 0 : i32
    return %c0_i32, %c0_i32_0 : i32, i32
  }
  func.func @transform_9(%arg0: i32) -> (i32, i32, i32) {
    %c0_i32 = arith.constant 0 : i32
    %c0_i32_0 = arith.constant 0 : i32
    %c0_i32_1 = arith.constant 0 : i32
    return %arg0, %c0_i32, %c0_i32_0 : i32, i32, i32
  }
}

</mosaic_0001>

<llo_original>
// kernel: tpu_custom_call.1
$region0: #{tpu_custom_call.1}
  #allocation0 [shape = 'u32[]', space=smem, size = 0x4, offset = 0x4, fixed_abs, tag = 'smem constant byte address 0x4 - core index']
  #allocation1 [shape = 'u32[144,128]{1,0:T(1,128)}', space=vmem, size = 0x12000, scoped, tag = 'internal scratch']
  #allocation2 [shape = 'f32[4,324]{1,0:T(4,128)}', space=vmem, size = 0x1800, scoped, tag = 'scratch operand']
  %s0 = inlined_call_operand.vmem [shape: f32[2,16,256], index: 0, kind: input, shape index: {}]
  %s1 = inlined_call_operand.vmem [shape: f32[4,16], index: 1, kind: input, shape index: {}]
  %s2 = inlined_call_operand.vmem [shape: f32[4,1], index: 2, kind: input, shape index: {}]
  %s3 = inlined_call_operand.vmem [shape: f32[256,324], index: 3, kind: input, shape index: {}]
  %s4 = inlined_call_operand.vmem [shape: f32[4,9], index: 4, kind: input, shape index: {}]
  %s5 = inlined_call_operand.vmem [shape: f32[4,1], index: 5, kind: input, shape index: {}]
  %s6 = inlined_call_operand.vmem [shape: f32[16,4], index: 6, kind: input, shape index: {}]
  %s7 = inlined_call_operand.vmem [shape: f32[16,1], index: 7, kind: input, shape index: {}]
  %s8 = inlined_call_operand.vmem [shape: f32[286,256], index: 8, kind: input, shape index: {}]
  %s9 = inlined_call_operand.hbm [shape: f32[2,16,256], index: 9, kind: output, shape index: {}]
  %s10 = sld [smem:[#allocation0]]
  $region69: #{tpu_custom_call.1} parent=0
    _
  %s12 = ssub.s32 1, %s10
  %s13 = scalar_select 0, %s12, %s10
  $region1: #{tpu_custom_call.1} parent=0
    #allocation3 [shape = 'u8[32768]{0}', space=vmem, size = 0x8000, scoped, tag = 'output window, operand 0']
    #allocation4 [shape = 's32[2]{0}', space=sflag, size = 0x8, scoped, tag = 'scoped memory for tpu_custom_call.1']
    %14 = vsyncpa [#allocation4], 0
    %s15 = scalar_lea.sflag [#allocation4], 1
    %16 = vsyncpa %s15, 0
    loop: start=0, step=1, limit=4
    $region2: #{tpu_custom_call.1} parent=1 // loop_pre_header
      _
    $region3: #{tpu_custom_call.1} parent=1 // loop_header
      %s18 = sphi 0, %s22
      %p19 = scmp.ge.s32.totalorder %s18, 4
      %s28 = sphi 0, %s30
      %s31 = sphi 0, %s28
      %s32 = sphi 0, %s31
      %s48 = sphi 0, %s32
      %s52 = sphi 0, %s52
      %s54 = sphi 0, %s52
      %s55 = sphi 0, %s54
      %s69 = sphi 0, %s55
      %s73 = sphi 0, %s73
      %s75 = sphi 0, %s73
      %s76 = sphi 0, %s75
      %s90 = sphi 0, %s76
      %s94 = sphi 0, %s94
      %s96 = sphi 0, %s94
      %s97 = sphi 0, %s96
      %s111 = sphi 0, %s97
      %s115 = sphi 0, %s115
      %s117 = sphi 0, %s115
      %s118 = sphi 0, %s117
      %s132 = sphi 0, %s118
      %s136 = sphi 0, %s136
      %s138 = sphi 0, %s136
      %s139 = sphi 0, %s138
      %s153 = sphi 0, %s139
      %s157 = sphi 0, %s157
      %s159 = sphi 0, %s157
      %s160 = sphi 0, %s159
      %s174 = sphi 0, %s160
      %s178 = sphi 0, %s178
      %s180 = sphi 0, %s178
      %s181 = sphi 0, %s180
      %s195 = sphi 0, %s181
      %s199 = sphi 0, %s199
      %s201 = sphi 0, %s199
      %s202 = sphi 0, %s201
      %s216 = sphi 0, %s202
      %s222 = sphi 0, %s224
      %s225 = sphi 0, %s222
      %s226 = sphi 0, %s225
      %s242 = sphi 0, %s226
    $region4: #{tpu_custom_call.1} parent=1 // loop_header_branch
      %21 = sbr.rel (%p19) target = $region8
    $region5: #{tpu_custom_call.1} parent=1 // loop_body
      %s23 = ssub.s32 %s18, 1
      %s24 = ssub.s32 %s18, 2
      %s25 = sadd.s32 %s18, 1
      %s26 = ssub.s32 %s18, %s25
      %p27 = scmp.eq.s32.totalorder %s26, 0
      %s29 = sadd.s32 %s28, 1
      %s30 = scalar_select %p27, %s28, %s29
      %p33 = pneg %p27
      %p34 = scmp.eq.s32.totalorder %s18, 1
      %p35 = por %p33, %p34
      %p36 = scmp.ne.s32.totalorder %s28, %s31
      %p37 = scmp.eq.s32.totalorder %s18, 0
      %p38 = por %p36, %p37
      %p39 = scmp.ne.s32.totalorder %s28, %s31
      %p40 = scmp.eq.s32.totalorder %s23, 1
      %p41 = por %p39, %p40
      %p42 = scmp.ne.s32.totalorder %s31, %s32
      %p43 = scmp.eq.s32.totalorder %s23, 0
      %p44 = por %p42, %p43
      %p45 = scmp.ne.s32.totalorder %s31, %s32
      %p46 = scmp.eq.s32.totalorder %s24, 1
      %p47 = por %p45, %p46
      %p49 = scmp.ne.s32.totalorder %s32, %s48
      %p50 = scmp.eq.s32.totalorder %s24, 0
      %p51 = por %p49, %p50
      %s53 = sadd.s32 %s52, 1
      %p56 = scmp.eq.s32.totalorder %s18, 1
      %p57 = scmp.ne.s32.totalorder %s52, %s54
      %p58 = scmp.eq.s32.totalorder %s18, 0
      %p59 = por %p57, %p58
      %p60 = scmp.ne.s32.totalorder %s52, %s54
      %p61 = scmp.eq.s32.totalorder %s23, 1
      %p62 = por %p60, %p61
      %p63 = scmp.ne.s32.totalorder %s54, %s55
      %p64 = scmp.eq.s32.totalorder %s23, 0
      %p65 = por %p63, %p64
      %p66 = scmp.ne.s32.totalorder %s54, %s55
      %p67 = scmp.eq.s32.totalorder %s24, 1
      %p68 = por %p66, %p67
      %p70 = scmp.ne.s32.totalorder %s55, %s69
      %p71 = scmp.eq.s32.totalorder %s24, 0
      %p72 = por %p70, %p71
      %s74 = sadd.s32 %s73, 1
      %p77 = scmp.eq.s32.totalorder %s18, 1
      %p78 = scmp.ne.s32.totalorder %s73, %s75
      %p79 = scmp.eq.s32.totalorder %s18, 0
      %p80 = por %p78, %p79
      %p81 = scmp.ne.s32.totalorder %s73, %s75
      %p82 = scmp.eq.s32.totalorder %s23, 1
      %p83 = por %p81, %p82
      %p84 = scmp.ne.s32.totalorder %s75, %s76
      %p85 = scmp.eq.s32.totalorder %s23, 0
      %p86 = por %p84, %p85
      %p87 = scmp.ne.s32.totalorder %s75, %s76
      %p88 = scmp.eq.s32.totalorder %s24, 1
      %p89 = por %p87, %p88
      %p91 = scmp.ne.s32.totalorder %s76, %s90
      %p92 = scmp.eq.s32.totalorder %s24, 0
      %p93 = por %p91, %p92
      %s95 = sadd.s32 %s94, 1
      %p98 = scmp.eq.s32.totalorder %s18, 1
      %p99 = scmp.ne.s32.totalorder %s94, %s96
      %p100 = scmp.eq.s32.totalorder %s18, 0
      %p101 = por %p99, %p100
      %p102 = scmp.ne.s32.totalorder %s94, %s96
      %p103 = scmp.eq.s32.totalorder %s23, 1
      %p104 = por %p102, %p103
      %p105 = scmp.ne.s32.totalorder %s96, %s97
      %p106 = scmp.eq.s32.totalorder %s23, 0
      %p107 = por %p105, %p106
      %p108 = scmp.ne.s32.totalorder %s96, %s97
      %p109 = scmp.eq.s32.totalorder %s24, 1
      %p110 = por %p108, %p109
      %p112 = scmp.ne.s32.totalorder %s97, %s111
      %p113 = scmp.eq.s32.totalorder %s24, 0
      %p114 = por %p112, %p113
      %s116 = sadd.s32 %s115, 1
      %p119 = scmp.eq.s32.totalorder %s18, 1
      %p120 = scmp.ne.s32.totalorder %s115, %s117
      %p121 = scmp.eq.s32.totalorder %s18, 0
      %p122 = por %p120, %p121
      %p123 = scmp.ne.s32.totalorder %s115, %s117
      %p124 = scmp.eq.s32.totalorder %s23, 1
      %p125 = por %p123, %p124
      %p126 = scmp.ne.s32.totalorder %s117, %s118
      %p127 = scmp.eq.s32.totalorder %s23, 0
      %p128 = por %p126, %p127
      %p129 = scmp.ne.s32.totalorder %s117, %s118
      %p130 = scmp.eq.s32.totalorder %s24, 1
      %p131 = por %p129, %p130
      %p133 = scmp.ne.s32.totalorder %s118, %s132
      %p134 = scmp.eq.s32.totalorder %s24, 0
      %p135 = por %p133, %p134
      %s137 = sadd.s32 %s136, 1
      %p140 = scmp.eq.s32.totalorder %s18, 1
      %p141 = scmp.ne.s32.totalorder %s136, %s138
      %p142 = scmp.eq.s32.totalorder %s18, 0
      %p143 = por %p141, %p142
      %p144 = scmp.ne.s32.totalorder %s136, %s138
      %p145 = scmp.eq.s32.totalorder %s23, 1
      %p146 = por %p144, %p145
      %p147 = scmp.ne.s32.totalorder %s138, %s139
      %p148 = scmp.eq.s32.totalorder %s23, 0
      %p149 = por %p147, %p148
      %p150 = scmp.ne.s32.totalorder %s138, %s139
      %p151 = scmp.eq.s32.totalorder %s24, 1
      %p152 = por %p150, %p151
      %p154 = scmp.ne.s32.totalorder %s139, %s153
      %p155 = scmp.eq.s32.totalorder %s24, 0
      %p156 = por %p154, %p155
      %s158 = sadd.s32 %s157, 1
      %p161 = scmp.eq.s32.totalorder %s18, 1
      %p162 = scmp.ne.s32.totalorder %s157, %s159
      %p163 = scmp.eq.s32.totalorder %s18, 0
      %p164 = por %p162, %p163
      %p165 = scmp.ne.s32.totalorder %s157, %s159
      %p166 = scmp.eq.s32.totalorder %s23, 1
      %p167 = por %p165, %p166
      %p168 = scmp.ne.s32.totalorder %s159, %s160
      %p169 = scmp.eq.s32.totalorder %s23, 0
      %p170 = por %p168, %p169
      %p171 = scmp.ne.s32.totalorder %s159, %s160
      %p172 = scmp.eq.s32.totalorder %s24, 1
      %p173 = por %p171, %p172
      %p175 = scmp.ne.s32.totalorder %s160, %s174
      %p176 = scmp.eq.s32.totalorder %s24, 0
      %p177 = por %p175, %p176
      %s179 = sadd.s32 %s178, 1
      %p182 = scmp.eq.s32.totalorder %s18, 1
      %p183 = scmp.ne.s32.totalorder %s178, %s180
      %p184 = scmp.eq.s32.totalorder %s18, 0
      %p185 = por %p183, %p184
      %p186 = scmp.ne.s32.totalorder %s178, %s180
      %p187 = scmp.eq.s32.totalorder %s23, 1
      %p188 = por %p186, %p187
      %p189 = scmp.ne.s32.totalorder %s180, %s181
      %p190 = scmp.eq.s32.totalorder %s23, 0
      %p191 = por %p189, %p190
      %p192 = scmp.ne.s32.totalorder %s180, %s181
      %p193 = scmp.eq.s32.totalorder %s24, 1
      %p194 = por %p192, %p193
      %p196 = scmp.ne.s32.totalorder %s181, %s195
      %p197 = scmp.eq.s32.totalorder %s24, 0
      %p198 = por %p196, %p197
      %s200 = sadd.s32 %s199, 1
      %p203 = scmp.eq.s32.totalorder %s18, 1
      %p204 = scmp.ne.s32.totalorder %s199, %s201
      %p205 = scmp.eq.s32.totalorder %s18, 0
      %p206 = por %p204, %p205
      %p207 = scmp.ne.s32.totalorder %s199, %s201
      %p208 = scmp.eq.s32.totalorder %s23, 1
      %p209 = por %p207, %p208
      %p210 = scmp.ne.s32.totalorder %s201, %s202
      %p211 = scmp.eq.s32.totalorder %s23, 0
      %p212 = por %p210, %p211
      %p213 = scmp.ne.s32.totalorder %s201, %s202
      %p214 = scmp.eq.s32.totalorder %s24, 1
      %p215 = por %p213, %p214
      %p217 = scmp.ne.s32.totalorder %s202, %s216
      %p218 = scmp.eq.s32.totalorder %s24, 0
      %p219 = por %p217, %p218
      %s220 = ssub.s32 %s18, %s25
      %p221 = scmp.eq.s32.totalorder %s220, 0
      %s223 = sadd.s32 %s222, 1
      %s224 = scalar_select %p221, %s222, %s223
      %p227 = pneg %p221
      %p228 = scmp.eq.s32.totalorder %s18, 1
      %p229 = por %p227, %p228
      %p230 = scmp.ne.s32.totalorder %s222, %s225
      %p231 = scmp.eq.s32.totalorder %s18, 0
      %p232 = por %p230, %p231
      %p233 = scmp.ne.s32.totalorder %s222, %s225
      %p234 = scmp.eq.s32.totalorder %s23, 1
      %p235 = por %p233, %p234
      %p236 = scmp.ne.s32.totalorder %s225, %s226
      %p237 = scmp.eq.s32.totalorder %s23, 0
      %p238 = por %p236, %p237
      %p239 = scmp.ne.s32.totalorder %s225, %s226
      %p240 = scmp.eq.s32.totalorder %s24, 1
      %p241 = por %p239, %p240
      %p243 = scmp.ne.s32.totalorder %s226, %s242
      %p244 = scmp.eq.s32.totalorder %s24, 0
      %p245 = por %p243, %p244
      %p246 = scmp.le.s32.totalorder 1, %s18
      %p247 = scmp.lt.s32.totalorder %s18, 3
      %p248 = pnand %p246, %p247
      %p249 = pneg %p248
      // Predicated region
      $region9: #{tpu_custom_call.1} parent=5 // pred_check
        _
      $region10: #{tpu_custom_call.1} parent=5 // pred_check_branch
        %251 = sbr.rel (%p248) target = $region12
      $region11: #{tpu_custom_call.1} parent=5 // pred_region
        %s252 = ssub.s32 %s18, 1
        // Predicated region
        $region13: #{tpu_custom_call.1} parent=11 // pred_check
          %p253 = pneg %p65
        $region14: #{tpu_custom_call.1} parent=11 // pred_check_branch
          %255 = sbr.rel (%p253) target = $region16
        $region15: #{tpu_custom_call.1} parent=11 // pred_region
          _
        $region16: #{tpu_custom_call.1} parent=11 // pred_fallthru
          _
        // Predicated region
        $region17: #{tpu_custom_call.1} parent=11 // pred_check
          %p256 = pneg %p86
        $region18: #{tpu_custom_call.1} parent=11 // pred_check_branch
          %258 = sbr.rel (%p256) target = $region20
        $region19: #{tpu_custom_call.1} parent=11 // pred_region
          _
        $region20: #{tpu_custom_call.1} parent=11 // pred_fallthru
          _
        // Predicated region
        $region21: #{tpu_custom_call.1} parent=11 // pred_check
          %p259 = pneg %p107
        $region22: #{tpu_custom_call.1} parent=11 // pred_check_branch
          %261 = sbr.rel (%p259) target = $region24
        $region23: #{tpu_custom_call.1} parent=11 // pred_region
          _
        $region24: #{tpu_custom_call.1} parent=11 // pred_fallthru
          _
        // Predicated region
        $region25: #{tpu_custom_call.1} parent=11 // pred_check
          %p262 = pneg %p128
        $region26: #{tpu_custom_call.1} parent=11 // pred_check_branch
          %264 = sbr.rel (%p262) target = $region28
        $region27: #{tpu_custom_call.1} parent=11 // pred_region
          _
        $region28: #{tpu_custom_call.1} parent=11 // pred_fallthru
          _
        // Predicated region
        $region29: #{tpu_custom_call.1} parent=11 // pred_check
          %p265 = pneg %p149
        $region30: #{tpu_custom_call.1} parent=11 // pred_check_branch
          %267 = sbr.rel (%p265) target = $region32
        $region31: #{tpu_custom_call.1} parent=11 // pred_region
          _
        $region32: #{tpu_custom_call.1} parent=11 // pred_fallthru
          _
        // Predicated region
        $region33: #{tpu_custom_call.1} parent=11 // pred_check
          %p268 = pneg %p170
        $region34: #{tpu_custom_call.1} parent=11 // pred_check_branch
          %270 = sbr.rel (%p268) target = $region36
        $region35: #{tpu_custom_call.1} parent=11 // pred_region
          _
        $region36: #{tpu_custom_call.1} parent=11 // pred_fallthru
          _
        // Predicated region
        $region37: #{tpu_custom_call.1} parent=11 // pred_check
          %p271 = pneg %p191
        $region38: #{tpu_custom_call.1} parent=11 // pred_check_branch
          %273 = sbr.rel (%p271) target = $region40
        $region39: #{tpu_custom_call.1} parent=11 // pred_region
          _
        $region40: #{tpu_custom_call.1} parent=11 // pred_fallthru
          _
        // Predicated region
        $region41: #{tpu_custom_call.1} parent=11 // pred_check
          %p274 = pneg %p212
        $region42: #{tpu_custom_call.1} parent=11 // pred_check_branch
          %276 = sbr.rel (%p274) target = $region44
        $region43: #{tpu_custom_call.1} parent=11 // pred_region
          _
        $region44: #{tpu_custom_call.1} parent=11 // pred_fallthru
          _
      $region12: #{tpu_custom_call.1} parent=5 // pred_fallthru
        _
      %p277 = scmp.lt.s32.totalorder %s18, 2
      // Predicated region
      $region45: #{tpu_custom_call.1} parent=5 // pred_check
        %p278 = pneg %p277
      $region46: #{tpu_custom_call.1} parent=5 // pred_check_branch
        %280 = sbr.rel (%p278) target = $region48
      $region47: #{tpu_custom_call.1} parent=5 // pred_region
        // Predicated region
        $region49: #{tpu_custom_call.1} parent=47 // pred_check
          %p281 = pneg %p38
        $region50: #{tpu_custom_call.1} parent=47 // pred_check_branch
          %283 = sbr.rel (%p281) target = $region52
        $region51: #{tpu_custom_call.1} parent=47 // pred_region
          %p284 = scmp.lt.s32.totalorder %s18, 1
          %s285 = scalar_select %p284, %s18, 1
          %s286 = smul.addr %s285, 4
          %s287 = smul.addr %s286, 8
          %s288 = scalar_lea.vmem %s0, %s287
        $region52: #{tpu_custom_call.1} parent=47 // pred_fallthru
          _
      $region48: #{tpu_custom_call.1} parent=5 // pred_fallthru
        _
      %p289 = scmp.le.s32.totalorder 1, %s18
      %p290 = scmp.lt.s32.totalorder %s18, 3
      %p291 = pnand %p289, %p290
      %p292 = pneg %p291
      // Predicated region
      $region53: #{tpu_custom_call.1} parent=5 // pred_check
        _
      $region54: #{tpu_custom_call.1} parent=5 // pred_check_branch
        %294 = sbr.rel (%p291) target = $region56
      $region55: #{tpu_custom_call.1} parent=5 // pred_region
        %s295 = ssub.s32 %s18, 1
        %p296 = scmp.lt.s32.totalorder %s23, 1
        %s297 = scalar_select %p296, %s23, 1
        %s298 = smul.addr %s297, 4
        %s299 = smul.addr %s298, 8
        %s300 = scalar_lea.vmem %s0, %s299
        %p301 = pneg %p44
        %p302 = pneg %p41
        %p303 = pneg %p65
        %p304 = pneg %p62
        %p305 = pneg %p86
        %p306 = pneg %p83
        %p307 = pneg %p107
        %p308 = pneg %p104
        %p309 = pneg %p128
        %p310 = pneg %p125
        %p311 = pneg %p149
        %p312 = pneg %p146
        %p313 = pneg %p170
        %p314 = pneg %p167
        %p315 = pneg %p191
        %p316 = pneg %p188
        %p317 = pneg %p212
        %p318 = pneg %p209
        %p319 = pneg %p238
        %p320 = pneg %p235
        %s321 = sand.u32 %s225, 1
        %s322 = scalar_lea.sflag [#allocation4], %s321
        %s323 = sand.u32 %s225, 1
        %s324 = smul.addr %s323, 32
        %s325 = scalar_lea.vmem [#allocation3], %s324
        %p326 = scmp.lt.s32.totalorder %s23, 1
        %s327 = scalar_select %p326, %s23, 1
        %s328 = smul.addr %s327, 4
        %s329 = smul.addr %s328, 8
        %s330 = scalar_lea.vmem %s0, %s329
        %v331 = vld [vmem:[%s330] sm:$0xff]
        %v332 = vld [vmem:[%s330 + $0x8] sm:$0xff]
        %v333 = vld [vmem:[%s330 + $0x10] sm:$0xff]
        %v334 = vld [vmem:[%s330 + $0x18] sm:$0xff]
        %v335 = vld [vmem:[%s1] sm:$0xf]
        %v336 = vld [vmem:[%s2] sm:$0xf]
        %338 = vset.pattern.permute.xlu0 0
        %339 = vperm.xlu0 %338, %v336
        %v340 = vpop.permute.xlu0 %339
        %vm342 = vcmask 130048
        %v344 = vsel %vm342, %v335, 0
        %v346 = vand.u32 %v332, 4294901760
        %347 = vmatprep.subr.mxu0 %v346
        %v348 = vand.u32 %v331, 4294901760
        %349 = vmatpush1.msra.mxu0 %v348
        %v350 = vand.u32 %v334, 4294901760
        %351 = vmatprep.subr.mxu0 %v350
        %v352 = vand.u32 %v333, 4294901760
        %353 = vmatpush1.msra.mxu0 %v352
        %354 = vmatprep.subr.mxu0 0.0
        %355 = vmatpush1.msra.mxu0 0.0
        %356 = vmatprep.subr.mxu0 0.0
        %357 = vmatpush1.msra.mxu0 0.0
        %358 = vmatprep.subr.mxu0 0.0
        %359 = vmatpush1.msra.mxu0 0.0
        %360 = vmatprep.subr.mxu0 0.0
        %361 = vmatpush1.msra.mxu0 0.0
        %362 = vmatprep.subr.mxu0 0.0
        %363 = vmatpush1.msra.mxu0 0.0
        %364 = vmatprep.subr.mxu0 0.0
        %365 = vmatpush1.msra.mxu0 0.0
        %366 = vmatprep.subr.mxu0 0.0
        %367 = vmatpush1.msra.mxu0 0.0
        %368 = vmatprep.subr.mxu0 0.0
        %369 = vmatpush1.msra.mxu0 0.0
        %370 = vmatprep.subr.mxu0 0.0
        %371 = vmatpush1.msra.mxu0 0.0
        %372 = vmatprep.subr.mxu0 0.0
        %373 = vmatpush1.msra.mxu0 0.0
        %374 = vmatprep.subr.mxu0 0.0
        %375 = vmatpush1.msra.mxu0 0.0
        %376 = vmatprep.subr.mxu0 0.0
        %377 = vmatpush1.msra.mxu0 0.0
        %378 = vmatprep.subr.mxu0 0.0
        %379 = vmatpush1.msra.mxu0 0.0
        %380 = vmatprep.subr.mxu0 0.0
        %381 = vmatpush1.msra.mxu0 0.0
        %382 = vmatprep.subr.mxu0 0.0
        %383 = vmatpush1.msra.mxu0 0.0
        %384 = vmatprep.subr.mxu0 0.0
        %385 = vmatpush1.msra.mxu0 0.0
        %386 = vmatprep.subr.mxu0 0.0
        %387 = vmatpush1.msra.mxu0 0.0
        %388 = vmatprep.subr.mxu0 0.0
        %389 = vmatpush1.msra.mxu0 0.0
        %390 = vmatprep.subr.mxu0 0.0
        %391 = vmatpush1.msra.mxu0 0.0
        %392 = vmatprep.subr.mxu0 0.0
        %393 = vmatpush1.msra.mxu0 0.0
        %394 = vmatprep.subr.mxu0 0.0
        %395 = vmatpush1.msra.mxu0 0.0
        %396 = vmatprep.subr.mxu0 0.0
        %397 = vmatpush1.msra.mxu0 0.0
        %398 = vmatprep.subr.mxu0 0.0
        %399 = vmatpush1.msra.mxu0 0.0
        %400 = vmatprep.subr.mxu0 0.0
        %401 = vmatpush1.msra.mxu0 0.0
        %402 = vmatprep.subr.mxu0 0.0
        %403 = vmatpush1.msra.mxu0 0.0
        %404 = vmatprep.subr.mxu0 0.0
        %405 = vmatpush1.msra.mxu0 0.0
        %406 = vmatprep.subr.mxu0 0.0
        %407 = vmatpush1.msra.mxu0 0.0
        %408 = vmatprep.subr.mxu0 0.0
        %409 = vmatpush1.msra.mxu0 0.0
        %410 = vmatprep.subr.mxu0 0.0
        %411 = vmatpush1.msra.mxu0 0.0
        %412 = vmatprep.subr.mxu0 0.0
        %413 = vmatpush1.msra.mxu0 0.0
        %414 = vmatprep.mubr.f32.mxu0 0.0
        %v415 = vand.u32 %v344, 4294901760
        %v416 = vsub.f32 %v344, %v415
        %v417 = vand.u32 %v416, 4294901760
        %v418 = vsub.f32 %v416, %v417
        %v419 = vand.u32 %v418, 4294901760
        %420 = vmatmul.mubr.f32.gmra.mrb[0].mxu0 %v419
        %v421 = vpop.f32.mrb[0].mxu0
        %v422 = vadd.f32 %v340, %v421
        %v423 = vpop.f32.mrb[0].mxu0
        %v424 = vadd.f32 %v340, %v423
        %425 = vdwg.mxu0
        %v426 = vand.u32 %v332, 4294901760
        %v427 = vsub.f32 %v332, %v426
        %v428 = vand.u32 %v427, 4294901760
        %v429 = vsub.f32 %v427, %v428
        %v430 = vand.u32 %v429, 4294901760
        %431 = vmatprep.subr.mxu0 %v430
        %v432 = vand.u32 %v331, 4294901760
        %v433 = vsub.f32 %v331, %v432
        %v434 = vand.u32 %v433, 4294901760
        %v435 = vsub.f32 %v433, %v434
        %v436 = vand.u32 %v435, 4294901760
        %437 = vmatpush1.msra.mxu0 %v436
        %v438 = vand.u32 %v334, 4294901760
        %v439 = vsub.f32 %v334, %v438
        %v440 = vand.u32 %v439, 4294901760
        %v441 = vsub.f32 %v439, %v440
        %v442 = vand.u32 %v441, 4294901760
        %443 = vmatprep.subr.mxu0 %v442
        %v444 = vand.u32 %v333, 4294901760
        %v445 = vsub.f32 %v333, %v444
        %v446 = vand.u32 %v445, 4294901760
        %v447 = vsub.f32 %v445, %v446
        %v448 = vand.u32 %v447, 4294901760
        %449 = vmatpush1.msra.mxu0 %v448
        %450 = vmatprep.subr.mxu0 0.0
        %451 = vmatpush1.msra.mxu0 0.0
        %452 = vmatprep.subr.mxu0 0.0
        %453 = vmatpush1.msra.mxu0 0.0
        %454 = vmatprep.subr.mxu0 0.0
        %455 = vmatpush1.msra.mxu0 0.0
        %456 = vmatprep.subr.mxu0 0.0
        %457 = vmatpush1.msra.mxu0 0.0
        %458 = vmatprep.subr.mxu0 0.0
        %459 = vmatpush1.msra.mxu0 0.0
        %460 = vmatprep.subr.mxu0 0.0
        %461 = vmatpush1.msra.mxu0 0.0
        %462 = vmatprep.subr.mxu0 0.0
        %463 = vmatpush1.msra.mxu0 0.0
        %464 = vmatprep.subr.mxu0 0.0
        %465 = vmatpush1.msra.mxu0 0.0
        %466 = vmatprep.subr.mxu0 0.0
        %467 = vmatpush1.msra.mxu0 0.0
        %468 = vmatprep.subr.mxu0 0.0
        %469 = vmatpush1.msra.mxu0 0.0
        %470 = vmatprep.subr.mxu0 0.0
        %471 = vmatpush1.msra.mxu0 0.0
        %472 = vmatprep.subr.mxu0 0.0
        %473 = vmatpush1.msra.mxu0 0.0
        %474 = vmatprep.subr.mxu0 0.0
        %475 = vmatpush1.msra.mxu0 0.0
        %476 = vmatprep.subr.mxu0 0.0
        %477 = vmatpush1.msra.mxu0 0.0
        %478 = vmatprep.subr.mxu0 0.0
        %479 = vmatpush1.msra.mxu0 0.0
        %480 = vmatprep.subr.mxu0 0.0
        %481 = vmatpush1.msra.mxu0 0.0
        %482 = vmatprep.subr.mxu0 0.0
        %483 = vmatpush1.msra.mxu0 0.0
        %484 = vmatprep.subr.mxu0 0.0
        %485 = vmatpush1.msra.mxu0 0.0
        %486 = vmatprep.subr.mxu0 0.0
        %487 = vmatpush1.msra.mxu0 0.0
        %488 = vmatprep.subr.mxu0 0.0
        %489 = vmatpush1.msra.mxu0 0.0
        %490 = vmatprep.subr.mxu0 0.0
        %491 = vmatpush1.msra.mxu0 0.0
        %492 = vmatprep.subr.mxu0 0.0
        %493 = vmatpush1.msra.mxu0 0.0
        %494 = vmatprep.subr.mxu0 0.0
        %495 = vmatpush1.msra.mxu0 0.0
        %496 = vmatprep.subr.mxu0 0.0
        %497 = vmatpush1.msra.mxu0 0.0
        %498 = vmatprep.subr.mxu0 0.0
        %499 = vmatpush1.msra.mxu0 0.0
        %500 = vmatprep.subr.mxu0 0.0
        %501 = vmatpush1.msra.mxu0 0.0
        %502 = vmatprep.subr.mxu0 0.0
        %503 = vmatpush1.msra.mxu0 0.0
        %504 = vmatprep.subr.mxu0 0.0
        %505 = vmatpush1.msra.mxu0 0.0
        %506 = vmatprep.subr.mxu0 0.0
        %507 = vmatpush1.msra.mxu0 0.0
        %508 = vmatprep.subr.mxu0 0.0
        %509 = vmatpush1.msra.mxu0 0.0
        %510 = vmatprep.mubr.f32.mxu0 0.0
        %v511 = vand.u32 %v344, 4294901760
        %512 = vmatmul.mubr.f32.gmra.mrb[0].mxu0 %v511
        %v513 = vpop.f32.mrb[0].mxu0
        %v514 = vadd.f32 %v422, %v513
        %v515 = vpop.f32.mrb[0].mxu0
        %v516 = vadd.f32 %v424, %v515
        %517 = vdwg.mxu0
        %v518 = vand.u32 %v332, 4294901760
        %v519 = vsub.f32 %v332, %v518
        %520 = vmatprep.subr.mxu0 %v519
        %v521 = vand.u32 %v331, 4294901760
        %v522 = vsub.f32 %v331, %v521
        %523 = vmatpush1.msra.mxu0 %v522
        %v524 = vand.u32 %v334, 4294901760
        %v525 = vsub.f32 %v334, %v524
        %526 = vmatprep.subr.mxu0 %v525
        %v527 = vand.u32 %v333, 4294901760
        %v528 = vsub.f32 %v333, %v527
        %529 = vmatpush1.msra.mxu0 %v528
        %530 = vmatprep.subr.mxu0 0.0
        %531 = vmatpush1.msra.mxu0 0.0
        %532 = vmatprep.subr.mxu0 0.0
        %533 = vmatpush1.msra.mxu0 0.0
        %534 = vmatprep.subr.mxu0 0.0
        %535 = vmatpush1.msra.mxu0 0.0
        %536 = vmatprep.subr.mxu0 0.0
        %537 = vmatpush1.msra.mxu0 0.0
        %538 = vmatprep.subr.mxu0 0.0
        %539 = vmatpush1.msra.mxu0 0.0
        %540 = vmatprep.subr.mxu0 0.0
        %541 = vmatpush1.msra.mxu0 0.0
        %542 = vmatprep.subr.mxu0 0.0
        %543 = vmatpush1.msra.mxu0 0.0
        %544 = vmatprep.subr.mxu0 0.0
        %545 = vmatpush1.msra.mxu0 0.0
        %546 = vmatprep.subr.mxu0 0.0
        %547 = vmatpush1.msra.mxu0 0.0
        %548 = vmatprep.subr.mxu0 0.0
        %549 = vmatpush1.msra.mxu0 0.0
        %550 = vmatprep.subr.mxu0 0.0
        %551 = vmatpush1.msra.mxu0 0.0
        %552 = vmatprep.subr.mxu0 0.0
        %553 = vmatpush1.msra.mxu0 0.0
        %554 = vmatprep.subr.mxu0 0.0
        %555 = vmatpush1.msra.mxu0 0.0
        %556 = vmatprep.subr.mxu0 0.0
        %557 = vmatpush1.msra.mxu0 0.0
        %558 = vmatprep.subr.mxu0 0.0
        %559 = vmatpush1.msra.mxu0 0.0
        %560 = vmatprep.subr.mxu0 0.0
        %561 = vmatpush1.msra.mxu0 0.0
        %562 = vmatprep.subr.mxu0 0.0
        %563 = vmatpush1.msra.mxu0 0.0
        %564 = vmatprep.subr.mxu0 0.0
        %565 = vmatpush1.msra.mxu0 0.0
        %566 = vmatprep.subr.mxu0 0.0
        %567 = vmatpush1.msra.mxu0 0.0
        %568 = vmatprep.subr.mxu0 0.0
        %569 = vmatpush1.msra.mxu0 0.0
        %570 = vmatprep.subr.mxu0 0.0
        %571 = vmatpush1.msra.mxu0 0.0
        %572 = vmatprep.subr.mxu0 0.0
        %573 = vmatpush1.msra.mxu0 0.0
        %574 = vmatprep.subr.mxu0 0.0
        %575 = vmatpush1.msra.mxu0 0.0
        %576 = vmatprep.subr.mxu0 0.0
        %577 = vmatpush1.msra.mxu0 0.0
        %578 = vmatprep.subr.mxu0 0.0
        %579 = vmatpush1.msra.mxu0 0.0
        %580 = vmatprep.subr.mxu0 0.0
        %581 = vmatpush1.msra.mxu0 0.0
        %582 = vmatprep.subr.mxu0 0.0
        %583 = vmatpush1.msra.mxu0 0.0
        %584 = vmatprep.subr.mxu0 0.0
        %585 = vmatpush1.msra.mxu0 0.0
        %586 = vmatprep.subr.mxu0 0.0
        %587 = vmatpush1.msra.mxu0 0.0
        %588 = vmatprep.subr.mxu0 0.0
        %589 = vmatpush1.msra.mxu0 0.0
        %590 = vmatprep.mubr.f32.mxu0 0.0
        %v591 = vand.u32 %v344, 4294901760
        %v592 = vsub.f32 %v344, %v591
        %593 = vmatmul.mubr.f32.gmra.mrb[0].mxu0 %v592
        %v594 = vpop.f32.mrb[0].mxu0
        %v595 = vadd.f32 %v514, %v594
        %v596 = vpop.f32.mrb[0].mxu0
        %v597 = vadd.f32 %v516, %v596
        %598 = vdwg.mxu0
        %v599 = vand.u32 %v332, 4294901760
        %600 = vmatprep.subr.mxu0 %v599
        %v601 = vand.u32 %v331, 4294901760
        %602 = vmatpush1.msra.mxu0 %v601
        %v603 = vand.u32 %v334, 4294901760
        %604 = vmatprep.subr.mxu0 %v603
        %v605 = vand.u32 %v333, 4294901760
        %606 = vmatpush1.msra.mxu0 %v605
        %607 = vmatprep.subr.mxu0 0.0
        %608 = vmatpush1.msra.mxu0 0.0
        %609 = vmatprep.subr.mxu0 0.0
        %610 = vmatpush1.msra.mxu0 0.0
        %611 = vmatprep.subr.mxu0 0.0
        %612 = vmatpush1.msra.mxu0 0.0
        %613 = vmatprep.subr.mxu0 0.0
        %614 = vmatpush1.msra.mxu0 0.0
        %615 = vmatprep.subr.mxu0 0.0
        %616 = vmatpush1.msra.mxu0 0.0
        %617 = vmatprep.subr.mxu0 0.0
        %618 = vmatpush1.msra.mxu0 0.0
        %619 = vmatprep.subr.mxu0 0.0
        %620 = vmatpush1.msra.mxu0 0.0
        %621 = vmatprep.subr.mxu0 0.0
        %622 = vmatpush1.msra.mxu0 0.0
        %623 = vmatprep.subr.mxu0 0.0
        %624 = vmatpush1.msra.mxu0 0.0
        %625 = vmatprep.subr.mxu0 0.0
        %626 = vmatpush1.msra.mxu0 0.0
        %627 = vmatprep.subr.mxu0 0.0
        %628 = vmatpush1.msra.mxu0 0.0
        %629 = vmatprep.subr.mxu0 0.0
        %630 = vmatpush1.msra.mxu0 0.0
        %631 = vmatprep.subr.mxu0 0.0
        %632 = vmatpush1.msra.mxu0 0.0
        %633 = vmatprep.subr.mxu0 0.0
        %634 = vmatpush1.msra.mxu0 0.0
        %635 = vmatprep.subr.mxu0 0.0
        %636 = vmatpush1.msra.mxu0 0.0
        %637 = vmatprep.subr.mxu0 0.0
        %638 = vmatpush1.msra.mxu0 0.0
        %639 = vmatprep.subr.mxu0 0.0
        %640 = vmatpush1.msra.mxu0 0.0
        %641 = vmatprep.subr.mxu0 0.0
        %642 = vmatpush1.msra.mxu0 0.0
        %643 = vmatprep.subr.mxu0 0.0
        %644 = vmatpush1.msra.mxu0 0.0
        %645 = vmatprep.subr.mxu0 0.0
        %646 = vmatpush1.msra.mxu0 0.0
        %647 = vmatprep.subr.mxu0 0.0
        %648 = vmatpush1.msra.mxu0 0.0
        %649 = vmatprep.subr.mxu0 0.0
        %650 = vmatpush1.msra.mxu0 0.0
        %651 = vmatprep.subr.mxu0 0.0
        %652 = vmatpush1.msra.mxu0 0.0
        %653 = vmatprep.subr.mxu0 0.0
        %654 = vmatpush1.msra.mxu0 0.0
        %655 = vmatprep.subr.mxu0 0.0
        %656 = vmatpush1.msra.mxu0 0.0
        %657 = vmatprep.subr.mxu0 0.0
        %658 = vmatpush1.msra.mxu0 0.0
        %659 = vmatprep.subr.mxu0 0.0
        %660 = vmatpush1.msra.mxu0 0.0
        %661 = vmatprep.subr.mxu0 0.0
        %662 = vmatpush1.msra.mxu0 0.0
        %663 = vmatprep.subr.mxu0 0.0
        %664 = vmatpush1.msra.mxu0 0.0
        %665 = vmatprep.subr.mxu0 0.0
        %666 = vmatpush1.msra.mxu0 0.0
        %667 = vmatprep.mubr.f32.mxu0 0.0
        %v668 = vand.u32 %v344, 4294901760
        %v669 = vsub.f32 %v344, %v668
        %v670 = vand.u32 %v669, 4294901760
        %671 = vmatmul.mubr.f32.gmra.mrb[0].mxu0 %v670
        %v672 = vpop.f32.mrb[0].mxu0
        %v673 = vadd.f32 %v595, %v672
        %v674 = vpop.f32.mrb[0].mxu0
        %v675 = vadd.f32 %v597, %v674
        %676 = vdwg.mxu0
        %v677 = vand.u32 %v332, 4294901760
        %v678 = vsub.f32 %v332, %v677
        %v679 = vand.u32 %v678, 4294901760
        %680 = vmatprep.subr.mxu0 %v679
        %v681 = vand.u32 %v331, 4294901760
        %v682 = vsub.f32 %v331, %v681
        %v683 = vand.u32 %v682, 4294901760
        %684 = vmatpush1.msra.mxu0 %v683
        %v685 = vand.u32 %v334, 4294901760
        %v686 = vsub.f32 %v334, %v685
        %v687 = vand.u32 %v686, 4294901760
        %688 = vmatprep.subr.mxu0 %v687
        %v689 = vand.u32 %v333, 4294901760
        %v690 = vsub.f32 %v333, %v689
        %v691 = vand.u32 %v690, 4294901760
        %692 = vmatpush1.msra.mxu0 %v691
        %693 = vmatprep.subr.mxu0 0.0
        %694 = vmatpush1.msra.mxu0 0.0
        %695 = vmatprep.subr.mxu0 0.0
        %696 = vmatpush1.msra.mxu0 0.0
        %697 = vmatprep.subr.mxu0 0.0
        %698 = vmatpush1.msra.mxu0 0.0
        %699 = vmatprep.subr.mxu0 0.0
        %700 = vmatpush1.msra.mxu0 0.0
        %701 = vmatprep.subr.mxu0 0.0
        %702 = vmatpush1.msra.mxu0 0.0
        %703 = vmatprep.subr.mxu0 0.0
        %704 = vmatpush1.msra.mxu0 0.0
        %705 = vmatprep.subr.mxu0 0.0
        %706 = vmatpush1.msra.mxu0 0.0
        %707 = vmatprep.subr.mxu0 0.0
        %708 = vmatpush1.msra.mxu0 0.0
        %709 = vmatprep.subr.mxu0 0.0
        %710 = vmatpush1.msra.mxu0 0.0
        %711 = vmatprep.subr.mxu0 0.0
        %712 = vmatpush1.msra.mxu0 0.0
        %713 = vmatprep.subr.mxu0 0.0
        %714 = vmatpush1.msra.mxu0 0.0
        %715 = vmatprep.subr.mxu0 0.0
        %716 = vmatpush1.msra.mxu0 0.0
        %717 = vmatprep.subr.mxu0 0.0
        %718 = vmatpush1.msra.mxu0 0.0
        %719 = vmatprep.subr.mxu0 0.0
        %720 = vmatpush1.msra.mxu0 0.0
        %721 = vmatprep.subr.mxu0 0.0
        %722 = vmatpush1.msra.mxu0 0.0
        %723 = vmatprep.subr.mxu0 0.0
        %724 = vmatpush1.msra.mxu0 0.0
        %725 = vmatprep.subr.mxu0 0.0
        %726 = vmatpush1.msra.mxu0 0.0
        %727 = vmatprep.subr.mxu0 0.0
        %728 = vmatpush1.msra.mxu0 0.0
        %729 = vmatprep.subr.mxu0 0.0
        %730 = vmatpush1.msra.mxu0 0.0
        %731 = vmatprep.subr.mxu0 0.0
        %732 = vmatpush1.msra.mxu0 0.0
        %733 = vmatprep.subr.mxu0 0.0
        %734 = vmatpush1.msra.mxu0 0.0
        %735 = vmatprep.subr.mxu0 0.0
        %736 = vmatpush1.msra.mxu0 0.0
        %737 = vmatprep.subr.mxu0 0.0
        %738 = vmatpush1.msra.mxu0 0.0
        %739 = vmatprep.subr.mxu0 0.0
        %740 = vmatpush1.msra.mxu0 0.0
        %741 = vmatprep.subr.mxu0 0.0
        %742 = vmatpush1.msra.mxu0 0.0
        %743 = vmatprep.subr.mxu0 0.0
        %744 = vmatpush1.msra.mxu0 0.0
        %745 = vmatprep.subr.mxu0 0.0
        %746 = vmatpush1.msra.mxu0 0.0
        %747 = vmatprep.subr.mxu0 0.0
        %748 = vmatpush1.msra.mxu0 0.0
        %749 = vmatprep.subr.mxu0 0.0
        %750 = vmatpush1.msra.mxu0 0.0
        %751 = vmatprep.subr.mxu0 0.0
        %752 = vmatpush1.msra.mxu0 0.0
        %753 = vmatprep.mubr.f32.mxu0 0.0
        %v754 = vand.u32 %v344, 4294901760
        %755 = vmatmul.mubr.f32.gmra.mrb[0].mxu0 %v754
        %v756 = vpop.f32.mrb[0].mxu0
        %v757 = vadd.f32 %v673, %v756
        %v758 = vpop.f32.mrb[0].mxu0
        %v759 = vadd.f32 %v675, %v758
        %760 = vdwg.mxu0
        %v761 = vand.u32 %v332, 4294901760
        %762 = vmatprep.subr.mxu0 %v761
        %v763 = vand.u32 %v331, 4294901760
        %764 = vmatpush1.msra.mxu0 %v763
        %v765 = vand.u32 %v334, 4294901760
        %766 = vmatprep.subr.mxu0 %v765
        %v767 = vand.u32 %v333, 4294901760
        %768 = vmatpush1.msra.mxu0 %v767
        %769 = vmatprep.subr.mxu0 0.0
        %770 = vmatpush1.msra.mxu0 0.0
        %771 = vmatprep.subr.mxu0 0.0
        %772 = vmatpush1.msra.mxu0 0.0
        %773 = vmatprep.subr.mxu0 0.0
        %774 = vmatpush1.msra.mxu0 0.0
        %775 = vmatprep.subr.mxu0 0.0
        %776 = vmatpush1.msra.mxu0 0.0
        %777 = vmatprep.subr.mxu0 0.0
        %778 = vmatpush1.msra.mxu0 0.0
        %779 = vmatprep.subr.mxu0 0.0
        %780 = vmatpush1.msra.mxu0 0.0
        %781 = vmatprep.subr.mxu0 0.0
        %782 = vmatpush1.msra.mxu0 0.0
        %783 = vmatprep.subr.mxu0 0.0
        %784 = vmatpush1.msra.mxu0 0.0
        %785 = vmatprep.subr.mxu0 0.0
        %786 = vmatpush1.msra.mxu0 0.0
        %787 = vmatprep.subr.mxu0 0.0
        %788 = vmatpush1.msra.mxu0 0.0
        %789 = vmatprep.subr.mxu0 0.0
        %790 = vmatpush1.msra.mxu0 0.0
        %791 = vmatprep.subr.mxu0 0.0
        %792 = vmatpush1.msra.mxu0 0.0
        %793 = vmatprep.subr.mxu0 0.0
        %794 = vmatpush1.msra.mxu0 0.0
        %795 = vmatprep.subr.mxu0 0.0
        %796 = vmatpush1.msra.mxu0 0.0
        %797 = vmatprep.subr.mxu0 0.0
        %798 = vmatpush1.msra.mxu0 0.0
        %799 = vmatprep.subr.mxu0 0.0
        %800 = vmatpush1.msra.mxu0 0.0
        %801 = vmatprep.subr.mxu0 0.0
        %802 = vmatpush1.msra.mxu0 0.0
        %803 = vmatprep.subr.mxu0 0.0
        %804 = vmatpush1.msra.mxu0 0.0
        %805 = vmatprep.subr.mxu0 0.0
        %806 = vmatpush1.msra.mxu0 0.0
        %807 = vmatprep.subr.mxu0 0.0
        %808 = vmatpush1.msra.mxu0 0.0
        %809 = vmatprep.subr.mxu0 0.0
        %810 = vmatpush1.msra.mxu0 0.0
        %811 = vmatprep.subr.mxu0 0.0
        %812 = vmatpush1.msra.mxu0 0.0
        %813 = vmatprep.subr.mxu0 0.0
        %814 = vmatpush1.msra.mxu0 0.0
        %815 = vmatprep.subr.mxu0 0.0
        %816 = vmatpush1.msra.mxu0 0.0
        %817 = vmatprep.subr.mxu0 0.0
        %818 = vmatpush1.msra.mxu0 0.0
        %819 = vmatprep.subr.mxu0 0.0
        %820 = vmatpush1.msra.mxu0 0.0
        %821 = vmatprep.subr.mxu0 0.0
        %822 = vmatpush1.msra.mxu0 0.0
        %823 = vmatprep.subr.mxu0 0.0
        %824 = vmatpush1.msra.mxu0 0.0
        %825 = vmatprep.subr.mxu0 0.0
        %826 = vmatpush1.msra.mxu0 0.0
        %827 = vmatprep.subr.mxu0 0.0
        %828 = vmatpush1.msra.mxu0 0.0
        %829 = vmatprep.mubr.f32.mxu0 0.0
        %v830 = vand.u32 %v344, 4294901760
        %831 = vmatmul.mubr.f32.gmra.mrb[0].mxu0 %v830
        %v832 = vpop.f32.mrb[0].mxu0
        %v833 = vadd.f32 %v757, %v832
        %v834 = vpop.f32.mrb[0].mxu0
        %v835 = vadd.f32 %v759, %v834
        %836 = vdwg.mxu0
        %v837 = vmax.f32 %v833, 0.0
        %v838 = vmax.f32 %v835, 0.0
        %v839 = vld [vmem:[%s3] sm:$0xff]
        %v840 = vld [vmem:[%s3 + $0x8] sm:$0xff]
        %v841 = vld [vmem:[%s3 + $0x10] sm:$0xff]
        %v842 = vld [vmem:[%s3 + $0x18] sm:$0xff]
        %v843 = vld [vmem:[%s3 + $0x20] sm:$0xff]
        %v844 = vld [vmem:[%s3 + $0x28] sm:$0xff]
        %v845 = vld [vmem:[%s3 + $0x30] sm:$0xff]
        %v846 = vld [vmem:[%s3 + $0x38] sm:$0xff]
        %v847 = vld [vmem:[%s3 + $0x40] sm:$0xff]
        %v848 = vld [vmem:[%s3 + $0x48] sm:$0xff]
        %v849 = vld [vmem:[%s3 + $0x50] sm:$0xff]
        %v850 = vld [vmem:[%s3 + $0x58] sm:$0xff]
        %v851 = vld [vmem:[%s3 + $0x60] sm:$0xff]
        %v852 = vld [vmem:[%s3 + $0x68] sm:$0xff]
        %v853 = vld [vmem:[%s3 + $0x70] sm:$0xff]
        %v854 = vld [vmem:[%s3 + $0x78] sm:$0xff]
        %v855 = vld [vmem:[%s3 + $0x80] sm:$0xff]
        %v856 = vld [vmem:[%s3 + $0x88] sm:$0xff]
        %v857 = vld [vmem:[%s3 + $0x90] sm:$0xff]
        %v858 = vld [vmem:[%s3 + $0x98] sm:$0xff]
        %v859 = vld [vmem:[%s3 + $0xa0] sm:$0xff]
        %v860 = vld [vmem:[%s3 + $0xa8] sm:$0xff]
        %v861 = vld [vmem:[%s3 + $0xb0] sm:$0xff]
        %v862 = vld [vmem:[%s3 + $0xb8] sm:$0xff]
        %v863 = vld [vmem:[%s3 + $0xc0] sm:$0xff]
        %v864 = vld [vmem:[%s3 + $0xc8] sm:$0xff]
        %v865 = vld [vmem:[%s3 + $0xd0] sm:$0xff]
        %v866 = vld [vmem:[%s3 + $0xd8] sm:$0xff]
        %v867 = vld [vmem:[%s3 + $0xe0] sm:$0xff]
        %v868 = vld [vmem:[%s3 + $0xe8] sm:$0xff]
        %v869 = vld [vmem:[%s3 + $0xf0] sm:$0xff]
        %v870 = vld [vmem:[%s3 + $0xf8] sm:$0xff]
        %v871 = vld [vmem:[%s3 + $0x100] sm:$0xff]
        %v872 = vld [vmem:[%s3 + $0x108] sm:$0xff]
        %v873 = vld [vmem:[%s3 + $0x110] sm:$0xff]
        %v874 = vld [vmem:[%s3 + $0x118] sm:$0xff]
        %v875 = vld [vmem:[%s3 + $0x120] sm:$0xff]
        %v876 = vld [vmem:[%s3 + $0x128] sm:$0xff]
        %v877 = vld [vmem:[%s3 + $0x130] sm:$0xff]
        %v878 = vld [vmem:[%s3 + $0x138] sm:$0xff]
        %v879 = vld [vmem:[%s3 + $0x140] sm:$0xff]
        %v880 = vld [vmem:[%s3 + $0x148] sm:$0xff]
        %v881 = vld [vmem:[%s3 + $0x150] sm:$0xff]
        %v882 = vld [vmem:[%s3 + $0x158] sm:$0xff]
        %v883 = vld [vmem:[%s3 + $0x160] sm:$0xff]
        %v884 = vld [vmem:[%s3 + $0x168] sm:$0xff]
        %v885 = vld [vmem:[%s3 + $0x170] sm:$0xff]
        %v886 = vld [vmem:[%s3 + $0x178] sm:$0xff]
        %v887 = vld [vmem:[%s3 + $0x180] sm:$0xff]
        %v888 = vld [vmem:[%s3 + $0x188] sm:$0xff]
        %v889 = vld [vmem:[%s3 + $0x190] sm:$0xff]
        %v890 = vld [vmem:[%s3 + $0x198] sm:$0xff]
        %v891 = vld [vmem:[%s3 + $0x1a0] sm:$0xff]
        %v892 = vld [vmem:[%s3 + $0x1a8] sm:$0xff]
        %v893 = vld [vmem:[%s3 + $0x1b0] sm:$0xff]
        %v894 = vld [vmem:[%s3 + $0x1b8] sm:$0xff]
        %v895 = vld [vmem:[%s3 + $0x1c0] sm:$0xff]
        %v896 = vld [vmem:[%s3 + $0x1c8] sm:$0xff]
        %v897 = vld [vmem:[%s3 + $0x1d0] sm:$0xff]
        %v898 = vld [vmem:[%s3 + $0x1d8] sm:$0xff]
        %v899 = vld [vmem:[%s3 + $0x1e0] sm:$0xff]
        %v900 = vld [vmem:[%s3 + $0x1e8] sm:$0xff]
        %v901 = vld [vmem:[%s3 + $0x1f0] sm:$0xff]
        %v902 = vld [vmem:[%s3 + $0x1f8] sm:$0xff]
        %v903 = vld [vmem:[%s3 + $0x200] sm:$0xff]
        %v904 = vld [vmem:[%s3 + $0x208] sm:$0xff]
        %v905 = vld [vmem:[%s3 + $0x210] sm:$0xff]
        %v906 = vld [vmem:[%s3 + $0x218] sm:$0xff]
        %v907 = vld [vmem:[%s3 + $0x220] sm:$0xff]
        %v908 = vld [vmem:[%s3 + $0x228] sm:$0xff]
        %v909 = vld [vmem:[%s3 + $0x230] sm:$0xff]
        %v910 = vld [vmem:[%s3 + $0x238] sm:$0xff]
        %v911 = vld [vmem:[%s3 + $0x240] sm:$0xff]
        %v912 = vld [vmem:[%s3 + $0x248] sm:$0xff]
        %v913 = vld [vmem:[%s3 + $0x250] sm:$0xff]
        %v914 = vld [vmem:[%s3 + $0x258] sm:$0xff]
        %v915 = vld [vmem:[%s3 + $0x260] sm:$0xff]
        %v916 = vld [vmem:[%s3 + $0x268] sm:$0xff]
        %v917 = vld [vmem:[%s3 + $0x270] sm:$0xff]
        %v918 = vld [vmem:[%s3 + $0x278] sm:$0xff]
        %v919 = vld [vmem:[%s3 + $0x280] sm:$0xff]
        %v920 = vld [vmem:[%s3 + $0x288] sm:$0xff]
        %v921 = vld [vmem:[%s3 + $0x290] sm:$0xff]
        %v922 = vld [vmem:[%s3 + $0x298] sm:$0xff]
        %v923 = vld [vmem:[%s3 + $0x2a0] sm:$0xff]
        %v924 = vld [vmem:[%s3 + $0x2a8] sm:$0xff]
        %v925 = vld [vmem:[%s3 + $0x2b0] sm:$0xff]
        %v926 = vld [vmem:[%s3 + $0x2b8] sm:$0xff]
        %v927 = vld [vmem:[%s3 + $0x2c0] sm:$0xff]
        %v928 = vld [vmem:[%s3 + $0x2c8] sm:$0xff]
        %v929 = vld [vmem:[%s3 + $0x2d0] sm:$0xff]
        %v930 = vld [vmem:[%s3 + $0x2d8] sm:$0xff]
        %v931 = vld [vmem:[%s3 + $0x2e0] sm:$0xff]
        %v932 = vld [vmem:[%s3 + $0x2e8] sm:$0xff]
        %v933 = vld [vmem:[%s3 + $0x2f0] sm:$0xff]
        %v934 = vld [vmem:[%s3 + $0x2f8] sm:$0xff]
        %v935 = vand.u32 %v840, 4294901760
        %936 = vmatprep.subr.mxu0 %v935
        %v937 = vand.u32 %v839, 4294901760
        %938 = vmatpush1.msra.mxu0 %v937
        %v939 = vand.u32 %v843, 4294901760
        %940 = vmatprep.subr.mxu0 %v939
        %v941 = vand.u32 %v842, 4294901760
        %942 = vmatpush1.msra.mxu0 %v941
        %v943 = vand.u32 %v846, 4294901760
        %944 = vmatprep.subr.mxu0 %v943
        %v945 = vand.u32 %v845, 4294901760
        %946 = vmatpush1.msra.mxu0 %v945
        %v947 = vand.u32 %v849, 4294901760
        %948 = vmatprep.subr.mxu0 %v947
        %v949 = vand.u32 %v848, 4294901760
        %950 = vmatpush1.msra.mxu0 %v949
        %v951 = vand.u32 %v852, 4294901760
        %952 = vmatprep.subr.mxu0 %v951
        %v953 = vand.u32 %v851, 4294901760
        %954 = vmatpush1.msra.mxu0 %v953
        %v955 = vand.u32 %v855, 4294901760
        %956 = vmatprep.subr.mxu0 %v955
        %v957 = vand.u32 %v854, 4294901760
        %958 = vmatpush1.msra.mxu0 %v957
        %v959 = vand.u32 %v858, 4294901760
        %960 = vmatprep.subr.mxu0 %v959
        %v961 = vand.u32 %v857, 4294901760
        %962 = vmatpush1.msra.mxu0 %v961
        %v963 = vand.u32 %v861, 4294901760
        %964 = vmatprep.subr.mxu0 %v963
        %v965 = vand.u32 %v860, 4294901760
        %966 = vmatpush1.msra.mxu0 %v965
        %v967 = vand.u32 %v864, 4294901760
        %968 = vmatprep.subr.mxu0 %v967
        %v969 = vand.u32 %v863, 4294901760
        %970 = vmatpush1.msra.mxu0 %v969
        %v971 = vand.u32 %v867, 4294901760
        %972 = vmatprep.subr.mxu0 %v971
        %v973 = vand.u32 %v866, 4294901760
        %974 = vmatpush1.msra.mxu0 %v973
        %v975 = vand.u32 %v870, 4294901760
        %976 = vmatprep.subr.mxu0 %v975
        %v977 = vand.u32 %v869, 4294901760
        %978 = vmatpush1.msra.mxu0 %v977
        %v979 = vand.u32 %v873, 4294901760
        %980 = vmatprep.subr.mxu0 %v979
        %v981 = vand.u32 %v872, 4294901760
        %982 = vmatpush1.msra.mxu0 %v981
        %v983 = vand.u32 %v876, 4294901760
        %984 = vmatprep.subr.mxu0 %v983
        %v985 = vand.u32 %v875, 4294901760
        %986 = vmatpush1.msra.mxu0 %v985
        %v987 = vand.u32 %v879, 4294901760
        %988 = vmatprep.subr.mxu0 %v987
        %v989 = vand.u32 %v878, 4294901760
        %990 = vmatpush1.msra.mxu0 %v989
        %v991 = vand.u32 %v882, 4294901760
        %992 = vmatprep.subr.mxu0 %v991
        %v993 = vand.u32 %v881, 4294901760
        %994 = vmatpush1.msra.mxu0 %v993
        %v995 = vand.u32 %v885, 4294901760
        %996 = vmatprep.subr.mxu0 %v995
        %v997 = vand.u32 %v884, 4294901760
        %998 = vmatpush1.msra.mxu0 %v997
        %v999 = vand.u32 %v888, 4294901760
        %1000 = vmatprep.subr.mxu0 %v999
        %v1001 = vand.u32 %v887, 4294901760
        %1002 = vmatpush1.msra.mxu0 %v1001
        %v1003 = vand.u32 %v891, 4294901760
        %1004 = vmatprep.subr.mxu0 %v1003
        %v1005 = vand.u32 %v890, 4294901760
        %1006 = vmatpush1.msra.mxu0 %v1005
        %v1007 = vand.u32 %v894, 4294901760
        %1008 = vmatprep.subr.mxu0 %v1007
        %v1009 = vand.u32 %v893, 4294901760
        %1010 = vmatpush1.msra.mxu0 %v1009
        %v1011 = vand.u32 %v897, 4294901760
        %1012 = vmatprep.subr.mxu0 %v1011
        %v1013 = vand.u32 %v896, 4294901760
        %1014 = vmatpush1.msra.mxu0 %v1013
        %v1015 = vand.u32 %v900, 4294901760
        %1016 = vmatprep.subr.mxu0 %v1015
        %v1017 = vand.u32 %v899, 4294901760
        %1018 = vmatpush1.msra.mxu0 %v1017
        %v1019 = vand.u32 %v903, 4294901760
        %1020 = vmatprep.subr.mxu0 %v1019
        %v1021 = vand.u32 %v902, 4294901760
        %1022 = vmatpush1.msra.mxu0 %v1021
        %v1023 = vand.u32 %v906, 4294901760
        %1024 = vmatprep.subr.mxu0 %v1023
        %v1025 = vand.u32 %v905, 4294901760
        %1026 = vmatpush1.msra.mxu0 %v1025
        %v1027 = vand.u32 %v909, 4294901760
        %1028 = vmatprep.subr.mxu0 %v1027
        %v1029 = vand.u32 %v908, 4294901760
        %1030 = vmatpush1.msra.mxu0 %v1029
        %v1031 = vand.u32 %v912, 4294901760
        %1032 = vmatprep.subr.mxu0 %v1031
        %v1033 = vand.u32 %v911, 4294901760
        %1034 = vmatpush1.msra.mxu0 %v1033
        %v1035 = vand.u32 %v915, 4294901760
        %1036 = vmatprep.subr.mxu0 %v1035
        %v1037 = vand.u32 %v914, 4294901760
        %1038 = vmatpush1.msra.mxu0 %v1037
        %v1039 = vand.u32 %v918, 4294901760
        %1040 = vmatprep.subr.mxu0 %v1039
        %v1041 = vand.u32 %v917, 4294901760
        %1042 = vmatpush1.msra.mxu0 %v1041
        %v1043 = vand.u32 %v921, 4294901760
        %1044 = vmatprep.subr.mxu0 %v1043
        %v1045 = vand.u32 %v920, 4294901760
        %1046 = vmatpush1.msra.mxu0 %v1045
        %v1047 = vand.u32 %v924, 4294901760
        %1048 = vmatprep.subr.mxu0 %v1047
        %v1049 = vand.u32 %v923, 4294901760
        %1050 = vmatpush1.msra.mxu0 %v1049
        %v1051 = vand.u32 %v927, 4294901760
        %1052 = vmatprep.subr.mxu0 %v1051
        %v1053 = vand.u32 %v926, 4294901760
        %1054 = vmatpush1.msra.mxu0 %v1053
        %v1055 = vand.u32 %v930, 4294901760
        %1056 = vmatprep.subr.mxu0 %v1055
        %v1057 = vand.u32 %v929, 4294901760
        %1058 = vmatpush1.msra.mxu0 %v1057
        %v1059 = vand.u32 %v933, 4294901760
        %1060 = vmatprep.subr.mxu0 %v1059
        %v1061 = vand.u32 %v932, 4294901760
        %1062 = vmatpush1.msra.mxu0 %v1061
        %v1063 = vand.u32 %v838, 4294901760
        %v1064 = vsub.f32 %v838, %v1063
        %v1065 = vand.u32 %v1064, 4294901760
        %v1066 = vsub.f32 %v1064, %v1065
        %v1067 = vand.u32 %v1066, 4294901760
        %1068 = vmatprep.mubr.f32.mxu0 %v1067
        %v1069 = vand.u32 %v837, 4294901760
        %v1070 = vsub.f32 %v837, %v1069
        %v1071 = vand.u32 %v1070, 4294901760
        %v1072 = vsub.f32 %v1070, %v1071
        %v1073 = vand.u32 %v1072, 4294901760
        %1074 = vmatmul.mubr.f32.gmra.mrb[0].mxu0 %v1073
        %v1075 = vpop.f32.mrb[0].mxu0
        %v1076 = vadd.f32 0.0, %v1075
        %v1077 = vpop.f32.mrb[0].mxu0
        %v1078 = vadd.f32 0.0, %v1077
        %1079 = vdwg.mxu0
        %v1080 = vand.u32 %v840, 4294901760
        %v1081 = vsub.f32 %v840, %v1080
        %v1082 = vand.u32 %v1081, 4294901760
        %v1083 = vsub.f32 %v1081, %v1082
        %v1084 = vand.u32 %v1083, 4294901760
        %1085 = vmatprep.subr.mxu0 %v1084
        %v1086 = vand.u32 %v839, 4294901760
        %v1087 = vsub.f32 %v839, %v1086
        %v1088 = vand.u32 %v1087, 4294901760
        %v1089 = vsub.f32 %v1087, %v1088
        %v1090 = vand.u32 %v1089, 4294901760
        %1091 = vmatpush1.msra.mxu0 %v1090
        %v1092 = vand.u32 %v843, 4294901760
        %v1093 = vsub.f32 %v843, %v1092
        %v1094 = vand.u32 %v1093, 4294901760
        %v1095 = vsub.f32 %v1093, %v1094
        %v1096 = vand.u32 %v1095, 4294901760
        %1097 = vmatprep.subr.mxu0 %v1096
        %v1098 = vand.u32 %v842, 4294901760
        %v1099 = vsub.f32 %v842, %v1098
        %v1100 = vand.u32 %v1099, 4294901760
        %v1101 = vsub.f32 %v1099, %v1100
        %v1102 = vand.u32 %v1101, 4294901760
        %1103 = vmatpush1.msra.mxu0 %v1102
        %v1104 = vand.u32 %v846, 4294901760
        %v1105 = vsub.f32 %v846, %v1104
        %v1106 = vand.u32 %v1105, 4294901760
        %v1107 = vsub.f32 %v1105, %v1106
        %v1108 = vand.u32 %v1107, 4294901760
        %1109 = vmatprep.subr.mxu0 %v1108
        %v1110 = vand.u32 %v845, 4294901760
        %v1111 = vsub.f32 %v845, %v1110
        %v1112 = vand.u32 %v1111, 4294901760
        %v1113 = vsub.f32 %v1111, %v1112
        %v1114 = vand.u32 %v1113, 4294901760
        %1115 = vmatpush1.msra.mxu0 %v1114
        %v1116 = vand.u32 %v849, 4294901760
        %v1117 = vsub.f32 %v849, %v1116
        %v1118 = vand.u32 %v1117, 4294901760
        %v1119 = vsub.f32 %v1117, %v1118
        %v1120 = vand.u32 %v1119, 4294901760
        %1121 = vmatprep.subr.mxu0 %v1120
        %v1122 = vand.u32 %v848, 4294901760
        %v1123 = vsub.f32 %v848, %v1122
        %v1124 = vand.u32 %v1123, 4294901760
        %v1125 = vsub.f32 %v1123, %v1124
        %v1126 = vand.u32 %v1125, 4294901760
        %1127 = vmatpush1.msra.mxu0 %v1126
        %v1128 = vand.u32 %v852, 4294901760
        %v1129 = vsub.f32 %v852, %v1128
        %v1130 = vand.u32 %v1129, 4294901760
        %v1131 = vsub.f32 %v1129, %v1130
        %v1132 = vand.u32 %v1131, 4294901760
        %1133 = vmatprep.subr.mxu0 %v1132
        %v1134 = vand.u32 %v851, 4294901760
        %v1135 = vsub.f32 %v851, %v1134
        %v1136 = vand.u32 %v1135, 4294901760
        %v1137 = vsub.f32 %v1135, %v1136
        %v1138 = vand.u32 %v1137, 4294901760
        %1139 = vmatpush1.msra.mxu0 %v1138
        %v1140 = vand.u32 %v855, 4294901760
        %v1141 = vsub.f32 %v855, %v1140
        %v1142 = vand.u32 %v1141, 4294901760
        %v1143 = vsub.f32 %v1141, %v1142
        %v1144 = vand.u32 %v1143, 4294901760
        %1145 = vmatprep.subr.mxu0 %v1144
        %v1146 = vand.u32 %v854, 4294901760
        %v1147 = vsub.f32 %v854, %v1146
        %v1148 = vand.u32 %v1147, 4294901760
        %v1149 = vsub.f32 %v1147, %v1148
        %v1150 = vand.u32 %v1149, 4294901760
        %1151 = vmatpush1.msra.mxu0 %v1150
        %v1152 = vand.u32 %v858, 4294901760
        %v1153 = vsub.f32 %v858, %v1152
        %v1154 = vand.u32 %v1153, 4294901760
        %v1155 = vsub.f32 %v1153, %v1154
        %v1156 = vand.u32 %v1155, 4294901760
        %1157 = vmatprep.subr.mxu0 %v1156
        %v1158 = vand.u32 %v857, 4294901760
        %v1159 = vsub.f32 %v857, %v1158
        %v1160 = vand.u32 %v1159, 4294901760
        %v1161 = vsub.f32 %v1159, %v1160
        %v1162 = vand.u32 %v1161, 4294901760
        %1163 = vmatpush1.msra.mxu0 %v1162
        %v1164 = vand.u32 %v861, 4294901760
        %v1165 = vsub.f32 %v861, %v1164
        %v1166 = vand.u32 %v1165, 4294901760
        %v1167 = vsub.f32 %v1165, %v1166
        %v1168 = vand.u32 %v1167, 4294901760
        %1169 = vmatprep.subr.mxu0 %v1168
        %v1170 = vand.u32 %v860, 4294901760
        %v1171 = vsub.f32 %v860, %v1170
        %v1172 = vand.u32 %v1171, 4294901760
        %v1173 = vsub.f32 %v1171, %v1172
        %v1174 = vand.u32 %v1173, 4294901760
        %1175 = vmatpush1.msra.mxu0 %v1174
        %v1176 = vand.u32 %v864, 4294901760
        %v1177 = vsub.f32 %v864, %v1176
        %v1178 = vand.u32 %v1177, 4294901760
        %v1179 = vsub.f32 %v1177, %v1178
        %v1180 = vand.u32 %v1179, 4294901760
        %1181 = vmatprep.subr.mxu0 %v1180
        %v1182 = vand.u32 %v863, 4294901760
        %v1183 = vsub.f32 %v863, %v1182
        %v1184 = vand.u32 %v1183, 4294901760
        %v1185 = vsub.f32 %v1183, %v1184
        %v1186 = vand.u32 %v1185, 4294901760
        %1187 = vmatpush1.msra.mxu0 %v1186
        %v1188 = vand.u32 %v867, 4294901760
        %v1189 = vsub.f32 %v867, %v1188
        %v1190 = vand.u32 %v1189, 4294901760
        %v1191 = vsub.f32 %v1189, %v1190
        %v1192 = vand.u32 %v1191, 4294901760
        %1193 = vmatprep.subr.mxu0 %v1192
        %v1194 = vand.u32 %v866, 4294901760
        %v1195 = vsub.f32 %v866, %v1194
        %v1196 = vand.u32 %v1195, 4294901760
        %v1197 = vsub.f32 %v1195, %v1196
        %v1198 = vand.u32 %v1197, 4294901760
        %1199 = vmatpush1.msra.mxu0 %v1198
        %v1200 = vand.u32 %v870, 4294901760
        %v1201 = vsub.f32 %v870, %v1200
        %v1202 = vand.u32 %v1201, 4294901760
        %v1203 = vsub.f32 %v1201, %v1202
        %v1204 = vand.u32 %v1203, 4294901760
        %1205 = vmatprep.subr.mxu0 %v1204
        %v1206 = vand.u32 %v869, 4294901760
        %v1207 = vsub.f32 %v869, %v1206
        %v1208 = vand.u32 %v1207, 4294901760
        %v1209 = vsub.f32 %v1207, %v1208
        %v1210 = vand.u32 %v1209, 4294901760
        %1211 = vmatpush1.msra.mxu0 %v1210
        %v1212 = vand.u32 %v873, 4294901760
        %v1213 = vsub.f32 %v873, %v1212
        %v1214 = vand.u32 %v1213, 4294901760
        %v1215 = vsub.f32 %v1213, %v1214
        %v1216 = vand.u32 %v1215, 4294901760
        %1217 = vmatprep.subr.mxu0 %v1216
        %v1218 = vand.u32 %v872, 4294901760
        %v1219 = vsub.f32 %v872, %v1218
        %v1220 = vand.u32 %v1219, 4294901760
        %v1221 = vsub.f32 %v1219, %v1220
        %v1222 = vand.u32 %v1221, 4294901760
        %1223 = vmatpush1.msra.mxu0 %v1222
        %v1224 = vand.u32 %v876, 4294901760
        %v1225 = vsub.f32 %v876, %v1224
        %v1226 = vand.u32 %v1225, 4294901760
        %v1227 = vsub.f32 %v1225, %v1226
        %v1228 = vand.u32 %v1227, 4294901760
        %1229 = vmatprep.subr.mxu0 %v1228
        %v1230 = vand.u32 %v875, 4294901760
        %v1231 = vsub.f32 %v875, %v1230
        %v1232 = vand.u32 %v1231, 4294901760
        %v1233 = vsub.f32 %v1231, %v1232
        %v1234 = vand.u32 %v1233, 4294901760
        %1235 = vmatpush1.msra.mxu0 %v1234
        %v1236 = vand.u32 %v879, 4294901760
        %v1237 = vsub.f32 %v879, %v1236
        %v1238 = vand.u32 %v1237, 4294901760
        %v1239 = vsub.f32 %v1237, %v1238
        %v1240 = vand.u32 %v1239, 4294901760
        %1241 = vmatprep.subr.mxu0 %v1240
        %v1242 = vand.u32 %v878, 4294901760
        %v1243 = vsub.f32 %v878, %v1242
        %v1244 = vand.u32 %v1243, 4294901760
        %v1245 = vsub.f32 %v1243, %v1244
        %v1246 = vand.u32 %v1245, 4294901760
        %1247 = vmatpush1.msra.mxu0 %v1246
        %v1248 = vand.u32 %v882, 4294901760
        %v1249 = vsub.f32 %v882, %v1248
        %v1250 = vand.u32 %v1249, 4294901760
        %v1251 = vsub.f32 %v1249, %v1250
        %v1252 = vand.u32 %v1251, 4294901760
        %1253 = vmatprep.subr.mxu0 %v1252
        %v1254 = vand.u32 %v881, 4294901760
        %v1255 = vsub.f32 %v881, %v1254
        %v1256 = vand.u32 %v1255, 4294901760
        %v1257 = vsub.f32 %v1255, %v1256
        %v1258 = vand.u32 %v1257, 4294901760
        %1259 = vmatpush1.msra.mxu0 %v1258
        %v1260 = vand.u32 %v885, 4294901760
        %v1261 = vsub.f32 %v885, %v1260
        %v1262 = vand.u32 %v1261, 4294901760
        %v1263 = vsub.f32 %v1261, %v1262
        %v1264 = vand.u32 %v1263, 4294901760
        %1265 = vmatprep.subr.mxu0 %v1264
        %v1266 = vand.u32 %v884, 4294901760
        %v1267 = vsub.f32 %v884, %v1266
        %v1268 = vand.u32 %v1267, 4294901760
        %v1269 = vsub.f32 %v1267, %v1268
        %v1270 = vand.u32 %v1269, 4294901760
        %1271 = vmatpush1.msra.mxu0 %v1270
        %v1272 = vand.u32 %v888, 4294901760
        %v1273 = vsub.f32 %v888, %v1272
        %v1274 = vand.u32 %v1273, 4294901760
        %v1275 = vsub.f32 %v1273, %v1274
        %v1276 = vand.u32 %v1275, 4294901760
        %1277 = vmatprep.subr.mxu0 %v1276
        %v1278 = vand.u32 %v887, 4294901760
        %v1279 = vsub.f32 %v887, %v1278
        %v1280 = vand.u32 %v1279, 4294901760
        %v1281 = vsub.f32 %v1279, %v1280
        %v1282 = vand.u32 %v1281, 4294901760
        %1283 = vmatpush1.msra.mxu0 %v1282
        %v1284 = vand.u32 %v891, 4294901760
        %v1285 = vsub.f32 %v891, %v1284
        %v1286 = vand.u32 %v1285, 4294901760
        %v1287 = vsub.f32 %v1285, %v1286
        %v1288 = vand.u32 %v1287, 4294901760
        %1289 = vmatprep.subr.mxu0 %v1288
        %v1290 = vand.u32 %v890, 4294901760
        %v1291 = vsub.f32 %v890, %v1290
        %v1292 = vand.u32 %v1291, 4294901760
        %v1293 = vsub.f32 %v1291, %v1292
        %v1294 = vand.u32 %v1293, 4294901760
        %1295 = vmatpush1.msra.mxu0 %v1294
        %v1296 = vand.u32 %v894, 4294901760
        %v1297 = vsub.f32 %v894, %v1296
        %v1298 = vand.u32 %v1297, 4294901760
        %v1299 = vsub.f32 %v1297, %v1298
        %v1300 = vand.u32 %v1299, 4294901760
        %1301 = vmatprep.subr.mxu0 %v1300
        %v1302 = vand.u32 %v893, 4294901760
        %v1303 = vsub.f32 %v893, %v1302
        %v1304 = vand.u32 %v1303, 4294901760
        %v1305 = vsub.f32 %v1303, %v1304
        %v1306 = vand.u32 %v1305, 4294901760
        %1307 = vmatpush1.msra.mxu0 %v1306
        %v1308 = vand.u32 %v897, 4294901760
        %v1309 = vsub.f32 %v897, %v1308
        %v1310 = vand.u32 %v1309, 4294901760
        %v1311 = vsub.f32 %v1309, %v1310
        %v1312 = vand.u32 %v1311, 4294901760
        %1313 = vmatprep.subr.mxu0 %v1312
        %v1314 = vand.u32 %v896, 4294901760
        %v1315 = vsub.f32 %v896, %v1314
        %v1316 = vand.u32 %v1315, 4294901760
        %v1317 = vsub.f32 %v1315, %v1316
        %v1318 = vand.u32 %v1317, 4294901760
        %1319 = vmatpush1.msra.mxu0 %v1318
        %v1320 = vand.u32 %v900, 4294901760
        %v1321 = vsub.f32 %v900, %v1320
        %v1322 = vand.u32 %v1321, 4294901760
        %v1323 = vsub.f32 %v1321, %v1322
        %v1324 = vand.u32 %v1323, 4294901760
        %1325 = vmatprep.subr.mxu0 %v1324
        %v1326 = vand.u32 %v899, 4294901760
        %v1327 = vsub.f32 %v899, %v1326
        %v1328 = vand.u32 %v1327, 4294901760
        %v1329 = vsub.f32 %v1327, %v1328
        %v1330 = vand.u32 %v1329, 4294901760
        %1331 = vmatpush1.msra.mxu0 %v1330
        %v1332 = vand.u32 %v903, 4294901760
        %v1333 = vsub.f32 %v903, %v1332
        %v1334 = vand.u32 %v1333, 4294901760
        %v1335 = vsub.f32 %v1333, %v1334
        %v1336 = vand.u32 %v1335, 4294901760
        %1337 = vmatprep.subr.mxu0 %v1336
        %v1338 = vand.u32 %v902, 4294901760
        %v1339 = vsub.f32 %v902, %v1338
        %v1340 = vand.u32 %v1339, 4294901760
        %v1341 = vsub.f32 %v1339, %v1340
        %v1342 = vand.u32 %v1341, 4294901760
        %1343 = vmatpush1.msra.mxu0 %v1342
        %v1344 = vand.u32 %v906, 4294901760
        %v1345 = vsub.f32 %v906, %v1344
        %v1346 = vand.u32 %v1345, 4294901760
        %v1347 = vsub.f32 %v1345, %v1346
        %v1348 = vand.u32 %v1347, 4294901760
        %1349 = vmatprep.subr.mxu0 %v1348
        %v1350 = vand.u32 %v905, 4294901760
        %v1351 = vsub.f32 %v905, %v1350
        %v1352 = vand.u32 %v1351, 4294901760
        %v1353 = vsub.f32 %v1351, %v1352
        %v1354 = vand.u32 %v1353, 4294901760
        %1355 = vmatpush1.msra.mxu0 %v1354
        %v1356 = vand.u32 %v909, 4294901760
        %v1357 = vsub.f32 %v909, %v1356
        %v1358 = vand.u32 %v1357, 4294901760
        %v1359 = vsub.f32 %v1357, %v1358
        %v1360 = vand.u32 %v1359, 4294901760
        %1361 = vmatprep.subr.mxu0 %v1360
        %v1362 = vand.u32 %v908, 4294901760
        %v1363 = vsub.f32 %v908, %v1362
        %v1364 = vand.u32 %v1363, 4294901760
        %v1365 = vsub.f32 %v1363, %v1364
        %v1366 = vand.u32 %v1365, 4294901760
        %1367 = vmatpush1.msra.mxu0 %v1366
        %v1368 = vand.u32 %v912, 4294901760
        %v1369 = vsub.f32 %v912, %v1368
        %v1370 = vand.u32 %v1369, 4294901760
        %v1371 = vsub.f32 %v1369, %v1370
        %v1372 = vand.u32 %v1371, 4294901760
        %1373 = vmatprep.subr.mxu0 %v1372
        %v1374 = vand.u32 %v911, 4294901760
        %v1375 = vsub.f32 %v911, %v1374
        %v1376 = vand.u32 %v1375, 4294901760
        %v1377 = vsub.f32 %v1375, %v1376
        %v1378 = vand.u32 %v1377, 4294901760
        %1379 = vmatpush1.msra.mxu0 %v1378
        %v1380 = vand.u32 %v915, 4294901760
        %v1381 = vsub.f32 %v915, %v1380
        %v1382 = vand.u32 %v1381, 4294901760
        %v1383 = vsub.f32 %v1381, %v1382
        %v1384 = vand.u32 %v1383, 4294901760
        %1385 = vmatprep.subr.mxu0 %v1384
        %v1386 = vand.u32 %v914, 4294901760
        %v1387 = vsub.f32 %v914, %v1386
        %v1388 = vand.u32 %v1387, 4294901760
        %v1389 = vsub.f32 %v1387, %v1388
        %v1390 = vand.u32 %v1389, 4294901760
        %1391 = vmatpush1.msra.mxu0 %v1390
        %v1392 = vand.u32 %v918, 4294901760
        %v1393 = vsub.f32 %v918, %v1392
        %v1394 = vand.u32 %v1393, 4294901760
        %v1395 = vsub.f32 %v1393, %v1394
        %v1396 = vand.u32 %v1395, 4294901760
        %1397 = vmatprep.subr.mxu0 %v1396
        %v1398 = vand.u32 %v917, 4294901760
        %v1399 = vsub.f32 %v917, %v1398
        %v1400 = vand.u32 %v1399, 4294901760
        %v1401 = vsub.f32 %v1399, %v1400
        %v1402 = vand.u32 %v1401, 4294901760
        %1403 = vmatpush1.msra.mxu0 %v1402
        %v1404 = vand.u32 %v921, 4294901760
        %v1405 = vsub.f32 %v921, %v1404
        %v1406 = vand.u32 %v1405, 4294901760
        %v1407 = vsub.f32 %v1405, %v1406
        %v1408 = vand.u32 %v1407, 4294901760
        %1409 = vmatprep.subr.mxu0 %v1408
        %v1410 = vand.u32 %v920, 4294901760
        %v1411 = vsub.f32 %v920, %v1410
        %v1412 = vand.u32 %v1411, 4294901760
        %v1413 = vsub.f32 %v1411, %v1412
        %v1414 = vand.u32 %v1413, 4294901760
        %1415 = vmatpush1.msra.mxu0 %v1414
        %v1416 = vand.u32 %v924, 4294901760
        %v1417 = vsub.f32 %v924, %v1416
        %v1418 = vand.u32 %v1417, 4294901760
        %v1419 = vsub.f32 %v1417, %v1418
        %v1420 = vand.u32 %v1419, 4294901760
        %1421 = vmatprep.subr.mxu0 %v1420
        %v1422 = vand.u32 %v923, 4294901760
        %v1423 = vsub.f32 %v923, %v1422
        %v1424 = vand.u32 %v1423, 4294901760
        %v1425 = vsub.f32 %v1423, %v1424
        %v1426 = vand.u32 %v1425, 4294901760
        %1427 = vmatpush1.msra.mxu0 %v1426
        %v1428 = vand.u32 %v927, 4294901760
        %v1429 = vsub.f32 %v927, %v1428
        %v1430 = vand.u32 %v1429, 4294901760
        %v1431 = vsub.f32 %v1429, %v1430
        %v1432 = vand.u32 %v1431, 4294901760
        %1433 = vmatprep.subr.mxu0 %v1432
        %v1434 = vand.u32 %v926, 4294901760
        %v1435 = vsub.f32 %v926, %v1434
        %v1436 = vand.u32 %v1435, 4294901760
        %v1437 = vsub.f32 %v1435, %v1436
        %v1438 = vand.u32 %v1437, 4294901760
        %1439 = vmatpush1.msra.mxu0 %v1438
        %v1440 = vand.u32 %v930, 4294901760
        %v1441 = vsub.f32 %v930, %v1440
        %v1442 = vand.u32 %v1441, 4294901760
        %v1443 = vsub.f32 %v1441, %v1442
        %v1444 = vand.u32 %v1443, 4294901760
        %1445 = vmatprep.subr.mxu0 %v1444
        %v1446 = vand.u32 %v929, 4294901760
        %v1447 = vsub.f32 %v929, %v1446
        %v1448 = vand.u32 %v1447, 4294901760
        %v1449 = vsub.f32 %v1447, %v1448
        %v1450 = vand.u32 %v1449, 4294901760
        %1451 = vmatpush1.msra.mxu0 %v1450
        %v1452 = vand.u32 %v933, 4294901760
        %v1453 = vsub.f32 %v933, %v1452
        %v1454 = vand.u32 %v1453, 4294901760
        %v1455 = vsub.f32 %v1453, %v1454
        %v1456 = vand.u32 %v1455, 4294901760
        %1457 = vmatprep.subr.mxu0 %v1456
        %v1458 = vand.u32 %v932, 4294901760
        %v1459 = vsub.f32 %v932, %v1458
        %v1460 = vand.u32 %v1459, 4294901760
        %v1461 = vsub.f32 %v1459, %v1460
        %v1462 = vand.u32 %v1461, 4294901760
        %1463 = vmatpush1.msra.mxu0 %v1462
        %v1464 = vand.u32 %v838, 4294901760
        %1465 = vmatprep.mubr.f32.mxu0 %v1464
        %v1466 = vand.u32 %v837, 4294901760
        %1467 = vmatmul.mubr.f32.gmra.mrb[0].mxu0 %v1466
        %v1468 = vpop.f32.mrb[0].mxu0
        %v1469 = vadd.f32 %v1076, %v1468
        %v1470 = vpop.f32.mrb[0].mxu0
        %v1471 = vadd.f32 %v1078, %v1470
        %1472 = vdwg.mxu0
        %v1473 = vand.u32 %v840, 4294901760
        %v1474 = vsub.f32 %v840, %v1473
        %1475 = vmatprep.subr.mxu0 %v1474
        %v1476 = vand.u32 %v839, 4294901760
        %v1477 = vsub.f32 %v839, %v1476
        %1478 = vmatpush1.msra.mxu0 %v1477
        %v1479 = vand.u32 %v843, 4294901760
        %v1480 = vsub.f32 %v843, %v1479
        %1481 = vmatprep.subr.mxu0 %v1480
        %v1482 = vand.u32 %v842, 4294901760
        %v1483 = vsub.f32 %v842, %v1482
        %1484 = vmatpush1.msra.mxu0 %v1483
        %v1485 = vand.u32 %v846, 4294901760
        %v1486 = vsub.f32 %v846, %v1485
        %1487 = vmatprep.subr.mxu0 %v1486
        %v1488 = vand.u32 %v845, 4294901760
        %v1489 = vsub.f32 %v845, %v1488
        %1490 = vmatpush1.msra.mxu0 %v1489
        %v1491 = vand.u32 %v849, 4294901760
        %v1492 = vsub.f32 %v849, %v1491
        %1493 = vmatprep.subr.mxu0 %v1492
        %v1494 = vand.u32 %v848, 4294901760
        %v1495 = vsub.f32 %v848, %v1494
        %1496 = vmatpush1.msra.mxu0 %v1495
        %v1497 = vand.u32 %v852, 4294901760
        %v1498 = vsub.f32 %v852, %v1497
        %1499 = vmatprep.subr.mxu0 %v1498
        %v1500 = vand.u32 %v851, 4294901760
        %v1501 = vsub.f32 %v851, %v1500
        %1502 = vmatpush1.msra.mxu0 %v1501
        %v1503 = vand.u32 %v855, 4294901760
        %v1504 = vsub.f32 %v855, %v1503
        %1505 = vmatprep.subr.mxu0 %v1504
        %v1506 = vand.u32 %v854, 4294901760
        %v1507 = vsub.f32 %v854, %v1506
        %1508 = vmatpush1.msra.mxu0 %v1507
        %v1509 = vand.u32 %v858, 4294901760
        %v1510 = vsub.f32 %v858, %v1509
        %1511 = vmatprep.subr.mxu0 %v1510
        %v1512 = vand.u32 %v857, 4294901760
        %v1513 = vsub.f32 %v857, %v1512
        %1514 = vmatpush1.msra.mxu0 %v1513
        %v1515 = vand.u32 %v861, 4294901760
        %v1516 = vsub.f32 %v861, %v1515
        %1517 = vmatprep.subr.mxu0 %v1516
        %v1518 = vand.u32 %v860, 4294901760
        %v1519 = vsub.f32 %v860, %v1518
        %1520 = vmatpush1.msra.mxu0 %v1519
        %v1521 = vand.u32 %v864, 4294901760
        %v1522 = vsub.f32 %v864, %v1521
        %1523 = vmatprep.subr.mxu0 %v1522
        %v1524 = vand.u32 %v863, 4294901760
        %v1525 = vsub.f32 %v863, %v1524
        %1526 = vmatpush1.msra.mxu0 %v1525
        %v1527 = vand.u32 %v867, 4294901760
        %v1528 = vsub.f32 %v867, %v1527
        %1529 = vmatprep.subr.mxu0 %v1528
        %v1530 = vand.u32 %v866, 4294901760
        %v1531 = vsub.f32 %v866, %v1530
        %1532 = vmatpush1.msra.mxu0 %v1531
        %v1533 = vand.u32 %v870, 4294901760
        %v1534 = vsub.f32 %v870, %v1533
        %1535 = vmatprep.subr.mxu0 %v1534
        %v1536 = vand.u32 %v869, 4294901760
        %v1537 = vsub.f32 %v869, %v1536
        %1538 = vmatpush1.msra.mxu0 %v1537
        %v1539 = vand.u32 %v873, 4294901760
        %v1540 = vsub.f32 %v873, %v1539
        %1541 = vmatprep.subr.mxu0 %v1540
        %v1542 = vand.u32 %v872, 4294901760
        %v1543 = vsub.f32 %v872, %v1542
        %1544 = vmatpush1.msra.mxu0 %v1543
        %v1545 = vand.u32 %v876, 4294901760
        %v1546 = vsub.f32 %v876, %v1545
        %1547 = vmatprep.subr.mxu0 %v1546
        %v1548 = vand.u32 %v875, 4294901760
        %v1549 = vsub.f32 %v875, %v1548
        %1550 = vmatpush1.msra.mxu0 %v1549
        %v1551 = vand.u32 %v879, 4294901760
        %v1552 = vsub.f32 %v879, %v1551
        %1553 = vmatprep.subr.mxu0 %v1552
        %v1554 = vand.u32 %v878, 4294901760
        %v1555 = vsub.f32 %v878, %v1554
        %1556 = vmatpush1.msra.mxu0 %v1555
        %v1557 = vand.u32 %v882, 4294901760
        %v1558 = vsub.f32 %v882, %v1557
        %1559 = vmatprep.subr.mxu0 %v1558
        %v1560 = vand.u32 %v881, 4294901760
        %v1561 = vsub.f32 %v881, %v1560
        %1562 = vmatpush1.msra.mxu0 %v1561
        %v1563 = vand.u32 %v885, 4294901760
        %v1564 = vsub.f32 %v885, %v1563
        %1565 = vmatprep.subr.mxu0 %v1564
        %v1566 = vand.u32 %v884, 4294901760
        %v1567 = vsub.f32 %v884, %v1566
        %1568 = vmatpush1.msra.mxu0 %v1567
        %v1569 = vand.u32 %v888, 4294901760
        %v1570 = vsub.f32 %v888, %v1569
        %1571 = vmatprep.subr.mxu0 %v1570
        %v1572 = vand.u32 %v887, 4294901760
        %v1573 = vsub.f32 %v887, %v1572
        %1574 = vmatpush1.msra.mxu0 %v1573
        %v1575 = vand.u32 %v891, 4294901760
        %v1576 = vsub.f32 %v891, %v1575
        %1577 = vmatprep.subr.mxu0 %v1576
        %v1578 = vand.u32 %v890, 4294901760
        %v1579 = vsub.f32 %v890, %v1578
        %1580 = vmatpush1.msra.mxu0 %v1579
        %v1581 = vand.u32 %v894, 4294901760
        %v1582 = vsub.f32 %v894, %v1581
        %1583 = vmatprep.subr.mxu0 %v1582
        %v1584 = vand.u32 %v893, 4294901760
        %v1585 = vsub.f32 %v893, %v1584
        %1586 = vmatpush1.msra.mxu0 %v1585
        %v1587 = vand.u32 %v897, 4294901760
        %v1588 = vsub.f32 %v897, %v1587
        %1589 = vmatprep.subr.mxu0 %v1588
        %v1590 = vand.u32 %v896, 4294901760
        %v1591 = vsub.f32 %v896, %v1590
        %1592 = vmatpush1.msra.mxu0 %v1591
        %v1593 = vand.u32 %v900, 4294901760
        %v1594 = vsub.f32 %v900, %v1593
        %1595 = vmatprep.subr.mxu0 %v1594
        %v1596 = vand.u32 %v899, 4294901760
        %v1597 = vsub.f32 %v899, %v1596
        %1598 = vmatpush1.msra.mxu0 %v1597
        %v1599 = vand.u32 %v903, 4294901760
        %v1600 = vsub.f32 %v903, %v1599
        %1601 = vmatprep.subr.mxu0 %v1600
        %v1602 = vand.u32 %v902, 4294901760
        %v1603 = vsub.f32 %v902, %v1602
        %1604 = vmatpush1.msra.mxu0 %v1603
        %v1605 = vand.u32 %v906, 4294901760
        %v1606 = vsub.f32 %v906, %v1605
        %1607 = vmatprep.subr.mxu0 %v1606
        %v1608 = vand.u32 %v905, 4294901760
        %v1609 = vsub.f32 %v905, %v1608
        %1610 = vmatpush1.msra.mxu0 %v1609
        %v1611 = vand.u32 %v909, 4294901760
        %v1612 = vsub.f32 %v909, %v1611
        %1613 = vmatprep.subr.mxu0 %v1612
        %v1614 = vand.u32 %v908, 4294901760
        %v1615 = vsub.f32 %v908, %v1614
        %1616 = vmatpush1.msra.mxu0 %v1615
        %v1617 = vand.u32 %v912, 4294901760
        %v1618 = vsub.f32 %v912, %v1617
        %1619 = vmatprep.subr.mxu0 %v1618
        %v1620 = vand.u32 %v911, 4294901760
        %v1621 = vsub.f32 %v911, %v1620
        %1622 = vmatpush1.msra.mxu0 %v1621
        %v1623 = vand.u32 %v915, 4294901760
        %v1624 = vsub.f32 %v915, %v1623
        %1625 = vmatprep.subr.mxu0 %v1624
        %v1626 = vand.u32 %v914, 4294901760
        %v1627 = vsub.f32 %v914, %v1626
        %1628 = vmatpush1.msra.mxu0 %v1627
        %v1629 = vand.u32 %v918, 4294901760
        %v1630 = vsub.f32 %v918, %v1629
        %1631 = vmatprep.subr.mxu0 %v1630
        %v1632 = vand.u32 %v917, 4294901760
        %v1633 = vsub.f32 %v917, %v1632
        %1634 = vmatpush1.msra.mxu0 %v1633
        %v1635 = vand.u32 %v921, 4294901760
        %v1636 = vsub.f32 %v921, %v1635
        %1637 = vmatprep.subr.mxu0 %v1636
        %v1638 = vand.u32 %v920, 4294901760
        %v1639 = vsub.f32 %v920, %v1638
        %1640 = vmatpush1.msra.mxu0 %v1639
        %v1641 = vand.u32 %v924, 4294901760
        %v1642 = vsub.f32 %v924, %v1641
        %1643 = vmatprep.subr.mxu0 %v1642
        %v1644 = vand.u32 %v923, 4294901760
        %v1645 = vsub.f32 %v923, %v1644
        %1646 = vmatpush1.msra.mxu0 %v1645
        %v1647 = vand.u32 %v927, 4294901760
        %v1648 = vsub.f32 %v927, %v1647
        %1649 = vmatprep.subr.mxu0 %v1648
        %v1650 = vand.u32 %v926, 4294901760
        %v1651 = vsub.f32 %v926, %v1650
        %1652 = vmatpush1.msra.mxu0 %v1651
        %v1653 = vand.u32 %v930, 4294901760
        %v1654 = vsub.f32 %v930, %v1653
        %1655 = vmatprep.subr.mxu0 %v1654
        %v1656 = vand.u32 %v929, 4294901760
        %v1657 = vsub.f32 %v929, %v1656
        %1658 = vmatpush1.msra.mxu0 %v1657
        %v1659 = vand.u32 %v933, 4294901760
        %v1660 = vsub.f32 %v933, %v1659
        %1661 = vmatprep.subr.mxu0 %v1660
        %v1662 = vand.u32 %v932, 4294901760
        %v1663 = vsub.f32 %v932, %v1662
        %1664 = vmatpush1.msra.mxu0 %v1663
        %v1665 = vand.u32 %v838, 4294901760
        %v1666 = vsub.f32 %v838, %v1665
        %1667 = vmatprep.mubr.f32.mxu0 %v1666
        %v1668 = vand.u32 %v837, 4294901760
        %v1669 = vsub.f32 %v837, %v1668
        %1670 = vmatmul.mubr.f32.gmra.mrb[0].mxu0 %v1669
        %v1671 = vpop.f32.mrb[0].mxu0
        %v1672 = vadd.f32 %v1469, %v1671
        %v1673 = vpop.f32.mrb[0].mxu0
        %v1674 = vadd.f32 %v1471, %v1673
        %1675 = vdwg.mxu0
        %v1676 = vand.u32 %v840, 4294901760
        %1677 = vmatprep.subr.mxu0 %v1676
        %v1678 = vand.u32 %v839, 4294901760
        %1679 = vmatpush1.msra.mxu0 %v1678
        %v1680 = vand.u32 %v843, 4294901760
        %1681 = vmatprep.subr.mxu0 %v1680
        %v1682 = vand.u32 %v842, 4294901760
        %1683 = vmatpush1.msra.mxu0 %v1682
        %v1684 = vand.u32 %v846, 4294901760
        %1685 = vmatprep.subr.mxu0 %v1684
        %v1686 = vand.u32 %v845, 4294901760
        %1687 = vmatpush1.msra.mxu0 %v1686
        %v1688 = vand.u32 %v849, 4294901760
        %1689 = vmatprep.subr.mxu0 %v1688
        %v1690 = vand.u32 %v848, 4294901760
        %1691 = vmatpush1.msra.mxu0 %v1690
        %v1692 = vand.u32 %v852, 4294901760
        %1693 = vmatprep.subr.mxu0 %v1692
        %v1694 = vand.u32 %v851, 4294901760
        %1695 = vmatpush1.msra.mxu0 %v1694
        %v1696 = vand.u32 %v855, 4294901760
        %1697 = vmatprep.subr.mxu0 %v1696
        %v1698 = vand.u32 %v854, 4294901760
        %1699 = vmatpush1.msra.mxu0 %v1698
        %v1700 = vand.u32 %v858, 4294901760
        %1701 = vmatprep.subr.mxu0 %v1700
        %v1702 = vand.u32 %v857, 4294901760
        %1703 = vmatpush1.msra.mxu0 %v1702
        %v1704 = vand.u32 %v861, 4294901760
        %1705 = vmatprep.subr.mxu0 %v1704
        %v1706 = vand.u32 %v860, 4294901760
        %1707 = vmatpush1.msra.mxu0 %v1706
        %v1708 = vand.u32 %v864, 4294901760
        %1709 = vmatprep.subr.mxu0 %v1708
        %v1710 = vand.u32 %v863, 4294901760
        %1711 = vmatpush1.msra.mxu0 %v1710
        %v1712 = vand.u32 %v867, 4294901760
        %1713 = vmatprep.subr.mxu0 %v1712
        %v1714 = vand.u32 %v866, 4294901760
        %1715 = vmatpush1.msra.mxu0 %v1714
        %v1716 = vand.u32 %v870, 4294901760
        %1717 = vmatprep.subr.mxu0 %v1716
        %v1718 = vand.u32 %v869, 4294901760
        %1719 = vmatpush1.msra.mxu0 %v1718
        %v1720 = vand.u32 %v873, 4294901760
        %1721 = vmatprep.subr.mxu0 %v1720
        %v1722 = vand.u32 %v872, 4294901760
        %1723 = vmatpush1.msra.mxu0 %v1722
        %v1724 = vand.u32 %v876, 4294901760
        %1725 = vmatprep.subr.mxu0 %v1724
        %v1726 = vand.u32 %v875, 4294901760
        %1727 = vmatpush1.msra.mxu0 %v1726
        %v1728 = vand.u32 %v879, 4294901760
        %1729 = vmatprep.subr.mxu0 %v1728
        %v1730 = vand.u32 %v878, 4294901760
        %1731 = vmatpush1.msra.mxu0 %v1730
        %v1732 = vand.u32 %v882, 4294901760
        %1733 = vmatprep.subr.mxu0 %v1732
        %v1734 = vand.u32 %v881, 4294901760
        %1735 = vmatpush1.msra.mxu0 %v1734
        %v1736 = vand.u32 %v885, 4294901760
        %1737 = vmatprep.subr.mxu0 %v1736
        %v1738 = vand.u32 %v884, 4294901760
        %1739 = vmatpush1.msra.mxu0 %v1738
        %v1740 = vand.u32 %v888, 4294901760
        %1741 = vmatprep.subr.mxu0 %v1740
        %v1742 = vand.u32 %v887, 4294901760
        %1743 = vmatpush1.msra.mxu0 %v1742
        %v1744 = vand.u32 %v891, 4294901760
        %1745 = vmatprep.subr.mxu0 %v1744
        %v1746 = vand.u32 %v890, 4294901760
        %1747 = vmatpush1.msra.mxu0 %v1746
        %v1748 = vand.u32 %v894, 4294901760
        %1749 = vmatprep.subr.mxu0 %v1748
        %v1750 = vand.u32 %v893, 4294901760
        %1751 = vmatpush1.msra.mxu0 %v1750
        %v1752 = vand.u32 %v897, 4294901760
        %1753 = vmatprep.subr.mxu0 %v1752
        %v1754 = vand.u32 %v896, 4294901760
        %1755 = vmatpush1.msra.mxu0 %v1754
        %v1756 = vand.u32 %v900, 4294901760
        %1757 = vmatprep.subr.mxu0 %v1756
        %v1758 = vand.u32 %v899, 4294901760
        %1759 = vmatpush1.msra.mxu0 %v1758
        %v1760 = vand.u32 %v903, 4294901760
        %1761 = vmatprep.subr.mxu0 %v1760
        %v1762 = vand.u32 %v902, 4294901760
        %1763 = vmatpush1.msra.mxu0 %v1762
        %v1764 = vand.u32 %v906, 4294901760
        %1765 = vmatprep.subr.mxu0 %v1764
        %v1766 = vand.u32 %v905, 4294901760
        %1767 = vmatpush1.msra.mxu0 %v1766
        %v1768 = vand.u32 %v909, 4294901760
        %1769 = vmatprep.subr.mxu0 %v1768
        %v1770 = vand.u32 %v908, 4294901760
        %1771 = vmatpush1.msra.mxu0 %v1770
        %v1772 = vand.u32 %v912, 4294901760
        %1773 = vmatprep.subr.mxu0 %v1772
        %v1774 = vand.u32 %v911, 4294901760
        %1775 = vmatpush1.msra.mxu0 %v1774
        %v1776 = vand.u32 %v915, 4294901760
        %1777 = vmatprep.subr.mxu0 %v1776
        %v1778 = vand.u32 %v914, 4294901760
        %1779 = vmatpush1.msra.mxu0 %v1778
        %v1780 = vand.u32 %v918, 4294901760
        %1781 = vmatprep.subr.mxu0 %v1780
        %v1782 = vand.u32 %v917, 4294901760
        %1783 = vmatpush1.msra.mxu0 %v1782
        %v1784 = vand.u32 %v921, 4294901760
        %1785 = vmatprep.subr.mxu0 %v1784
        %v1786 = vand.u32 %v920, 4294901760
        %1787 = vmatpush1.msra.mxu0 %v1786
        %v1788 = vand.u32 %v924, 4294901760
        %1789 = vmatprep.subr.mxu0 %v1788
        %v1790 = vand.u32 %v923, 4294901760
        %1791 = vmatpush1.msra.mxu0 %v1790
        %v1792 = vand.u32 %v927, 4294901760
        %1793 = vmatprep.subr.mxu0 %v1792
        %v1794 = vand.u32 %v926, 4294901760
        %1795 = vmatpush1.msra.mxu0 %v1794
        %v1796 = vand.u32 %v930, 4294901760
        %1797 = vmatprep.subr.mxu0 %v1796
        %v1798 = vand.u32 %v929, 4294901760
        %1799 = vmatpush1.msra.mxu0 %v1798
        %v1800 = vand.u32 %v933, 4294901760
        %1801 = vmatprep.subr.mxu0 %v1800
        %v1802 = vand.u32 %v932, 4294901760
        %1803 = vmatpush1.msra.mxu0 %v1802
        %v1804 = vand.u32 %v838, 4294901760
        %v1805 = vsub.f32 %v838, %v1804
        %v1806 = vand.u32 %v1805, 4294901760
        %1807 = vmatprep.mubr.f32.mxu0 %v1806
        %v1808 = vand.u32 %v837, 4294901760
        %v1809 = vsub.f32 %v837, %v1808
        %v1810 = vand.u32 %v1809, 4294901760
        %1811 = vmatmul.mubr.f32.gmra.mrb[0].mxu0 %v1810
        %v1812 = vpop.f32.mrb[0].mxu0
        %v1813 = vadd.f32 %v1672, %v1812
        %v1814 = vpop.f32.mrb[0].mxu0
        %v1815 = vadd.f32 %v1674, %v1814
        %1816 = vdwg.mxu0
        %v1817 = vand.u32 %v840, 4294901760
        %v1818 = vsub.f32 %v840, %v1817
        %v1819 = vand.u32 %v1818, 4294901760
        %1820 = vmatprep.subr.mxu0 %v1819
        %v1821 = vand.u32 %v839, 4294901760
        %v1822 = vsub.f32 %v839, %v1821
        %v1823 = vand.u32 %v1822, 4294901760
        %1824 = vmatpush1.msra.mxu0 %v1823
        %v1825 = vand.u32 %v843, 4294901760
        %v1826 = vsub.f32 %v843, %v1825
        %v1827 = vand.u32 %v1826, 4294901760
        %1828 = vmatprep.subr.mxu0 %v1827
        %v1829 = vand.u32 %v842, 4294901760
        %v1830 = vsub.f32 %v842, %v1829
        %v1831 = vand.u32 %v1830, 4294901760
        %1832 = vmatpush1.msra.mxu0 %v1831
        %v1833 = vand.u32 %v846, 4294901760
        %v1834 = vsub.f32 %v846, %v1833
        %v1835 = vand.u32 %v1834, 4294901760
        %1836 = vmatprep.subr.mxu0 %v1835
        %v1837 = vand.u32 %v845, 4294901760
        %v1838 = vsub.f32 %v845, %v1837
        %v1839 = vand.u32 %v1838, 4294901760
        %1840 = vmatpush1.msra.mxu0 %v1839
        %v1841 = vand.u32 %v849, 4294901760
        %v1842 = vsub.f32 %v849, %v1841
        %v1843 = vand.u32 %v1842, 4294901760
        %1844 = vmatprep.subr.mxu0 %v1843
        %v1845 = vand.u32 %v848, 4294901760
        %v1846 = vsub.f32 %v848, %v1845
        %v1847 = vand.u32 %v1846, 4294901760
        %1848 = vmatpush1.msra.mxu0 %v1847
        %v1849 = vand.u32 %v852, 4294901760
        %v1850 = vsub.f32 %v852, %v1849
        %v1851 = vand.u32 %v1850, 4294901760
        %1852 = vmatprep.subr.mxu0 %v1851
        %v1853 = vand.u32 %v851, 4294901760
        %v1854 = vsub.f32 %v851, %v1853
        %v1855 = vand.u32 %v1854, 4294901760
        %1856 = vmatpush1.msra.mxu0 %v1855
        %v1857 = vand.u32 %v855, 4294901760
        %v1858 = vsub.f32 %v855, %v1857
        %v1859 = vand.u32 %v1858, 4294901760
        %1860 = vmatprep.subr.mxu0 %v1859
        %v1861 = vand.u32 %v854, 4294901760
        %v1862 = vsub.f32 %v854, %v1861
        %v1863 = vand.u32 %v1862, 4294901760
        %1864 = vmatpush1.msra.mxu0 %v1863
        %v1865 = vand.u32 %v858, 4294901760
        %v1866 = vsub.f32 %v858, %v1865
        %v1867 = vand.u32 %v1866, 4294901760
        %1868 = vmatprep.subr.mxu0 %v1867
        %v1869 = vand.u32 %v857, 4294901760
        %v1870 = vsub.f32 %v857, %v1869
        %v1871 = vand.u32 %v1870, 4294901760
        %1872 = vmatpush1.msra.mxu0 %v1871
        %v1873 = vand.u32 %v861, 4294901760
        %v1874 = vsub.f32 %v861, %v1873
        %v1875 = vand.u32 %v1874, 4294901760
        %1876 = vmatprep.subr.mxu0 %v1875
        %v1877 = vand.u32 %v860, 4294901760
        %v1878 = vsub.f32 %v860, %v1877
        %v1879 = vand.u32 %v1878, 4294901760
        %1880 = vmatpush1.msra.mxu0 %v1879
        %v1881 = vand.u32 %v864, 4294901760
        %v1882 = vsub.f32 %v864, %v1881
        %v1883 = vand.u32 %v1882, 4294901760
        %1884 = vmatprep.subr.mxu0 %v1883
        %v1885 = vand.u32 %v863, 4294901760
        %v1886 = vsub.f32 %v863, %v1885
        %v1887 = vand.u32 %v1886, 4294901760
        %1888 = vmatpush1.msra.mxu0 %v1887
        %v1889 = vand.u32 %v867, 4294901760
        %v1890 = vsub.f32 %v867, %v1889
        %v1891 = vand.u32 %v1890, 4294901760
        %1892 = vmatprep.subr.mxu0 %v1891
        %v1893 = vand.u32 %v866, 4294901760
        %v1894 = vsub.f32 %v866, %v1893
        %v1895 = vand.u32 %v1894, 4294901760
        %1896 = vmatpush1.msra.mxu0 %v1895
        %v1897 = vand.u32 %v870, 4294901760
        %v1898 = vsub.f32 %v870, %v1897
        %v1899 = vand.u32 %v1898, 4294901760
        %1900 = vmatprep.subr.mxu0 %v1899
        %v1901 = vand.u32 %v869, 4294901760
        %v1902 = vsub.f32 %v869, %v1901
        %v1903 = vand.u32 %v1902, 4294901760
        %1904 = vmatpush1.msra.mxu0 %v1903
        %v1905 = vand.u32 %v873, 4294901760
        %v1906 = vsub.f32 %v873, %v1905
        %v1907 = vand.u32 %v1906, 4294901760
        %1908 = vmatprep.subr.mxu0 %v1907
        %v1909 = vand.u32 %v872, 4294901760
        %v1910 = vsub.f32 %v872, %v1909
        %v1911 = vand.u32 %v1910, 4294901760
        %1912 = vmatpush1.msra.mxu0 %v1911
        %v1913 = vand.u32 %v876, 4294901760
        %v1914 = vsub.f32 %v876, %v1913
        %v1915 = vand.u32 %v1914, 4294901760
        %1916 = vmatprep.subr.mxu0 %v1915
        %v1917 = vand.u32 %v875, 4294901760
        %v1918 = vsub.f32 %v875, %v1917
        %v1919 = vand.u32 %v1918, 4294901760
        %1920 = vmatpush1.msra.mxu0 %v1919
        %v1921 = vand.u32 %v879, 4294901760
        %v1922 = vsub.f32 %v879, %v1921
        %v1923 = vand.u32 %v1922, 4294901760
        %1924 = vmatprep.subr.mxu0 %v1923
        %v1925 = vand.u32 %v878, 4294901760
        %v1926 = vsub.f32 %v878, %v1925
        %v1927 = vand.u32 %v1926, 4294901760
        %1928 = vmatpush1.msra.mxu0 %v1927
        %v1929 = vand.u32 %v882, 4294901760
        %v1930 = vsub.f32 %v882, %v1929
        %v1931 = vand.u32 %v1930, 4294901760
        %1932 = vmatprep.subr.mxu0 %v1931
        %v1933 = vand.u32 %v881, 4294901760
        %v1934 = vsub.f32 %v881, %v1933
        %v1935 = vand.u32 %v1934, 4294901760
        %1936 = vmatpush1.msra.mxu0 %v1935
        %v1937 = vand.u32 %v885, 4294901760
        %v1938 = vsub.f32 %v885, %v1937
        %v1939 = vand.u32 %v1938, 4294901760
        %1940 = vmatprep.subr.mxu0 %v1939
        %v1941 = vand.u32 %v884, 4294901760
        %v1942 = vsub.f32 %v884, %v1941
        %v1943 = vand.u32 %v1942, 4294901760
        %1944 = vmatpush1.msra.mxu0 %v1943
        %v1945 = vand.u32 %v888, 4294901760
        %v1946 = vsub.f32 %v888, %v1945
        %v1947 = vand.u32 %v1946, 4294901760
        %1948 = vmatprep.subr.mxu0 %v1947
        %v1949 = vand.u32 %v887, 4294901760
        %v1950 = vsub.f32 %v887, %v1949
        %v1951 = vand.u32 %v1950, 4294901760
        %1952 = vmatpush1.msra.mxu0 %v1951
        %v1953 = vand.u32 %v891, 4294901760
        %v1954 = vsub.f32 %v891, %v1953
        %v1955 = vand.u32 %v1954, 4294901760
        %1956 = vmatprep.subr.mxu0 %v1955
        %v1957 = vand.u32 %v890, 4294901760
        %v1958 = vsub.f32 %v890, %v1957
        %v1959 = vand.u32 %v1958, 4294901760
        %1960 = vmatpush1.msra.mxu0 %v1959
        %v1961 = vand.u32 %v894, 4294901760
        %v1962 = vsub.f32 %v894, %v1961
        %v1963 = vand.u32 %v1962, 4294901760
        %1964 = vmatprep.subr.mxu0 %v1963
        %v1965 = vand.u32 %v893, 4294901760
        %v1966 = vsub.f32 %v893, %v1965
        %v1967 = vand.u32 %v1966, 4294901760
        %1968 = vmatpush1.msra.mxu0 %v1967
        %v1969 = vand.u32 %v897, 4294901760
        %v1970 = vsub.f32 %v897, %v1969
        %v1971 = vand.u32 %v1970, 4294901760
        %1972 = vmatprep.subr.mxu0 %v1971
        %v1973 = vand.u32 %v896, 4294901760
        %v1974 = vsub.f32 %v896, %v1973
        %v1975 = vand.u32 %v1974, 4294901760
        %1976 = vmatpush1.msra.mxu0 %v1975
        %v1977 = vand.u32 %v900, 4294901760
        %v1978 = vsub.f32 %v900, %v1977
        %v1979 = vand.u32 %v1978, 4294901760
        %1980 = vmatprep.subr.mxu0 %v1979
        %v1981 = vand.u32 %v899, 4294901760
        %v1982 = vsub.f32 %v899, %v1981
        %v1983 = vand.u32 %v1982, 4294901760
        %1984 = vmatpush1.msra.mxu0 %v1983
        %v1985 = vand.u32 %v903, 4294901760
        %v1986 = vsub.f32 %v903, %v1985
        %v1987 = vand.u32 %v1986, 4294901760
        %1988 = vmatprep.subr.mxu0 %v1987
        %v1989 = vand.u32 %v902, 4294901760
        %v1990 = vsub.f32 %v902, %v1989
        %v1991 = vand.u32 %v1990, 4294901760
        %1992 = vmatpush1.msra.mxu0 %v1991
        %v1993 = vand.u32 %v906, 4294901760
        %v1994 = vsub.f32 %v906, %v1993
        %v1995 = vand.u32 %v1994, 4294901760
        %1996 = vmatprep.subr.mxu0 %v1995
        %v1997 = vand.u32 %v905, 4294901760
        %v1998 = vsub.f32 %v905, %v1997
        %v1999 = vand.u32 %v1998, 4294901760
        %2000 = vmatpush1.msra.mxu0 %v1999
        %v2001 = vand.u32 %v909, 4294901760
        %v2002 = vsub.f32 %v909, %v2001
        %v2003 = vand.u32 %v2002, 4294901760
        %2004 = vmatprep.subr.mxu0 %v2003
        %v2005 = vand.u32 %v908, 4294901760
        %v2006 = vsub.f32 %v908, %v2005
        %v2007 = vand.u32 %v2006, 4294901760
        %2008 = vmatpush1.msra.mxu0 %v2007
        %v2009 = vand.u32 %v912, 4294901760
        %v2010 = vsub.f32 %v912, %v2009
        %v2011 = vand.u32 %v2010, 4294901760
        %2012 = vmatprep.subr.mxu0 %v2011
        %v2013 = vand.u32 %v911, 4294901760
        %v2014 = vsub.f32 %v911, %v2013
        %v2015 = vand.u32 %v2014, 4294901760
        %2016 = vmatpush1.msra.mxu0 %v2015
        %v2017 = vand.u32 %v915, 4294901760
        %v2018 = vsub.f32 %v915, %v2017
        %v2019 = vand.u32 %v2018, 4294901760
        %2020 = vmatprep.subr.mxu0 %v2019
        %v2021 = vand.u32 %v914, 4294901760
        %v2022 = vsub.f32 %v914, %v2021
        %v2023 = vand.u32 %v2022, 4294901760
        %2024 = vmatpush1.msra.mxu0 %v2023
        %v2025 = vand.u32 %v918, 4294901760
        %v2026 = vsub.f32 %v918, %v2025
        %v2027 = vand.u32 %v2026, 4294901760
        %2028 = vmatprep.subr.mxu0 %v2027
        %v2029 = vand.u32 %v917, 4294901760
        %v2030 = vsub.f32 %v917, %v2029
        %v2031 = vand.u32 %v2030, 4294901760
        %2032 = vmatpush1.msra.mxu0 %v2031
        %v2033 = vand.u32 %v921, 4294901760
        %v2034 = vsub.f32 %v921, %v2033
        %v2035 = vand.u32 %v2034, 4294901760
        %2036 = vmatprep.subr.mxu0 %v2035
        %v2037 = vand.u32 %v920, 4294901760
        %v2038 = vsub.f32 %v920, %v2037
        %v2039 = vand.u32 %v2038, 4294901760
        %2040 = vmatpush1.msra.mxu0 %v2039
        %v2041 = vand.u32 %v924, 4294901760
        %v2042 = vsub.f32 %v924, %v2041
        %v2043 = vand.u32 %v2042, 4294901760
        %2044 = vmatprep.subr.mxu0 %v2043
        %v2045 = vand.u32 %v923, 4294901760
        %v2046 = vsub.f32 %v923, %v2045
        %v2047 = vand.u32 %v2046, 4294901760
        %2048 = vmatpush1.msra.mxu0 %v2047
        %v2049 = vand.u32 %v927, 4294901760
        %v2050 = vsub.f32 %v927, %v2049
        %v2051 = vand.u32 %v2050, 4294901760
        %2052 = vmatprep.subr.mxu0 %v2051
        %v2053 = vand.u32 %v926, 4294901760
        %v2054 = vsub.f32 %v926, %v2053
        %v2055 = vand.u32 %v2054, 4294901760
        %2056 = vmatpush1.msra.mxu0 %v2055
        %v2057 = vand.u32 %v930, 4294901760
        %v2058 = vsub.f32 %v930, %v2057
        %v2059 = vand.u32 %v2058, 4294901760
        %2060 = vmatprep.subr.mxu0 %v2059
        %v2061 = vand.u32 %v929, 4294901760
        %v2062 = vsub.f32 %v929, %v2061
        %v2063 = vand.u32 %v2062, 4294901760
        %2064 = vmatpush1.msra.mxu0 %v2063
        %v2065 = vand.u32 %v933, 4294901760
        %v2066 = vsub.f32 %v933, %v2065
        %v2067 = vand.u32 %v2066, 4294901760
        %2068 = vmatprep.subr.mxu0 %v2067
        %v2069 = vand.u32 %v932, 4294901760
        %v2070 = vsub.f32 %v932, %v2069
        %v2071 = vand.u32 %v2070, 4294901760
        %2072 = vmatpush1.msra.mxu0 %v2071
        %v2073 = vand.u32 %v838, 4294901760
        %2074 = vmatprep.mubr.f32.mxu0 %v2073
        %v2075 = vand.u32 %v837, 4294901760
        %2076 = vmatmul.mubr.f32.gmra.mrb[0].mxu0 %v2075
        %v2077 = vpop.f32.mrb[0].mxu0
        %v2078 = vadd.f32 %v1813, %v2077
        %v2079 = vpop.f32.mrb[0].mxu0
        %v2080 = vadd.f32 %v1815, %v2079
        %2081 = vdwg.mxu0
        %v2082 = vand.u32 %v840, 4294901760
        %2083 = vmatprep.subr.mxu0 %v2082
        %v2084 = vand.u32 %v839, 4294901760
        %2085 = vmatpush1.msra.mxu0 %v2084
        %v2086 = vand.u32 %v843, 4294901760
        %2087 = vmatprep.subr.mxu0 %v2086
        %v2088 = vand.u32 %v842, 4294901760
        %2089 = vmatpush1.msra.mxu0 %v2088
        %v2090 = vand.u32 %v846, 4294901760
        %2091 = vmatprep.subr.mxu0 %v2090
        %v2092 = vand.u32 %v845, 4294901760
        %2093 = vmatpush1.msra.mxu0 %v2092
        %v2094 = vand.u32 %v849, 4294901760
        %2095 = vmatprep.subr.mxu0 %v2094
        %v2096 = vand.u32 %v848, 4294901760
        %2097 = vmatpush1.msra.mxu0 %v2096
        %v2098 = vand.u32 %v852, 4294901760
        %2099 = vmatprep.subr.mxu0 %v2098
        %v2100 = vand.u32 %v851, 4294901760
        %2101 = vmatpush1.msra.mxu0 %v2100
        %v2102 = vand.u32 %v855, 4294901760
        %2103 = vmatprep.subr.mxu0 %v2102
        %v2104 = vand.u32 %v854, 4294901760
        %2105 = vmatpush1.msra.mxu0 %v2104
        %v2106 = vand.u32 %v858, 4294901760
        %2107 = vmatprep.subr.mxu0 %v2106
        %v2108 = vand.u32 %v857, 4294901760
        %2109 = vmatpush1.msra.mxu0 %v2108
        %v2110 = vand.u32 %v861, 4294901760
        %2111 = vmatprep.subr.mxu0 %v2110
        %v2112 = vand.u32 %v860, 4294901760
        %2113 = vmatpush1.msra.mxu0 %v2112
        %v2114 = vand.u32 %v864, 4294901760
        %2115 = vmatprep.subr.mxu0 %v2114
        %v2116 = vand.u32 %v863, 4294901760
        %2117 = vmatpush1.msra.mxu0 %v2116
        %v2118 = vand.u32 %v867, 4294901760
        %2119 = vmatprep.subr.mxu0 %v2118
        %v2120 = vand.u32 %v866, 4294901760
        %2121 = vmatpush1.msra.mxu0 %v2120
        %v2122 = vand.u32 %v870, 4294901760
        %2123 = vmatprep.subr.mxu0 %v2122
        %v2124 = vand.u32 %v869, 4294901760
        %2125 = vmatpush1.msra.mxu0 %v2124
        %v2126 = vand.u32 %v873, 4294901760
        %2127 = vmatprep.subr.mxu0 %v2126
        %v2128 = vand.u32 %v872, 4294901760
        %2129 = vmatpush1.msra.mxu0 %v2128
        %v2130 = vand.u32 %v876, 4294901760
        %2131 = vmatprep.subr.mxu0 %v2130
        %v2132 = vand.u32 %v875, 4294901760
        %2133 = vmatpush1.msra.mxu0 %v2132
        %v2134 = vand.u32 %v879, 4294901760
        %2135 = vmatprep.subr.mxu0 %v2134
        %v2136 = vand.u32 %v878, 4294901760
        %2137 = vmatpush1.msra.mxu0 %v2136
        %v2138 = vand.u32 %v882, 4294901760
        %2139 = vmatprep.subr.mxu0 %v2138
        %v2140 = vand.u32 %v881, 4294901760
        %2141 = vmatpush1.msra.mxu0 %v2140
        %v2142 = vand.u32 %v885, 4294901760
        %2143 = vmatprep.subr.mxu0 %v2142
        %v2144 = vand.u32 %v884, 4294901760
        %2145 = vmatpush1.msra.mxu0 %v2144
        %v2146 = vand.u32 %v888, 4294901760
        %2147 = vmatprep.subr.mxu0 %v2146
        %v2148 = vand.u32 %v887, 4294901760
        %2149 = vmatpush1.msra.mxu0 %v2148
        %v2150 = vand.u32 %v891, 4294901760
        %2151 = vmatprep.subr.mxu0 %v2150
        %v2152 = vand.u32 %v890, 4294901760
        %2153 = vmatpush1.msra.mxu0 %v2152
        %v2154 = vand.u32 %v894, 4294901760
        %2155 = vmatprep.subr.mxu0 %v2154
        %v2156 = vand.u32 %v893, 4294901760
        %2157 = vmatpush1.msra.mxu0 %v2156
        %v2158 = vand.u32 %v897, 4294901760
        %2159 = vmatprep.subr.mxu0 %v2158
        %v2160 = vand.u32 %v896, 4294901760
        %2161 = vmatpush1.msra.mxu0 %v2160
        %v2162 = vand.u32 %v900, 4294901760
        %2163 = vmatprep.subr.mxu0 %v2162
        %v2164 = vand.u32 %v899, 4294901760
        %2165 = vmatpush1.msra.mxu0 %v2164
        %v2166 = vand.u32 %v903, 4294901760
        %2167 = vmatprep.subr.mxu0 %v2166
        %v2168 = vand.u32 %v902, 4294901760
        %2169 = vmatpush1.msra.mxu0 %v2168
        %v2170 = vand.u32 %v906, 4294901760
        %2171 = vmatprep.subr.mxu0 %v2170
        %v2172 = vand.u32 %v905, 4294901760
        %2173 = vmatpush1.msra.mxu0 %v2172
        %v2174 = vand.u32 %v909, 4294901760
        %2175 = vmatprep.subr.mxu0 %v2174
        %v2176 = vand.u32 %v908, 4294901760
        %2177 = vmatpush1.msra.mxu0 %v2176
        %v2178 = vand.u32 %v912, 4294901760
        %2179 = vmatprep.subr.mxu0 %v2178
        %v2180 = vand.u32 %v911, 4294901760
        %2181 = vmatpush1.msra.mxu0 %v2180
        %v2182 = vand.u32 %v915, 4294901760
        %2183 = vmatprep.subr.mxu0 %v2182
        %v2184 = vand.u32 %v914, 4294901760
        %2185 = vmatpush1.msra.mxu0 %v2184
        %v2186 = vand.u32 %v918, 4294901760
        %2187 = vmatprep.subr.mxu0 %v2186
        %v2188 = vand.u32 %v917, 4294901760
        %2189 = vmatpush1.msra.mxu0 %v2188
        %v2190 = vand.u32 %v921, 4294901760
        %2191 = vmatprep.subr.mxu0 %v2190
        %v2192 = vand.u32 %v920, 4294901760
        %2193 = vmatpush1.msra.mxu0 %v2192
        %v2194 = vand.u32 %v924, 4294901760
        %2195 = vmatprep.subr.mxu0 %v2194
        %v2196 = vand.u32 %v923, 4294901760
        %2197 = vmatpush1.msra.mxu0 %v2196
        %v2198 = vand.u32 %v927, 4294901760
        %2199 = vmatprep.subr.mxu0 %v2198
        %v2200 = vand.u32 %v926, 4294901760
        %2201 = vmatpush1.msra.mxu0 %v2200
        %v2202 = vand.u32 %v930, 4294901760
        %2203 = vmatprep.subr.mxu0 %v2202
        %v2204 = vand.u32 %v929, 4294901760
        %2205 = vmatpush1.msra.mxu0 %v2204
        %v2206 = vand.u32 %v933, 4294901760
        %2207 = vmatprep.subr.mxu0 %v2206
        %v2208 = vand.u32 %v932, 4294901760
        %2209 = vmatpush1.msra.mxu0 %v2208
        %v2210 = vand.u32 %v838, 4294901760
        %2211 = vmatprep.mubr.f32.mxu0 %v2210
        %v2212 = vand.u32 %v837, 4294901760
        %2213 = vmatmul.mubr.f32.gmra.mrb[0].mxu0 %v2212
        %v2214 = vpop.f32.mrb[0].mxu0
        %v2215 = vadd.f32 %v2078, %v2214
        %v2216 = vpop.f32.mrb[0].mxu0
        %v2217 = vadd.f32 %v2080, %v2216
        %2218 = vdwg.mxu0
        %2219 = vmatprep.subr.mxu0 0.0
        %v2220 = vand.u32 %v841, 4294901760
        %2221 = vmatpush1.msra.mxu0 %v2220
        %2222 = vmatprep.subr.mxu0 0.0
        %v2223 = vand.u32 %v844, 4294901760
        %2224 = vmatpush1.msra.mxu0 %v2223
        %2225 = vmatprep.subr.mxu0 0.0
        %v2226 = vand.u32 %v847, 4294901760
        %2227 = vmatpush1.msra.mxu0 %v2226
        %2228 = vmatprep.subr.mxu0 0.0
        %v2229 = vand.u32 %v850, 4294901760
        %2230 = vmatpush1.msra.mxu0 %v2229
        %2231 = vmatprep.subr.mxu0 0.0
        %v2232 = vand.u32 %v853, 4294901760
        %2233 = vmatpush1.msra.mxu0 %v2232
        %2234 = vmatprep.subr.mxu0 0.0
        %v2235 = vand.u32 %v856, 4294901760
        %2236 = vmatpush1.msra.mxu0 %v2235
        %2237 = vmatprep.subr.mxu0 0.0
        %v2238 = vand.u32 %v859, 4294901760
        %2239 = vmatpush1.msra.mxu0 %v2238
        %2240 = vmatprep.subr.mxu0 0.0
        %v2241 = vand.u32 %v862, 4294901760
        %2242 = vmatpush1.msra.mxu0 %v2241
        %2243 = vmatprep.subr.mxu0 0.0
        %v2244 = vand.u32 %v865, 4294901760
        %2245 = vmatpush1.msra.mxu0 %v2244
        %2246 = vmatprep.subr.mxu0 0.0
        %v2247 = vand.u32 %v868, 4294901760
        %2248 = vmatpush1.msra.mxu0 %v2247
        %2249 = vmatprep.subr.mxu0 0.0
        %v2250 = vand.u32 %v871, 4294901760
        %2251 = vmatpush1.msra.mxu0 %v2250
        %2252 = vmatprep.subr.mxu0 0.0
        %v2253 = vand.u32 %v874, 4294901760
        %2254 = vmatpush1.msra.mxu0 %v2253
        %2255 = vmatprep.subr.mxu0 0.0
        %v2256 = vand.u32 %v877, 4294901760
        %2257 = vmatpush1.msra.mxu0 %v2256
        %2258 = vmatprep.subr.mxu0 0.0
        %v2259 = vand.u32 %v880, 4294901760
        %2260 = vmatpush1.msra.mxu0 %v2259
        %2261 = vmatprep.subr.mxu0 0.0
        %v2262 = vand.u32 %v883, 4294901760
        %2263 = vmatpush1.msra.mxu0 %v2262
        %2264 = vmatprep.subr.mxu0 0.0
        %v2265 = vand.u32 %v886, 4294901760
        %2266 = vmatpush1.msra.mxu0 %v2265
        %2267 = vmatprep.subr.mxu0 0.0
        %v2268 = vand.u32 %v889, 4294901760
        %2269 = vmatpush1.msra.mxu0 %v2268
        %2270 = vmatprep.subr.mxu0 0.0
        %v2271 = vand.u32 %v892, 4294901760
        %2272 = vmatpush1.msra.mxu0 %v2271
        %2273 = vmatprep.subr.mxu0 0.0
        %v2274 = vand.u32 %v895, 4294901760
        %2275 = vmatpush1.msra.mxu0 %v2274
        %2276 = vmatprep.subr.mxu0 0.0
        %v2277 = vand.u32 %v898, 4294901760
        %2278 = vmatpush1.msra.mxu0 %v2277
        %2279 = vmatprep.subr.mxu0 0.0
        %v2280 = vand.u32 %v901, 4294901760
        %2281 = vmatpush1.msra.mxu0 %v2280
        %2282 = vmatprep.subr.mxu0 0.0
        %v2283 = vand.u32 %v904, 4294901760
        %2284 = vmatpush1.msra.mxu0 %v2283
        %2285 = vmatprep.subr.mxu0 0.0
        %v2286 = vand.u32 %v907, 4294901760
        %2287 = vmatpush1.msra.mxu0 %v2286
        %2288 = vmatprep.subr.mxu0 0.0
        %v2289 = vand.u32 %v910, 4294901760
        %2290 = vmatpush1.msra.mxu0 %v2289
        %2291 = vmatprep.subr.mxu0 0.0
        %v2292 = vand.u32 %v913, 4294901760
        %2293 = vmatpush1.msra.mxu0 %v2292
        %2294 = vmatprep.subr.mxu0 0.0
        %v2295 = vand.u32 %v916, 4294901760
        %2296 = vmatpush1.msra.mxu0 %v2295
        %2297 = vmatprep.subr.mxu0 0.0
        %v2298 = vand.u32 %v919, 4294901760
        %2299 = vmatpush1.msra.mxu0 %v2298
        %2300 = vmatprep.subr.mxu0 0.0
        %v2301 = vand.u32 %v922, 4294901760
        %2302 = vmatpush1.msra.mxu0 %v2301
        %2303 = vmatprep.subr.mxu0 0.0
        %v2304 = vand.u32 %v925, 4294901760
        %2305 = vmatpush1.msra.mxu0 %v2304
        %2306 = vmatprep.subr.mxu0 0.0
        %v2307 = vand.u32 %v928, 4294901760
        %2308 = vmatpush1.msra.mxu0 %v2307
        %2309 = vmatprep.subr.mxu0 0.0
        %v2310 = vand.u32 %v931, 4294901760
        %2311 = vmatpush1.msra.mxu0 %v2310
        %2312 = vmatprep.subr.mxu0 0.0
        %v2313 = vand.u32 %v934, 4294901760
        %2314 = vmatpush1.msra.mxu0 %v2313
        %v2315 = vand.u32 %v838, 4294901760
        %v2316 = vsub.f32 %v838, %v2315
        %v2317 = vand.u32 %v2316, 4294901760
        %v2318 = vsub.f32 %v2316, %v2317
        %v2319 = vand.u32 %v2318, 4294901760
        %2320 = vmatprep.mubr.f32.mxu0 %v2319
        %v2321 = vand.u32 %v837, 4294901760
        %v2322 = vsub.f32 %v837, %v2321
        %v2323 = vand.u32 %v2322, 4294901760
        %v2324 = vsub.f32 %v2322, %v2323
        %v2325 = vand.u32 %v2324, 4294901760
        %2326 = vmatmul.mubr.f32.gmra.mrb[0].mxu0 %v2325
        %v2327 = vpop.f32.mrb[0].mxu0
        %v2328 = vadd.f32 0.0, %v2327
        %v2329 = vpop.f32.mrb[0].mxu0
        %2330 = vdwg.mxu0
        %2331 = vmatprep.subr.mxu0 0.0
        %v2332 = vand.u32 %v841, 4294901760
        %v2333 = vsub.f32 %v841, %v2332
        %v2334 = vand.u32 %v2333, 4294901760
        %v2335 = vsub.f32 %v2333, %v2334
        %v2336 = vand.u32 %v2335, 4294901760
        %2337 = vmatpush1.msra.mxu0 %v2336
        %2338 = vmatprep.subr.mxu0 0.0
        %v2339 = vand.u32 %v844, 4294901760
        %v2340 = vsub.f32 %v844, %v2339
        %v2341 = vand.u32 %v2340, 4294901760
        %v2342 = vsub.f32 %v2340, %v2341
        %v2343 = vand.u32 %v2342, 4294901760
        %2344 = vmatpush1.msra.mxu0 %v2343
        %2345 = vmatprep.subr.mxu0 0.0
        %v2346 = vand.u32 %v847, 4294901760
        %v2347 = vsub.f32 %v847, %v2346
        %v2348 = vand.u32 %v2347, 4294901760
        %v2349 = vsub.f32 %v2347, %v2348
        %v2350 = vand.u32 %v2349, 4294901760
        %2351 = vmatpush1.msra.mxu0 %v2350
        %2352 = vmatprep.subr.mxu0 0.0
        %v2353 = vand.u32 %v850, 4294901760
        %v2354 = vsub.f32 %v850, %v2353
        %v2355 = vand.u32 %v2354, 4294901760
        %v2356 = vsub.f32 %v2354, %v2355
        %v2357 = vand.u32 %v2356, 4294901760
        %2358 = vmatpush1.msra.mxu0 %v2357
        %2359 = vmatprep.subr.mxu0 0.0
        %v2360 = vand.u32 %v853, 4294901760
        %v2361 = vsub.f32 %v853, %v2360
        %v2362 = vand.u32 %v2361, 4294901760
        %v2363 = vsub.f32 %v2361, %v2362
        %v2364 = vand.u32 %v2363, 4294901760
        %2365 = vmatpush1.msra.mxu0 %v2364
        %2366 = vmatprep.subr.mxu0 0.0
        %v2367 = vand.u32 %v856, 4294901760
        %v2368 = vsub.f32 %v856, %v2367
        %v2369 = vand.u32 %v2368, 4294901760
        %v2370 = vsub.f32 %v2368, %v2369
        %v2371 = vand.u32 %v2370, 4294901760
        %2372 = vmatpush1.msra.mxu0 %v2371
        %2373 = vmatprep.subr.mxu0 0.0
        %v2374 = vand.u32 %v859, 4294901760
        %v2375 = vsub.f32 %v859, %v2374
        %v2376 = vand.u32 %v2375, 4294901760
        %v2377 = vsub.f32 %v2375, %v2376
        %v2378 = vand.u32 %v2377, 4294901760
        %2379 = vmatpush1.msra.mxu0 %v2378
        %2380 = vmatprep.subr.mxu0 0.0
        %v2381 = vand.u32 %v862, 4294901760
        %v2382 = vsub.f32 %v862, %v2381
        %v2383 = vand.u32 %v2382, 4294901760
        %v2384 = vsub.f32 %v2382, %v2383
        %v2385 = vand.u32 %v2384, 4294901760
        %2386 = vmatpush1.msra.mxu0 %v2385
        %2387 = vmatprep.subr.mxu0 0.0
        %v2388 = vand.u32 %v865, 4294901760
        %v2389 = vsub.f32 %v865, %v2388
        %v2390 = vand.u32 %v2389, 4294901760
        %v2391 = vsub.f32 %v2389, %v2390
        %v2392 = vand.u32 %v2391, 4294901760
        %2393 = vmatpush1.msra.mxu0 %v2392
        %2394 = vmatprep.subr.mxu0 0.0
        %v2395 = vand.u32 %v868, 4294901760
        %v2396 = vsub.f32 %v868, %v2395
        %v2397 = vand.u32 %v2396, 4294901760
        %v2398 = vsub.f32 %v2396, %v2397
        %v2399 = vand.u32 %v2398, 4294901760
        %2400 = vmatpush1.msra.mxu0 %v2399
        %2401 = vmatprep.subr.mxu0 0.0
        %v2402 = vand.u32 %v871, 4294901760
        %v2403 = vsub.f32 %v871, %v2402
        %v2404 = vand.u32 %v2403, 4294901760
        %v2405 = vsub.f32 %v2403, %v2404
        %v2406 = vand.u32 %v2405, 4294901760
        %2407 = vmatpush1.msra.mxu0 %v2406
        %2408 = vmatprep.subr.mxu0 0.0
        %v2409 = vand.u32 %v874, 4294901760
        %v2410 = vsub.f32 %v874, %v2409
        %v2411 = vand.u32 %v2410, 4294901760
        %v2412 = vsub.f32 %v2410, %v2411
        %v2413 = vand.u32 %v2412, 4294901760
        %2414 = vmatpush1.msra.mxu0 %v2413
        %2415 = vmatprep.subr.mxu0 0.0
        %v2416 = vand.u32 %v877, 4294901760
        %v2417 = vsub.f32 %v877, %v2416
        %v2418 = vand.u32 %v2417, 4294901760
        %v2419 = vsub.f32 %v2417, %v2418
        %v2420 = vand.u32 %v2419, 4294901760
        %2421 = vmatpush1.msra.mxu0 %v2420
        %2422 = vmatprep.subr.mxu0 0.0
        %v2423 = vand.u32 %v880, 4294901760
        %v2424 = vsub.f32 %v880, %v2423
        %v2425 = vand.u32 %v2424, 4294901760
        %v2426 = vsub.f32 %v2424, %v2425
        %v2427 = vand.u32 %v2426, 4294901760
        %2428 = vmatpush1.msra.mxu0 %v2427
        %2429 = vmatprep.subr.mxu0 0.0
        %v2430 = vand.u32 %v883, 4294901760
        %v2431 = vsub.f32 %v883, %v2430
        %v2432 = vand.u32 %v2431, 4294901760
        %v2433 = vsub.f32 %v2431, %v2432
        %v2434 = vand.u32 %v2433, 4294901760
        %2435 = vmatpush1.msra.mxu0 %v2434
        %2436 = vmatprep.subr.mxu0 0.0
        %v2437 = vand.u32 %v886, 4294901760
        %v2438 = vsub.f32 %v886, %v2437
        %v2439 = vand.u32 %v2438, 4294901760
        %v2440 = vsub.f32 %v2438, %v2439
        %v2441 = vand.u32 %v2440, 4294901760
        %2442 = vmatpush1.msra.mxu0 %v2441
        %2443 = vmatprep.subr.mxu0 0.0
        %v2444 = vand.u32 %v889, 4294901760
        %v2445 = vsub.f32 %v889, %v2444
        %v2446 = vand.u32 %v2445, 4294901760
        %v2447 = vsub.f32 %v2445, %v2446
        %v2448 = vand.u32 %v2447, 4294901760
        %2449 = vmatpush1.msra.mxu0 %v2448
        %2450 = vmatprep.subr.mxu0 0.0
        %v2451 = vand.u32 %v892, 4294901760
        %v2452 = vsub.f32 %v892, %v2451
        %v2453 = vand.u32 %v2452, 4294901760
        %v2454 = vsub.f32 %v2452, %v2453
        %v2455 = vand.u32 %v2454, 4294901760
        %2456 = vmatpush1.msra.mxu0 %v2455
        %2457 = vmatprep.subr.mxu0 0.0
        %v2458 = vand.u32 %v895, 4294901760
        %v2459 = vsub.f32 %v895, %v2458
        %v2460 = vand.u32 %v2459, 4294901760
        %v2461 = vsub.f32 %v2459, %v2460
        %v2462 = vand.u32 %v2461, 4294901760
        %2463 = vmatpush1.msra.mxu0 %v2462
        %2464 = vmatprep.subr.mxu0 0.0
        %v2465 = vand.u32 %v898, 4294901760
        %v2466 = vsub.f32 %v898, %v2465
        %v2467 = vand.u32 %v2466, 4294901760
        %v2468 = vsub.f32 %v2466, %v2467
        %v2469 = vand.u32 %v2468, 4294901760
        %2470 = vmatpush1.msra.mxu0 %v2469
        %2471 = vmatprep.subr.mxu0 0.0
        %v2472 = vand.u32 %v901, 4294901760
        %v2473 = vsub.f32 %v901, %v2472
        %v2474 = vand.u32 %v2473, 4294901760
        %v2475 = vsub.f32 %v2473, %v2474
        %v2476 = vand.u32 %v2475, 4294901760
        %2477 = vmatpush1.msra.mxu0 %v2476
        %2478 = vmatprep.subr.mxu0 0.0
        %v2479 = vand.u32 %v904, 4294901760
        %v2480 = vsub.f32 %v904, %v2479
        %v2481 = vand.u32 %v2480, 4294901760
        %v2482 = vsub.f32 %v2480, %v2481
        %v2483 = vand.u32 %v2482, 4294901760
        %2484 = vmatpush1.msra.mxu0 %v2483
        %2485 = vmatprep.subr.mxu0 0.0
        %v2486 = vand.u32 %v907, 4294901760
        %v2487 = vsub.f32 %v907, %v2486
        %v2488 = vand.u32 %v2487, 4294901760
        %v2489 = vsub.f32 %v2487, %v2488
        %v2490 = vand.u32 %v2489, 4294901760
        %2491 = vmatpush1.msra.mxu0 %v2490
        %2492 = vmatprep.subr.mxu0 0.0
        %v2493 = vand.u32 %v910, 4294901760
        %v2494 = vsub.f32 %v910, %v2493
        %v2495 = vand.u32 %v2494, 4294901760
        %v2496 = vsub.f32 %v2494, %v2495
        %v2497 = vand.u32 %v2496, 4294901760
        %2498 = vmatpush1.msra.mxu0 %v2497
        %2499 = vmatprep.subr.mxu0 0.0
        %v2500 = vand.u32 %v913, 4294901760
        %v2501 = vsub.f32 %v913, %v2500
        %v2502 = vand.u32 %v2501, 4294901760
        %v2503 = vsub.f32 %v2501, %v2502
        %v2504 = vand.u32 %v2503, 4294901760
        %2505 = vmatpush1.msra.mxu0 %v2504
        %2506 = vmatprep.subr.mxu0 0.0
        %v2507 = vand.u32 %v916, 4294901760
        %v2508 = vsub.f32 %v916, %v2507
        %v2509 = vand.u32 %v2508, 4294901760
        %v2510 = vsub.f32 %v2508, %v2509
        %v2511 = vand.u32 %v2510, 4294901760
        %2512 = vmatpush1.msra.mxu0 %v2511
        %2513 = vmatprep.subr.mxu0 0.0
        %v2514 = vand.u32 %v919, 4294901760
        %v2515 = vsub.f32 %v919, %v2514
        %v2516 = vand.u32 %v2515, 4294901760
        %v2517 = vsub.f32 %v2515, %v2516
        %v2518 = vand.u32 %v2517, 4294901760
        %2519 = vmatpush1.msra.mxu0 %v2518
        %2520 = vmatprep.subr.mxu0 0.0
        %v2521 = vand.u32 %v922, 4294901760
        %v2522 = vsub.f32 %v922, %v2521
        %v2523 = vand.u32 %v2522, 4294901760
        %v2524 = vsub.f32 %v2522, %v2523
        %v2525 = vand.u32 %v2524, 4294901760
        %2526 = vmatpush1.msra.mxu0 %v2525
        %2527 = vmatprep.subr.mxu0 0.0
        %v2528 = vand.u32 %v925, 4294901760
        %v2529 = vsub.f32 %v925, %v2528
        %v2530 = vand.u32 %v2529, 4294901760
        %v2531 = vsub.f32 %v2529, %v2530
        %v2532 = vand.u32 %v2531, 4294901760
        %2533 = vmatpush1.msra.mxu0 %v2532
        %2534 = vmatprep.subr.mxu0 0.0
        %v2535 = vand.u32 %v928, 4294901760
        %v2536 = vsub.f32 %v928, %v2535
        %v2537 = vand.u32 %v2536, 4294901760
        %v2538 = vsub.f32 %v2536, %v2537
        %v2539 = vand.u32 %v2538, 4294901760
        %2540 = vmatpush1.msra.mxu0 %v2539
        %2541 = vmatprep.subr.mxu0 0.0
        %v2542 = vand.u32 %v931, 4294901760
        %v2543 = vsub.f32 %v931, %v2542
        %v2544 = vand.u32 %v2543, 4294901760
        %v2545 = vsub.f32 %v2543, %v2544
        %v2546 = vand.u32 %v2545, 4294901760
        %2547 = vmatpush1.msra.mxu0 %v2546
        %2548 = vmatprep.subr.mxu0 0.0
        %v2549 = vand.u32 %v934, 4294901760
        %v2550 = vsub.f32 %v934, %v2549
        %v2551 = vand.u32 %v2550, 4294901760
        %v2552 = vsub.f32 %v2550, %v2551
        %v2553 = vand.u32 %v2552, 4294901760
        %2554 = vmatpush1.msra.mxu0 %v2553
        %v2555 = vand.u32 %v838, 4294901760
        %2556 = vmatprep.mubr.f32.mxu0 %v2555
        %v2557 = vand.u32 %v837, 4294901760
        %2558 = vmatmul.mubr.f32.gmra.mrb[0].mxu0 %v2557
        %v2559 = vpop.f32.mrb[0].mxu0
        %v2560 = vadd.f32 %v2328, %v2559
        %v2561 = vpop.f32.mrb[0].mxu0
        %2562 = vdwg.mxu0
        %2563 = vmatprep.subr.mxu0 0.0
        %v2564 = vand.u32 %v841, 4294901760
        %v2565 = vsub.f32 %v841, %v2564
        %2566 = vmatpush1.msra.mxu0 %v2565
        %2567 = vmatprep.subr.mxu0 0.0
        %v2568 = vand.u32 %v844, 4294901760
        %v2569 = vsub.f32 %v844, %v2568
        %2570 = vmatpush1.msra.mxu0 %v2569
        %2571 = vmatprep.subr.mxu0 0.0
        %v2572 = vand.u32 %v847, 4294901760
        %v2573 = vsub.f32 %v847, %v2572
        %2574 = vmatpush1.msra.mxu0 %v2573
        %2575 = vmatprep.subr.mxu0 0.0
        %v2576 = vand.u32 %v850, 4294901760
        %v2577 = vsub.f32 %v850, %v2576
        %2578 = vmatpush1.msra.mxu0 %v2577
        %2579 = vmatprep.subr.mxu0 0.0
        %v2580 = vand.u32 %v853, 4294901760
        %v2581 = vsub.f32 %v853, %v2580
        %2582 = vmatpush1.msra.mxu0 %v2581
        %2583 = vmatprep.subr.mxu0 0.0
        %v2584 = vand.u32 %v856, 4294901760
        %v2585 = vsub.f32 %v856, %v2584
        %2586 = vmatpush1.msra.mxu0 %v2585
        %2587 = vmatprep.subr.mxu0 0.0
        %v2588 = vand.u32 %v859, 4294901760
        %v2589 = vsub.f32 %v859, %v2588
        %2590 = vmatpush1.msra.mxu0 %v2589
        %2591 = vmatprep.subr.mxu0 0.0
        %v2592 = vand.u32 %v862, 4294901760
        %v2593 = vsub.f32 %v862, %v2592
        %2594 = vmatpush1.msra.mxu0 %v2593
        %2595 = vmatprep.subr.mxu0 0.0
        %v2596 = vand.u32 %v865, 4294901760
        %v2597 = vsub.f32 %v865, %v2596
        %2598 = vmatpush1.msra.mxu0 %v2597
        %2599 = vmatprep.subr.mxu0 0.0
        %v2600 = vand.u32 %v868, 4294901760
        %v2601 = vsub.f32 %v868, %v2600
        %2602 = vmatpush1.msra.mxu0 %v2601
        %2603 = vmatprep.subr.mxu0 0.0
        %v2604 = vand.u32 %v871, 4294901760
        %v2605 = vsub.f32 %v871, %v2604
        %2606 = vmatpush1.msra.mxu0 %v2605
        %2607 = vmatprep.subr.mxu0 0.0
        %v2608 = vand.u32 %v874, 4294901760
        %v2609 = vsub.f32 %v874, %v2608
        %2610 = vmatpush1.msra.mxu0 %v2609
        %2611 = vmatprep.subr.mxu0 0.0
        %v2612 = vand.u32 %v877, 4294901760
        %v2613 = vsub.f32 %v877, %v2612
        %2614 = vmatpush1.msra.mxu0 %v2613
        %2615 = vmatprep.subr.mxu0 0.0
        %v2616 = vand.u32 %v880, 4294901760
        %v2617 = vsub.f32 %v880, %v2616
        %2618 = vmatpush1.msra.mxu0 %v2617
        %2619 = vmatprep.subr.mxu0 0.0
        %v2620 = vand.u32 %v883, 4294901760
        %v2621 = vsub.f32 %v883, %v2620
        %2622 = vmatpush1.msra.mxu0 %v2621
        %2623 = vmatprep.subr.mxu0 0.0
        %v2624 = vand.u32 %v886, 4294901760
        %v2625 = vsub.f32 %v886, %v2624
        %2626 = vmatpush1.msra.mxu0 %v2625
        %2627 = vmatprep.subr.mxu0 0.0
        %v2628 = vand.u32 %v889, 4294901760
        %v2629 = vsub.f32 %v889, %v2628
        %2630 = vmatpush1.msra.mxu0 %v2629
        %2631 = vmatprep.subr.mxu0 0.0
        %v2632 = vand.u32 %v892, 4294901760
        %v2633 = vsub.f32 %v892, %v2632
        %2634 = vmatpush1.msra.mxu0 %v2633
        %2635 = vmatprep.subr.mxu0 0.0
        %v2636 = vand.u32 %v895, 4294901760
        %v2637 = vsub.f32 %v895, %v2636
        %2638 = vmatpush1.msra.mxu0 %v2637
        %2639 = vmatprep.subr.mxu0 0.0
        %v2640 = vand.u32 %v898, 4294901760
        %v2641 = vsub.f32 %v898, %v2640
        %2642 = vmatpush1.msra.mxu0 %v2641
        %2643 = vmatprep.subr.mxu0 0.0
        %v2644 = vand.u32 %v901, 4294901760
        %v2645 = vsub.f32 %v901, %v2644
        %2646 = vmatpush1.msra.mxu0 %v2645
        %2647 = vmatprep.subr.mxu0 0.0
        %v2648 = vand.u32 %v904, 4294901760
        %v2649 = vsub.f32 %v904, %v2648
        %2650 = vmatpush1.msra.mxu0 %v2649
        %2651 = vmatprep.subr.mxu0 0.0
        %v2652 = vand.u32 %v907, 4294901760
        %v2653 = vsub.f32 %v907, %v2652
        %2654 = vmatpush1.msra.mxu0 %v2653
        %2655 = vmatprep.subr.mxu0 0.0
        %v2656 = vand.u32 %v910, 4294901760
        %v2657 = vsub.f32 %v910, %v2656
        %2658 = vmatpush1.msra.mxu0 %v2657
        %2659 = vmatprep.subr.mxu0 0.0
        %v2660 = vand.u32 %v913, 4294901760
        %v2661 = vsub.f32 %v913, %v2660
        %2662 = vmatpush1.msra.mxu0 %v2661
        %2663 = vmatprep.subr.mxu0 0.0
        %v2664 = vand.u32 %v916, 4294901760
        %v2665 = vsub.f32 %v916, %v2664
        %2666 = vmatpush1.msra.mxu0 %v2665
        %2667 = vmatprep.subr.mxu0 0.0
        %v2668 = vand.u32 %v919, 4294901760
        %v2669 = vsub.f32 %v919, %v2668
        %2670 = vmatpush1.msra.mxu0 %v2669
        %2671 = vmatprep.subr.mxu0 0.0
        %v2672 = vand.u32 %v922, 4294901760
        %v2673 = vsub.f32 %v922, %v2672
        %2674 = vmatpush1.msra.mxu0 %v2673
        %2675 = vmatprep.subr.mxu0 0.0
        %v2676 = vand.u32 %v925, 4294901760
        %v2677 = vsub.f32 %v925, %v2676
        %2678 = vmatpush1.msra.mxu0 %v2677
        %2679 = vmatprep.subr.mxu0 0.0
        %v2680 = vand.u32 %v928, 4294901760
        %v2681 = vsub.f32 %v928, %v2680
        %2682 = vmatpush1.msra.mxu0 %v2681
        %2683 = vmatprep.subr.mxu0 0.0
        %v2684 = vand.u32 %v931, 4294901760
        %v2685 = vsub.f32 %v931, %v2684
        %2686 = vmatpush1.msra.mxu0 %v2685
        %2687 = vmatprep.subr.mxu0 0.0
        %v2688 = vand.u32 %v934, 4294901760
        %v2689 = vsub.f32 %v934, %v2688
        %2690 = vmatpush1.msra.mxu0 %v2689
        %v2691 = vand.u32 %v838, 4294901760
        %v2692 = vsub.f32 %v838, %v2691
        %2693 = vmatprep.mubr.f32.mxu0 %v2692
        %v2694 = vand.u32 %v837, 4294901760
        %v2695 = vsub.f32 %v837, %v2694
        %2696 = vmatmul.mubr.f32.gmra.mrb[0].mxu0 %v2695
        %v2697 = vpop.f32.mrb[0].mxu0
        %v2698 = vadd.f32 %v2560, %v2697
        %v2699 = vpop.f32.mrb[0].mxu0
        %2700 = vdwg.mxu0
        %2701 = vmatprep.subr.mxu0 0.0
        %v2702 = vand.u32 %v841, 4294901760
        %2703 = vmatpush1.msra.mxu0 %v2702
        %2704 = vmatprep.subr.mxu0 0.0
        %v2705 = vand.u32 %v844, 4294901760
        %2706 = vmatpush1.msra.mxu0 %v2705
        %2707 = vmatprep.subr.mxu0 0.0
        %v2708 = vand.u32 %v847, 4294901760
        %2709 = vmatpush1.msra.mxu0 %v2708
        %2710 = vmatprep.subr.mxu0 0.0
        %v2711 = vand.u32 %v850, 4294901760
        %2712 = vmatpush1.msra.mxu0 %v2711
        %2713 = vmatprep.subr.mxu0 0.0
        %v2714 = vand.u32 %v853, 4294901760
        %2715 = vmatpush1.msra.mxu0 %v2714
        %2716 = vmatprep.subr.mxu0 0.0
        %v2717 = vand.u32 %v856, 4294901760
        %2718 = vmatpush1.msra.mxu0 %v2717
        %2719 = vmatprep.subr.mxu0 0.0
        %v2720 = vand.u32 %v859, 4294901760
        %2721 = vmatpush1.msra.mxu0 %v2720
        %2722 = vmatprep.subr.mxu0 0.0
        %v2723 = vand.u32 %v862, 4294901760
        %2724 = vmatpush1.msra.mxu0 %v2723
        %2725 = vmatprep.subr.mxu0 0.0
        %v2726 = vand.u32 %v865, 4294901760
        %2727 = vmatpush1.msra.mxu0 %v2726
        %2728 = vmatprep.subr.mxu0 0.0
        %v2729 = vand.u32 %v868, 4294901760
        %2730 = vmatpush1.msra.mxu0 %v2729
        %2731 = vmatprep.subr.mxu0 0.0
        %v2732 = vand.u32 %v871, 4294901760
        %2733 = vmatpush1.msra.mxu0 %v2732
        %2734 = vmatprep.subr.mxu0 0.0
        %v2735 = vand.u32 %v874, 4294901760
        %2736 = vmatpush1.msra.mxu0 %v2735
        %2737 = vmatprep.subr.mxu0 0.0
        %v2738 = vand.u32 %v877, 4294901760
        %2739 = vmatpush1.msra.mxu0 %v2738
        %2740 = vmatprep.subr.mxu0 0.0
        %v2741 = vand.u32 %v880, 4294901760
        %2742 = vmatpush1.msra.mxu0 %v2741
        %2743 = vmatprep.subr.mxu0 0.0
        %v2744 = vand.u32 %v883, 4294901760
        %2745 = vmatpush1.msra.mxu0 %v2744
        %2746 = vmatprep.subr.mxu0 0.0
        %v2747 = vand.u32 %v886, 4294901760
        %2748 = vmatpush1.msra.mxu0 %v2747
        %2749 = vmatprep.subr.mxu0 0.0
        %v2750 = vand.u32 %v889, 4294901760
        %2751 = vmatpush1.msra.mxu0 %v2750
        %2752 = vmatprep.subr.mxu0 0.0
        %v2753 = vand.u32 %v892, 4294901760
        %2754 = vmatpush1.msra.mxu0 %v2753
        %2755 = vmatprep.subr.mxu0 0.0
        %v2756 = vand.u32 %v895, 4294901760
        %2757 = vmatpush1.msra.mxu0 %v2756
        %2758 = vmatprep.subr.mxu0 0.0
        %v2759 = vand.u32 %v898, 4294901760
        %2760 = vmatpush1.msra.mxu0 %v2759
        %2761 = vmatprep.subr.mxu0 0.0
        %v2762 = vand.u32 %v901, 4294901760
        %2763 = vmatpush1.msra.mxu0 %v2762
        %2764 = vmatprep.subr.mxu0 0.0
        %v2765 = vand.u32 %v904, 4294901760
        %2766 = vmatpush1.msra.mxu0 %v2765
        %2767 = vmatprep.subr.mxu0 0.0
        %v2768 = vand.u32 %v907, 4294901760
        %2769 = vmatpush1.msra.mxu0 %v2768
        %2770 = vmatprep.subr.mxu0 0.0
        %v2771 = vand.u32 %v910, 4294901760
        %2772 = vmatpush1.msra.mxu0 %v2771
        %2773 = vmatprep.subr.mxu0 0.0
        %v2774 = vand.u32 %v913, 4294901760
        %2775 = vmatpush1.msra.mxu0 %v2774
        %2776 = vmatprep.subr.mxu0 0.0
        %v2777 = vand.u32 %v916, 4294901760
        %2778 = vmatpush1.msra.mxu0 %v2777
        %2779 = vmatprep.subr.mxu0 0.0
        %v2780 = vand.u32 %v919, 4294901760
        %2781 = vmatpush1.msra.mxu0 %v2780
        %2782 = vmatprep.subr.mxu0 0.0
        %v2783 = vand.u32 %v922, 4294901760
        %2784 = vmatpush1.msra.mxu0 %v2783
        %2785 = vmatprep.subr.mxu0 0.0
        %v2786 = vand.u32 %v925, 4294901760
        %2787 = vmatpush1.msra.mxu0 %v2786
        %2788 = vmatprep.subr.mxu0 0.0
        %v2789 = vand.u32 %v928, 4294901760
        %2790 = vmatpush1.msra.mxu0 %v2789
        %2791 = vmatprep.subr.mxu0 0.0
        %v2792 = vand.u32 %v931, 4294901760
        %2793 = vmatpush1.msra.mxu0 %v2792
        %2794 = vmatprep.subr.mxu0 0.0
        %v2795 = vand.u32 %v934, 4294901760
        %2796 = vmatpush1.msra.mxu0 %v2795
        %v2797 = vand.u32 %v838, 4294901760
        %v2798 = vsub.f32 %v838, %v2797
        %v2799 = vand.u32 %v2798, 4294901760
        %2800 = vmatprep.mubr.f32.mxu0 %v2799
        %v2801 = vand.u32 %v837, 4294901760
        %v2802 = vsub.f32 %v837, %v2801
        %v2803 = vand.u32 %v2802, 4294901760
        %2804 = vmatmul.mubr.f32.gmra.mrb[0].mxu0 %v2803
        %v2805 = vpop.f32.mrb[0].mxu0
        %v2806 = vadd.f32 %v2698, %v2805
        %v2807 = vpop.f32.mrb[0].mxu0
        %2808 = vdwg.mxu0
        %2809 = vmatprep.subr.mxu0 0.0
        %v2810 = vand.u32 %v841, 4294901760
        %v2811 = vsub.f32 %v841, %v2810
        %v2812 = vand.u32 %v2811, 4294901760
        %2813 = vmatpush1.msra.mxu0 %v2812
        %2814 = vmatprep.subr.mxu0 0.0
        %v2815 = vand.u32 %v844, 4294901760
        %v2816 = vsub.f32 %v844, %v2815
        %v2817 = vand.u32 %v2816, 4294901760
        %2818 = vmatpush1.msra.mxu0 %v2817
        %2819 = vmatprep.subr.mxu0 0.0
        %v2820 = vand.u32 %v847, 4294901760
        %v2821 = vsub.f32 %v847, %v2820
        %v2822 = vand.u32 %v2821, 4294901760
        %2823 = vmatpush1.msra.mxu0 %v2822
        %2824 = vmatprep.subr.mxu0 0.0
        %v2825 = vand.u32 %v850, 4294901760
        %v2826 = vsub.f32 %v850, %v2825
        %v2827 = vand.u32 %v2826, 4294901760
        %2828 = vmatpush1.msra.mxu0 %v2827
        %2829 = vmatprep.subr.mxu0 0.0
        %v2830 = vand.u32 %v853, 4294901760
        %v2831 = vsub.f32 %v853, %v2830
        %v2832 = vand.u32 %v2831, 4294901760
        %2833 = vmatpush1.msra.mxu0 %v2832
        %2834 = vmatprep.subr.mxu0 0.0
        %v2835 = vand.u32 %v856, 4294901760
        %v2836 = vsub.f32 %v856, %v2835
        %v2837 = vand.u32 %v2836, 4294901760
        %2838 = vmatpush1.msra.mxu0 %v2837
        %2839 = vmatprep.subr.mxu0 0.0
        %v2840 = vand.u32 %v859, 4294901760
        %v2841 = vsub.f32 %v859, %v2840
        %v2842 = vand.u32 %v2841, 4294901760
        %2843 = vmatpush1.msra.mxu0 %v2842
        %2844 = vmatprep.subr.mxu0 0.0
        %v2845 = vand.u32 %v862, 4294901760
        %v2846 = vsub.f32 %v862, %v2845
        %v2847 = vand.u32 %v2846, 4294901760
        %2848 = vmatpush1.msra.mxu0 %v2847
        %2849 = vmatprep.subr.mxu0 0.0
        %v2850 = vand.u32 %v865, 4294901760
        %v2851 = vsub.f32 %v865, %v2850
        %v2852 = vand.u32 %v2851, 4294901760
        %2853 = vmatpush1.msra.mxu0 %v2852
        %2854 = vmatprep.subr.mxu0 0.0
        %v2855 = vand.u32 %v868, 4294901760
        %v2856 = vsub.f32 %v868, %v2855
        %v2857 = vand.u32 %v2856, 4294901760
        %2858 = vmatpush1.msra.mxu0 %v2857
        %2859 = vmatprep.subr.mxu0 0.0
        %v2860 = vand.u32 %v871, 4294901760
        %v2861 = vsub.f32 %v871, %v2860
        %v2862 = vand.u32 %v2861, 4294901760
        %2863 = vmatpush1.msra.mxu0 %v2862
        %2864 = vmatprep.subr.mxu0 0.0
        %v2865 = vand.u32 %v874, 4294901760
        %v2866 = vsub.f32 %v874, %v2865
        %v2867 = vand.u32 %v2866, 4294901760
        %2868 = vmatpush1.msra.mxu0 %v2867
        %2869 = vmatprep.subr.mxu0 0.0
        %v2870 = vand.u32 %v877, 4294901760
        %v2871 = vsub.f32 %v877, %v2870
        %v2872 = vand.u32 %v2871, 4294901760
        %2873 = vmatpush1.msra.mxu0 %v2872
        %2874 = vmatprep.subr.mxu0 0.0
        %v2875 = vand.u32 %v880, 4294901760
        %v2876 = vsub.f32 %v880, %v2875
        %v2877 = vand.u32 %v2876, 4294901760
        %2878 = vmatpush1.msra.mxu0 %v2877
        %2879 = vmatprep.subr.mxu0 0.0
        %v2880 = vand.u32 %v883, 4294901760
        %v2881 = vsub.f32 %v883, %v2880
        %v2882 = vand.u32 %v2881, 4294901760
        %2883 = vmatpush1.msra.mxu0 %v2882
        %2884 = vmatprep.subr.mxu0 0.0
        %v2885 = vand.u32 %v886, 4294901760
        %v2886 = vsub.f32 %v886, %v2885
        %v2887 = vand.u32 %v2886, 4294901760
        %2888 = vmatpush1.msra.mxu0 %v2887
        %2889 = vmatprep.subr.mxu0 0.0
        %v2890 = vand.u32 %v889, 4294901760
        %v2891 = vsub.f32 %v889, %v2890
        %v2892 = vand.u32 %v2891, 4294901760
        %2893 = vmatpush1.msra.mxu0 %v2892
        %2894 = vmatprep.subr.mxu0 0.0
        %v2895 = vand.u32 %v892, 4294901760
        %v2896 = vsub.f32 %v892, %v2895
        %v2897 = vand.u32 %v2896, 4294901760
        %2898 = vmatpush1.msra.mxu0 %v2897
        %2899 = vmatprep.subr.mxu0 0.0
        %v2900 = vand.u32 %v895, 4294901760
        %v2901 = vsub.f32 %v895, %v2900
        %v2902 = vand.u32 %v2901, 4294901760
        %2903 = vmatpush1.msra.mxu0 %v2902
        %2904 = vmatprep.subr.mxu0 0.0
        %v2905 = vand.u32 %v898, 4294901760
        %v2906 = vsub.f32 %v898, %v2905
        %v2907 = vand.u32 %v2906, 4294901760
        %2908 = vmatpush1.msra.mxu0 %v2907
        %2909 = vmatprep.subr.mxu0 0.0
        %v2910 = vand.u32 %v901, 4294901760
        %v2911 = vsub.f32 %v901, %v2910
        %v2912 = vand.u32 %v2911, 4294901760
        %2913 = vmatpush1.msra.mxu0 %v2912
        %2914 = vmatprep.subr.mxu0 0.0
        %v2915 = vand.u32 %v904, 4294901760
        %v2916 = vsub.f32 %v904, %v2915
        %v2917 = vand.u32 %v2916, 4294901760
        %2918 = vmatpush1.msra.mxu0 %v2917
        %2919 = vmatprep.subr.mxu0 0.0
        %v2920 = vand.u32 %v907, 4294901760
        %v2921 = vsub.f32 %v907, %v2920
        %v2922 = vand.u32 %v2921, 4294901760
        %2923 = vmatpush1.msra.mxu0 %v2922
        %2924 = vmatprep.subr.mxu0 0.0
        %v2925 = vand.u32 %v910, 4294901760
        %v2926 = vsub.f32 %v910, %v2925
        %v2927 = vand.u32 %v2926, 4294901760
        %2928 = vmatpush1.msra.mxu0 %v2927
        %2929 = vmatprep.subr.mxu0 0.0
        %v2930 = vand.u32 %v913, 4294901760
        %v2931 = vsub.f32 %v913, %v2930
        %v2932 = vand.u32 %v2931, 4294901760
        %2933 = vmatpush1.msra.mxu0 %v2932
        %2934 = vmatprep.subr.mxu0 0.0
        %v2935 = vand.u32 %v916, 4294901760
        %v2936 = vsub.f32 %v916, %v2935
        %v2937 = vand.u32 %v2936, 4294901760
        %2938 = vmatpush1.msra.mxu0 %v2937
        %2939 = vmatprep.subr.mxu0 0.0
        %v2940 = vand.u32 %v919, 4294901760
        %v2941 = vsub.f32 %v919, %v2940
        %v2942 = vand.u32 %v2941, 4294901760
        %2943 = vmatpush1.msra.mxu0 %v2942
        %2944 = vmatprep.subr.mxu0 0.0
        %v2945 = vand.u32 %v922, 4294901760
        %v2946 = vsub.f32 %v922, %v2945
        %v2947 = vand.u32 %v2946, 4294901760
        %2948 = vmatpush1.msra.mxu0 %v2947
        %2949 = vmatprep.subr.mxu0 0.0
        %v2950 = vand.u32 %v925, 4294901760
        %v2951 = vsub.f32 %v925, %v2950
        %v2952 = vand.u32 %v2951, 4294901760
        %2953 = vmatpush1.msra.mxu0 %v2952
        %2954 = vmatprep.subr.mxu0 0.0
        %v2955 = vand.u32 %v928, 4294901760
        %v2956 = vsub.f32 %v928, %v2955
        %v2957 = vand.u32 %v2956, 4294901760
        %2958 = vmatpush1.msra.mxu0 %v2957
        %2959 = vmatprep.subr.mxu0 0.0
        %v2960 = vand.u32 %v931, 4294901760
        %v2961 = vsub.f32 %v931, %v2960
        %v2962 = vand.u32 %v2961, 4294901760
        %2963 = vmatpush1.msra.mxu0 %v2962
        %2964 = vmatprep.subr.mxu0 0.0
        %v2965 = vand.u32 %v934, 4294901760
        %v2966 = vsub.f32 %v934, %v2965
        %v2967 = vand.u32 %v2966, 4294901760
        %2968 = vmatpush1.msra.mxu0 %v2967
        %v2969 = vand.u32 %v838, 4294901760
        %2970 = vmatprep.mubr.f32.mxu0 %v2969
        %v2971 = vand.u32 %v837, 4294901760
        %2972 = vmatmul.mubr.f32.gmra.mrb[0].mxu0 %v2971
        %v2973 = vpop.f32.mrb[0].mxu0
        %v2974 = vadd.f32 %v2806, %v2973
        %v2975 = vpop.f32.mrb[0].mxu0
        %2976 = vdwg.mxu0
        %2977 = vmatprep.subr.mxu0 0.0
        %v2978 = vand.u32 %v841, 4294901760
        %2979 = vmatpush1.msra.mxu0 %v2978
        %2980 = vmatprep.subr.mxu0 0.0
        %v2981 = vand.u32 %v844, 4294901760
        %2982 = vmatpush1.msra.mxu0 %v2981
        %2983 = vmatprep.subr.mxu0 0.0
        %v2984 = vand.u32 %v847, 4294901760
        %2985 = vmatpush1.msra.mxu0 %v2984
        %2986 = vmatprep.subr.mxu0 0.0
        %v2987 = vand.u32 %v850, 4294901760
        %2988 = vmatpush1.msra.mxu0 %v2987
        %2989 = vmatprep.subr.mxu0 0.0
        %v2990 = vand.u32 %v853, 4294901760
        %2991 = vmatpush1.msra.mxu0 %v2990
        %2992 = vmatprep.subr.mxu0 0.0
        %v2993 = vand.u32 %v856, 4294901760
        %2994 = vmatpush1.msra.mxu0 %v2993
        %2995 = vmatprep.subr.mxu0 0.0
        %v2996 = vand.u32 %v859, 4294901760
        %2997 = vmatpush1.msra.mxu0 %v2996
        %2998 = vmatprep.subr.mxu0 0.0
        %v2999 = vand.u32 %v862, 4294901760
        %3000 = vmatpush1.msra.mxu0 %v2999
        %3001 = vmatprep.subr.mxu0 0.0
        %v3002 = vand.u32 %v865, 4294901760
        %3003 = vmatpush1.msra.mxu0 %v3002
        %3004 = vmatprep.subr.mxu0 0.0
        %v3005 = vand.u32 %v868, 4294901760
        %3006 = vmatpush1.msra.mxu0 %v3005
        %3007 = vmatprep.subr.mxu0 0.0
        %v3008 = vand.u32 %v871, 4294901760
        %3009 = vmatpush1.msra.mxu0 %v3008
        %3010 = vmatprep.subr.mxu0 0.0
        %v3011 = vand.u32 %v874, 4294901760
        %3012 = vmatpush1.msra.mxu0 %v3011
        %3013 = vmatprep.subr.mxu0 0.0
        %v3014 = vand.u32 %v877, 4294901760
        %3015 = vmatpush1.msra.mxu0 %v3014
        %3016 = vmatprep.subr.mxu0 0.0
        %v3017 = vand.u32 %v880, 4294901760
        %3018 = vmatpush1.msra.mxu0 %v3017
        %3019 = vmatprep.subr.mxu0 0.0
        %v3020 = vand.u32 %v883, 4294901760
        %3021 = vmatpush1.msra.mxu0 %v3020
        %3022 = vmatprep.subr.mxu0 0.0
        %v3023 = vand.u32 %v886, 4294901760
        %3024 = vmatpush1.msra.mxu0 %v3023
        %3025 = vmatprep.subr.mxu0 0.0
        %v3026 = vand.u32 %v889, 4294901760
        %3027 = vmatpush1.msra.mxu0 %v3026
        %3028 = vmatprep.subr.mxu0 0.0
        %v3029 = vand.u32 %v892, 4294901760
        %3030 = vmatpush1.msra.mxu0 %v3029
        %3031 = vmatprep.subr.mxu0 0.0
        %v3032 = vand.u32 %v895, 4294901760
        %3033 = vmatpush1.msra.mxu0 %v3032
        %3034 = vmatprep.subr.mxu0 0.0
        %v3035 = vand.u32 %v898, 4294901760
        %3036 = vmatpush1.msra.mxu0 %v3035
        %3037 = vmatprep.subr.mxu0 0.0
        %v3038 = vand.u32 %v901, 4294901760
        %3039 = vmatpush1.msra.mxu0 %v3038
        %3040 = vmatprep.subr.mxu0 0.0
        %v3041 = vand.u32 %v904, 4294901760
        %3042 = vmatpush1.msra.mxu0 %v3041
        %3043 = vmatprep.subr.mxu0 0.0
        %v3044 = vand.u32 %v907, 4294901760
        %3045 = vmatpush1.msra.mxu0 %v3044
        %3046 = vmatprep.subr.mxu0 0.0
        %v3047 = vand.u32 %v910, 4294901760
        %3048 = vmatpush1.msra.mxu0 %v3047
        %3049 = vmatprep.subr.mxu0 0.0
        %v3050 = vand.u32 %v913, 4294901760
        %3051 = vmatpush1.msra.mxu0 %v3050
        %3052 = vmatprep.subr.mxu0 0.0
        %v3053 = vand.u32 %v916, 4294901760
        %3054 = vmatpush1.msra.mxu0 %v3053
        %3055 = vmatprep.subr.mxu0 0.0
        %v3056 = vand.u32 %v919, 4294901760
        %3057 = vmatpush1.msra.mxu0 %v3056
        %3058 = vmatprep.subr.mxu0 0.0
        %v3059 = vand.u32 %v922, 4294901760
        %3060 = vmatpush1.msra.mxu0 %v3059
        %3061 = vmatprep.subr.mxu0 0.0
        %v3062 = vand.u32 %v925, 4294901760
        %3063 = vmatpush1.msra.mxu0 %v3062
        %3064 = vmatprep.subr.mxu0 0.0
        %v3065 = vand.u32 %v928, 4294901760
        %3066 = vmatpush1.msra.mxu0 %v3065
        %3067 = vmatprep.subr.mxu0 0.0
        %v3068 = vand.u32 %v931, 4294901760
        %3069 = vmatpush1.msra.mxu0 %v3068
        %3070 = vmatprep.subr.mxu0 0.0
        %v3071 = vand.u32 %v934, 4294901760
        %3072 = vmatpush1.msra.mxu0 %v3071
        %v3073 = vand.u32 %v838, 4294901760
        %3074 = vmatprep.mubr.f32.mxu0 %v3073
        %v3075 = vand.u32 %v837, 4294901760
        %3076 = vmatmul.mubr.f32.gmra.mrb[0].mxu0 %v3075
        %v3077 = vpop.f32.mrb[0].mxu0
        %v3078 = vadd.f32 %v2974, %v3077
        %v3079 = vpop.f32.mrb[0].mxu0
        %3080 = vdwg.mxu0
        %v3083 = vcombine.low %v2215, %v2217
        %3085 = vst [vmem:[#allocation2] sm:$0xff] %v3083
        %vm3086 = vcmask 551936
        %3087 = vst.msk [vmem:[#allocation2 + $0x8] sm:$0xf] %vm3086, %v3078
        %v3088 = vld [vmem:[%s4] sm:$0xf]
        %v3089 = vld [vmem:[#allocation2] sm:$0xff]
        %v3090 = vld [vmem:[#allocation2 + $0x8] sm:$0xf]
        %3092 = vset.pattern.permute.xlu0 0
        %3093 = vperm.xlu0 %3092, %v3088
        %v3094 = vpop.permute.xlu0 %3093
        %v3096 = vunpack.c.l.s4 839922192
        %v3097 = vunpack.c.0.s8 %v3096
        %v3098 = vlaneseq
        %v3099 = vshrl.u32 %v3098, 7
        %v3100 = vsub.s32 %v3097, %v3099
        %v3101 = vrot.slane %v3094, %v3100
        %v3103 = vmul.f32 %v3089, %v3101
        %v3104 = vmul.f32 %v3090, %v3101
        %v3105 = vadd.f32 %v3103, 0.0
        %v3106 = vadd.f32 %v3104, 0.0
        %3107 = vset.pattern.permute.xlu0 1
        %3108 = vperm.xlu0 %3107, %v3088
        %v3109 = vpop.permute.xlu0 %3108
        %v3111 = vunpack.c.l.s4 839922192
        %v3112 = vunpack.c.0.s8 %v3111
        %v3113 = vlaneseq
        %v3114 = vshrl.u32 %v3113, 7
        %v3115 = vsub.s32 %v3112, %v3114
        %v3116 = vrot.slane %v3109, %v3115
        %v3118 = vmul.f32 %v3089, %v3116
        %v3119 = vmul.f32 %v3090, %v3116
        %3122 = vrot.lane.b32.xlu0 %v3118, 127
        %v3123 = vpop.permute.xlu0 %3122
        %3124 = vrot.lane.b32.xlu0 %v3119, 127
        %v3125 = vpop.permute.xlu0 %3124
        %v3126 = vrot.slane %v3123, 4
        %v3127 = vrot.slane %v3125, 4
        %vm3128 = vcmask 1043456
        %v3129 = vsel %vm3128, %v3126, %v3127
        %vm3130 = vcmask 1039360
        %v3131 = vsel %vm3130, %v3123, %v3129
        %v3134 = vadd.f32 %v3105, %v3131
        %v3135 = vadd.f32 %v3106, %v3125
        %3136 = vset.pattern.permute.xlu0 2
        %3137 = vperm.xlu0 %3136, %v3088
        %v3138 = vpop.permute.xlu0 %3137
        %v3140 = vunpack.c.l.s4 839922192
        %v3141 = vunpack.c.0.s8 %v3140
        %v3142 = vlaneseq
        %v3143 = vshrl.u32 %v3142, 7
        %v3144 = vsub.s32 %v3141, %v3143
        %v3145 = vrot.slane %v3138, %v3144
        %v3147 = vmul.f32 %v3089, %v3145
        %v3148 = vmul.f32 %v3090, %v3145
        %3151 = vrot.lane.b32.xlu0 %v3147, 126
        %v3152 = vpop.permute.xlu0 %3151
        %3153 = vrot.lane.b32.xlu0 %v3148, 126
        %v3154 = vpop.permute.xlu0 %3153
        %v3155 = vrot.slane %v3152, 4
        %v3156 = vrot.slane %v3154, 4
        %v3157 = vsel %vm3128, %v3155, %v3156
        %vm3158 = vcmask 1031168
        %v3159 = vsel %vm3158, %v3152, %v3157
        %v3162 = vadd.f32 %v3134, %v3159
        %v3163 = vadd.f32 %v3135, %v3154
        %3164 = vset.pattern.permute.xlu0 3
        %3165 = vperm.xlu0 %3164, %v3088
        %v3166 = vpop.permute.xlu0 %3165
        %v3168 = vunpack.c.l.s4 839922192
        %v3169 = vunpack.c.0.s8 %v3168
        %v3170 = vlaneseq
        %v3171 = vshrl.u32 %v3170, 7
        %v3172 = vsub.s32 %v3169, %v3171
        %v3173 = vrot.slane %v3166, %v3172
        %v3175 = vmul.f32 %v3089, %v3173
        %v3176 = vmul.f32 %v3090, %v3173
        %v3177 = vadd.f32 %v3175, 0.0
        %v3178 = vadd.f32 %v3176, 0.0
        %3179 = vset.pattern.permute.xlu0 4
        %3180 = vperm.xlu0 %3179, %v3088
        %v3181 = vpop.permute.xlu0 %3180
        %v3183 = vunpack.c.l.s4 839922192
        %v3184 = vunpack.c.0.s8 %v3183
        %v3185 = vlaneseq
        %v3186 = vshrl.u32 %v3185, 7
        %v3187 = vsub.s32 %v3184, %v3186
        %v3188 = vrot.slane %v3181, %v3187
        %v3190 = vmul.f32 %v3089, %v3188
        %v3191 = vmul.f32 %v3090, %v3188
        %3194 = vrot.lane.b32.xlu0 %v3190, 127
        %v3195 = vpop.permute.xlu0 %3194
        %3196 = vrot.lane.b32.xlu0 %v3191, 127
        %v3197 = vpop.permute.xlu0 %3196
        %v3198 = vrot.slane %v3195, 4
        %v3199 = vrot.slane %v3197, 4
        %v3200 = vsel %vm3128, %v3198, %v3199
        %v3201 = vsel %vm3130, %v3195, %v3200
        %v3204 = vadd.f32 %v3177, %v3201
        %v3205 = vadd.f32 %v3178, %v3197
        %3206 = vset.pattern.permute.xlu0 5
        %3207 = vperm.xlu0 %3206, %v3088
        %v3208 = vpop.permute.xlu0 %3207
        %v3210 = vunpack.c.l.s4 839922192
        %v3211 = vunpack.c.0.s8 %v3210
        %v3212 = vlaneseq
        %v3213 = vshrl.u32 %v3212, 7
        %v3214 = vsub.s32 %v3211, %v3213
        %v3215 = vrot.slane %v3208, %v3214
        %v3217 = vmul.f32 %v3089, %v3215
        %v3218 = vmul.f32 %v3090, %v3215
        %3221 = vrot.lane.b32.xlu0 %v3217, 126
        %v3222 = vpop.permute.xlu0 %3221
        %3223 = vrot.lane.b32.xlu0 %v3218, 126
        %v3224 = vpop.permute.xlu0 %3223
        %v3225 = vrot.slane %v3222, 4
        %v3226 = vrot.slane %v3224, 4
        %v3227 = vsel %vm3128, %v3225, %v3226
        %v3228 = vsel %vm3158, %v3222, %v3227
        %v3231 = vadd.f32 %v3204, %v3228
        %v3232 = vadd.f32 %v3205, %v3224
        %3233 = vset.pattern.permute.xlu0 6
        %3234 = vperm.xlu0 %3233, %v3088
        %v3235 = vpop.permute.xlu0 %3234
        %v3237 = vunpack.c.l.s4 839922192
        %v3238 = vunpack.c.0.s8 %v3237
        %v3239 = vlaneseq
        %v3240 = vshrl.u32 %v3239, 7
        %v3241 = vsub.s32 %v3238, %v3240
        %v3242 = vrot.slane %v3235, %v3241
        %v3244 = vmul.f32 %v3089, %v3242
        %v3245 = vmul.f32 %v3090, %v3242
        %v3246 = vadd.f32 %v3244, 0.0
        %v3247 = vadd.f32 %v3245, 0.0
        %3248 = vset.pattern.permute.xlu0 7
        %3249 = vperm.xlu0 %3248, %v3088
        %v3250 = vpop.permute.xlu0 %3249
        %v3252 = vunpack.c.l.s4 839922192
        %v3253 = vunpack.c.0.s8 %v3252
        %v3254 = vlaneseq
        %v3255 = vshrl.u32 %v3254, 7
        %v3256 = vsub.s32 %v3253, %v3255
        %v3257 = vrot.slane %v3250, %v3256
        %v3259 = vmul.f32 %v3089, %v3257
        %v3260 = vmul.f32 %v3090, %v3257
        %3263 = vrot.lane.b32.xlu0 %v3259, 127
        %v3264 = vpop.permute.xlu0 %3263
        %3265 = vrot.lane.b32.xlu0 %v3260, 127
        %v3266 = vpop.permute.xlu0 %3265
        %v3267 = vrot.slane %v3264, 4
        %v3268 = vrot.slane %v3266, 4
        %v3269 = vsel %vm3128, %v3267, %v3268
        %v3270 = vsel %vm3130, %v3264, %v3269
        %v3273 = vadd.f32 %v3246, %v3270
        %v3274 = vadd.f32 %v3247, %v3266
        %3275 = vset.pattern.permute.xlu0 8
        %3276 = vperm.xlu0 %3275, %v3088
        %v3277 = vpop.permute.xlu0 %3276
        %v3279 = vunpack.c.l.s4 839922192
        %v3280 = vunpack.c.0.s8 %v3279
        %v3281 = vlaneseq
        %v3282 = vshrl.u32 %v3281, 7
        %v3283 = vsub.s32 %v3280, %v3282
        %v3284 = vrot.slane %v3277, %v3283
        %v3286 = vmul.f32 %v3089, %v3284
        %v3287 = vmul.f32 %v3090, %v3284
        %3290 = vrot.lane.b32.xlu0 %v3286, 126
        %v3291 = vpop.permute.xlu0 %3290
        %3292 = vrot.lane.b32.xlu0 %v3287, 126
        %v3293 = vpop.permute.xlu0 %3292
        %v3294 = vrot.slane %v3291, 4
        %v3295 = vrot.slane %v3293, 4
        %v3296 = vsel %vm3128, %v3294, %v3295
        %v3297 = vsel %vm3158, %v3291, %v3296
        %v3300 = vadd.f32 %v3273, %v3297
        %v3301 = vadd.f32 %v3274, %v3293
        %3304 = vrot.lane.b32.xlu0 %v3231, 110
        %v3305 = vpop.permute.xlu0 %3304
        %3306 = vrot.lane.b32.xlu0 %v3232, 110
        %v3307 = vpop.permute.xlu0 %3306
        %v3308 = vrot.slane %v3305, 4
        %v3309 = vrot.slane %v3307, 4
        %v3310 = vsel %vm3128, %v3308, %v3309
        %vm3311 = vcmask 900096
        %v3312 = vsel %vm3311, %v3305, %v3310
        %v3315 = vadd.f32 %v3162, %v3312
        %v3316 = vadd.f32 %v3163, %v3307
        %3319 = vrot.lane.b32.xlu0 %v3300, 92
        %v3320 = vpop.permute.xlu0 %3319
        %3321 = vrot.lane.b32.xlu0 %v3301, 92
        %v3322 = vpop.permute.xlu0 %3321
        %v3323 = vrot.slane %v3320, 4
        %v3324 = vrot.slane %v3322, 4
        %v3325 = vsel %vm3128, %v3323, %v3324
        %vm3326 = vcmask 752640
        %v3327 = vsel %vm3326, %v3320, %v3325
        %v3330 = vadd.f32 %v3315, %v3327
        %v3331 = vadd.f32 %v3316, %v3322
        %v3332 = vld [vmem:[%s5] sm:$0xf]
        %3334 = vset.pattern.permute.xlu0 0
        %3335 = vperm.xlu0 %3334, %v3332
        %v3336 = vpop.permute.xlu0 %3335
        %v3338 = vunpack.c.l.s4 839922192
        %v3339 = vunpack.c.0.s8 %v3338
        %v3340 = vlaneseq
        %v3341 = vshrl.u32 %v3340, 7
        %v3342 = vsub.s32 %v3339, %v3341
        %v3343 = vrot.slane %v3336, %v3342
        %v3345 = vadd.f32 %v3330, %v3343
        %v3346 = vadd.f32 %v3331, %v3343
        %v3347 = vld [vmem:[%s6] sm:$0xff]
        %v3348 = vld [vmem:[%s6 + $0x8] sm:$0xff]
        %v3349 = vld [vmem:[%s7] sm:$0xff]
        %v3350 = vld [vmem:[%s7 + $0x8] sm:$0xff]
        %3352 = vset.pattern.permute.xlu0 0
        %3353 = vperm.xlu0 %3352, %v3349
        %v3354 = vpop.permute.xlu0 %3353
        %3357 = vset.pattern.permute.xlu0 0
        %3358 = vperm.xlu0 %3357, %v3350
        %v3359 = vpop.permute.xlu0 %3358
        %v3363 = vcombine.high %v3345, %v3345
        %vm3364 = vcmask 31744
        %v3366 = vsel %vm3364, %v3347, 0
        %v3369 = vsel %vm3364, %v3348, 0
        %v3371 = vsel %vm3128, %v3345, 0
        %v3373 = vsel %vm3128, %v3363, 0
        %v3375 = vsel %vm3128, %v3346, 0
        %v3377 = vand.u32 %v3373, 4294901760
        %3378 = vmatprep.subr.mxu0 %v3377
        %v3379 = vand.u32 %v3371, 4294901760
        %3380 = vmatpush1.msra.mxu0 %v3379
        %3381 = vmatprep.subr.mxu0 0.0
        %3382 = vmatpush1.msra.mxu0 0.0
        %3383 = vmatprep.subr.mxu0 0.0
        %3384 = vmatpush1.msra.mxu0 0.0
        %3385 = vmatprep.subr.mxu0 0.0
        %3386 = vmatpush1.msra.mxu0 0.0
        %3387 = vmatprep.subr.mxu0 0.0
        %3388 = vmatpush1.msra.mxu0 0.0
        %3389 = vmatprep.subr.mxu0 0.0
        %3390 = vmatpush1.msra.mxu0 0.0
        %3391 = vmatprep.subr.mxu0 0.0
        %3392 = vmatpush1.msra.mxu0 0.0
        %3393 = vmatprep.subr.mxu0 0.0
        %3394 = vmatpush1.msra.mxu0 0.0
        %3395 = vmatprep.subr.mxu0 0.0
        %3396 = vmatpush1.msra.mxu0 0.0
        %3397 = vmatprep.subr.mxu0 0.0
        %3398 = vmatpush1.msra.mxu0 0.0
        %3399 = vmatprep.subr.mxu0 0.0
        %3400 = vmatpush1.msra.mxu0 0.0
        %3401 = vmatprep.subr.mxu0 0.0
        %3402 = vmatpush1.msra.mxu0 0.0
        %3403 = vmatprep.subr.mxu0 0.0
        %3404 = vmatpush1.msra.mxu0 0.0
        %3405 = vmatprep.subr.mxu0 0.0
        %3406 = vmatpush1.msra.mxu0 0.0
        %3407 = vmatprep.subr.mxu0 0.0
        %3408 = vmatpush1.msra.mxu0 0.0
        %3409 = vmatprep.subr.mxu0 0.0
        %3410 = vmatpush1.msra.mxu0 0.0
        %3411 = vmatprep.subr.mxu0 0.0
        %3412 = vmatpush1.msra.mxu0 0.0
        %3413 = vmatprep.subr.mxu0 0.0
        %3414 = vmatpush1.msra.mxu0 0.0
        %3415 = vmatprep.subr.mxu0 0.0
        %3416 = vmatpush1.msra.mxu0 0.0
        %3417 = vmatprep.subr.mxu0 0.0
        %3418 = vmatpush1.msra.mxu0 0.0
        %3419 = vmatprep.subr.mxu0 0.0
        %3420 = vmatpush1.msra.mxu0 0.0
        %3421 = vmatprep.subr.mxu0 0.0
        %3422 = vmatpush1.msra.mxu0 0.0
        %3423 = vmatprep.subr.mxu0 0.0
        %3424 = vmatpush1.msra.mxu0 0.0
        %3425 = vmatprep.subr.mxu0 0.0
        %3426 = vmatpush1.msra.mxu0 0.0
        %3427 = vmatprep.subr.mxu0 0.0
        %3428 = vmatpush1.msra.mxu0 0.0
        %3429 = vmatprep.subr.mxu0 0.0
        %3430 = vmatpush1.msra.mxu0 0.0
        %3431 = vmatprep.subr.mxu0 0.0
        %3432 = vmatpush1.msra.mxu0 0.0
        %3433 = vmatprep.subr.mxu0 0.0
        %3434 = vmatpush1.msra.mxu0 0.0
        %3435 = vmatprep.subr.mxu0 0.0
        %3436 = vmatpush1.msra.mxu0 0.0
        %3437 = vmatprep.subr.mxu0 0.0
        %3438 = vmatpush1.msra.mxu0 0.0
        %3439 = vmatprep.subr.mxu0 0.0
        %3440 = vmatpush1.msra.mxu0 0.0
        %3441 = vmatprep.subr.mxu0 0.0
        %3442 = vmatpush1.msra.mxu0 0.0
        %3443 = vmatprep.mubr.f32.mxu0 0.0
        %v3444 = vand.u32 %v3366, 4294901760
        %v3445 = vsub.f32 %v3366, %v3444
        %v3446 = vand.u32 %v3445, 4294901760
        %v3447 = vsub.f32 %v3445, %v3446
        %v3448 = vand.u32 %v3447, 4294901760
        %3449 = vmatmul.mubr.f32.gmra.mrb[0].mxu0 %v3448
        %v3450 = vpop.f32.mrb[0].mxu0
        %v3451 = vadd.f32 %v3354, %v3450
        %v3452 = vpop.f32.mrb[0].mxu0
        %v3453 = vadd.f32 %v3354, %v3452
        %3454 = vmatprep.mubr.f32.mxu0 0.0
        %v3455 = vand.u32 %v3369, 4294901760
        %v3456 = vsub.f32 %v3369, %v3455
        %v3457 = vand.u32 %v3456, 4294901760
        %v3458 = vsub.f32 %v3456, %v3457
        %v3459 = vand.u32 %v3458, 4294901760
        %3460 = vmatmul.mubr.f32.gmra.mrb[0].mxu0 %v3459
        %v3461 = vpop.f32.mrb[0].mxu0
        %v3462 = vadd.f32 %v3359, %v3461
        %v3463 = vpop.f32.mrb[0].mxu0
        %v3464 = vadd.f32 %v3359, %v3463
        %3465 = vdwg.mxu0
        %v3466 = vand.u32 %v3373, 4294901760
        %v3467 = vsub.f32 %v3373, %v3466
        %v3468 = vand.u32 %v3467, 4294901760
        %v3469 = vsub.f32 %v3467, %v3468
        %v3470 = vand.u32 %v3469, 4294901760
        %3471 = vmatprep.subr.mxu0 %v3470
        %v3472 = vand.u32 %v3371, 4294901760
        %v3473 = vsub.f32 %v3371, %v3472
        %v3474 = vand.u32 %v3473, 4294901760
        %v3475 = vsub.f32 %v3473, %v3474
        %v3476 = vand.u32 %v3475, 4294901760
        %3477 = vmatpush1.msra.mxu0 %v3476
        %3478 = vmatprep.subr.mxu0 0.0
        %3479 = vmatpush1.msra.mxu0 0.0
        %3480 = vmatprep.subr.mxu0 0.0
        %3481 = vmatpush1.msra.mxu0 0.0
        %3482 = vmatprep.subr.mxu0 0.0
        %3483 = vmatpush1.msra.mxu0 0.0
        %3484 = vmatprep.subr.mxu0 0.0
        %3485 = vmatpush1.msra.mxu0 0.0
        %3486 = vmatprep.subr.mxu0 0.0
        %3487 = vmatpush1.msra.mxu0 0.0
        %3488 = vmatprep.subr.mxu0 0.0
        %3489 = vmatpush1.msra.mxu0 0.0
        %3490 = vmatprep.subr.mxu0 0.0
        %3491 = vmatpush1.msra.mxu0 0.0
        %3492 = vmatprep.subr.mxu0 0.0
        %3493 = vmatpush1.msra.mxu0 0.0
        %3494 = vmatprep.subr.mxu0 0.0
        %3495 = vmatpush1.msra.mxu0 0.0
        %3496 = vmatprep.subr.mxu0 0.0
        %3497 = vmatpush1.msra.mxu0 0.0
        %3498 = vmatprep.subr.mxu0 0.0
        %3499 = vmatpush1.msra.mxu0 0.0
        %3500 = vmatprep.subr.mxu0 0.0
        %3501 = vmatpush1.msra.mxu0 0.0
        %3502 = vmatprep.subr.mxu0 0.0
        %3503 = vmatpush1.msra.mxu0 0.0
        %3504 = vmatprep.subr.mxu0 0.0
        %3505 = vmatpush1.msra.mxu0 0.0
        %3506 = vmatprep.subr.mxu0 0.0
        %3507 = vmatpush1.msra.mxu0 0.0
        %3508 = vmatprep.subr.mxu0 0.0
        %3509 = vmatpush1.msra.mxu0 0.0
        %3510 = vmatprep.subr.mxu0 0.0
        %3511 = vmatpush1.msra.mxu0 0.0
        %3512 = vmatprep.subr.mxu0 0.0
        %3513 = vmatpush1.msra.mxu0 0.0
        %3514 = vmatprep.subr.mxu0 0.0
        %3515 = vmatpush1.msra.mxu0 0.0
        %3516 = vmatprep.subr.mxu0 0.0
        %3517 = vmatpush1.msra.mxu0 0.0
        %3518 = vmatprep.subr.mxu0 0.0
        %3519 = vmatpush1.msra.mxu0 0.0
        %3520 = vmatprep.subr.mxu0 0.0
        %3521 = vmatpush1.msra.mxu0 0.0
        %3522 = vmatprep.subr.mxu0 0.0
        %3523 = vmatpush1.msra.mxu0 0.0
        %3524 = vmatprep.subr.mxu0 0.0
        %3525 = vmatpush1.msra.mxu0 0.0
        %3526 = vmatprep.subr.mxu0 0.0
        %3527 = vmatpush1.msra.mxu0 0.0
        %3528 = vmatprep.subr.mxu0 0.0
        %3529 = vmatpush1.msra.mxu0 0.0
        %3530 = vmatprep.subr.mxu0 0.0
        %3531 = vmatpush1.msra.mxu0 0.0
        %3532 = vmatprep.subr.mxu0 0.0
        %3533 = vmatpush1.msra.mxu0 0.0
        %3534 = vmatprep.subr.mxu0 0.0
        %3535 = vmatpush1.msra.mxu0 0.0
        %3536 = vmatprep.subr.mxu0 0.0
        %3537 = vmatpush1.msra.mxu0 0.0
        %3538 = vmatprep.subr.mxu0 0.0
        %3539 = vmatpush1.msra.mxu0 0.0
        %3540 = vmatprep.mubr.f32.mxu0 0.0
        %v3541 = vand.u32 %v3366, 4294901760
        %3542 = vmatmul.mubr.f32.gmra.mrb[0].mxu0 %v3541
        %v3543 = vpop.f32.mrb[0].mxu0
        %v3544 = vadd.f32 %v3451, %v3543
        %v3545 = vpop.f32.mrb[0].mxu0
        %v3546 = vadd.f32 %v3453, %v3545
        %3547 = vmatprep.mubr.f32.mxu0 0.0
        %v3548 = vand.u32 %v3369, 4294901760
        %3549 = vmatmul.mubr.f32.gmra.mrb[0].mxu0 %v3548
        %v3550 = vpop.f32.mrb[0].mxu0
        %v3551 = vadd.f32 %v3462, %v3550
        %v3552 = vpop.f32.mrb[0].mxu0
        %v3553 = vadd.f32 %v3464, %v3552
        %3554 = vdwg.mxu0
        %v3555 = vand.u32 %v3373, 4294901760
        %v3556 = vsub.f32 %v3373, %v3555
        %3557 = vmatprep.subr.mxu0 %v3556
        %v3558 = vand.u32 %v3371, 4294901760
        %v3559 = vsub.f32 %v3371, %v3558
        %3560 = vmatpush1.msra.mxu0 %v3559
        %3561 = vmatprep.subr.mxu0 0.0
        %3562 = vmatpush1.msra.mxu0 0.0
        %3563 = vmatprep.subr.mxu0 0.0
        %3564 = vmatpush1.msra.mxu0 0.0
        %3565 = vmatprep.subr.mxu0 0.0
        %3566 = vmatpush1.msra.mxu0 0.0
        %3567 = vmatprep.subr.mxu0 0.0
        %3568 = vmatpush1.msra.mxu0 0.0
        %3569 = vmatprep.subr.mxu0 0.0
        %3570 = vmatpush1.msra.mxu0 0.0
        %3571 = vmatprep.subr.mxu0 0.0
        %3572 = vmatpush1.msra.mxu0 0.0
        %3573 = vmatprep.subr.mxu0 0.0
        %3574 = vmatpush1.msra.mxu0 0.0
        %3575 = vmatprep.subr.mxu0 0.0
        %3576 = vmatpush1.msra.mxu0 0.0
        %3577 = vmatprep.subr.mxu0 0.0
        %3578 = vmatpush1.msra.mxu0 0.0
        %3579 = vmatprep.subr.mxu0 0.0
        %3580 = vmatpush1.msra.mxu0 0.0
        %3581 = vmatprep.subr.mxu0 0.0
        %3582 = vmatpush1.msra.mxu0 0.0
        %3583 = vmatprep.subr.mxu0 0.0
        %3584 = vmatpush1.msra.mxu0 0.0
        %3585 = vmatprep.subr.mxu0 0.0
        %3586 = vmatpush1.msra.mxu0 0.0
        %3587 = vmatprep.subr.mxu0 0.0
        %3588 = vmatpush1.msra.mxu0 0.0
        %3589 = vmatprep.subr.mxu0 0.0
        %3590 = vmatpush1.msra.mxu0 0.0
        %3591 = vmatprep.subr.mxu0 0.0
        %3592 = vmatpush1.msra.mxu0 0.0
        %3593 = vmatprep.subr.mxu0 0.0
        %3594 = vmatpush1.msra.mxu0 0.0
        %3595 = vmatprep.subr.mxu0 0.0
        %3596 = vmatpush1.msra.mxu0 0.0
        %3597 = vmatprep.subr.mxu0 0.0
        %3598 = vmatpush1.msra.mxu0 0.0
        %3599 = vmatprep.subr.mxu0 0.0
        %3600 = vmatpush1.msra.mxu0 0.0
        %3601 = vmatprep.subr.mxu0 0.0
        %3602 = vmatpush1.msra.mxu0 0.0
        %3603 = vmatprep.subr.mxu0 0.0
        %3604 = vmatpush1.msra.mxu0 0.0
        %3605 = vmatprep.subr.mxu0 0.0
        %3606 = vmatpush1.msra.mxu0 0.0
        %3607 = vmatprep.subr.mxu0 0.0
        %3608 = vmatpush1.msra.mxu0 0.0
        %3609 = vmatprep.subr.mxu0 0.0
        %3610 = vmatpush1.msra.mxu0 0.0
        %3611 = vmatprep.subr.mxu0 0.0
        %3612 = vmatpush1.msra.mxu0 0.0
        %3613 = vmatprep.subr.mxu0 0.0
        %3614 = vmatpush1.msra.mxu0 0.0
        %3615 = vmatprep.subr.mxu0 0.0
        %3616 = vmatpush1.msra.mxu0 0.0
        %3617 = vmatprep.subr.mxu0 0.0
        %3618 = vmatpush1.msra.mxu0 0.0
        %3619 = vmatprep.subr.mxu0 0.0
        %3620 = vmatpush1.msra.mxu0 0.0
        %3621 = vmatprep.subr.mxu0 0.0
        %3622 = vmatpush1.msra.mxu0 0.0
        %3623 = vmatprep.mubr.f32.mxu0 0.0
        %v3624 = vand.u32 %v3366, 4294901760
        %v3625 = vsub.f32 %v3366, %v3624
        %3626 = vmatmul.mubr.f32.gmra.mrb[0].mxu0 %v3625
        %v3627 = vpop.f32.mrb[0].mxu0
        %v3628 = vadd.f32 %v3544, %v3627
        %v3629 = vpop.f32.mrb[0].mxu0
        %v3630 = vadd.f32 %v3546, %v3629
        %3631 = vmatprep.mubr.f32.mxu0 0.0
        %v3632 = vand.u32 %v3369, 4294901760
        %v3633 = vsub.f32 %v3369, %v3632
        %3634 = vmatmul.mubr.f32.gmra.mrb[0].mxu0 %v3633
        %v3635 = vpop.f32.mrb[0].mxu0
        %v3636 = vadd.f32 %v3551, %v3635
        %v3637 = vpop.f32.mrb[0].mxu0
        %v3638 = vadd.f32 %v3553, %v3637
        %3639 = vdwg.mxu0
        %v3640 = vand.u32 %v3373, 4294901760
        %3641 = vmatprep.subr.mxu0 %v3640
        %v3642 = vand.u32 %v3371, 4294901760
        %3643 = vmatpush1.msra.mxu0 %v3642
        %3644 = vmatprep.subr.mxu0 0.0
        %3645 = vmatpush1.msra.mxu0 0.0
        %3646 = vmatprep.subr.mxu0 0.0
        %3647 = vmatpush1.msra.mxu0 0.0
        %3648 = vmatprep.subr.mxu0 0.0
        %3649 = vmatpush1.msra.mxu0 0.0
        %3650 = vmatprep.subr.mxu0 0.0
        %3651 = vmatpush1.msra.mxu0 0.0
        %3652 = vmatprep.subr.mxu0 0.0
        %3653 = vmatpush1.msra.mxu0 0.0
        %3654 = vmatprep.subr.mxu0 0.0
        %3655 = vmatpush1.msra.mxu0 0.0
        %3656 = vmatprep.subr.mxu0 0.0
        %3657 = vmatpush1.msra.mxu0 0.0
        %3658 = vmatprep.subr.mxu0 0.0
        %3659 = vmatpush1.msra.mxu0 0.0
        %3660 = vmatprep.subr.mxu0 0.0
        %3661 = vmatpush1.msra.mxu0 0.0
        %3662 = vmatprep.subr.mxu0 0.0
        %3663 = vmatpush1.msra.mxu0 0.0
        %3664 = vmatprep.subr.mxu0 0.0
        %3665 = vmatpush1.msra.mxu0 0.0
        %3666 = vmatprep.subr.mxu0 0.0
        %3667 = vmatpush1.msra.mxu0 0.0
        %3668 = vmatprep.subr.mxu0 0.0
        %3669 = vmatpush1.msra.mxu0 0.0
        %3670 = vmatprep.subr.mxu0 0.0
        %3671 = vmatpush1.msra.mxu0 0.0
        %3672 = vmatprep.subr.mxu0 0.0
        %3673 = vmatpush1.msra.mxu0 0.0
        %3674 = vmatprep.subr.mxu0 0.0
        %3675 = vmatpush1.msra.mxu0 0.0
        %3676 = vmatprep.subr.mxu0 0.0
        %3677 = vmatpush1.msra.mxu0 0.0
        %3678 = vmatprep.subr.mxu0 0.0
        %3679 = vmatpush1.msra.mxu0 0.0
        %3680 = vmatprep.subr.mxu0 0.0
        %3681 = vmatpush1.msra.mxu0 0.0
        %3682 = vmatprep.subr.mxu0 0.0
        %3683 = vmatpush1.msra.mxu0 0.0
        %3684 = vmatprep.subr.mxu0 0.0
        %3685 = vmatpush1.msra.mxu0 0.0
        %3686 = vmatprep.subr.mxu0 0.0
        %3687 = vmatpush1.msra.mxu0 0.0
        %3688 = vmatprep.subr.mxu0 0.0
        %3689 = vmatpush1.msra.mxu0 0.0
        %3690 = vmatprep.subr.mxu0 0.0
        %3691 = vmatpush1.msra.mxu0 0.0
        %3692 = vmatprep.subr.mxu0 0.0
        %3693 = vmatpush1.msra.mxu0 0.0
        %3694 = vmatprep.subr.mxu0 0.0
        %3695 = vmatpush1.msra.mxu0 0.0
        %3696 = vmatprep.subr.mxu0 0.0
        %3697 = vmatpush1.msra.mxu0 0.0
        %3698 = vmatprep.subr.mxu0 0.0
        %3699 = vmatpush1.msra.mxu0 0.0
        %3700 = vmatprep.subr.mxu0 0.0
        %3701 = vmatpush1.msra.mxu0 0.0
        %3702 = vmatprep.subr.mxu0 0.0
        %3703 = vmatpush1.msra.mxu0 0.0
        %3704 = vmatprep.subr.mxu0 0.0
        %3705 = vmatpush1.msra.mxu0 0.0
        %3706 = vmatprep.mubr.f32.mxu0 0.0
        %v3707 = vand.u32 %v3366, 4294901760
        %v3708 = vsub.f32 %v3366, %v3707
        %v3709 = vand.u32 %v3708, 4294901760
        %3710 = vmatmul.mubr.f32.gmra.mrb[0].mxu0 %v3709
        %v3711 = vpop.f32.mrb[0].mxu0
        %v3712 = vadd.f32 %v3628, %v3711
        %v3713 = vpop.f32.mrb[0].mxu0
        %v3714 = vadd.f32 %v3630, %v3713
        %3715 = vmatprep.mubr.f32.mxu0 0.0
        %v3716 = vand.u32 %v3369, 4294901760
        %v3717 = vsub.f32 %v3369, %v3716
        %v3718 = vand.u32 %v3717, 4294901760
        %3719 = vmatmul.mubr.f32.gmra.mrb[0].mxu0 %v3718
        %v3720 = vpop.f32.mrb[0].mxu0
        %v3721 = vadd.f32 %v3636, %v3720
        %v3722 = vpop.f32.mrb[0].mxu0
        %v3723 = vadd.f32 %v3638, %v3722
        %3724 = vdwg.mxu0
        %v3725 = vand.u32 %v3373, 4294901760
        %v3726 = vsub.f32 %v3373, %v3725
        %v3727 = vand.u32 %v3726, 4294901760
        %3728 = vmatprep.subr.mxu0 %v3727
        %v3729 = vand.u32 %v3371, 4294901760
        %v3730 = vsub.f32 %v3371, %v3729
        %v3731 = vand.u32 %v3730, 4294901760
        %3732 = vmatpush1.msra.mxu0 %v3731
        %3733 = vmatprep.subr.mxu0 0.0
        %3734 = vmatpush1.msra.mxu0 0.0
        %3735 = vmatprep.subr.mxu0 0.0
        %3736 = vmatpush1.msra.mxu0 0.0
        %3737 = vmatprep.subr.mxu0 0.0
        %3738 = vmatpush1.msra.mxu0 0.0
        %3739 = vmatprep.subr.mxu0 0.0
        %3740 = vmatpush1.msra.mxu0 0.0
        %3741 = vmatprep.subr.mxu0 0.0
        %3742 = vmatpush1.msra.mxu0 0.0
        %3743 = vmatprep.subr.mxu0 0.0
        %3744 = vmatpush1.msra.mxu0 0.0
        %3745 = vmatprep.subr.mxu0 0.0
        %3746 = vmatpush1.msra.mxu0 0.0
        %3747 = vmatprep.subr.mxu0 0.0
        %3748 = vmatpush1.msra.mxu0 0.0
        %3749 = vmatprep.subr.mxu0 0.0
        %3750 = vmatpush1.msra.mxu0 0.0
        %3751 = vmatprep.subr.mxu0 0.0
        %3752 = vmatpush1.msra.mxu0 0.0
        %3753 = vmatprep.subr.mxu0 0.0
        %3754 = vmatpush1.msra.mxu0 0.0
        %3755 = vmatprep.subr.mxu0 0.0
        %3756 = vmatpush1.msra.mxu0 0.0
        %3757 = vmatprep.subr.mxu0 0.0
        %3758 = vmatpush1.msra.mxu0 0.0
        %3759 = vmatprep.subr.mxu0 0.0
        %3760 = vmatpush1.msra.mxu0 0.0
        %3761 = vmatprep.subr.mxu0 0.0
        %3762 = vmatpush1.msra.mxu0 0.0
        %3763 = vmatprep.subr.mxu0 0.0
        %3764 = vmatpush1.msra.mxu0 0.0
        %3765 = vmatprep.subr.mxu0 0.0
        %3766 = vmatpush1.msra.mxu0 0.0
        %3767 = vmatprep.subr.mxu0 0.0
        %3768 = vmatpush1.msra.mxu0 0.0
        %3769 = vmatprep.subr.mxu0 0.0
        %3770 = vmatpush1.msra.mxu0 0.0
        %3771 = vmatprep.subr.mxu0 0.0
        %3772 = vmatpush1.msra.mxu0 0.0
        %3773 = vmatprep.subr.mxu0 0.0
        %3774 = vmatpush1.msra.mxu0 0.0
        %3775 = vmatprep.subr.mxu0 0.0
        %3776 = vmatpush1.msra.mxu0 0.0
        %3777 = vmatprep.subr.mxu0 0.0
        %3778 = vmatpush1.msra.mxu0 0.0
        %3779 = vmatprep.subr.mxu0 0.0
        %3780 = vmatpush1.msra.mxu0 0.0
        %3781 = vmatprep.subr.mxu0 0.0
        %3782 = vmatpush1.msra.mxu0 0.0
        %3783 = vmatprep.subr.mxu0 0.0
        %3784 = vmatpush1.msra.mxu0 0.0
        %3785 = vmatprep.subr.mxu0 0.0
        %3786 = vmatpush1.msra.mxu0 0.0
        %3787 = vmatprep.subr.mxu0 0.0
        %3788 = vmatpush1.msra.mxu0 0.0
        %3789 = vmatprep.subr.mxu0 0.0
        %3790 = vmatpush1.msra.mxu0 0.0
        %3791 = vmatprep.subr.mxu0 0.0
        %3792 = vmatpush1.msra.mxu0 0.0
        %3793 = vmatprep.subr.mxu0 0.0
        %3794 = vmatpush1.msra.mxu0 0.0
        %3795 = vmatprep.mubr.f32.mxu0 0.0
        %v3796 = vand.u32 %v3366, 4294901760
        %3797 = vmatmul.mubr.f32.gmra.mrb[0].mxu0 %v3796
        %v3798 = vpop.f32.mrb[0].mxu0
        %v3799 = vadd.f32 %v3712, %v3798
        %v3800 = vpop.f32.mrb[0].mxu0
        %v3801 = vadd.f32 %v3714, %v3800
        %3802 = vmatprep.mubr.f32.mxu0 0.0
        %v3803 = vand.u32 %v3369, 4294901760
        %3804 = vmatmul.mubr.f32.gmra.mrb[0].mxu0 %v3803
        %v3805 = vpop.f32.mrb[0].mxu0
        %v3806 = vadd.f32 %v3721, %v3805
        %v3807 = vpop.f32.mrb[0].mxu0
        %v3808 = vadd.f32 %v3723, %v3807
        %3809 = vdwg.mxu0
        %v3810 = vand.u32 %v3373, 4294901760
        %3811 = vmatprep.subr.mxu0 %v3810
        %v3812 = vand.u32 %v3371, 4294901760
        %3813 = vmatpush1.msra.mxu0 %v3812
        %3814 = vmatprep.subr.mxu0 0.0
        %3815 = vmatpush1.msra.mxu0 0.0
        %3816 = vmatprep.subr.mxu0 0.0
        %3817 = vmatpush1.msra.mxu0 0.0
        %3818 = vmatprep.subr.mxu0 0.0
        %3819 = vmatpush1.msra.mxu0 0.0
        %3820 = vmatprep.subr.mxu0 0.0
        %3821 = vmatpush1.msra.mxu0 0.0
        %3822 = vmatprep.subr.mxu0 0.0
        %3823 = vmatpush1.msra.mxu0 0.0
        %3824 = vmatprep.subr.mxu0 0.0
        %3825 = vmatpush1.msra.mxu0 0.0
        %3826 = vmatprep.subr.mxu0 0.0
        %3827 = vmatpush1.msra.mxu0 0.0
        %3828 = vmatprep.subr.mxu0 0.0
        %3829 = vmatpush1.msra.mxu0 0.0
        %3830 = vmatprep.subr.mxu0 0.0
        %3831 = vmatpush1.msra.mxu0 0.0
        %3832 = vmatprep.subr.mxu0 0.0
        %3833 = vmatpush1.msra.mxu0 0.0
        %3834 = vmatprep.subr.mxu0 0.0
        %3835 = vmatpush1.msra.mxu0 0.0
        %3836 = vmatprep.subr.mxu0 0.0
        %3837 = vmatpush1.msra.mxu0 0.0
        %3838 = vmatprep.subr.mxu0 0.0
        %3839 = vmatpush1.msra.mxu0 0.0
        %3840 = vmatprep.subr.mxu0 0.0
        %3841 = vmatpush1.msra.mxu0 0.0
        %3842 = vmatprep.subr.mxu0 0.0
        %3843 = vmatpush1.msra.mxu0 0.0
        %3844 = vmatprep.subr.mxu0 0.0
        %3845 = vmatpush1.msra.mxu0 0.0
        %3846 = vmatprep.subr.mxu0 0.0
        %3847 = vmatpush1.msra.mxu0 0.0
        %3848 = vmatprep.subr.mxu0 0.0
        %3849 = vmatpush1.msra.mxu0 0.0
        %3850 = vmatprep.subr.mxu0 0.0
        %3851 = vmatpush1.msra.mxu0 0.0
        %3852 = vmatprep.subr.mxu0 0.0
        %3853 = vmatpush1.msra.mxu0 0.0
        %3854 = vmatprep.subr.mxu0 0.0
        %3855 = vmatpush1.msra.mxu0 0.0
        %3856 = vmatprep.subr.mxu0 0.0
        %3857 = vmatpush1.msra.mxu0 0.0
        %3858 = vmatprep.subr.mxu0 0.0
        %3859 = vmatpush1.msra.mxu0 0.0
        %3860 = vmatprep.subr.mxu0 0.0
        %3861 = vmatpush1.msra.mxu0 0.0
        %3862 = vmatprep.subr.mxu0 0.0
        %3863 = vmatpush1.msra.mxu0 0.0
        %3864 = vmatprep.subr.mxu0 0.0
        %3865 = vmatpush1.msra.mxu0 0.0
        %3866 = vmatprep.subr.mxu0 0.0
        %3867 = vmatpush1.msra.mxu0 0.0
        %3868 = vmatprep.subr.mxu0 0.0
        %3869 = vmatpush1.msra.mxu0 0.0
        %3870 = vmatprep.subr.mxu0 0.0
        %3871 = vmatpush1.msra.mxu0 0.0
        %3872 = vmatprep.subr.mxu0 0.0
        %3873 = vmatpush1.msra.mxu0 0.0
        %3874 = vmatprep.subr.mxu0 0.0
        %3875 = vmatpush1.msra.mxu0 0.0
        %3876 = vmatprep.mubr.f32.mxu0 0.0
        %v3877 = vand.u32 %v3366, 4294901760
        %3878 = vmatmul.mubr.f32.gmra.mrb[0].mxu0 %v3877
        %v3879 = vpop.f32.mrb[0].mxu0
        %v3880 = vadd.f32 %v3799, %v3879
        %v3881 = vpop.f32.mrb[0].mxu0
        %v3882 = vadd.f32 %v3801, %v3881
        %3883 = vmatprep.mubr.f32.mxu0 0.0
        %v3884 = vand.u32 %v3369, 4294901760
        %3885 = vmatmul.mubr.f32.gmra.mrb[0].mxu0 %v3884
        %v3886 = vpop.f32.mrb[0].mxu0
        %v3887 = vadd.f32 %v3806, %v3886
        %v3888 = vpop.f32.mrb[0].mxu0
        %v3889 = vadd.f32 %v3808, %v3888
        %3890 = vdwg.mxu0
        %3891 = vmatprep.subr.mxu0 0.0
        %v3892 = vand.u32 %v3375, 4294901760
        %3893 = vmatpush1.msra.mxu0 %v3892
        %3894 = vmatprep.subr.mxu0 0.0
        %3895 = vmatpush1.msra.mxu0 0.0
        %3896 = vmatprep.subr.mxu0 0.0
        %3897 = vmatpush1.msra.mxu0 0.0
        %3898 = vmatprep.subr.mxu0 0.0
        %3899 = vmatpush1.msra.mxu0 0.0
        %3900 = vmatprep.subr.mxu0 0.0
        %3901 = vmatpush1.msra.mxu0 0.0
        %3902 = vmatprep.subr.mxu0 0.0
        %3903 = vmatpush1.msra.mxu0 0.0
        %3904 = vmatprep.subr.mxu0 0.0
        %3905 = vmatpush1.msra.mxu0 0.0
        %3906 = vmatprep.subr.mxu0 0.0
        %3907 = vmatpush1.msra.mxu0 0.0
        %3908 = vmatprep.subr.mxu0 0.0
        %3909 = vmatpush1.msra.mxu0 0.0
        %3910 = vmatprep.subr.mxu0 0.0
        %3911 = vmatpush1.msra.mxu0 0.0
        %3912 = vmatprep.subr.mxu0 0.0
        %3913 = vmatpush1.msra.mxu0 0.0
        %3914 = vmatprep.subr.mxu0 0.0
        %3915 = vmatpush1.msra.mxu0 0.0
        %3916 = vmatprep.subr.mxu0 0.0
        %3917 = vmatpush1.msra.mxu0 0.0
        %3918 = vmatprep.subr.mxu0 0.0
        %3919 = vmatpush1.msra.mxu0 0.0
        %3920 = vmatprep.subr.mxu0 0.0
        %3921 = vmatpush1.msra.mxu0 0.0
        %3922 = vmatprep.subr.mxu0 0.0
        %3923 = vmatpush1.msra.mxu0 0.0
        %3924 = vmatprep.subr.mxu0 0.0
        %3925 = vmatpush1.msra.mxu0 0.0
        %3926 = vmatprep.subr.mxu0 0.0
        %3927 = vmatpush1.msra.mxu0 0.0
        %3928 = vmatprep.subr.mxu0 0.0
        %3929 = vmatpush1.msra.mxu0 0.0
        %3930 = vmatprep.subr.mxu0 0.0
        %3931 = vmatpush1.msra.mxu0 0.0
        %3932 = vmatprep.subr.mxu0 0.0
        %3933 = vmatpush1.msra.mxu0 0.0
        %3934 = vmatprep.subr.mxu0 0.0
        %3935 = vmatpush1.msra.mxu0 0.0
        %3936 = vmatprep.subr.mxu0 0.0
        %3937 = vmatpush1.msra.mxu0 0.0
        %3938 = vmatprep.subr.mxu0 0.0
        %3939 = vmatpush1.msra.mxu0 0.0
        %3940 = vmatprep.subr.mxu0 0.0
        %3941 = vmatpush1.msra.mxu0 0.0
        %3942 = vmatprep.subr.mxu0 0.0
        %3943 = vmatpush1.msra.mxu0 0.0
        %3944 = vmatprep.subr.mxu0 0.0
        %3945 = vmatpush1.msra.mxu0 0.0
        %3946 = vmatprep.subr.mxu0 0.0
        %3947 = vmatpush1.msra.mxu0 0.0
        %3948 = vmatprep.subr.mxu0 0.0
        %3949 = vmatpush1.msra.mxu0 0.0
        %3950 = vmatprep.subr.mxu0 0.0
        %3951 = vmatpush1.msra.mxu0 0.0
        %3952 = vmatprep.subr.mxu0 0.0
        %3953 = vmatpush1.msra.mxu0 0.0
        %3954 = vmatprep.subr.mxu0 0.0
        %3955 = vmatpush1.msra.mxu0 0.0
        %3956 = vmatprep.mubr.f32.mxu0 0.0
        %v3957 = vand.u32 %v3366, 4294901760
        %v3958 = vsub.f32 %v3366, %v3957
        %v3959 = vand.u32 %v3958, 4294901760
        %v3960 = vsub.f32 %v3958, %v3959
        %v3961 = vand.u32 %v3960, 4294901760
        %3962 = vmatmul.mubr.f32.gmra.mrb[0].mxu0 %v3961
        %v3963 = vpop.f32.mrb[0].mxu0
        %v3964 = vadd.f32 %v3354, %v3963
        %v3965 = vpop.f32.mrb[0].mxu0
        %3966 = vmatprep.mubr.f32.mxu0 0.0
        %v3967 = vand.u32 %v3369, 4294901760
        %v3968 = vsub.f32 %v3369, %v3967
        %v3969 = vand.u32 %v3968, 4294901760
        %v3970 = vsub.f32 %v3968, %v3969
        %v3971 = vand.u32 %v3970, 4294901760
        %3972 = vmatmul.mubr.f32.gmra.mrb[0].mxu0 %v3971
        %v3973 = vpop.f32.mrb[0].mxu0
        %v3974 = vadd.f32 %v3359, %v3973
        %v3975 = vpop.f32.mrb[0].mxu0
        %3976 = vdwg.mxu0
        %3977 = vmatprep.subr.mxu0 0.0
        %v3978 = vand.u32 %v3375, 4294901760
        %v3979 = vsub.f32 %v3375, %v3978
        %v3980 = vand.u32 %v3979, 4294901760
        %v3981 = vsub.f32 %v3979, %v3980
        %v3982 = vand.u32 %v3981, 4294901760
        %3983 = vmatpush1.msra.mxu0 %v3982
        %3984 = vmatprep.subr.mxu0 0.0
        %3985 = vmatpush1.msra.mxu0 0.0
        %3986 = vmatprep.subr.mxu0 0.0
        %3987 = vmatpush1.msra.mxu0 0.0
        %3988 = vmatprep.subr.mxu0 0.0
        %3989 = vmatpush1.msra.mxu0 0.0
        %3990 = vmatprep.subr.mxu0 0.0
        %3991 = vmatpush1.msra.mxu0 0.0
        %3992 = vmatprep.subr.mxu0 0.0
        %3993 = vmatpush1.msra.mxu0 0.0
        %3994 = vmatprep.subr.mxu0 0.0
        %3995 = vmatpush1.msra.mxu0 0.0
        %3996 = vmatprep.subr.mxu0 0.0
        %3997 = vmatpush1.msra.mxu0 0.0
        %3998 = vmatprep.subr.mxu0 0.0
        %3999 = vmatpush1.msra.mxu0 0.0
        %4000 = vmatprep.subr.mxu0 0.0
        %4001 = vmatpush1.msra.mxu0 0.0
        %4002 = vmatprep.subr.mxu0 0.0
        %4003 = vmatpush1.msra.mxu0 0.0
        %4004 = vmatprep.subr.mxu0 0.0
        %4005 = vmatpush1.msra.mxu0 0.0
        %4006 = vmatprep.subr.mxu0 0.0
        %4007 = vmatpush1.msra.mxu0 0.0
        %4008 = vmatprep.subr.mxu0 0.0
        %4009 = vmatpush1.msra.mxu0 0.0
        %4010 = vmatprep.subr.mxu0 0.0
        %4011 = vmatpush1.msra.mxu0 0.0
        %4012 = vmatprep.subr.mxu0 0.0
        %4013 = vmatpush1.msra.mxu0 0.0
        %4014 = vmatprep.subr.mxu0 0.0
        %4015 = vmatpush1.msra.mxu0 0.0
        %4016 = vmatprep.subr.mxu0 0.0
        %4017 = vmatpush1.msra.mxu0 0.0
        %4018 = vmatprep.subr.mxu0 0.0
        %4019 = vmatpush1.msra.mxu0 0.0
        %4020 = vmatprep.subr.mxu0 0.0
        %4021 = vmatpush1.msra.mxu0 0.0
        %4022 = vmatprep.subr.mxu0 0.0
        %4023 = vmatpush1.msra.mxu0 0.0
        %4024 = vmatprep.subr.mxu0 0.0
        %4025 = vmatpush1.msra.mxu0 0.0
        %4026 = vmatprep.subr.mxu0 0.0
        %4027 = vmatpush1.msra.mxu0 0.0
        %4028 = vmatprep.subr.mxu0 0.0
        %4029 = vmatpush1.msra.mxu0 0.0
        %4030 = vmatprep.subr.mxu0 0.0
        %4031 = vmatpush1.msra.mxu0 0.0
        %4032 = vmatprep.subr.mxu0 0.0
        %4033 = vmatpush1.msra.mxu0 0.0
        %4034 = vmatprep.subr.mxu0 0.0
        %4035 = vmatpush1.msra.mxu0 0.0
        %4036 = vmatprep.subr.mxu0 0.0
        %4037 = vmatpush1.msra.mxu0 0.0
        %4038 = vmatprep.subr.mxu0 0.0
        %4039 = vmatpush1.msra.mxu0 0.0
        %4040 = vmatprep.subr.mxu0 0.0
        %4041 = vmatpush1.msra.mxu0 0.0
        %4042 = vmatprep.subr.mxu0 0.0
        %4043 = vmatpush1.msra.mxu0 0.0
        %4044 = vmatprep.subr.mxu0 0.0
        %4045 = vmatpush1.msra.mxu0 0.0
        %4046 = vmatprep.mubr.f32.mxu0 0.0
        %v4047 = vand.u32 %v3366, 4294901760
        %4048 = vmatmul.mubr.f32.gmra.mrb[0].mxu0 %v4047
        %v4049 = vpop.f32.mrb[0].mxu0
        %v4050 = vadd.f32 %v3964, %v4049
        %v4051 = vpop.f32.mrb[0].mxu0
        %4052 = vmatprep.mubr.f32.mxu0 0.0
        %v4053 = vand.u32 %v3369, 4294901760
        %4054 = vmatmul.mubr.f32.gmra.mrb[0].mxu0 %v4053
        %v4055 = vpop.f32.mrb[0].mxu0
        %v4056 = vadd.f32 %v3974, %v4055
        %v4057 = vpop.f32.mrb[0].mxu0
        %4058 = vdwg.mxu0
        %4059 = vmatprep.subr.mxu0 0.0
        %v4060 = vand.u32 %v3375, 4294901760
        %v4061 = vsub.f32 %v3375, %v4060
        %4062 = vmatpush1.msra.mxu0 %v4061
        %4063 = vmatprep.subr.mxu0 0.0
        %4064 = vmatpush1.msra.mxu0 0.0
        %4065 = vmatprep.subr.mxu0 0.0
        %4066 = vmatpush1.msra.mxu0 0.0
        %4067 = vmatprep.subr.mxu0 0.0
        %4068 = vmatpush1.msra.mxu0 0.0
        %4069 = vmatprep.subr.mxu0 0.0
        %4070 = vmatpush1.msra.mxu0 0.0
        %4071 = vmatprep.subr.mxu0 0.0
        %4072 = vmatpush1.msra.mxu0 0.0
        %4073 = vmatprep.subr.mxu0 0.0
        %4074 = vmatpush1.msra.mxu0 0.0
        %4075 = vmatprep.subr.mxu0 0.0
        %4076 = vmatpush1.msra.mxu0 0.0
        %4077 = vmatprep.subr.mxu0 0.0
        %4078 = vmatpush1.msra.mxu0 0.0
        %4079 = vmatprep.subr.mxu0 0.0
        %4080 = vmatpush1.msra.mxu0 0.0
        %4081 = vmatprep.subr.mxu0 0.0
        %4082 = vmatpush1.msra.mxu0 0.0
        %4083 = vmatprep.subr.mxu0 0.0
        %4084 = vmatpush1.msra.mxu0 0.0
        %4085 = vmatprep.subr.mxu0 0.0
        %4086 = vmatpush1.msra.mxu0 0.0
        %4087 = vmatprep.subr.mxu0 0.0
        %4088 = vmatpush1.msra.mxu0 0.0
        %4089 = vmatprep.subr.mxu0 0.0
        %4090 = vmatpush1.msra.mxu0 0.0
        %4091 = vmatprep.subr.mxu0 0.0
        %4092 = vmatpush1.msra.mxu0 0.0
        %4093 = vmatprep.subr.mxu0 0.0
        %4094 = vmatpush1.msra.mxu0 0.0
        %4095 = vmatprep.subr.mxu0 0.0
        %4096 = vmatpush1.msra.mxu0 0.0
        %4097 = vmatprep.subr.mxu0 0.0
        %4098 = vmatpush1.msra.mxu0 0.0
        %4099 = vmatprep.subr.mxu0 0.0
        %4100 = vmatpush1.msra.mxu0 0.0
        %4101 = vmatprep.subr.mxu0 0.0
        %4102 = vmatpush1.msra.mxu0 0.0
        %4103 = vmatprep.subr.mxu0 0.0
        %4104 = vmatpush1.msra.mxu0 0.0
        %4105 = vmatprep.subr.mxu0 0.0
        %4106 = vmatpush1.msra.mxu0 0.0
        %4107 = vmatprep.subr.mxu0 0.0
        %4108 = vmatpush1.msra.mxu0 0.0
        %4109 = vmatprep.subr.mxu0 0.0
        %4110 = vmatpush1.msra.mxu0 0.0
        %4111 = vmatprep.subr.mxu0 0.0
        %4112 = vmatpush1.msra.mxu0 0.0
        %4113 = vmatprep.subr.mxu0 0.0
        %4114 = vmatpush1.msra.mxu0 0.0
        %4115 = vmatprep.subr.mxu0 0.0
        %4116 = vmatpush1.msra.mxu0 0.0
        %4117 = vmatprep.subr.mxu0 0.0
        %4118 = vmatpush1.msra.mxu0 0.0
        %4119 = vmatprep.subr.mxu0 0.0
        %4120 = vmatpush1.msra.mxu0 0.0
        %4121 = vmatprep.subr.mxu0 0.0
        %4122 = vmatpush1.msra.mxu0 0.0
        %4123 = vmatprep.subr.mxu0 0.0
        %4124 = vmatpush1.msra.mxu0 0.0
        %4125 = vmatprep.mubr.f32.mxu0 0.0
        %v4126 = vand.u32 %v3366, 4294901760
        %v4127 = vsub.f32 %v3366, %v4126
        %4128 = vmatmul.mubr.f32.gmra.mrb[0].mxu0 %v4127
        %v4129 = vpop.f32.mrb[0].mxu0
        %v4130 = vadd.f32 %v4050, %v4129
        %v4131 = vpop.f32.mrb[0].mxu0
        %4132 = vmatprep.mubr.f32.mxu0 0.0
        %v4133 = vand.u32 %v3369, 4294901760
        %v4134 = vsub.f32 %v3369, %v4133
        %4135 = vmatmul.mubr.f32.gmra.mrb[0].mxu0 %v4134
        %v4136 = vpop.f32.mrb[0].mxu0
        %v4137 = vadd.f32 %v4056, %v4136
        %v4138 = vpop.f32.mrb[0].mxu0
        %4139 = vdwg.mxu0
        %4140 = vmatprep.subr.mxu0 0.0
        %v4141 = vand.u32 %v3375, 4294901760
        %4142 = vmatpush1.msra.mxu0 %v4141
        %4143 = vmatprep.subr.mxu0 0.0
        %4144 = vmatpush1.msra.mxu0 0.0
        %4145 = vmatprep.subr.mxu0 0.0
        %4146 = vmatpush1.msra.mxu0 0.0
        %4147 = vmatprep.subr.mxu0 0.0
        %4148 = vmatpush1.msra.mxu0 0.0
        %4149 = vmatprep.subr.mxu0 0.0
        %4150 = vmatpush1.msra.mxu0 0.0
        %4151 = vmatprep.subr.mxu0 0.0
        %4152 = vmatpush1.msra.mxu0 0.0
        %4153 = vmatprep.subr.mxu0 0.0
        %4154 = vmatpush1.msra.mxu0 0.0
        %4155 = vmatprep.subr.mxu0 0.0
        %4156 = vmatpush1.msra.mxu0 0.0
        %4157 = vmatprep.subr.mxu0 0.0
        %4158 = vmatpush1.msra.mxu0 0.0
        %4159 = vmatprep.subr.mxu0 0.0
        %4160 = vmatpush1.msra.mxu0 0.0
        %4161 = vmatprep.subr.mxu0 0.0
        %4162 = vmatpush1.msra.mxu0 0.0
        %4163 = vmatprep.subr.mxu0 0.0
        %4164 = vmatpush1.msra.mxu0 0.0
        %4165 = vmatprep.subr.mxu0 0.0
        %4166 = vmatpush1.msra.mxu0 0.0
        %4167 = vmatprep.subr.mxu0 0.0
        %4168 = vmatpush1.msra.mxu0 0.0
        %4169 = vmatprep.subr.mxu0 0.0
        %4170 = vmatpush1.msra.mxu0 0.0
        %4171 = vmatprep.subr.mxu0 0.0
        %4172 = vmatpush1.msra.mxu0 0.0
        %4173 = vmatprep.subr.mxu0 0.0
        %4174 = vmatpush1.msra.mxu0 0.0
        %4175 = vmatprep.subr.mxu0 0.0
        %4176 = vmatpush1.msra.mxu0 0.0
        %4177 = vmatprep.subr.mxu0 0.0
        %4178 = vmatpush1.msra.mxu0 0.0
        %4179 = vmatprep.subr.mxu0 0.0
        %4180 = vmatpush1.msra.mxu0 0.0
        %4181 = vmatprep.subr.mxu0 0.0
        %4182 = vmatpush1.msra.mxu0 0.0
        %4183 = vmatprep.subr.mxu0 0.0
        %4184 = vmatpush1.msra.mxu0 0.0
        %4185 = vmatprep.subr.mxu0 0.0
        %4186 = vmatpush1.msra.mxu0 0.0
        %4187 = vmatprep.subr.mxu0 0.0
        %4188 = vmatpush1.msra.mxu0 0.0
        %4189 = vmatprep.subr.mxu0 0.0
        %4190 = vmatpush1.msra.mxu0 0.0
        %4191 = vmatprep.subr.mxu0 0.0
        %4192 = vmatpush1.msra.mxu0 0.0
        %4193 = vmatprep.subr.mxu0 0.0
        %4194 = vmatpush1.msra.mxu0 0.0
        %4195 = vmatprep.subr.mxu0 0.0
        %4196 = vmatpush1.msra.mxu0 0.0
        %4197 = vmatprep.subr.mxu0 0.0
        %4198 = vmatpush1.msra.mxu0 0.0
        %4199 = vmatprep.subr.mxu0 0.0
        %4200 = vmatpush1.msra.mxu0 0.0
        %4201 = vmatprep.subr.mxu0 0.0
        %4202 = vmatpush1.msra.mxu0 0.0
        %4203 = vmatprep.subr.mxu0 0.0
        %4204 = vmatpush1.msra.mxu0 0.0
        %4205 = vmatprep.mubr.f32.mxu0 0.0
        %v4206 = vand.u32 %v3366, 4294901760
        %v4207 = vsub.f32 %v3366, %v4206
        %v4208 = vand.u32 %v4207, 4294901760
        %4209 = vmatmul.mubr.f32.gmra.mrb[0].mxu0 %v4208
        %v4210 = vpop.f32.mrb[0].mxu0
        %v4211 = vadd.f32 %v4130, %v4210
        %v4212 = vpop.f32.mrb[0].mxu0
        %4213 = vmatprep.mubr.f32.mxu0 0.0
        %v4214 = vand.u32 %v3369, 4294901760
        %v4215 = vsub.f32 %v3369, %v4214
        %v4216 = vand.u32 %v4215, 4294901760
        %4217 = vmatmul.mubr.f32.gmra.mrb[0].mxu0 %v4216
        %v4218 = vpop.f32.mrb[0].mxu0
        %v4219 = vadd.f32 %v4137, %v4218
        %v4220 = vpop.f32.mrb[0].mxu0
        %4221 = vdwg.mxu0
        %4222 = vmatprep.subr.mxu0 0.0
        %v4223 = vand.u32 %v3375, 4294901760
        %v4224 = vsub.f32 %v3375, %v4223
        %v4225 = vand.u32 %v4224, 4294901760
        %4226 = vmatpush1.msra.mxu0 %v4225
        %4227 = vmatprep.subr.mxu0 0.0
        %4228 = vmatpush1.msra.mxu0 0.0
        %4229 = vmatprep.subr.mxu0 0.0
        %4230 = vmatpush1.msra.mxu0 0.0
        %4231 = vmatprep.subr.mxu0 0.0
        %4232 = vmatpush1.msra.mxu0 0.0
        %4233 = vmatprep.subr.mxu0 0.0
        %4234 = vmatpush1.msra.mxu0 0.0
        %4235 = vmatprep.subr.mxu0 0.0
        %4236 = vmatpush1.msra.mxu0 0.0
        %4237 = vmatprep.subr.mxu0 0.0
        %4238 = vmatpush1.msra.mxu0 0.0
        %4239 = vmatprep.subr.mxu0 0.0
        %4240 = vmatpush1.msra.mxu0 0.0
        %4241 = vmatprep.subr.mxu0 0.0
        %4242 = vmatpush1.msra.mxu0 0.0
        %4243 = vmatprep.subr.mxu0 0.0
        %4244 = vmatpush1.msra.mxu0 0.0
        %4245 = vmatprep.subr.mxu0 0.0
        %4246 = vmatpush1.msra.mxu0 0.0
        %4247 = vmatprep.subr.mxu0 0.0
        %4248 = vmatpush1.msra.mxu0 0.0
        %4249 = vmatprep.subr.mxu0 0.0
        %4250 = vmatpush1.msra.mxu0 0.0
        %4251 = vmatprep.subr.mxu0 0.0
        %4252 = vmatpush1.msra.mxu0 0.0
        %4253 = vmatprep.subr.mxu0 0.0
        %4254 = vmatpush1.msra.mxu0 0.0
        %4255 = vmatprep.subr.mxu0 0.0
        %4256 = vmatpush1.msra.mxu0 0.0
        %4257 = vmatprep.subr.mxu0 0.0
        %4258 = vmatpush1.msra.mxu0 0.0
        %4259 = vmatprep.subr.mxu0 0.0
        %4260 = vmatpush1.msra.mxu0 0.0
        %4261 = vmatprep.subr.mxu0 0.0
        %4262 = vmatpush1.msra.mxu0 0.0
        %4263 = vmatprep.subr.mxu0 0.0
        %4264 = vmatpush1.msra.mxu0 0.0
        %4265 = vmatprep.subr.mxu0 0.0
        %4266 = vmatpush1.msra.mxu0 0.0
        %4267 = vmatprep.subr.mxu0 0.0
        %4268 = vmatpush1.msra.mxu0 0.0
        %4269 = vmatprep.subr.mxu0 0.0
        %4270 = vmatpush1.msra.mxu0 0.0
        %4271 = vmatprep.subr.mxu0 0.0
        %4272 = vmatpush1.msra.mxu0 0.0
        %4273 = vmatprep.subr.mxu0 0.0
        %4274 = vmatpush1.msra.mxu0 0.0
        %4275 = vmatprep.subr.mxu0 0.0
        %4276 = vmatpush1.msra.mxu0 0.0
        %4277 = vmatprep.subr.mxu0 0.0
        %4278 = vmatpush1.msra.mxu0 0.0
        %4279 = vmatprep.subr.mxu0 0.0
        %4280 = vmatpush1.msra.mxu0 0.0
        %4281 = vmatprep.subr.mxu0 0.0
        %4282 = vmatpush1.msra.mxu0 0.0
        %4283 = vmatprep.subr.mxu0 0.0
        %4284 = vmatpush1.msra.mxu0 0.0
        %4285 = vmatprep.subr.mxu0 0.0
        %4286 = vmatpush1.msra.mxu0 0.0
        %4287 = vmatprep.subr.mxu0 0.0
        %4288 = vmatpush1.msra.mxu0 0.0
        %4289 = vmatprep.mubr.f32.mxu0 0.0
        %v4290 = vand.u32 %v3366, 4294901760
        %4291 = vmatmul.mubr.f32.gmra.mrb[0].mxu0 %v4290
        %v4292 = vpop.f32.mrb[0].mxu0
        %v4293 = vadd.f32 %v4211, %v4292
        %v4294 = vpop.f32.mrb[0].mxu0
        %4295 = vmatprep.mubr.f32.mxu0 0.0
        %v4296 = vand.u32 %v3369, 4294901760
        %4297 = vmatmul.mubr.f32.gmra.mrb[0].mxu0 %v4296
        %v4298 = vpop.f32.mrb[0].mxu0
        %v4299 = vadd.f32 %v4219, %v4298
        %v4300 = vpop.f32.mrb[0].mxu0
        %4301 = vdwg.mxu0
        %4302 = vmatprep.subr.mxu0 0.0
        %v4303 = vand.u32 %v3375, 4294901760
        %4304 = vmatpush1.msra.mxu0 %v4303
        %4305 = vmatprep.subr.mxu0 0.0
        %4306 = vmatpush1.msra.mxu0 0.0
        %4307 = vmatprep.subr.mxu0 0.0
        %4308 = vmatpush1.msra.mxu0 0.0
        %4309 = vmatprep.subr.mxu0 0.0
        %4310 = vmatpush1.msra.mxu0 0.0
        %4311 = vmatprep.subr.mxu0 0.0
        %4312 = vmatpush1.msra.mxu0 0.0
        %4313 = vmatprep.subr.mxu0 0.0
        %4314 = vmatpush1.msra.mxu0 0.0
        %4315 = vmatprep.subr.mxu0 0.0
        %4316 = vmatpush1.msra.mxu0 0.0
        %4317 = vmatprep.subr.mxu0 0.0
        %4318 = vmatpush1.msra.mxu0 0.0
        %4319 = vmatprep.subr.mxu0 0.0
        %4320 = vmatpush1.msra.mxu0 0.0
        %4321 = vmatprep.subr.mxu0 0.0
        %4322 = vmatpush1.msra.mxu0 0.0
        %4323 = vmatprep.subr.mxu0 0.0
        %4324 = vmatpush1.msra.mxu0 0.0
        %4325 = vmatprep.subr.mxu0 0.0
        %4326 = vmatpush1.msra.mxu0 0.0
        %4327 = vmatprep.subr.mxu0 0.0
        %4328 = vmatpush1.msra.mxu0 0.0
        %4329 = vmatprep.subr.mxu0 0.0
        %4330 = vmatpush1.msra.mxu0 0.0
        %4331 = vmatprep.subr.mxu0 0.0
        %4332 = vmatpush1.msra.mxu0 0.0
        %4333 = vmatprep.subr.mxu0 0.0
        %4334 = vmatpush1.msra.mxu0 0.0
        %4335 = vmatprep.subr.mxu0 0.0
        %4336 = vmatpush1.msra.mxu0 0.0
        %4337 = vmatprep.subr.mxu0 0.0
        %4338 = vmatpush1.msra.mxu0 0.0
        %4339 = vmatprep.subr.mxu0 0.0
        %4340 = vmatpush1.msra.mxu0 0.0
        %4341 = vmatprep.subr.mxu0 0.0
        %4342 = vmatpush1.msra.mxu0 0.0
        %4343 = vmatprep.subr.mxu0 0.0
        %4344 = vmatpush1.msra.mxu0 0.0
        %4345 = vmatprep.subr.mxu0 0.0
        %4346 = vmatpush1.msra.mxu0 0.0
        %4347 = vmatprep.subr.mxu0 0.0
        %4348 = vmatpush1.msra.mxu0 0.0
        %4349 = vmatprep.subr.mxu0 0.0
        %4350 = vmatpush1.msra.mxu0 0.0
        %4351 = vmatprep.subr.mxu0 0.0
        %4352 = vmatpush1.msra.mxu0 0.0
        %4353 = vmatprep.subr.mxu0 0.0
        %4354 = vmatpush1.msra.mxu0 0.0
        %4355 = vmatprep.subr.mxu0 0.0
        %4356 = vmatpush1.msra.mxu0 0.0
        %4357 = vmatprep.subr.mxu0 0.0
        %4358 = vmatpush1.msra.mxu0 0.0
        %4359 = vmatprep.subr.mxu0 0.0
        %4360 = vmatpush1.msra.mxu0 0.0
        %4361 = vmatprep.subr.mxu0 0.0
        %4362 = vmatpush1.msra.mxu0 0.0
        %4363 = vmatprep.subr.mxu0 0.0
        %4364 = vmatpush1.msra.mxu0 0.0
        %4365 = vmatprep.subr.mxu0 0.0
        %4366 = vmatpush1.msra.mxu0 0.0
        %4367 = vmatprep.mubr.f32.mxu0 0.0
        %v4368 = vand.u32 %v3366, 4294901760
        %4369 = vmatmul.mubr.f32.gmra.mrb[0].mxu0 %v4368
        %v4370 = vpop.f32.mrb[0].mxu0
        %v4371 = vadd.f32 %v4293, %v4370
        %v4372 = vpop.f32.mrb[0].mxu0
        %4373 = vmatprep.mubr.f32.mxu0 0.0
        %v4374 = vand.u32 %v3369, 4294901760
        %4375 = vmatmul.mubr.f32.gmra.mrb[0].mxu0 %v4374
        %v4376 = vpop.f32.mrb[0].mxu0
        %v4377 = vadd.f32 %v4299, %v4376
        %v4378 = vpop.f32.mrb[0].mxu0
        %4379 = vdwg.mxu0
        %v4380 = vld [vmem:[%s8] sm:$0xff]
        %v4381 = vld [vmem:[%s8 + $0x8] sm:$0xff]
        %v4382 = vld [vmem:[%s8 + $0x10] sm:$0xff]
        %v4383 = vld [vmem:[%s8 + $0x18] sm:$0xff]
        %v4384 = vld [vmem:[%s8 + $0x20] sm:$0xff]
        %v4385 = vld [vmem:[%s8 + $0x28] sm:$0xff]
        %v4386 = vld [vmem:[%s8 + $0x30] sm:$0xff]
        %v4387 = vld [vmem:[%s8 + $0x38] sm:$0xff]
        %v4388 = vld [vmem:[%s8 + $0x40] sm:$0xff]
        %v4389 = vld [vmem:[%s8 + $0x48] sm:$0xff]
        %v4390 = vld [vmem:[%s8 + $0x50] sm:$0xff]
        %v4391 = vld [vmem:[%s8 + $0x58] sm:$0xff]
        %v4392 = vld [vmem:[%s8 + $0x60] sm:$0xff]
        %v4393 = vld [vmem:[%s8 + $0x68] sm:$0xff]
        %v4394 = vld [vmem:[%s8 + $0x70] sm:$0xff]
        %v4395 = vld [vmem:[%s8 + $0x78] sm:$0xff]
        %v4396 = vld [vmem:[%s8 + $0x80] sm:$0xff]
        %v4397 = vld [vmem:[%s8 + $0x88] sm:$0xff]
        %v4398 = vld [vmem:[%s8 + $0x90] sm:$0xff]
        %v4399 = vld [vmem:[%s8 + $0x98] sm:$0xff]
        %v4400 = vld [vmem:[%s8 + $0xa0] sm:$0xff]
        %v4401 = vld [vmem:[%s8 + $0xa8] sm:$0xff]
        %v4402 = vld [vmem:[%s8 + $0xb0] sm:$0xff]
        %v4403 = vld [vmem:[%s8 + $0xb8] sm:$0xff]
        %v4404 = vld [vmem:[%s8 + $0xc0] sm:$0xff]
        %v4405 = vld [vmem:[%s8 + $0xc8] sm:$0xff]
        %v4406 = vld [vmem:[%s8 + $0xd0] sm:$0xff]
        %v4407 = vld [vmem:[%s8 + $0xd8] sm:$0xff]
        %v4408 = vld [vmem:[%s8 + $0xe0] sm:$0xff]
        %v4409 = vld [vmem:[%s8 + $0xe8] sm:$0xff]
        %v4410 = vld [vmem:[%s8 + $0xf0] sm:$0xff]
        %v4411 = vld [vmem:[%s8 + $0xf8] sm:$0xff]
        %v4412 = vld [vmem:[%s8 + $0x100] sm:$0xff]
        %v4413 = vld [vmem:[%s8 + $0x108] sm:$0xff]
        %v4414 = vld [vmem:[%s8 + $0x110] sm:$0xff]
        %v4415 = vld [vmem:[%s8 + $0x118] sm:$0xff]
        %v4416 = vld [vmem:[%s8 + $0x120] sm:$0xff]
        %v4417 = vld [vmem:[%s8 + $0x128] sm:$0xff]
        %v4418 = vld [vmem:[%s8 + $0x130] sm:$0xff]
        %v4419 = vld [vmem:[%s8 + $0x138] sm:$0xff]
        %v4420 = vld [vmem:[%s8 + $0x140] sm:$0xff]
        %v4421 = vld [vmem:[%s8 + $0x148] sm:$0xff]
        %v4422 = vld [vmem:[%s8 + $0x150] sm:$0xff]
        %v4423 = vld [vmem:[%s8 + $0x158] sm:$0xff]
        %v4424 = vld [vmem:[%s8 + $0x160] sm:$0xff]
        %v4425 = vld [vmem:[%s8 + $0x168] sm:$0xff]
        %v4426 = vld [vmem:[%s8 + $0x170] sm:$0xff]
        %v4427 = vld [vmem:[%s8 + $0x178] sm:$0xff]
        %v4428 = vld [vmem:[%s8 + $0x180] sm:$0xff]
        %v4429 = vld [vmem:[%s8 + $0x188] sm:$0xff]
        %v4430 = vld [vmem:[%s8 + $0x190] sm:$0xff]
        %v4431 = vld [vmem:[%s8 + $0x198] sm:$0xff]
        %v4432 = vld [vmem:[%s8 + $0x1a0] sm:$0xff]
        %v4433 = vld [vmem:[%s8 + $0x1a8] sm:$0xff]
        %v4434 = vld [vmem:[%s8 + $0x1b0] sm:$0xff]
        %v4435 = vld [vmem:[%s8 + $0x1b8] sm:$0xff]
        %v4436 = vld [vmem:[%s8 + $0x1c0] sm:$0xff]
        %v4437 = vld [vmem:[%s8 + $0x1c8] sm:$0xff]
        %v4438 = vld [vmem:[%s8 + $0x1d0] sm:$0xff]
        %v4439 = vld [vmem:[%s8 + $0x1d8] sm:$0xff]
        %v4440 = vld [vmem:[%s8 + $0x1e0] sm:$0xff]
        %v4441 = vld [vmem:[%s8 + $0x1e8] sm:$0xff]
        %v4442 = vld [vmem:[%s8 + $0x1f0] sm:$0xff]
        %v4443 = vld [vmem:[%s8 + $0x1f8] sm:$0xff]
        %v4444 = vld [vmem:[%s8 + $0x200] sm:$0xff]
        %v4445 = vld [vmem:[%s8 + $0x208] sm:$0xff]
        %v4446 = vld [vmem:[%s8 + $0x210] sm:$0xff]
        %v4447 = vld [vmem:[%s8 + $0x218] sm:$0xff]
        %v4448 = vld [vmem:[%s8 + $0x220] sm:$0xff]
        %v4449 = vld [vmem:[%s8 + $0x228] sm:$0xff]
        %v4450 = vld [vmem:[%s8 + $0x230] sm:$0x3f]
        %v4451 = vld [vmem:[%s8 + $0x238] sm:$0x3f]
        %vm4452 = vcmask 244736
        %v4454 = vsel %vm4452, %v4371, 0
        %v4457 = vsel %vm4452, %v4377, 0
        %vm4459 = vcmask 1045504
        %v4461 = vsel %vm4459, %v4450, 0
        %v4464 = vsel %vm4459, %v4451, 0
        %v4466 = vand.u32 %v4381, 4294901760
        %4467 = vmatprep.subr.mxu0 %v4466
        %v4468 = vand.u32 %v4380, 4294901760
        %4469 = vmatpush1.msra.mxu0 %v4468
        %v4470 = vand.u32 %v4383, 4294901760
        %4471 = vmatprep.subr.mxu0 %v4470
        %v4472 = vand.u32 %v4382, 4294901760
        %4473 = vmatpush1.msra.mxu0 %v4472
        %v4474 = vand.u32 %v4385, 4294901760
        %4475 = vmatprep.subr.mxu0 %v4474
        %v4476 = vand.u32 %v4384, 4294901760
        %4477 = vmatpush1.msra.mxu0 %v4476
        %v4478 = vand.u32 %v4387, 4294901760
        %4479 = vmatprep.subr.mxu0 %v4478
        %v4480 = vand.u32 %v4386, 4294901760
        %4481 = vmatpush1.msra.mxu0 %v4480
        %v4482 = vand.u32 %v4389, 4294901760
        %4483 = vmatprep.subr.mxu0 %v4482
        %v4484 = vand.u32 %v4388, 4294901760
        %4485 = vmatpush1.msra.mxu0 %v4484
        %v4486 = vand.u32 %v4391, 4294901760
        %4487 = vmatprep.subr.mxu0 %v4486
        %v4488 = vand.u32 %v4390, 4294901760
        %4489 = vmatpush1.msra.mxu0 %v4488
        %v4490 = vand.u32 %v4393, 4294901760
        %4491 = vmatprep.subr.mxu0 %v4490
        %v4492 = vand.u32 %v4392, 4294901760
        %4493 = vmatpush1.msra.mxu0 %v4492
        %v4494 = vand.u32 %v4395, 4294901760
        %4495 = vmatprep.subr.mxu0 %v4494
        %v4496 = vand.u32 %v4394, 4294901760
        %4497 = vmatpush1.msra.mxu0 %v4496
        %v4498 = vand.u32 %v4397, 4294901760
        %4499 = vmatprep.subr.mxu0 %v4498
        %v4500 = vand.u32 %v4396, 4294901760
        %4501 = vmatpush1.msra.mxu0 %v4500
        %v4502 = vand.u32 %v4399, 4294901760
        %4503 = vmatprep.subr.mxu0 %v4502
        %v4504 = vand.u32 %v4398, 4294901760
        %4505 = vmatpush1.msra.mxu0 %v4504
        %v4506 = vand.u32 %v4401, 4294901760
        %4507 = vmatprep.subr.mxu0 %v4506
        %v4508 = vand.u32 %v4400, 4294901760
        %4509 = vmatpush1.msra.mxu0 %v4508
        %v4510 = vand.u32 %v4403, 4294901760
        %4511 = vmatprep.subr.mxu0 %v4510
        %v4512 = vand.u32 %v4402, 4294901760
        %4513 = vmatpush1.msra.mxu0 %v4512
        %v4514 = vand.u32 %v4405, 4294901760
        %4515 = vmatprep.subr.mxu0 %v4514
        %v4516 = vand.u32 %v4404, 4294901760
        %4517 = vmatpush1.msra.mxu0 %v4516
        %v4518 = vand.u32 %v4407, 4294901760
        %4519 = vmatprep.subr.mxu0 %v4518
        %v4520 = vand.u32 %v4406, 4294901760
        %4521 = vmatpush1.msra.mxu0 %v4520
        %v4522 = vand.u32 %v4409, 4294901760
        %4523 = vmatprep.subr.mxu0 %v4522
        %v4524 = vand.u32 %v4408, 4294901760
        %4525 = vmatpush1.msra.mxu0 %v4524
        %v4526 = vand.u32 %v4411, 4294901760
        %4527 = vmatprep.subr.mxu0 %v4526
        %v4528 = vand.u32 %v4410, 4294901760
        %4529 = vmatpush1.msra.mxu0 %v4528
        %v4530 = vand.u32 %v4413, 4294901760
        %4531 = vmatprep.subr.mxu0 %v4530
        %v4532 = vand.u32 %v4412, 4294901760
        %4533 = vmatpush1.msra.mxu0 %v4532
        %v4534 = vand.u32 %v4415, 4294901760
        %4535 = vmatprep.subr.mxu0 %v4534
        %v4536 = vand.u32 %v4414, 4294901760
        %4537 = vmatpush1.msra.mxu0 %v4536
        %v4538 = vand.u32 %v4417, 4294901760
        %4539 = vmatprep.subr.mxu0 %v4538
        %v4540 = vand.u32 %v4416, 4294901760
        %4541 = vmatpush1.msra.mxu0 %v4540
        %v4542 = vand.u32 %v4419, 4294901760
        %4543 = vmatprep.subr.mxu0 %v4542
        %v4544 = vand.u32 %v4418, 4294901760
        %4545 = vmatpush1.msra.mxu0 %v4544
        %v4546 = vand.u32 %v4421, 4294901760
        %4547 = vmatprep.subr.mxu0 %v4546
        %v4548 = vand.u32 %v4420, 4294901760
        %4549 = vmatpush1.msra.mxu0 %v4548
        %v4550 = vand.u32 %v4423, 4294901760
        %4551 = vmatprep.subr.mxu0 %v4550
        %v4552 = vand.u32 %v4422, 4294901760
        %4553 = vmatpush1.msra.mxu0 %v4552
        %v4554 = vand.u32 %v4425, 4294901760
        %4555 = vmatprep.subr.mxu0 %v4554
        %v4556 = vand.u32 %v4424, 4294901760
        %4557 = vmatpush1.msra.mxu0 %v4556
        %v4558 = vand.u32 %v4427, 4294901760
        %4559 = vmatprep.subr.mxu0 %v4558
        %v4560 = vand.u32 %v4426, 4294901760
        %4561 = vmatpush1.msra.mxu0 %v4560
        %v4562 = vand.u32 %v4429, 4294901760
        %4563 = vmatprep.subr.mxu0 %v4562
        %v4564 = vand.u32 %v4428, 4294901760
        %4565 = vmatpush1.msra.mxu0 %v4564
        %v4566 = vand.u32 %v4431, 4294901760
        %4567 = vmatprep.subr.mxu0 %v4566
        %v4568 = vand.u32 %v4430, 4294901760
        %4569 = vmatpush1.msra.mxu0 %v4568
        %v4570 = vand.u32 %v4433, 4294901760
        %4571 = vmatprep.subr.mxu0 %v4570
        %v4572 = vand.u32 %v4432, 4294901760
        %4573 = vmatpush1.msra.mxu0 %v4572
        %v4574 = vand.u32 %v4435, 4294901760
        %4575 = vmatprep.subr.mxu0 %v4574
        %v4576 = vand.u32 %v4434, 4294901760
        %4577 = vmatpush1.msra.mxu0 %v4576
        %v4578 = vand.u32 %v4437, 4294901760
        %4579 = vmatprep.subr.mxu0 %v4578
        %v4580 = vand.u32 %v4436, 4294901760
        %4581 = vmatpush1.msra.mxu0 %v4580
        %v4582 = vand.u32 %v4439, 4294901760
        %4583 = vmatprep.subr.mxu0 %v4582
        %v4584 = vand.u32 %v4438, 4294901760
        %4585 = vmatpush1.msra.mxu0 %v4584
        %v4586 = vand.u32 %v4441, 4294901760
        %4587 = vmatprep.subr.mxu0 %v4586
        %v4588 = vand.u32 %v4440, 4294901760
        %4589 = vmatpush1.msra.mxu0 %v4588
        %v4590 = vand.u32 %v4443, 4294901760
        %4591 = vmatprep.subr.mxu0 %v4590
        %v4592 = vand.u32 %v4442, 4294901760
        %4593 = vmatpush1.msra.mxu0 %v4592
        %v4594 = vand.u32 %v3882, 4294901760
        %v4595 = vsub.f32 %v3882, %v4594
        %v4596 = vand.u32 %v4595, 4294901760
        %v4597 = vsub.f32 %v4595, %v4596
        %v4598 = vand.u32 %v4597, 4294901760
        %4599 = vmatprep.mubr.f32.mxu0 %v4598
        %v4600 = vand.u32 %v3880, 4294901760
        %v4601 = vsub.f32 %v3880, %v4600
        %v4602 = vand.u32 %v4601, 4294901760
        %v4603 = vsub.f32 %v4601, %v4602
        %v4604 = vand.u32 %v4603, 4294901760
        %4605 = vmatmul.mubr.f32.gmra.mrb[0].mxu0 %v4604
        %v4606 = vpop.f32.mrb[0].mxu0
        %v4607 = vadd.f32 %v331, %v4606
        %v4608 = vpop.f32.mrb[0].mxu0
        %v4609 = vadd.f32 %v332, %v4608
        %v4610 = vand.u32 %v3889, 4294901760
        %v4611 = vsub.f32 %v3889, %v4610
        %v4612 = vand.u32 %v4611, 4294901760
        %v4613 = vsub.f32 %v4611, %v4612
        %v4614 = vand.u32 %v4613, 4294901760
        %4615 = vmatprep.mubr.f32.mxu0 %v4614
        %v4616 = vand.u32 %v3887, 4294901760
        %v4617 = vsub.f32 %v3887, %v4616
        %v4618 = vand.u32 %v4617, 4294901760
        %v4619 = vsub.f32 %v4617, %v4618
        %v4620 = vand.u32 %v4619, 4294901760
        %4621 = vmatmul.mubr.f32.gmra.mrb[0].mxu0 %v4620
        %v4622 = vpop.f32.mrb[0].mxu0
        %v4623 = vadd.f32 %v333, %v4622
        %v4624 = vpop.f32.mrb[0].mxu0
        %v4625 = vadd.f32 %v334, %v4624
        %4626 = vdwg.mxu0
        %v4627 = vand.u32 %v4381, 4294901760
        %v4628 = vsub.f32 %v4381, %v4627
        %v4629 = vand.u32 %v4628, 4294901760
        %v4630 = vsub.f32 %v4628, %v4629
        %v4631 = vand.u32 %v4630, 4294901760
        %4632 = vmatprep.subr.mxu0 %v4631
        %v4633 = vand.u32 %v4380, 4294901760
        %v4634 = vsub.f32 %v4380, %v4633
        %v4635 = vand.u32 %v4634, 4294901760
        %v4636 = vsub.f32 %v4634, %v4635
        %v4637 = vand.u32 %v4636, 4294901760
        %4638 = vmatpush1.msra.mxu0 %v4637
        %v4639 = vand.u32 %v4383, 4294901760
        %v4640 = vsub.f32 %v4383, %v4639
        %v4641 = vand.u32 %v4640, 4294901760
        %v4642 = vsub.f32 %v4640, %v4641
        %v4643 = vand.u32 %v4642, 4294901760
        %4644 = vmatprep.subr.mxu0 %v4643
        %v4645 = vand.u32 %v4382, 4294901760
        %v4646 = vsub.f32 %v4382, %v4645
        %v4647 = vand.u32 %v4646, 4294901760
        %v4648 = vsub.f32 %v4646, %v4647
        %v4649 = vand.u32 %v4648, 4294901760
        %4650 = vmatpush1.msra.mxu0 %v4649
        %v4651 = vand.u32 %v4385, 4294901760
        %v4652 = vsub.f32 %v4385, %v4651
        %v4653 = vand.u32 %v4652, 4294901760
        %v4654 = vsub.f32 %v4652, %v4653
        %v4655 = vand.u32 %v4654, 4294901760
        %4656 = vmatprep.subr.mxu0 %v4655
        %v4657 = vand.u32 %v4384, 4294901760
        %v4658 = vsub.f32 %v4384, %v4657
        %v4659 = vand.u32 %v4658, 4294901760
        %v4660 = vsub.f32 %v4658, %v4659
        %v4661 = vand.u32 %v4660, 4294901760
        %4662 = vmatpush1.msra.mxu0 %v4661
        %v4663 = vand.u32 %v4387, 4294901760
        %v4664 = vsub.f32 %v4387, %v4663
        %v4665 = vand.u32 %v4664, 4294901760
        %v4666 = vsub.f32 %v4664, %v4665
        %v4667 = vand.u32 %v4666, 4294901760
        %4668 = vmatprep.subr.mxu0 %v4667
        %v4669 = vand.u32 %v4386, 4294901760
        %v4670 = vsub.f32 %v4386, %v4669
        %v4671 = vand.u32 %v4670, 4294901760
        %v4672 = vsub.f32 %v4670, %v4671
        %v4673 = vand.u32 %v4672, 4294901760
        %4674 = vmatpush1.msra.mxu0 %v4673
        %v4675 = vand.u32 %v4389, 4294901760
        %v4676 = vsub.f32 %v4389, %v4675
        %v4677 = vand.u32 %v4676, 4294901760
        %v4678 = vsub.f32 %v4676, %v4677
        %v4679 = vand.u32 %v4678, 4294901760
        %4680 = vmatprep.subr.mxu0 %v4679
        %v4681 = vand.u32 %v4388, 4294901760
        %v4682 = vsub.f32 %v4388, %v4681
        %v4683 = vand.u32 %v4682, 4294901760
        %v4684 = vsub.f32 %v4682, %v4683
        %v4685 = vand.u32 %v4684, 4294901760
        %4686 = vmatpush1.msra.mxu0 %v4685
        %v4687 = vand.u32 %v4391, 4294901760
        %v4688 = vsub.f32 %v4391, %v4687
        %v4689 = vand.u32 %v4688, 4294901760
        %v4690 = vsub.f32 %v4688, %v4689
        %v4691 = vand.u32 %v4690, 4294901760
        %4692 = vmatprep.subr.mxu0 %v4691
        %v4693 = vand.u32 %v4390, 4294901760
        %v4694 = vsub.f32 %v4390, %v4693
        %v4695 = vand.u32 %v4694, 4294901760
        %v4696 = vsub.f32 %v4694, %v4695
        %v4697 = vand.u32 %v4696, 4294901760
        %4698 = vmatpush1.msra.mxu0 %v4697
        %v4699 = vand.u32 %v4393, 4294901760
        %v4700 = vsub.f32 %v4393, %v4699
        %v4701 = vand.u32 %v4700, 4294901760
        %v4702 = vsub.f32 %v4700, %v4701
        %v4703 = vand.u32 %v4702, 4294901760
        %4704 = vmatprep.subr.mxu0 %v4703
        %v4705 = vand.u32 %v4392, 4294901760
        %v4706 = vsub.f32 %v4392, %v4705
        %v4707 = vand.u32 %v4706, 4294901760
        %v4708 = vsub.f32 %v4706, %v4707
        %v4709 = vand.u32 %v4708, 4294901760
        %4710 = vmatpush1.msra.mxu0 %v4709
        %v4711 = vand.u32 %v4395, 4294901760
        %v4712 = vsub.f32 %v4395, %v4711
        %v4713 = vand.u32 %v4712, 4294901760
        %v4714 = vsub.f32 %v4712, %v4713
        %v4715 = vand.u32 %v4714, 4294901760
        %4716 = vmatprep.subr.mxu0 %v4715
        %v4717 = vand.u32 %v4394, 4294901760
        %v4718 = vsub.f32 %v4394, %v4717
        %v4719 = vand.u32 %v4718, 4294901760
        %v4720 = vsub.f32 %v4718, %v4719
        %v4721 = vand.u32 %v4720, 4294901760
        %4722 = vmatpush1.msra.mxu0 %v4721
        %v4723 = vand.u32 %v4397, 4294901760
        %v4724 = vsub.f32 %v4397, %v4723
        %v4725 = vand.u32 %v4724, 4294901760
        %v4726 = vsub.f32 %v4724, %v4725
        %v4727 = vand.u32 %v4726, 4294901760
        %4728 = vmatprep.subr.mxu0 %v4727
        %v4729 = vand.u32 %v4396, 4294901760
        %v4730 = vsub.f32 %v4396, %v4729
        %v4731 = vand.u32 %v4730, 4294901760
        %v4732 = vsub.f32 %v4730, %v4731
        %v4733 = vand.u32 %v4732, 4294901760
        %4734 = vmatpush1.msra.mxu0 %v4733
        %v4735 = vand.u32 %v4399, 4294901760
        %v4736 = vsub.f32 %v4399, %v4735
        %v4737 = vand.u32 %v4736, 4294901760
        %v4738 = vsub.f32 %v4736, %v4737
        %v4739 = vand.u32 %v4738, 4294901760
        %4740 = vmatprep.subr.mxu0 %v4739
        %v4741 = vand.u32 %v4398, 4294901760
        %v4742 = vsub.f32 %v4398, %v4741
        %v4743 = vand.u32 %v4742, 4294901760
        %v4744 = vsub.f32 %v4742, %v4743
        %v4745 = vand.u32 %v4744, 4294901760
        %4746 = vmatpush1.msra.mxu0 %v4745
        %v4747 = vand.u32 %v4401, 4294901760
        %v4748 = vsub.f32 %v4401, %v4747
        %v4749 = vand.u32 %v4748, 4294901760
        %v4750 = vsub.f32 %v4748, %v4749
        %v4751 = vand.u32 %v4750, 4294901760
        %4752 = vmatprep.subr.mxu0 %v4751
        %v4753 = vand.u32 %v4400, 4294901760
        %v4754 = vsub.f32 %v4400, %v4753
        %v4755 = vand.u32 %v4754, 4294901760
        %v4756 = vsub.f32 %v4754, %v4755
        %v4757 = vand.u32 %v4756, 4294901760
        %4758 = vmatpush1.msra.mxu0 %v4757
        %v4759 = vand.u32 %v4403, 4294901760
        %v4760 = vsub.f32 %v4403, %v4759
        %v4761 = vand.u32 %v4760, 4294901760
        %v4762 = vsub.f32 %v4760, %v4761
        %v4763 = vand.u32 %v4762, 4294901760
        %4764 = vmatprep.subr.mxu0 %v4763
        %v4765 = vand.u32 %v4402, 4294901760
        %v4766 = vsub.f32 %v4402, %v4765
        %v4767 = vand.u32 %v4766, 4294901760
        %v4768 = vsub.f32 %v4766, %v4767
        %v4769 = vand.u32 %v4768, 4294901760
        %4770 = vmatpush1.msra.mxu0 %v4769
        %v4771 = vand.u32 %v4405, 4294901760
        %v4772 = vsub.f32 %v4405, %v4771
        %v4773 = vand.u32 %v4772, 4294901760
        %v4774 = vsub.f32 %v4772, %v4773
        %v4775 = vand.u32 %v4774, 4294901760
        %4776 = vmatprep.subr.mxu0 %v4775
        %v4777 = vand.u32 %v4404, 4294901760
        %v4778 = vsub.f32 %v4404, %v4777
        %v4779 = vand.u32 %v4778, 4294901760
        %v4780 = vsub.f32 %v4778, %v4779
        %v4781 = vand.u32 %v4780, 4294901760
        %4782 = vmatpush1.msra.mxu0 %v4781
        %v4783 = vand.u32 %v4407, 4294901760
        %v4784 = vsub.f32 %v4407, %v4783
        %v4785 = vand.u32 %v4784, 4294901760
        %v4786 = vsub.f32 %v4784, %v4785
        %v4787 = vand.u32 %v4786, 4294901760
        %4788 = vmatprep.subr.mxu0 %v4787
        %v4789 = vand.u32 %v4406, 4294901760
        %v4790 = vsub.f32 %v4406, %v4789
        %v4791 = vand.u32 %v4790, 4294901760
        %v4792 = vsub.f32 %v4790, %v4791
        %v4793 = vand.u32 %v4792, 4294901760
        %4794 = vmatpush1.msra.mxu0 %v4793
        %v4795 = vand.u32 %v4409, 4294901760
        %v4796 = vsub.f32 %v4409, %v4795
        %v4797 = vand.u32 %v4796, 4294901760
        %v4798 = vsub.f32 %v4796, %v4797
        %v4799 = vand.u32 %v4798, 4294901760
        %4800 = vmatprep.subr.mxu0 %v4799
        %v4801 = vand.u32 %v4408, 4294901760
        %v4802 = vsub.f32 %v4408, %v4801
        %v4803 = vand.u32 %v4802, 4294901760
        %v4804 = vsub.f32 %v4802, %v4803
        %v4805 = vand.u32 %v4804, 4294901760
        %4806 = vmatpush1.msra.mxu0 %v4805
        %v4807 = vand.u32 %v4411, 4294901760
        %v4808 = vsub.f32 %v4411, %v4807
        %v4809 = vand.u32 %v4808, 4294901760
        %v4810 = vsub.f32 %v4808, %v4809
        %v4811 = vand.u32 %v4810, 4294901760
        %4812 = vmatprep.subr.mxu0 %v4811
        %v4813 = vand.u32 %v4410, 4294901760
        %v4814 = vsub.f32 %v4410, %v4813
        %v4815 = vand.u32 %v4814, 4294901760
        %v4816 = vsub.f32 %v4814, %v4815
        %v4817 = vand.u32 %v4816, 4294901760
        %4818 = vmatpush1.msra.mxu0 %v4817
        %v4819 = vand.u32 %v4413, 4294901760
        %v4820 = vsub.f32 %v4413, %v4819
        %v4821 = vand.u32 %v4820, 4294901760
        %v4822 = vsub.f32 %v4820, %v4821
        %v4823 = vand.u32 %v4822, 4294901760
        %4824 = vmatprep.subr.mxu0 %v4823
        %v4825 = vand.u32 %v4412, 4294901760
        %v4826 = vsub.f32 %v4412, %v4825
        %v4827 = vand.u32 %v4826, 4294901760
        %v4828 = vsub.f32 %v4826, %v4827
        %v4829 = vand.u32 %v4828, 4294901760
        %4830 = vmatpush1.msra.mxu0 %v4829
        %v4831 = vand.u32 %v4415, 4294901760
        %v4832 = vsub.f32 %v4415, %v4831
        %v4833 = vand.u32 %v4832, 4294901760
        %v4834 = vsub.f32 %v4832, %v4833
        %v4835 = vand.u32 %v4834, 4294901760
        %4836 = vmatprep.subr.mxu0 %v4835
        %v4837 = vand.u32 %v4414, 4294901760
        %v4838 = vsub.f32 %v4414, %v4837
        %v4839 = vand.u32 %v4838, 4294901760
        %v4840 = vsub.f32 %v4838, %v4839
        %v4841 = vand.u32 %v4840, 4294901760
        %4842 = vmatpush1.msra.mxu0 %v4841
        %v4843 = vand.u32 %v4417, 4294901760
        %v4844 = vsub.f32 %v4417, %v4843
        %v4845 = vand.u32 %v4844, 4294901760
        %v4846 = vsub.f32 %v4844, %v4845
        %v4847 = vand.u32 %v4846, 4294901760
        %4848 = vmatprep.subr.mxu0 %v4847
        %v4849 = vand.u32 %v4416, 4294901760
        %v4850 = vsub.f32 %v4416, %v4849
        %v4851 = vand.u32 %v4850, 4294901760
        %v4852 = vsub.f32 %v4850, %v4851
        %v4853 = vand.u32 %v4852, 4294901760
        %4854 = vmatpush1.msra.mxu0 %v4853
        %v4855 = vand.u32 %v4419, 4294901760
        %v4856 = vsub.f32 %v4419, %v4855
        %v4857 = vand.u32 %v4856, 4294901760
        %v4858 = vsub.f32 %v4856, %v4857
        %v4859 = vand.u32 %v4858, 4294901760
        %4860 = vmatprep.subr.mxu0 %v4859
        %v4861 = vand.u32 %v4418, 4294901760
        %v4862 = vsub.f32 %v4418, %v4861
        %v4863 = vand.u32 %v4862, 4294901760
        %v4864 = vsub.f32 %v4862, %v4863
        %v4865 = vand.u32 %v4864, 4294901760
        %4866 = vmatpush1.msra.mxu0 %v4865
        %v4867 = vand.u32 %v4421, 4294901760
        %v4868 = vsub.f32 %v4421, %v4867
        %v4869 = vand.u32 %v4868, 4294901760
        %v4870 = vsub.f32 %v4868, %v4869
        %v4871 = vand.u32 %v4870, 4294901760
        %4872 = vmatprep.subr.mxu0 %v4871
        %v4873 = vand.u32 %v4420, 4294901760
        %v4874 = vsub.f32 %v4420, %v4873
        %v4875 = vand.u32 %v4874, 4294901760
        %v4876 = vsub.f32 %v4874, %v4875
        %v4877 = vand.u32 %v4876, 4294901760
        %4878 = vmatpush1.msra.mxu0 %v4877
        %v4879 = vand.u32 %v4423, 4294901760
        %v4880 = vsub.f32 %v4423, %v4879
        %v4881 = vand.u32 %v4880, 4294901760
        %v4882 = vsub.f32 %v4880, %v4881
        %v4883 = vand.u32 %v4882, 4294901760
        %4884 = vmatprep.subr.mxu0 %v4883
        %v4885 = vand.u32 %v4422, 4294901760
        %v4886 = vsub.f32 %v4422, %v4885
        %v4887 = vand.u32 %v4886, 4294901760
        %v4888 = vsub.f32 %v4886, %v4887
        %v4889 = vand.u32 %v4888, 4294901760
        %4890 = vmatpush1.msra.mxu0 %v4889
        %v4891 = vand.u32 %v4425, 4294901760
        %v4892 = vsub.f32 %v4425, %v4891
        %v4893 = vand.u32 %v4892, 4294901760
        %v4894 = vsub.f32 %v4892, %v4893
        %v4895 = vand.u32 %v4894, 4294901760
        %4896 = vmatprep.subr.mxu0 %v4895
        %v4897 = vand.u32 %v4424, 4294901760
        %v4898 = vsub.f32 %v4424, %v4897
        %v4899 = vand.u32 %v4898, 4294901760
        %v4900 = vsub.f32 %v4898, %v4899
        %v4901 = vand.u32 %v4900, 4294901760
        %4902 = vmatpush1.msra.mxu0 %v4901
        %v4903 = vand.u32 %v4427, 4294901760
        %v4904 = vsub.f32 %v4427, %v4903
        %v4905 = vand.u32 %v4904, 4294901760
        %v4906 = vsub.f32 %v4904, %v4905
        %v4907 = vand.u32 %v4906, 4294901760
        %4908 = vmatprep.subr.mxu0 %v4907
        %v4909 = vand.u32 %v4426, 4294901760
        %v4910 = vsub.f32 %v4426, %v4909
        %v4911 = vand.u32 %v4910, 4294901760
        %v4912 = vsub.f32 %v4910, %v4911
        %v4913 = vand.u32 %v4912, 4294901760
        %4914 = vmatpush1.msra.mxu0 %v4913
        %v4915 = vand.u32 %v4429, 4294901760
        %v4916 = vsub.f32 %v4429, %v4915
        %v4917 = vand.u32 %v4916, 4294901760
        %v4918 = vsub.f32 %v4916, %v4917
        %v4919 = vand.u32 %v4918, 4294901760
        %4920 = vmatprep.subr.mxu0 %v4919
        %v4921 = vand.u32 %v4428, 4294901760
        %v4922 = vsub.f32 %v4428, %v4921
        %v4923 = vand.u32 %v4922, 4294901760
        %v4924 = vsub.f32 %v4922, %v4923
        %v4925 = vand.u32 %v4924, 4294901760
        %4926 = vmatpush1.msra.mxu0 %v4925
        %v4927 = vand.u32 %v4431, 4294901760
        %v4928 = vsub.f32 %v4431, %v4927
        %v4929 = vand.u32 %v4928, 4294901760
        %v4930 = vsub.f32 %v4928, %v4929
        %v4931 = vand.u32 %v4930, 4294901760
        %4932 = vmatprep.subr.mxu0 %v4931
        %v4933 = vand.u32 %v4430, 4294901760
        %v4934 = vsub.f32 %v4430, %v4933
        %v4935 = vand.u32 %v4934, 4294901760
        %v4936 = vsub.f32 %v4934, %v4935
        %v4937 = vand.u32 %v4936, 4294901760
        %4938 = vmatpush1.msra.mxu0 %v4937
        %v4939 = vand.u32 %v4433, 4294901760
        %v4940 = vsub.f32 %v4433, %v4939
        %v4941 = vand.u32 %v4940, 4294901760
        %v4942 = vsub.f32 %v4940, %v4941
        %v4943 = vand.u32 %v4942, 4294901760
        %4944 = vmatprep.subr.mxu0 %v4943
        %v4945 = vand.u32 %v4432, 4294901760
        %v4946 = vsub.f32 %v4432, %v4945
        %v4947 = vand.u32 %v4946, 4294901760
        %v4948 = vsub.f32 %v4946, %v4947
        %v4949 = vand.u32 %v4948, 4294901760
        %4950 = vmatpush1.msra.mxu0 %v4949
        %v4951 = vand.u32 %v4435, 4294901760
        %v4952 = vsub.f32 %v4435, %v4951
        %v4953 = vand.u32 %v4952, 4294901760
        %v4954 = vsub.f32 %v4952, %v4953
        %v4955 = vand.u32 %v4954, 4294901760
        %4956 = vmatprep.subr.mxu0 %v4955
        %v4957 = vand.u32 %v4434, 4294901760
        %v4958 = vsub.f32 %v4434, %v4957
        %v4959 = vand.u32 %v4958, 4294901760
        %v4960 = vsub.f32 %v4958, %v4959
        %v4961 = vand.u32 %v4960, 4294901760
        %4962 = vmatpush1.msra.mxu0 %v4961
        %v4963 = vand.u32 %v4437, 4294901760
        %v4964 = vsub.f32 %v4437, %v4963
        %v4965 = vand.u32 %v4964, 4294901760
        %v4966 = vsub.f32 %v4964, %v4965
        %v4967 = vand.u32 %v4966, 4294901760
        %4968 = vmatprep.subr.mxu0 %v4967
        %v4969 = vand.u32 %v4436, 4294901760
        %v4970 = vsub.f32 %v4436, %v4969
        %v4971 = vand.u32 %v4970, 4294901760
        %v4972 = vsub.f32 %v4970, %v4971
        %v4973 = vand.u32 %v4972, 4294901760
        %4974 = vmatpush1.msra.mxu0 %v4973
        %v4975 = vand.u32 %v4439, 4294901760
        %v4976 = vsub.f32 %v4439, %v4975
        %v4977 = vand.u32 %v4976, 4294901760
        %v4978 = vsub.f32 %v4976, %v4977
        %v4979 = vand.u32 %v4978, 4294901760
        %4980 = vmatprep.subr.mxu0 %v4979
        %v4981 = vand.u32 %v4438, 4294901760
        %v4982 = vsub.f32 %v4438, %v4981
        %v4983 = vand.u32 %v4982, 4294901760
        %v4984 = vsub.f32 %v4982, %v4983
        %v4985 = vand.u32 %v4984, 4294901760
        %4986 = vmatpush1.msra.mxu0 %v4985
        %v4987 = vand.u32 %v4441, 4294901760
        %v4988 = vsub.f32 %v4441, %v4987
        %v4989 = vand.u32 %v4988, 4294901760
        %v4990 = vsub.f32 %v4988, %v4989
        %v4991 = vand.u32 %v4990, 4294901760
        %4992 = vmatprep.subr.mxu0 %v4991
        %v4993 = vand.u32 %v4440, 4294901760
        %v4994 = vsub.f32 %v4440, %v4993
        %v4995 = vand.u32 %v4994, 4294901760
        %v4996 = vsub.f32 %v4994, %v4995
        %v4997 = vand.u32 %v4996, 4294901760
        %4998 = vmatpush1.msra.mxu0 %v4997
        %v4999 = vand.u32 %v4443, 4294901760
        %v5000 = vsub.f32 %v4443, %v4999
        %v5001 = vand.u32 %v5000, 4294901760
        %v5002 = vsub.f32 %v5000, %v5001
        %v5003 = vand.u32 %v5002, 4294901760
        %5004 = vmatprep.subr.mxu0 %v5003
        %v5005 = vand.u32 %v4442, 4294901760
        %v5006 = vsub.f32 %v4442, %v5005
        %v5007 = vand.u32 %v5006, 4294901760
        %v5008 = vsub.f32 %v5006, %v5007
        %v5009 = vand.u32 %v5008, 4294901760
        %5010 = vmatpush1.msra.mxu0 %v5009
        %v5011 = vand.u32 %v3882, 4294901760
        %5012 = vmatprep.mubr.f32.mxu0 %v5011
        %v5013 = vand.u32 %v3880, 4294901760
        %5014 = vmatmul.mubr.f32.gmra.mrb[0].mxu0 %v5013
        %v5015 = vpop.f32.mrb[0].mxu0
        %v5016 = vadd.f32 %v4607, %v5015
        %v5017 = vpop.f32.mrb[0].mxu0
        %v5018 = vadd.f32 %v4609, %v5017
        %v5019 = vand.u32 %v3889, 4294901760
        %5020 = vmatprep.mubr.f32.mxu0 %v5019
        %v5021 = vand.u32 %v3887, 4294901760
        %5022 = vmatmul.mubr.f32.gmra.mrb[0].mxu0 %v5021
        %v5023 = vpop.f32.mrb[0].mxu0
        %v5024 = vadd.f32 %v4623, %v5023
        %v5025 = vpop.f32.mrb[0].mxu0
        %v5026 = vadd.f32 %v4625, %v5025
        %5027 = vdwg.mxu0
        %v5028 = vand.u32 %v4381, 4294901760
        %v5029 = vsub.f32 %v4381, %v5028
        %5030 = vmatprep.subr.mxu0 %v5029
        %v5031 = vand.u32 %v4380, 4294901760
        %v5032 = vsub.f32 %v4380, %v5031
        %5033 = vmatpush1.msra.mxu0 %v5032
        %v5034 = vand.u32 %v4383, 4294901760
        %v5035 = vsub.f32 %v4383, %v5034
        %5036 = vmatprep.subr.mxu0 %v5035
        %v5037 = vand.u32 %v4382, 4294901760
        %v5038 = vsub.f32 %v4382, %v5037
        %5039 = vmatpush1.msra.mxu0 %v5038
        %v5040 = vand.u32 %v4385, 4294901760
        %v5041 = vsub.f32 %v4385, %v5040
        %5042 = vmatprep.subr.mxu0 %v5041
        %v5043 = vand.u32 %v4384, 4294901760
        %v5044 = vsub.f32 %v4384, %v5043
        %5045 = vmatpush1.msra.mxu0 %v5044
        %v5046 = vand.u32 %v4387, 4294901760
        %v5047 = vsub.f32 %v4387, %v5046
        %5048 = vmatprep.subr.mxu0 %v5047
        %v5049 = vand.u32 %v4386, 4294901760
        %v5050 = vsub.f32 %v4386, %v5049
        %5051 = vmatpush1.msra.mxu0 %v5050
        %v5052 = vand.u32 %v4389, 4294901760
        %v5053 = vsub.f32 %v4389, %v5052
        %5054 = vmatprep.subr.mxu0 %v5053
        %v5055 = vand.u32 %v4388, 4294901760
        %v5056 = vsub.f32 %v4388, %v5055
        %5057 = vmatpush1.msra.mxu0 %v5056
        %v5058 = vand.u32 %v4391, 4294901760
        %v5059 = vsub.f32 %v4391, %v5058
        %5060 = vmatprep.subr.mxu0 %v5059
        %v5061 = vand.u32 %v4390, 4294901760
        %v5062 = vsub.f32 %v4390, %v5061
        %5063 = vmatpush1.msra.mxu0 %v5062
        %v5064 = vand.u32 %v4393, 4294901760
        %v5065 = vsub.f32 %v4393, %v5064
        %5066 = vmatprep.subr.mxu0 %v5065
        %v5067 = vand.u32 %v4392, 4294901760
        %v5068 = vsub.f32 %v4392, %v5067
        %5069 = vmatpush1.msra.mxu0 %v5068
        %v5070 = vand.u32 %v4395, 4294901760
        %v5071 = vsub.f32 %v4395, %v5070
        %5072 = vmatprep.subr.mxu0 %v5071
        %v5073 = vand.u32 %v4394, 4294901760
        %v5074 = vsub.f32 %v4394, %v5073
        %5075 = vmatpush1.msra.mxu0 %v5074
        %v5076 = vand.u32 %v4397, 4294901760
        %v5077 = vsub.f32 %v4397, %v5076
        %5078 = vmatprep.subr.mxu0 %v5077
        %v5079 = vand.u32 %v4396, 4294901760
        %v5080 = vsub.f32 %v4396, %v5079
        %5081 = vmatpush1.msra.mxu0 %v5080
        %v5082 = vand.u32 %v4399, 4294901760
        %v5083 = vsub.f32 %v4399, %v5082
        %5084 = vmatprep.subr.mxu0 %v5083
        %v5085 = vand.u32 %v4398, 4294901760
        %v5086 = vsub.f32 %v4398, %v5085
        %5087 = vmatpush1.msra.mxu0 %v5086
        %v5088 = vand.u32 %v4401, 4294901760
        %v5089 = vsub.f32 %v4401, %v5088
        %5090 = vmatprep.subr.mxu0 %v5089
        %v5091 = vand.u32 %v4400, 4294901760
        %v5092 = vsub.f32 %v4400, %v5091
        %5093 = vmatpush1.msra.mxu0 %v5092
        %v5094 = vand.u32 %v4403, 4294901760
        %v5095 = vsub.f32 %v4403, %v5094
        %5096 = vmatprep.subr.mxu0 %v5095
        %v5097 = vand.u32 %v4402, 4294901760
        %v5098 = vsub.f32 %v4402, %v5097
        %5099 = vmatpush1.msra.mxu0 %v5098
        %v5100 = vand.u32 %v4405, 4294901760
        %v5101 = vsub.f32 %v4405, %v5100
        %5102 = vmatprep.subr.mxu0 %v5101
        %v5103 = vand.u32 %v4404, 4294901760
        %v5104 = vsub.f32 %v4404, %v5103
        %5105 = vmatpush1.msra.mxu0 %v5104
        %v5106 = vand.u32 %v4407, 4294901760
        %v5107 = vsub.f32 %v4407, %v5106
        %5108 = vmatprep.subr.mxu0 %v5107
        %v5109 = vand.u32 %v4406, 4294901760
        %v5110 = vsub.f32 %v4406, %v5109
        %5111 = vmatpush1.msra.mxu0 %v5110
        %v5112 = vand.u32 %v4409, 4294901760
        %v5113 = vsub.f32 %v4409, %v5112
        %5114 = vmatprep.subr.mxu0 %v5113
        %v5115 = vand.u32 %v4408, 4294901760
        %v5116 = vsub.f32 %v4408, %v5115
        %5117 = vmatpush1.msra.mxu0 %v5116
        %v5118 = vand.u32 %v4411, 4294901760
        %v5119 = vsub.f32 %v4411, %v5118
        %5120 = vmatprep.subr.mxu0 %v5119
        %v5121 = vand.u32 %v4410, 4294901760
        %v5122 = vsub.f32 %v4410, %v5121
        %5123 = vmatpush1.msra.mxu0 %v5122
        %v5124 = vand.u32 %v4413, 4294901760
        %v5125 = vsub.f32 %v4413, %v5124
        %5126 = vmatprep.subr.mxu0 %v5125
        %v5127 = vand.u32 %v4412, 4294901760
        %v5128 = vsub.f32 %v4412, %v5127
        %5129 = vmatpush1.msra.mxu0 %v5128
        %v5130 = vand.u32 %v4415, 4294901760
        %v5131 = vsub.f32 %v4415, %v5130
        %5132 = vmatprep.subr.mxu0 %v5131
        %v5133 = vand.u32 %v4414, 4294901760
        %v5134 = vsub.f32 %v4414, %v5133
        %5135 = vmatpush1.msra.mxu0 %v5134
        %v5136 = vand.u32 %v4417, 4294901760
        %v5137 = vsub.f32 %v4417, %v5136
        %5138 = vmatprep.subr.mxu0 %v5137
        %v5139 = vand.u32 %v4416, 4294901760
        %v5140 = vsub.f32 %v4416, %v5139
        %5141 = vmatpush1.msra.mxu0 %v5140
        %v5142 = vand.u32 %v4419, 4294901760
        %v5143 = vsub.f32 %v4419, %v5142
        %5144 = vmatprep.subr.mxu0 %v5143
        %v5145 = vand.u32 %v4418, 4294901760
        %v5146 = vsub.f32 %v4418, %v5145
        %5147 = vmatpush1.msra.mxu0 %v5146
        %v5148 = vand.u32 %v4421, 4294901760
        %v5149 = vsub.f32 %v4421, %v5148
        %5150 = vmatprep.subr.mxu0 %v5149
        %v5151 = vand.u32 %v4420, 4294901760
        %v5152 = vsub.f32 %v4420, %v5151
        %5153 = vmatpush1.msra.mxu0 %v5152
        %v5154 = vand.u32 %v4423, 4294901760
        %v5155 = vsub.f32 %v4423, %v5154
        %5156 = vmatprep.subr.mxu0 %v5155
        %v5157 = vand.u32 %v4422, 4294901760
        %v5158 = vsub.f32 %v4422, %v5157
        %5159 = vmatpush1.msra.mxu0 %v5158
        %v5160 = vand.u32 %v4425, 4294901760
        %v5161 = vsub.f32 %v4425, %v5160
        %5162 = vmatprep.subr.mxu0 %v5161
        %v5163 = vand.u32 %v4424, 4294901760
        %v5164 = vsub.f32 %v4424, %v5163
        %5165 = vmatpush1.msra.mxu0 %v5164
        %v5166 = vand.u32 %v4427, 4294901760
        %v5167 = vsub.f32 %v4427, %v5166
        %5168 = vmatprep.subr.mxu0 %v5167
        %v5169 = vand.u32 %v4426, 4294901760
        %v5170 = vsub.f32 %v4426, %v5169
        %5171 = vmatpush1.msra.mxu0 %v5170
        %v5172 = vand.u32 %v4429, 4294901760
        %v5173 = vsub.f32 %v4429, %v5172
        %5174 = vmatprep.subr.mxu0 %v5173
        %v5175 = vand.u32 %v4428, 4294901760
        %v5176 = vsub.f32 %v4428, %v5175
        %5177 = vmatpush1.msra.mxu0 %v5176
        %v5178 = vand.u32 %v4431, 4294901760
        %v5179 = vsub.f32 %v4431, %v5178
        %5180 = vmatprep.subr.mxu0 %v5179
        %v5181 = vand.u32 %v4430, 4294901760
        %v5182 = vsub.f32 %v4430, %v5181
        %5183 = vmatpush1.msra.mxu0 %v5182
        %v5184 = vand.u32 %v4433, 4294901760
        %v5185 = vsub.f32 %v4433, %v5184
        %5186 = vmatprep.subr.mxu0 %v5185
        %v5187 = vand.u32 %v4432, 4294901760
        %v5188 = vsub.f32 %v4432, %v5187
        %5189 = vmatpush1.msra.mxu0 %v5188
        %v5190 = vand.u32 %v4435, 4294901760
        %v5191 = vsub.f32 %v4435, %v5190
        %5192 = vmatprep.subr.mxu0 %v5191
        %v5193 = vand.u32 %v4434, 4294901760
        %v5194 = vsub.f32 %v4434, %v5193
        %5195 = vmatpush1.msra.mxu0 %v5194
        %v5196 = vand.u32 %v4437, 4294901760
        %v5197 = vsub.f32 %v4437, %v5196
        %5198 = vmatprep.subr.mxu0 %v5197
        %v5199 = vand.u32 %v4436, 4294901760
        %v5200 = vsub.f32 %v4436, %v5199
        %5201 = vmatpush1.msra.mxu0 %v5200
        %v5202 = vand.u32 %v4439, 4294901760
        %v5203 = vsub.f32 %v4439, %v5202
        %5204 = vmatprep.subr.mxu0 %v5203
        %v5205 = vand.u32 %v4438, 4294901760
        %v5206 = vsub.f32 %v4438, %v5205
        %5207 = vmatpush1.msra.mxu0 %v5206
        %v5208 = vand.u32 %v4441, 4294901760
        %v5209 = vsub.f32 %v4441, %v5208
        %5210 = vmatprep.subr.mxu0 %v5209
        %v5211 = vand.u32 %v4440, 4294901760
        %v5212 = vsub.f32 %v4440, %v5211
        %5213 = vmatpush1.msra.mxu0 %v5212
        %v5214 = vand.u32 %v4443, 4294901760
        %v5215 = vsub.f32 %v4443, %v5214
        %5216 = vmatprep.subr.mxu0 %v5215
        %v5217 = vand.u32 %v4442, 4294901760
        %v5218 = vsub.f32 %v4442, %v5217
        %5219 = vmatpush1.msra.mxu0 %v5218
        %v5220 = vand.u32 %v3882, 4294901760
        %v5221 = vsub.f32 %v3882, %v5220
        %5222 = vmatprep.mubr.f32.mxu0 %v5221
        %v5223 = vand.u32 %v3880, 4294901760
        %v5224 = vsub.f32 %v3880, %v5223
        %5225 = vmatmul.mubr.f32.gmra.mrb[0].mxu0 %v5224
        %v5226 = vpop.f32.mrb[0].mxu0
        %v5227 = vadd.f32 %v5016, %v5226
        %v5228 = vpop.f32.mrb[0].mxu0
        %v5229 = vadd.f32 %v5018, %v5228
        %v5230 = vand.u32 %v3889, 4294901760
        %v5231 = vsub.f32 %v3889, %v5230
        %5232 = vmatprep.mubr.f32.mxu0 %v5231
        %v5233 = vand.u32 %v3887, 4294901760
        %v5234 = vsub.f32 %v3887, %v5233
        %5235 = vmatmul.mubr.f32.gmra.mrb[0].mxu0 %v5234
        %v5236 = vpop.f32.mrb[0].mxu0
        %v5237 = vadd.f32 %v5024, %v5236
        %v5238 = vpop.f32.mrb[0].mxu0
        %v5239 = vadd.f32 %v5026, %v5238
        %5240 = vdwg.mxu0
        %v5241 = vand.u32 %v4381, 4294901760
        %5242 = vmatprep.subr.mxu0 %v5241
        %v5243 = vand.u32 %v4380, 4294901760
        %5244 = vmatpush1.msra.mxu0 %v5243
        %v5245 = vand.u32 %v4383, 4294901760
        %5246 = vmatprep.subr.mxu0 %v5245
        %v5247 = vand.u32 %v4382, 4294901760
        %5248 = vmatpush1.msra.mxu0 %v5247
        %v5249 = vand.u32 %v4385, 4294901760
        %5250 = vmatprep.subr.mxu0 %v5249
        %v5251 = vand.u32 %v4384, 4294901760
        %5252 = vmatpush1.msra.mxu0 %v5251
        %v5253 = vand.u32 %v4387, 4294901760
        %5254 = vmatprep.subr.mxu0 %v5253
        %v5255 = vand.u32 %v4386, 4294901760
        %5256 = vmatpush1.msra.mxu0 %v5255
        %v5257 = vand.u32 %v4389, 4294901760
        %5258 = vmatprep.subr.mxu0 %v5257
        %v5259 = vand.u32 %v4388, 4294901760
        %5260 = vmatpush1.msra.mxu0 %v5259
        %v5261 = vand.u32 %v4391, 4294901760
        %5262 = vmatprep.subr.mxu0 %v5261
        %v5263 = vand.u32 %v4390, 4294901760
        %5264 = vmatpush1.msra.mxu0 %v5263
        %v5265 = vand.u32 %v4393, 4294901760
        %5266 = vmatprep.subr.mxu0 %v5265
        %v5267 = vand.u32 %v4392, 4294901760
        %5268 = vmatpush1.msra.mxu0 %v5267
        %v5269 = vand.u32 %v4395, 4294901760
        %5270 = vmatprep.subr.mxu0 %v5269
        %v5271 = vand.u32 %v4394, 4294901760
        %5272 = vmatpush1.msra.mxu0 %v5271
        %v5273 = vand.u32 %v4397, 4294901760
        %5274 = vmatprep.subr.mxu0 %v5273
        %v5275 = vand.u32 %v4396, 4294901760
        %5276 = vmatpush1.msra.mxu0 %v5275
        %v5277 = vand.u32 %v4399, 4294901760
        %5278 = vmatprep.subr.mxu0 %v5277
        %v5279 = vand.u32 %v4398, 4294901760
        %5280 = vmatpush1.msra.mxu0 %v5279
        %v5281 = vand.u32 %v4401, 4294901760
        %5282 = vmatprep.subr.mxu0 %v5281
        %v5283 = vand.u32 %v4400, 4294901760
        %5284 = vmatpush1.msra.mxu0 %v5283
        %v5285 = vand.u32 %v4403, 4294901760
        %5286 = vmatprep.subr.mxu0 %v5285
        %v5287 = vand.u32 %v4402, 4294901760
        %5288 = vmatpush1.msra.mxu0 %v5287
        %v5289 = vand.u32 %v4405, 4294901760
        %5290 = vmatprep.subr.mxu0 %v5289
        %v5291 = vand.u32 %v4404, 4294901760
        %5292 = vmatpush1.msra.mxu0 %v5291
        %v5293 = vand.u32 %v4407, 4294901760
        %5294 = vmatprep.subr.mxu0 %v5293
        %v5295 = vand.u32 %v4406, 4294901760
        %5296 = vmatpush1.msra.mxu0 %v5295
        %v5297 = vand.u32 %v4409, 4294901760
        %5298 = vmatprep.subr.mxu0 %v5297
        %v5299 = vand.u32 %v4408, 4294901760
        %5300 = vmatpush1.msra.mxu0 %v5299
        %v5301 = vand.u32 %v4411, 4294901760
        %5302 = vmatprep.subr.mxu0 %v5301
        %v5303 = vand.u32 %v4410, 4294901760
        %5304 = vmatpush1.msra.mxu0 %v5303
        %v5305 = vand.u32 %v4413, 4294901760
        %5306 = vmatprep.subr.mxu0 %v5305
        %v5307 = vand.u32 %v4412, 4294901760
        %5308 = vmatpush1.msra.mxu0 %v5307
        %v5309 = vand.u32 %v4415, 4294901760
        %5310 = vmatprep.subr.mxu0 %v5309
        %v5311 = vand.u32 %v4414, 4294901760
        %5312 = vmatpush1.msra.mxu0 %v5311
        %v5313 = vand.u32 %v4417, 4294901760
        %5314 = vmatprep.subr.mxu0 %v5313
        %v5315 = vand.u32 %v4416, 4294901760
        %5316 = vmatpush1.msra.mxu0 %v5315
        %v5317 = vand.u32 %v4419, 4294901760
        %5318 = vmatprep.subr.mxu0 %v5317
        %v5319 = vand.u32 %v4418, 4294901760
        %5320 = vmatpush1.msra.mxu0 %v5319
        %v5321 = vand.u32 %v4421, 4294901760
        %5322 = vmatprep.subr.mxu0 %v5321
        %v5323 = vand.u32 %v4420, 4294901760
        %5324 = vmatpush1.msra.mxu0 %v5323
        %v5325 = vand.u32 %v4423, 4294901760
        %5326 = vmatprep.subr.mxu0 %v5325
        %v5327 = vand.u32 %v4422, 4294901760
        %5328 = vmatpush1.msra.mxu0 %v5327
        %v5329 = vand.u32 %v4425, 4294901760
        %5330 = vmatprep.subr.mxu0 %v5329
        %v5331 = vand.u32 %v4424, 4294901760
        %5332 = vmatpush1.msra.mxu0 %v5331
        %v5333 = vand.u32 %v4427, 4294901760
        %5334 = vmatprep.subr.mxu0 %v5333
        %v5335 = vand.u32 %v4426, 4294901760
        %5336 = vmatpush1.msra.mxu0 %v5335
        %v5337 = vand.u32 %v4429, 4294901760
        %5338 = vmatprep.subr.mxu0 %v5337
        %v5339 = vand.u32 %v4428, 4294901760
        %5340 = vmatpush1.msra.mxu0 %v5339
        %v5341 = vand.u32 %v4431, 4294901760
        %5342 = vmatprep.subr.mxu0 %v5341
        %v5343 = vand.u32 %v4430, 4294901760
        %5344 = vmatpush1.msra.mxu0 %v5343
        %v5345 = vand.u32 %v4433, 4294901760
        %5346 = vmatprep.subr.mxu0 %v5345
        %v5347 = vand.u32 %v4432, 4294901760
        %5348 = vmatpush1.msra.mxu0 %v5347
        %v5349 = vand.u32 %v4435, 4294901760
        %5350 = vmatprep.subr.mxu0 %v5349
        %v5351 = vand.u32 %v4434, 4294901760
        %5352 = vmatpush1.msra.mxu0 %v5351
        %v5353 = vand.u32 %v4437, 4294901760
        %5354 = vmatprep.subr.mxu0 %v5353
        %v5355 = vand.u32 %v4436, 4294901760
        %5356 = vmatpush1.msra.mxu0 %v5355
        %v5357 = vand.u32 %v4439, 4294901760
        %5358 = vmatprep.subr.mxu0 %v5357
        %v5359 = vand.u32 %v4438, 4294901760
        %5360 = vmatpush1.msra.mxu0 %v5359
        %v5361 = vand.u32 %v4441, 4294901760
        %5362 = vmatprep.subr.mxu0 %v5361
        %v5363 = vand.u32 %v4440, 4294901760
        %5364 = vmatpush1.msra.mxu0 %v5363
        %v5365 = vand.u32 %v4443, 4294901760
        %5366 = vmatprep.subr.mxu0 %v5365
        %v5367 = vand.u32 %v4442, 4294901760
        %5368 = vmatpush1.msra.mxu0 %v5367
        %v5369 = vand.u32 %v3882, 4294901760
        %v5370 = vsub.f32 %v3882, %v5369
        %v5371 = vand.u32 %v5370, 4294901760
        %5372 = vmatprep.mubr.f32.mxu0 %v5371
        %v5373 = vand.u32 %v3880, 4294901760
        %v5374 = vsub.f32 %v3880, %v5373
        %v5375 = vand.u32 %v5374, 4294901760
        %5376 = vmatmul.mubr.f32.gmra.mrb[0].mxu0 %v5375
        %v5377 = vpop.f32.mrb[0].mxu0
        %v5378 = vadd.f32 %v5227, %v5377
        %v5379 = vpop.f32.mrb[0].mxu0
        %v5380 = vadd.f32 %v5229, %v5379
        %v5381 = vand.u32 %v3889, 4294901760
        %v5382 = vsub.f32 %v3889, %v5381
        %v5383 = vand.u32 %v5382, 4294901760
        %5384 = vmatprep.mubr.f32.mxu0 %v5383
        %v5385 = vand.u32 %v3887, 4294901760
        %v5386 = vsub.f32 %v3887, %v5385
        %v5387 = vand.u32 %v5386, 4294901760
        %5388 = vmatmul.mubr.f32.gmra.mrb[0].mxu0 %v5387
        %v5389 = vpop.f32.mrb[0].mxu0
        %v5390 = vadd.f32 %v5237, %v5389
        %v5391 = vpop.f32.mrb[0].mxu0
        %v5392 = vadd.f32 %v5239, %v5391
        %5393 = vdwg.mxu0
        %v5394 = vand.u32 %v4381, 4294901760
        %v5395 = vsub.f32 %v4381, %v5394
        %v5396 = vand.u32 %v5395, 4294901760
        %5397 = vmatprep.subr.mxu0 %v5396
        %v5398 = vand.u32 %v4380, 4294901760
        %v5399 = vsub.f32 %v4380, %v5398
        %v5400 = vand.u32 %v5399, 4294901760
        %5401 = vmatpush1.msra.mxu0 %v5400
        %v5402 = vand.u32 %v4383, 4294901760
        %v5403 = vsub.f32 %v4383, %v5402
        %v5404 = vand.u32 %v5403, 4294901760
        %5405 = vmatprep.subr.mxu0 %v5404
        %v5406 = vand.u32 %v4382, 4294901760
        %v5407 = vsub.f32 %v4382, %v5406
        %v5408 = vand.u32 %v5407, 4294901760
        %5409 = vmatpush1.msra.mxu0 %v5408
        %v5410 = vand.u32 %v4385, 4294901760
        %v5411 = vsub.f32 %v4385, %v5410
        %v5412 = vand.u32 %v5411, 4294901760
        %5413 = vmatprep.subr.mxu0 %v5412
        %v5414 = vand.u32 %v4384, 4294901760
        %v5415 = vsub.f32 %v4384, %v5414
        %v5416 = vand.u32 %v5415, 4294901760
        %5417 = vmatpush1.msra.mxu0 %v5416
        %v5418 = vand.u32 %v4387, 4294901760
        %v5419 = vsub.f32 %v4387, %v5418
        %v5420 = vand.u32 %v5419, 4294901760
        %5421 = vmatprep.subr.mxu0 %v5420
        %v5422 = vand.u32 %v4386, 4294901760
        %v5423 = vsub.f32 %v4386, %v5422
        %v5424 = vand.u32 %v5423, 4294901760
        %5425 = vmatpush1.msra.mxu0 %v5424
        %v5426 = vand.u32 %v4389, 4294901760
        %v5427 = vsub.f32 %v4389, %v5426
        %v5428 = vand.u32 %v5427, 4294901760
        %5429 = vmatprep.subr.mxu0 %v5428
        %v5430 = vand.u32 %v4388, 4294901760
        %v5431 = vsub.f32 %v4388, %v5430
        %v5432 = vand.u32 %v5431, 4294901760
        %5433 = vmatpush1.msra.mxu0 %v5432
        %v5434 = vand.u32 %v4391, 4294901760
        %v5435 = vsub.f32 %v4391, %v5434
        %v5436 = vand.u32 %v5435, 4294901760
        %5437 = vmatprep.subr.mxu0 %v5436
        %v5438 = vand.u32 %v4390, 4294901760
        %v5439 = vsub.f32 %v4390, %v5438
        %v5440 = vand.u32 %v5439, 4294901760
        %5441 = vmatpush1.msra.mxu0 %v5440
        %v5442 = vand.u32 %v4393, 4294901760
        %v5443 = vsub.f32 %v4393, %v5442
        %v5444 = vand.u32 %v5443, 4294901760
        %5445 = vmatprep.subr.mxu0 %v5444
        %v5446 = vand.u32 %v4392, 4294901760
        %v5447 = vsub.f32 %v4392, %v5446
        %v5448 = vand.u32 %v5447, 4294901760
        %5449 = vmatpush1.msra.mxu0 %v5448
        %v5450 = vand.u32 %v4395, 4294901760
        %v5451 = vsub.f32 %v4395, %v5450
        %v5452 = vand.u32 %v5451, 4294901760
        %5453 = vmatprep.subr.mxu0 %v5452
        %v5454 = vand.u32 %v4394, 4294901760
        %v5455 = vsub.f32 %v4394, %v5454
        %v5456 = vand.u32 %v5455, 4294901760
        %5457 = vmatpush1.msra.mxu0 %v5456
        %v5458 = vand.u32 %v4397, 4294901760
        %v5459 = vsub.f32 %v4397, %v5458
        %v5460 = vand.u32 %v5459, 4294901760
        %5461 = vmatprep.subr.mxu0 %v5460
        %v5462 = vand.u32 %v4396, 4294901760
        %v5463 = vsub.f32 %v4396, %v5462
        %v5464 = vand.u32 %v5463, 4294901760
        %5465 = vmatpush1.msra.mxu0 %v5464
        %v5466 = vand.u32 %v4399, 4294901760
        %v5467 = vsub.f32 %v4399, %v5466
        %v5468 = vand.u32 %v5467, 4294901760
        %5469 = vmatprep.subr.mxu0 %v5468
        %v5470 = vand.u32 %v4398, 4294901760
        %v5471 = vsub.f32 %v4398, %v5470
        %v5472 = vand.u32 %v5471, 4294901760
        %5473 = vmatpush1.msra.mxu0 %v5472
        %v5474 = vand.u32 %v4401, 4294901760
        %v5475 = vsub.f32 %v4401, %v5474
        %v5476 = vand.u32 %v5475, 4294901760
        %5477 = vmatprep.subr.mxu0 %v5476
        %v5478 = vand.u32 %v4400, 4294901760
        %v5479 = vsub.f32 %v4400, %v5478
        %v5480 = vand.u32 %v5479, 4294901760
        %5481 = vmatpush1.msra.mxu0 %v5480
        %v5482 = vand.u32 %v4403, 4294901760
        %v5483 = vsub.f32 %v4403, %v5482
        %v5484 = vand.u32 %v5483, 4294901760
        %5485 = vmatprep.subr.mxu0 %v5484
        %v5486 = vand.u32 %v4402, 4294901760
        %v5487 = vsub.f32 %v4402, %v5486
        %v5488 = vand.u32 %v5487, 4294901760
        %5489 = vmatpush1.msra.mxu0 %v5488
        %v5490 = vand.u32 %v4405, 4294901760
        %v5491 = vsub.f32 %v4405, %v5490
        %v5492 = vand.u32 %v5491, 4294901760
        %5493 = vmatprep.subr.mxu0 %v5492
        %v5494 = vand.u32 %v4404, 4294901760
        %v5495 = vsub.f32 %v4404, %v5494
        %v5496 = vand.u32 %v5495, 4294901760
        %5497 = vmatpush1.msra.mxu0 %v5496
        %v5498 = vand.u32 %v4407, 4294901760
        %v5499 = vsub.f32 %v4407, %v5498
        %v5500 = vand.u32 %v5499, 4294901760
        %5501 = vmatprep.subr.mxu0 %v5500
        %v5502 = vand.u32 %v4406, 4294901760
        %v5503 = vsub.f32 %v4406, %v5502
        %v5504 = vand.u32 %v5503, 4294901760
        %5505 = vmatpush1.msra.mxu0 %v5504
        %v5506 = vand.u32 %v4409, 4294901760
        %v5507 = vsub.f32 %v4409, %v5506
        %v5508 = vand.u32 %v5507, 4294901760
        %5509 = vmatprep.subr.mxu0 %v5508
        %v5510 = vand.u32 %v4408, 4294901760
        %v5511 = vsub.f32 %v4408, %v5510
        %v5512 = vand.u32 %v5511, 4294901760
        %5513 = vmatpush1.msra.mxu0 %v5512
        %v5514 = vand.u32 %v4411, 4294901760
        %v5515 = vsub.f32 %v4411, %v5514
        %v5516 = vand.u32 %v5515, 4294901760
        %5517 = vmatprep.subr.mxu0 %v5516
        %v5518 = vand.u32 %v4410, 4294901760
        %v5519 = vsub.f32 %v4410, %v5518
        %v5520 = vand.u32 %v5519, 4294901760
        %5521 = vmatpush1.msra.mxu0 %v5520
        %v5522 = vand.u32 %v4413, 4294901760
        %v5523 = vsub.f32 %v4413, %v5522
        %v5524 = vand.u32 %v5523, 4294901760
        %5525 = vmatprep.subr.mxu0 %v5524
        %v5526 = vand.u32 %v4412, 4294901760
        %v5527 = vsub.f32 %v4412, %v5526
        %v5528 = vand.u32 %v5527, 4294901760
        %5529 = vmatpush1.msra.mxu0 %v5528
        %v5530 = vand.u32 %v4415, 4294901760
        %v5531 = vsub.f32 %v4415, %v5530
        %v5532 = vand.u32 %v5531, 4294901760
        %5533 = vmatprep.subr.mxu0 %v5532
        %v5534 = vand.u32 %v4414, 4294901760
        %v5535 = vsub.f32 %v4414, %v5534
        %v5536 = vand.u32 %v5535, 4294901760
        %5537 = vmatpush1.msra.mxu0 %v5536
        %v5538 = vand.u32 %v4417, 4294901760
        %v5539 = vsub.f32 %v4417, %v5538
        %v5540 = vand.u32 %v5539, 4294901760
        %5541 = vmatprep.subr.mxu0 %v5540
        %v5542 = vand.u32 %v4416, 4294901760
        %v5543 = vsub.f32 %v4416, %v5542
        %v5544 = vand.u32 %v5543, 4294901760
        %5545 = vmatpush1.msra.mxu0 %v5544
        %v5546 = vand.u32 %v4419, 4294901760
        %v5547 = vsub.f32 %v4419, %v5546
        %v5548 = vand.u32 %v5547, 4294901760
        %5549 = vmatprep.subr.mxu0 %v5548
        %v5550 = vand.u32 %v4418, 4294901760
        %v5551 = vsub.f32 %v4418, %v5550
        %v5552 = vand.u32 %v5551, 4294901760
        %5553 = vmatpush1.msra.mxu0 %v5552
        %v5554 = vand.u32 %v4421, 4294901760
        %v5555 = vsub.f32 %v4421, %v5554
        %v5556 = vand.u32 %v5555, 4294901760
        %5557 = vmatprep.subr.mxu0 %v5556
        %v5558 = vand.u32 %v4420, 4294901760
        %v5559 = vsub.f32 %v4420, %v5558
        %v5560 = vand.u32 %v5559, 4294901760
        %5561 = vmatpush1.msra.mxu0 %v5560
        %v5562 = vand.u32 %v4423, 4294901760
        %v5563 = vsub.f32 %v4423, %v5562
        %v5564 = vand.u32 %v5563, 4294901760
        %5565 = vmatprep.subr.mxu0 %v5564
        %v5566 = vand.u32 %v4422, 4294901760
        %v5567 = vsub.f32 %v4422, %v5566
        %v5568 = vand.u32 %v5567, 4294901760
        %5569 = vmatpush1.msra.mxu0 %v5568
        %v5570 = vand.u32 %v4425, 4294901760
        %v5571 = vsub.f32 %v4425, %v5570
        %v5572 = vand.u32 %v5571, 4294901760
        %5573 = vmatprep.subr.mxu0 %v5572
        %v5574 = vand.u32 %v4424, 4294901760
        %v5575 = vsub.f32 %v4424, %v5574
        %v5576 = vand.u32 %v5575, 4294901760
        %5577 = vmatpush1.msra.mxu0 %v5576
        %v5578 = vand.u32 %v4427, 4294901760
        %v5579 = vsub.f32 %v4427, %v5578
        %v5580 = vand.u32 %v5579, 4294901760
        %5581 = vmatprep.subr.mxu0 %v5580
        %v5582 = vand.u32 %v4426, 4294901760
        %v5583 = vsub.f32 %v4426, %v5582
        %v5584 = vand.u32 %v5583, 4294901760
        %5585 = vmatpush1.msra.mxu0 %v5584
        %v5586 = vand.u32 %v4429, 4294901760
        %v5587 = vsub.f32 %v4429, %v5586
        %v5588 = vand.u32 %v5587, 4294901760
        %5589 = vmatprep.subr.mxu0 %v5588
        %v5590 = vand.u32 %v4428, 4294901760
        %v5591 = vsub.f32 %v4428, %v5590
        %v5592 = vand.u32 %v5591, 4294901760
        %5593 = vmatpush1.msra.mxu0 %v5592
        %v5594 = vand.u32 %v4431, 4294901760
        %v5595 = vsub.f32 %v4431, %v5594
        %v5596 = vand.u32 %v5595, 4294901760
        %5597 = vmatprep.subr.mxu0 %v5596
        %v5598 = vand.u32 %v4430, 4294901760
        %v5599 = vsub.f32 %v4430, %v5598
        %v5600 = vand.u32 %v5599, 4294901760
        %5601 = vmatpush1.msra.mxu0 %v5600
        %v5602 = vand.u32 %v4433, 4294901760
        %v5603 = vsub.f32 %v4433, %v5602
        %v5604 = vand.u32 %v5603, 4294901760
        %5605 = vmatprep.subr.mxu0 %v5604
        %v5606 = vand.u32 %v4432, 4294901760
        %v5607 = vsub.f32 %v4432, %v5606
        %v5608 = vand.u32 %v5607, 4294901760
        %5609 = vmatpush1.msra.mxu0 %v5608
        %v5610 = vand.u32 %v4435, 4294901760
        %v5611 = vsub.f32 %v4435, %v5610
        %v5612 = vand.u32 %v5611, 4294901760
        %5613 = vmatprep.subr.mxu0 %v5612
        %v5614 = vand.u32 %v4434, 4294901760
        %v5615 = vsub.f32 %v4434, %v5614
        %v5616 = vand.u32 %v5615, 4294901760
        %5617 = vmatpush1.msra.mxu0 %v5616
        %v5618 = vand.u32 %v4437, 4294901760
        %v5619 = vsub.f32 %v4437, %v5618
        %v5620 = vand.u32 %v5619, 4294901760
        %5621 = vmatprep.subr.mxu0 %v5620
        %v5622 = vand.u32 %v4436, 4294901760
        %v5623 = vsub.f32 %v4436, %v5622
        %v5624 = vand.u32 %v5623, 4294901760
        %5625 = vmatpush1.msra.mxu0 %v5624
        %v5626 = vand.u32 %v4439, 4294901760
        %v5627 = vsub.f32 %v4439, %v5626
        %v5628 = vand.u32 %v5627, 4294901760
        %5629 = vmatprep.subr.mxu0 %v5628
        %v5630 = vand.u32 %v4438, 4294901760
        %v5631 = vsub.f32 %v4438, %v5630
        %v5632 = vand.u32 %v5631, 4294901760
        %5633 = vmatpush1.msra.mxu0 %v5632
        %v5634 = vand.u32 %v4441, 4294901760
        %v5635 = vsub.f32 %v4441, %v5634
        %v5636 = vand.u32 %v5635, 4294901760
        %5637 = vmatprep.subr.mxu0 %v5636
        %v5638 = vand.u32 %v4440, 4294901760
        %v5639 = vsub.f32 %v4440, %v5638
        %v5640 = vand.u32 %v5639, 4294901760
        %5641 = vmatpush1.msra.mxu0 %v5640
        %v5642 = vand.u32 %v4443, 4294901760
        %v5643 = vsub.f32 %v4443, %v5642
        %v5644 = vand.u32 %v5643, 4294901760
        %5645 = vmatprep.subr.mxu0 %v5644
        %v5646 = vand.u32 %v4442, 4294901760
        %v5647 = vsub.f32 %v4442, %v5646
        %v5648 = vand.u32 %v5647, 4294901760
        %5649 = vmatpush1.msra.mxu0 %v5648
        %v5650 = vand.u32 %v3882, 4294901760
        %5651 = vmatprep.mubr.f32.mxu0 %v5650
        %v5652 = vand.u32 %v3880, 4294901760
        %5653 = vmatmul.mubr.f32.gmra.mrb[0].mxu0 %v5652
        %v5654 = vpop.f32.mrb[0].mxu0
        %v5655 = vadd.f32 %v5378, %v5654
        %v5656 = vpop.f32.mrb[0].mxu0
        %v5657 = vadd.f32 %v5380, %v5656
        %v5658 = vand.u32 %v3889, 4294901760
        %5659 = vmatprep.mubr.f32.mxu0 %v5658
        %v5660 = vand.u32 %v3887, 4294901760
        %5661 = vmatmul.mubr.f32.gmra.mrb[0].mxu0 %v5660
        %v5662 = vpop.f32.mrb[0].mxu0
        %v5663 = vadd.f32 %v5390, %v5662
        %v5664 = vpop.f32.mrb[0].mxu0
        %v5665 = vadd.f32 %v5392, %v5664
        %5666 = vdwg.mxu0
        %v5667 = vand.u32 %v4381, 4294901760
        %5668 = vmatprep.subr.mxu0 %v5667
        %v5669 = vand.u32 %v4380, 4294901760
        %5670 = vmatpush1.msra.mxu0 %v5669
        %v5671 = vand.u32 %v4383, 4294901760
        %5672 = vmatprep.subr.mxu0 %v5671
        %v5673 = vand.u32 %v4382, 4294901760
        %5674 = vmatpush1.msra.mxu0 %v5673
        %v5675 = vand.u32 %v4385, 4294901760
        %5676 = vmatprep.subr.mxu0 %v5675
        %v5677 = vand.u32 %v4384, 4294901760
        %5678 = vmatpush1.msra.mxu0 %v5677
        %v5679 = vand.u32 %v4387, 4294901760
        %5680 = vmatprep.subr.mxu0 %v5679
        %v5681 = vand.u32 %v4386, 4294901760
        %5682 = vmatpush1.msra.mxu0 %v5681
        %v5683 = vand.u32 %v4389, 4294901760
        %5684 = vmatprep.subr.mxu0 %v5683
        %v5685 = vand.u32 %v4388, 4294901760
        %5686 = vmatpush1.msra.mxu0 %v5685
        %v5687 = vand.u32 %v4391, 4294901760
        %5688 = vmatprep.subr.mxu0 %v5687
        %v5689 = vand.u32 %v4390, 4294901760
        %5690 = vmatpush1.msra.mxu0 %v5689
        %v5691 = vand.u32 %v4393, 4294901760
        %5692 = vmatprep.subr.mxu0 %v5691
        %v5693 = vand.u32 %v4392, 4294901760
        %5694 = vmatpush1.msra.mxu0 %v5693
        %v5695 = vand.u32 %v4395, 4294901760
        %5696 = vmatprep.subr.mxu0 %v5695
        %v5697 = vand.u32 %v4394, 4294901760
        %5698 = vmatpush1.msra.mxu0 %v5697
        %v5699 = vand.u32 %v4397, 4294901760
        %5700 = vmatprep.subr.mxu0 %v5699
        %v5701 = vand.u32 %v4396, 4294901760
        %5702 = vmatpush1.msra.mxu0 %v5701
        %v5703 = vand.u32 %v4399, 4294901760
        %5704 = vmatprep.subr.mxu0 %v5703
        %v5705 = vand.u32 %v4398, 4294901760
        %5706 = vmatpush1.msra.mxu0 %v5705
        %v5707 = vand.u32 %v4401, 4294901760
        %5708 = vmatprep.subr.mxu0 %v5707
        %v5709 = vand.u32 %v4400, 4294901760
        %5710 = vmatpush1.msra.mxu0 %v5709
        %v5711 = vand.u32 %v4403, 4294901760
        %5712 = vmatprep.subr.mxu0 %v5711
        %v5713 = vand.u32 %v4402, 4294901760
        %5714 = vmatpush1.msra.mxu0 %v5713
        %v5715 = vand.u32 %v4405, 4294901760
        %5716 = vmatprep.subr.mxu0 %v5715
        %v5717 = vand.u32 %v4404, 4294901760
        %5718 = vmatpush1.msra.mxu0 %v5717
        %v5719 = vand.u32 %v4407, 4294901760
        %5720 = vmatprep.subr.mxu0 %v5719
        %v5721 = vand.u32 %v4406, 4294901760
        %5722 = vmatpush1.msra.mxu0 %v5721
        %v5723 = vand.u32 %v4409, 4294901760
        %5724 = vmatprep.subr.mxu0 %v5723
        %v5725 = vand.u32 %v4408, 4294901760
        %5726 = vmatpush1.msra.mxu0 %v5725
        %v5727 = vand.u32 %v4411, 4294901760
        %5728 = vmatprep.subr.mxu0 %v5727
        %v5729 = vand.u32 %v4410, 4294901760
        %5730 = vmatpush1.msra.mxu0 %v5729
        %v5731 = vand.u32 %v4413, 4294901760
        %5732 = vmatprep.subr.mxu0 %v5731
        %v5733 = vand.u32 %v4412, 4294901760
        %5734 = vmatpush1.msra.mxu0 %v5733
        %v5735 = vand.u32 %v4415, 4294901760
        %5736 = vmatprep.subr.mxu0 %v5735
        %v5737 = vand.u32 %v4414, 4294901760
        %5738 = vmatpush1.msra.mxu0 %v5737
        %v5739 = vand.u32 %v4417, 4294901760
        %5740 = vmatprep.subr.mxu0 %v5739
        %v5741 = vand.u32 %v4416, 4294901760
        %5742 = vmatpush1.msra.mxu0 %v5741
        %v5743 = vand.u32 %v4419, 4294901760
        %5744 = vmatprep.subr.mxu0 %v5743
        %v5745 = vand.u32 %v4418, 4294901760
        %5746 = vmatpush1.msra.mxu0 %v5745
        %v5747 = vand.u32 %v4421, 4294901760
        %5748 = vmatprep.subr.mxu0 %v5747
        %v5749 = vand.u32 %v4420, 4294901760
        %5750 = vmatpush1.msra.mxu0 %v5749
        %v5751 = vand.u32 %v4423, 4294901760
        %5752 = vmatprep.subr.mxu0 %v5751
        %v5753 = vand.u32 %v4422, 4294901760
        %5754 = vmatpush1.msra.mxu0 %v5753
        %v5755 = vand.u32 %v4425, 4294901760
        %5756 = vmatprep.subr.mxu0 %v5755
        %v5757 = vand.u32 %v4424, 4294901760
        %5758 = vmatpush1.msra.mxu0 %v5757
        %v5759 = vand.u32 %v4427, 4294901760
        %5760 = vmatprep.subr.mxu0 %v5759
        %v5761 = vand.u32 %v4426, 4294901760
        %5762 = vmatpush1.msra.mxu0 %v5761
        %v5763 = vand.u32 %v4429, 4294901760
        %5764 = vmatprep.subr.mxu0 %v5763
        %v5765 = vand.u32 %v4428, 4294901760
        %5766 = vmatpush1.msra.mxu0 %v5765
        %v5767 = vand.u32 %v4431, 4294901760
        %5768 = vmatprep.subr.mxu0 %v5767
        %v5769 = vand.u32 %v4430, 4294901760
        %5770 = vmatpush1.msra.mxu0 %v5769
        %v5771 = vand.u32 %v4433, 4294901760
        %5772 = vmatprep.subr.mxu0 %v5771
        %v5773 = vand.u32 %v4432, 4294901760
        %5774 = vmatpush1.msra.mxu0 %v5773
        %v5775 = vand.u32 %v4435, 4294901760
        %5776 = vmatprep.subr.mxu0 %v5775
        %v5777 = vand.u32 %v4434, 4294901760
        %5778 = vmatpush1.msra.mxu0 %v5777
        %v5779 = vand.u32 %v4437, 4294901760
        %5780 = vmatprep.subr.mxu0 %v5779
        %v5781 = vand.u32 %v4436, 4294901760
        %5782 = vmatpush1.msra.mxu0 %v5781
        %v5783 = vand.u32 %v4439, 4294901760
        %5784 = vmatprep.subr.mxu0 %v5783
        %v5785 = vand.u32 %v4438, 4294901760
        %5786 = vmatpush1.msra.mxu0 %v5785
        %v5787 = vand.u32 %v4441, 4294901760
        %5788 = vmatprep.subr.mxu0 %v5787
        %v5789 = vand.u32 %v4440, 4294901760
        %5790 = vmatpush1.msra.mxu0 %v5789
        %v5791 = vand.u32 %v4443, 4294901760
        %5792 = vmatprep.subr.mxu0 %v5791
        %v5793 = vand.u32 %v4442, 4294901760
        %5794 = vmatpush1.msra.mxu0 %v5793
        %v5795 = vand.u32 %v3882, 4294901760
        %5796 = vmatprep.mubr.f32.mxu0 %v5795
        %v5797 = vand.u32 %v3880, 4294901760
        %5798 = vmatmul.mubr.f32.gmra.mrb[0].mxu0 %v5797
        %v5799 = vpop.f32.mrb[0].mxu0
        %v5800 = vadd.f32 %v5655, %v5799
        %v5801 = vpop.f32.mrb[0].mxu0
        %v5802 = vadd.f32 %v5657, %v5801
        %v5803 = vand.u32 %v3889, 4294901760
        %5804 = vmatprep.mubr.f32.mxu0 %v5803
        %v5805 = vand.u32 %v3887, 4294901760
        %5806 = vmatmul.mubr.f32.gmra.mrb[0].mxu0 %v5805
        %v5807 = vpop.f32.mrb[0].mxu0
        %v5808 = vadd.f32 %v5663, %v5807
        %v5809 = vpop.f32.mrb[0].mxu0
        %v5810 = vadd.f32 %v5665, %v5809
        %5811 = vdwg.mxu0
        %v5812 = vand.u32 %v4445, 4294901760
        %5813 = vmatprep.subr.mxu0 %v5812
        %v5814 = vand.u32 %v4444, 4294901760
        %5815 = vmatpush1.msra.mxu0 %v5814
        %v5816 = vand.u32 %v4447, 4294901760
        %5817 = vmatprep.subr.mxu0 %v5816
        %v5818 = vand.u32 %v4446, 4294901760
        %5819 = vmatpush1.msra.mxu0 %v5818
        %v5820 = vand.u32 %v4449, 4294901760
        %5821 = vmatprep.subr.mxu0 %v5820
        %v5822 = vand.u32 %v4448, 4294901760
        %5823 = vmatpush1.msra.mxu0 %v5822
        %v5824 = vand.u32 %v4464, 4294901760
        %5825 = vmatprep.subr.mxu0 %v5824
        %v5826 = vand.u32 %v4461, 4294901760
        %5827 = vmatpush1.msra.mxu0 %v5826
        %5828 = vmatprep.subr.mxu0 0.0
        %5829 = vmatpush1.msra.mxu0 0.0
        %5830 = vmatprep.subr.mxu0 0.0
        %5831 = vmatpush1.msra.mxu0 0.0
        %5832 = vmatprep.subr.mxu0 0.0
        %5833 = vmatpush1.msra.mxu0 0.0
        %5834 = vmatprep.subr.mxu0 0.0
        %5835 = vmatpush1.msra.mxu0 0.0
        %5836 = vmatprep.subr.mxu0 0.0
        %5837 = vmatpush1.msra.mxu0 0.0
        %5838 = vmatprep.subr.mxu0 0.0
        %5839 = vmatpush1.msra.mxu0 0.0
        %5840 = vmatprep.subr.mxu0 0.0
        %5841 = vmatpush1.msra.mxu0 0.0
        %5842 = vmatprep.subr.mxu0 0.0
        %5843 = vmatpush1.msra.mxu0 0.0
        %5844 = vmatprep.subr.mxu0 0.0
        %5845 = vmatpush1.msra.mxu0 0.0
        %5846 = vmatprep.subr.mxu0 0.0
        %5847 = vmatpush1.msra.mxu0 0.0
        %5848 = vmatprep.subr.mxu0 0.0
        %5849 = vmatpush1.msra.mxu0 0.0
        %5850 = vmatprep.subr.mxu0 0.0
        %5851 = vmatpush1.msra.mxu0 0.0
        %5852 = vmatprep.subr.mxu0 0.0
        %5853 = vmatpush1.msra.mxu0 0.0
        %5854 = vmatprep.subr.mxu0 0.0
        %5855 = vmatpush1.msra.mxu0 0.0
        %5856 = vmatprep.subr.mxu0 0.0
        %5857 = vmatpush1.msra.mxu0 0.0
        %5858 = vmatprep.subr.mxu0 0.0
        %5859 = vmatpush1.msra.mxu0 0.0
        %5860 = vmatprep.subr.mxu0 0.0
        %5861 = vmatpush1.msra.mxu0 0.0
        %5862 = vmatprep.subr.mxu0 0.0
        %5863 = vmatpush1.msra.mxu0 0.0
        %5864 = vmatprep.subr.mxu0 0.0
        %5865 = vmatpush1.msra.mxu0 0.0
        %5866 = vmatprep.subr.mxu0 0.0
        %5867 = vmatpush1.msra.mxu0 0.0
        %5868 = vmatprep.subr.mxu0 0.0
        %5869 = vmatpush1.msra.mxu0 0.0
        %5870 = vmatprep.subr.mxu0 0.0
        %5871 = vmatpush1.msra.mxu0 0.0
        %5872 = vmatprep.subr.mxu0 0.0
        %5873 = vmatpush1.msra.mxu0 0.0
        %5874 = vmatprep.subr.mxu0 0.0
        %5875 = vmatpush1.msra.mxu0 0.0
        %5876 = vmatprep.subr.mxu0 0.0
        %5877 = vmatpush1.msra.mxu0 0.0
        %5878 = vmatprep.subr.mxu0 0.0
        %5879 = vmatpush1.msra.mxu0 0.0
        %5880 = vmatprep.subr.mxu0 0.0
        %5881 = vmatpush1.msra.mxu0 0.0
        %5882 = vmatprep.subr.mxu0 0.0
        %5883 = vmatpush1.msra.mxu0 0.0
        %5884 = vmatprep.mubr.f32.mxu0 0.0
        %v5885 = vand.u32 %v4454, 4294901760
        %v5886 = vsub.f32 %v4454, %v5885
        %v5887 = vand.u32 %v5886, 4294901760
        %v5888 = vsub.f32 %v5886, %v5887
        %v5889 = vand.u32 %v5888, 4294901760
        %5890 = vmatmul.mubr.f32.gmra.mrb[0].mxu0 %v5889
        %v5891 = vpop.f32.mrb[0].mxu0
        %v5892 = vadd.f32 %v5800, %v5891
        %v5893 = vpop.f32.mrb[0].mxu0
        %v5894 = vadd.f32 %v5802, %v5893
        %5895 = vmatprep.mubr.f32.mxu0 0.0
        %v5896 = vand.u32 %v4457, 4294901760
        %v5897 = vsub.f32 %v4457, %v5896
        %v5898 = vand.u32 %v5897, 4294901760
        %v5899 = vsub.f32 %v5897, %v5898
        %v5900 = vand.u32 %v5899, 4294901760
        %5901 = vmatmul.mubr.f32.gmra.mrb[0].mxu0 %v5900
        %v5902 = vpop.f32.mrb[0].mxu0
        %v5903 = vadd.f32 %v5808, %v5902
        %v5904 = vpop.f32.mrb[0].mxu0
        %v5905 = vadd.f32 %v5810, %v5904
        %5906 = vdwg.mxu0
        %v5907 = vand.u32 %v4445, 4294901760
        %v5908 = vsub.f32 %v4445, %v5907
        %v5909 = vand.u32 %v5908, 4294901760
        %v5910 = vsub.f32 %v5908, %v5909
        %v5911 = vand.u32 %v5910, 4294901760
        %5912 = vmatprep.subr.mxu0 %v5911
        %v5913 = vand.u32 %v4444, 4294901760
        %v5914 = vsub.f32 %v4444, %v5913
        %v5915 = vand.u32 %v5914, 4294901760
        %v5916 = vsub.f32 %v5914, %v5915
        %v5917 = vand.u32 %v5916, 4294901760
        %5918 = vmatpush1.msra.mxu0 %v5917
        %v5919 = vand.u32 %v4447, 4294901760
        %v5920 = vsub.f32 %v4447, %v5919
        %v5921 = vand.u32 %v5920, 4294901760
        %v5922 = vsub.f32 %v5920, %v5921
        %v5923 = vand.u32 %v5922, 4294901760
        %5924 = vmatprep.subr.mxu0 %v5923
        %v5925 = vand.u32 %v4446, 4294901760
        %v5926 = vsub.f32 %v4446, %v5925
        %v5927 = vand.u32 %v5926, 4294901760
        %v5928 = vsub.f32 %v5926, %v5927
        %v5929 = vand.u32 %v5928, 4294901760
        %5930 = vmatpush1.msra.mxu0 %v5929
        %v5931 = vand.u32 %v4449, 4294901760
        %v5932 = vsub.f32 %v4449, %v5931
        %v5933 = vand.u32 %v5932, 4294901760
        %v5934 = vsub.f32 %v5932, %v5933
        %v5935 = vand.u32 %v5934, 4294901760
        %5936 = vmatprep.subr.mxu0 %v5935
        %v5937 = vand.u32 %v4448, 4294901760
        %v5938 = vsub.f32 %v4448, %v5937
        %v5939 = vand.u32 %v5938, 4294901760
        %v5940 = vsub.f32 %v5938, %v5939
        %v5941 = vand.u32 %v5940, 4294901760
        %5942 = vmatpush1.msra.mxu0 %v5941
        %v5943 = vand.u32 %v4464, 4294901760
        %v5944 = vsub.f32 %v4464, %v5943
        %v5945 = vand.u32 %v5944, 4294901760
        %v5946 = vsub.f32 %v5944, %v5945
        %v5947 = vand.u32 %v5946, 4294901760
        %5948 = vmatprep.subr.mxu0 %v5947
        %v5949 = vand.u32 %v4461, 4294901760
        %v5950 = vsub.f32 %v4461, %v5949
        %v5951 = vand.u32 %v5950, 4294901760
        %v5952 = vsub.f32 %v5950, %v5951
        %v5953 = vand.u32 %v5952, 4294901760
        %5954 = vmatpush1.msra.mxu0 %v5953
        %5955 = vmatprep.subr.mxu0 0.0
        %5956 = vmatpush1.msra.mxu0 0.0
        %5957 = vmatprep.subr.mxu0 0.0
        %5958 = vmatpush1.msra.mxu0 0.0
        %5959 = vmatprep.subr.mxu0 0.0
        %5960 = vmatpush1.msra.mxu0 0.0
        %5961 = vmatprep.subr.mxu0 0.0
        %5962 = vmatpush1.msra.mxu0 0.0
        %5963 = vmatprep.subr.mxu0 0.0
        %5964 = vmatpush1.msra.mxu0 0.0
        %5965 = vmatprep.subr.mxu0 0.0
        %5966 = vmatpush1.msra.mxu0 0.0
        %5967 = vmatprep.subr.mxu0 0.0
        %5968 = vmatpush1.msra.mxu0 0.0
        %5969 = vmatprep.subr.mxu0 0.0
        %5970 = vmatpush1.msra.mxu0 0.0
        %5971 = vmatprep.subr.mxu0 0.0
        %5972 = vmatpush1.msra.mxu0 0.0
        %5973 = vmatprep.subr.mxu0 0.0
        %5974 = vmatpush1.msra.mxu0 0.0
        %5975 = vmatprep.subr.mxu0 0.0
        %5976 = vmatpush1.msra.mxu0 0.0
        %5977 = vmatprep.subr.mxu0 0.0
        %5978 = vmatpush1.msra.mxu0 0.0
        %5979 = vmatprep.subr.mxu0 0.0
        %5980 = vmatpush1.msra.mxu0 0.0
        %5981 = vmatprep.subr.mxu0 0.0
        %5982 = vmatpush1.msra.mxu0 0.0
        %5983 = vmatprep.subr.mxu0 0.0
        %5984 = vmatpush1.msra.mxu0 0.0
        %5985 = vmatprep.subr.mxu0 0.0
        %5986 = vmatpush1.msra.mxu0 0.0
        %5987 = vmatprep.subr.mxu0 0.0
        %5988 = vmatpush1.msra.mxu0 0.0
        %5989 = vmatprep.subr.mxu0 0.0
        %5990 = vmatpush1.msra.mxu0 0.0
        %5991 = vmatprep.subr.mxu0 0.0
        %5992 = vmatpush1.msra.mxu0 0.0
        %5993 = vmatprep.subr.mxu0 0.0
        %5994 = vmatpush1.msra.mxu0 0.0
        %5995 = vmatprep.subr.mxu0 0.0
        %5996 = vmatpush1.msra.mxu0 0.0
        %5997 = vmatprep.subr.mxu0 0.0
        %5998 = vmatpush1.msra.mxu0 0.0
        %5999 = vmatprep.subr.mxu0 0.0
        %6000 = vmatpush1.msra.mxu0 0.0
        %6001 = vmatprep.subr.mxu0 0.0
        %6002 = vmatpush1.msra.mxu0 0.0
        %6003 = vmatprep.subr.mxu0 0.0
        %6004 = vmatpush1.msra.mxu0 0.0
        %6005 = vmatprep.subr.mxu0 0.0
        %6006 = vmatpush1.msra.mxu0 0.0
        %6007 = vmatprep.subr.mxu0 0.0
        %6008 = vmatpush1.msra.mxu0 0.0
        %6009 = vmatprep.subr.mxu0 0.0
        %6010 = vmatpush1.msra.mxu0 0.0
        %6011 = vmatprep.mubr.f32.mxu0 0.0
        %v6012 = vand.u32 %v4454, 4294901760
        %6013 = vmatmul.mubr.f32.gmra.mrb[0].mxu0 %v6012
        %v6014 = vpop.f32.mrb[0].mxu0
        %v6015 = vadd.f32 %v5892, %v6014
        %v6016 = vpop.f32.mrb[0].mxu0
        %v6017 = vadd.f32 %v5894, %v6016
        %6018 = vmatprep.mubr.f32.mxu0 0.0
        %v6019 = vand.u32 %v4457, 4294901760
        %6020 = vmatmul.mubr.f32.gmra.mrb[0].mxu0 %v6019
        %v6021 = vpop.f32.mrb[0].mxu0
        %v6022 = vadd.f32 %v5903, %v6021
        %v6023 = vpop.f32.mrb[0].mxu0
        %v6024 = vadd.f32 %v5905, %v6023
        %6025 = vdwg.mxu0
        %v6026 = vand.u32 %v4445, 4294901760
        %v6027 = vsub.f32 %v4445, %v6026
        %6028 = vmatprep.subr.mxu0 %v6027
        %v6029 = vand.u32 %v4444, 4294901760
        %v6030 = vsub.f32 %v4444, %v6029
        %6031 = vmatpush1.msra.mxu0 %v6030
        %v6032 = vand.u32 %v4447, 4294901760
        %v6033 = vsub.f32 %v4447, %v6032
        %6034 = vmatprep.subr.mxu0 %v6033
        %v6035 = vand.u32 %v4446, 4294901760
        %v6036 = vsub.f32 %v4446, %v6035
        %6037 = vmatpush1.msra.mxu0 %v6036
        %v6038 = vand.u32 %v4449, 4294901760
        %v6039 = vsub.f32 %v4449, %v6038
        %6040 = vmatprep.subr.mxu0 %v6039
        %v6041 = vand.u32 %v4448, 4294901760
        %v6042 = vsub.f32 %v4448, %v6041
        %6043 = vmatpush1.msra.mxu0 %v6042
        %v6044 = vand.u32 %v4464, 4294901760
        %v6045 = vsub.f32 %v4464, %v6044
        %6046 = vmatprep.subr.mxu0 %v6045
        %v6047 = vand.u32 %v4461, 4294901760
        %v6048 = vsub.f32 %v4461, %v6047
        %6049 = vmatpush1.msra.mxu0 %v6048
        %6050 = vmatprep.subr.mxu0 0.0
        %6051 = vmatpush1.msra.mxu0 0.0
        %6052 = vmatprep.subr.mxu0 0.0
        %6053 = vmatpush1.msra.mxu0 0.0
        %6054 = vmatprep.subr.mxu0 0.0
        %6055 = vmatpush1.msra.mxu0 0.0
        %6056 = vmatprep.subr.mxu0 0.0
        %6057 = vmatpush1.msra.mxu0 0.0
        %6058 = vmatprep.subr.mxu0 0.0
        %6059 = vmatpush1.msra.mxu0 0.0
        %6060 = vmatprep.subr.mxu0 0.0
        %6061 = vmatpush1.msra.mxu0 0.0
        %6062 = vmatprep.subr.mxu0 0.0
        %6063 = vmatpush1.msra.mxu0 0.0
        %6064 = vmatprep.subr.mxu0 0.0
        %6065 = vmatpush1.msra.mxu0 0.0
        %6066 = vmatprep.subr.mxu0 0.0
        %6067 = vmatpush1.msra.mxu0 0.0
        %6068 = vmatprep.subr.mxu0 0.0
        %6069 = vmatpush1.msra.mxu0 0.0
        %6070 = vmatprep.subr.mxu0 0.0
        %6071 = vmatpush1.msra.mxu0 0.0
        %6072 = vmatprep.subr.mxu0 0.0
        %6073 = vmatpush1.msra.mxu0 0.0
        %6074 = vmatprep.subr.mxu0 0.0
        %6075 = vmatpush1.msra.mxu0 0.0
        %6076 = vmatprep.subr.mxu0 0.0
        %6077 = vmatpush1.msra.mxu0 0.0
        %6078 = vmatprep.subr.mxu0 0.0
        %6079 = vmatpush1.msra.mxu0 0.0
        %6080 = vmatprep.subr.mxu0 0.0
        %6081 = vmatpush1.msra.mxu0 0.0
        %6082 = vmatprep.subr.mxu0 0.0
        %6083 = vmatpush1.msra.mxu0 0.0
        %6084 = vmatprep.subr.mxu0 0.0
        %6085 = vmatpush1.msra.mxu0 0.0
        %6086 = vmatprep.subr.mxu0 0.0
        %6087 = vmatpush1.msra.mxu0 0.0
        %6088 = vmatprep.subr.mxu0 0.0
        %6089 = vmatpush1.msra.mxu0 0.0
        %6090 = vmatprep.subr.mxu0 0.0
        %6091 = vmatpush1.msra.mxu0 0.0
        %6092 = vmatprep.subr.mxu0 0.0
        %6093 = vmatpush1.msra.mxu0 0.0
        %6094 = vmatprep.subr.mxu0 0.0
        %6095 = vmatpush1.msra.mxu0 0.0
        %6096 = vmatprep.subr.mxu0 0.0
        %6097 = vmatpush1.msra.mxu0 0.0
        %6098 = vmatprep.subr.mxu0 0.0
        %6099 = vmatpush1.msra.mxu0 0.0
        %6100 = vmatprep.subr.mxu0 0.0
        %6101 = vmatpush1.msra.mxu0 0.0
        %6102 = vmatprep.subr.mxu0 0.0
        %6103 = vmatpush1.msra.mxu0 0.0
        %6104 = vmatprep.subr.mxu0 0.0
        %6105 = vmatpush1.msra.mxu0 0.0
        %6106 = vmatprep.mubr.f32.mxu0 0.0
        %v6107 = vand.u32 %v4454, 4294901760
        %v6108 = vsub.f32 %v4454, %v6107
        %6109 = vmatmul.mubr.f32.gmra.mrb[0].mxu0 %v6108
        %v6110 = vpop.f32.mrb[0].mxu0
        %v6111 = vadd.f32 %v6015, %v6110
        %v6112 = vpop.f32.mrb[0].mxu0
        %v6113 = vadd.f32 %v6017, %v6112
        %6114 = vmatprep.mubr.f32.mxu0 0.0
        %v6115 = vand.u32 %v4457, 4294901760
        %v6116 = vsub.f32 %v4457, %v6115
        %6117 = vmatmul.mubr.f32.gmra.mrb[0].mxu0 %v6116
        %v6118 = vpop.f32.mrb[0].mxu0
        %v6119 = vadd.f32 %v6022, %v6118
        %v6120 = vpop.f32.mrb[0].mxu0
        %v6121 = vadd.f32 %v6024, %v6120
        %6122 = vdwg.mxu0
        %v6123 = vand.u32 %v4445, 4294901760
        %6124 = vmatprep.subr.mxu0 %v6123
        %v6125 = vand.u32 %v4444, 4294901760
        %6126 = vmatpush1.msra.mxu0 %v6125
        %v6127 = vand.u32 %v4447, 4294901760
        %6128 = vmatprep.subr.mxu0 %v6127
        %v6129 = vand.u32 %v4446, 4294901760
        %6130 = vmatpush1.msra.mxu0 %v6129
        %v6131 = vand.u32 %v4449, 4294901760
        %6132 = vmatprep.subr.mxu0 %v6131
        %v6133 = vand.u32 %v4448, 4294901760
        %6134 = vmatpush1.msra.mxu0 %v6133
        %v6135 = vand.u32 %v4464, 4294901760
        %6136 = vmatprep.subr.mxu0 %v6135
        %v6137 = vand.u32 %v4461, 4294901760
        %6138 = vmatpush1.msra.mxu0 %v6137
        %6139 = vmatprep.subr.mxu0 0.0
        %6140 = vmatpush1.msra.mxu0 0.0
        %6141 = vmatprep.subr.mxu0 0.0
        %6142 = vmatpush1.msra.mxu0 0.0
        %6143 = vmatprep.subr.mxu0 0.0
        %6144 = vmatpush1.msra.mxu0 0.0
        %6145 = vmatprep.subr.mxu0 0.0
        %6146 = vmatpush1.msra.mxu0 0.0
        %6147 = vmatprep.subr.mxu0 0.0
        %6148 = vmatpush1.msra.mxu0 0.0
        %6149 = vmatprep.subr.mxu0 0.0
        %6150 = vmatpush1.msra.mxu0 0.0
        %6151 = vmatprep.subr.mxu0 0.0
        %6152 = vmatpush1.msra.mxu0 0.0
        %6153 = vmatprep.subr.mxu0 0.0
        %6154 = vmatpush1.msra.mxu0 0.0
        %6155 = vmatprep.subr.mxu0 0.0
        %6156 = vmatpush1.msra.mxu0 0.0
        %6157 = vmatprep.subr.mxu0 0.0
        %6158 = vmatpush1.msra.mxu0 0.0
        %6159 = vmatprep.subr.mxu0 0.0
        %6160 = vmatpush1.msra.mxu0 0.0
        %6161 = vmatprep.subr.mxu0 0.0
        %6162 = vmatpush1.msra.mxu0 0.0
        %6163 = vmatprep.subr.mxu0 0.0
        %6164 = vmatpush1.msra.mxu0 0.0
        %6165 = vmatprep.subr.mxu0 0.0
        %6166 = vmatpush1.msra.mxu0 0.0
        %6167 = vmatprep.subr.mxu0 0.0
        %6168 = vmatpush1.msra.mxu0 0.0
        %6169 = vmatprep.subr.mxu0 0.0
        %6170 = vmatpush1.msra.mxu0 0.0
        %6171 = vmatprep.subr.mxu0 0.0
        %6172 = vmatpush1.msra.mxu0 0.0
        %6173 = vmatprep.subr.mxu0 0.0
        %6174 = vmatpush1.msra.mxu0 0.0
        %6175 = vmatprep.subr.mxu0 0.0
        %6176 = vmatpush1.msra.mxu0 0.0
        %6177 = vmatprep.subr.mxu0 0.0
        %6178 = vmatpush1.msra.mxu0 0.0
        %6179 = vmatprep.subr.mxu0 0.0
        %6180 = vmatpush1.msra.mxu0 0.0
        %6181 = vmatprep.subr.mxu0 0.0
        %6182 = vmatpush1.msra.mxu0 0.0
        %6183 = vmatprep.subr.mxu0 0.0
        %6184 = vmatpush1.msra.mxu0 0.0
        %6185 = vmatprep.subr.mxu0 0.0
        %6186 = vmatpush1.msra.mxu0 0.0
        %6187 = vmatprep.subr.mxu0 0.0
        %6188 = vmatpush1.msra.mxu0 0.0
        %6189 = vmatprep.subr.mxu0 0.0
        %6190 = vmatpush1.msra.mxu0 0.0
        %6191 = vmatprep.subr.mxu0 0.0
        %6192 = vmatpush1.msra.mxu0 0.0
        %6193 = vmatprep.subr.mxu0 0.0
        %6194 = vmatpush1.msra.mxu0 0.0
        %6195 = vmatprep.mubr.f32.mxu0 0.0
        %v6196 = vand.u32 %v4454, 4294901760
        %v6197 = vsub.f32 %v4454, %v6196
        %v6198 = vand.u32 %v6197, 4294901760
        %6199 = vmatmul.mubr.f32.gmra.mrb[0].mxu0 %v6198
        %v6200 = vpop.f32.mrb[0].mxu0
        %v6201 = vadd.f32 %v6111, %v6200
        %v6202 = vpop.f32.mrb[0].mxu0
        %v6203 = vadd.f32 %v6113, %v6202
        %6204 = vmatprep.mubr.f32.mxu0 0.0
        %v6205 = vand.u32 %v4457, 4294901760
        %v6206 = vsub.f32 %v4457, %v6205
        %v6207 = vand.u32 %v6206, 4294901760
        %6208 = vmatmul.mubr.f32.gmra.mrb[0].mxu0 %v6207
        %v6209 = vpop.f32.mrb[0].mxu0
        %v6210 = vadd.f32 %v6119, %v6209
        %v6211 = vpop.f32.mrb[0].mxu0
        %v6212 = vadd.f32 %v6121, %v6211
        %6213 = vdwg.mxu0
        %v6214 = vand.u32 %v4445, 4294901760
        %v6215 = vsub.f32 %v4445, %v6214
        %v6216 = vand.u32 %v6215, 4294901760
        %6217 = vmatprep.subr.mxu0 %v6216
        %v6218 = vand.u32 %v4444, 4294901760
        %v6219 = vsub.f32 %v4444, %v6218
        %v6220 = vand.u32 %v6219, 4294901760
        %6221 = vmatpush1.msra.mxu0 %v6220
        %v6222 = vand.u32 %v4447, 4294901760
        %v6223 = vsub.f32 %v4447, %v6222
        %v6224 = vand.u32 %v6223, 4294901760
        %6225 = vmatprep.subr.mxu0 %v6224
        %v6226 = vand.u32 %v4446, 4294901760
        %v6227 = vsub.f32 %v4446, %v6226
        %v6228 = vand.u32 %v6227, 4294901760
        %6229 = vmatpush1.msra.mxu0 %v6228
        %v6230 = vand.u32 %v4449, 4294901760
        %v6231 = vsub.f32 %v4449, %v6230
        %v6232 = vand.u32 %v6231, 4294901760
        %6233 = vmatprep.subr.mxu0 %v6232
        %v6234 = vand.u32 %v4448, 4294901760
        %v6235 = vsub.f32 %v4448, %v6234
        %v6236 = vand.u32 %v6235, 4294901760
        %6237 = vmatpush1.msra.mxu0 %v6236
        %v6238 = vand.u32 %v4464, 4294901760
        %v6239 = vsub.f32 %v4464, %v6238
        %v6240 = vand.u32 %v6239, 4294901760
        %6241 = vmatprep.subr.mxu0 %v6240
        %v6242 = vand.u32 %v4461, 4294901760
        %v6243 = vsub.f32 %v4461, %v6242
        %v6244 = vand.u32 %v6243, 4294901760
        %6245 = vmatpush1.msra.mxu0 %v6244
        %6246 = vmatprep.subr.mxu0 0.0
        %6247 = vmatpush1.msra.mxu0 0.0
        %6248 = vmatprep.subr.mxu0 0.0
        %6249 = vmatpush1.msra.mxu0 0.0
        %6250 = vmatprep.subr.mxu0 0.0
        %6251 = vmatpush1.msra.mxu0 0.0
        %6252 = vmatprep.subr.mxu0 0.0
        %6253 = vmatpush1.msra.mxu0 0.0
        %6254 = vmatprep.subr.mxu0 0.0
        %6255 = vmatpush1.msra.mxu0 0.0
        %6256 = vmatprep.subr.mxu0 0.0
        %6257 = vmatpush1.msra.mxu0 0.0
        %6258 = vmatprep.subr.mxu0 0.0
        %6259 = vmatpush1.msra.mxu0 0.0
        %6260 = vmatprep.subr.mxu0 0.0
        %6261 = vmatpush1.msra.mxu0 0.0
        %6262 = vmatprep.subr.mxu0 0.0
        %6263 = vmatpush1.msra.mxu0 0.0
        %6264 = vmatprep.subr.mxu0 0.0
        %6265 = vmatpush1.msra.mxu0 0.0
        %6266 = vmatprep.subr.mxu0 0.0
        %6267 = vmatpush1.msra.mxu0 0.0
        %6268 = vmatprep.subr.mxu0 0.0
        %6269 = vmatpush1.msra.mxu0 0.0
        %6270 = vmatprep.subr.mxu0 0.0
        %6271 = vmatpush1.msra.mxu0 0.0
        %6272 = vmatprep.subr.mxu0 0.0
        %6273 = vmatpush1.msra.mxu0 0.0
        %6274 = vmatprep.subr.mxu0 0.0
        %6275 = vmatpush1.msra.mxu0 0.0
        %6276 = vmatprep.subr.mxu0 0.0
        %6277 = vmatpush1.msra.mxu0 0.0
        %6278 = vmatprep.subr.mxu0 0.0
        %6279 = vmatpush1.msra.mxu0 0.0
        %6280 = vmatprep.subr.mxu0 0.0
        %6281 = vmatpush1.msra.mxu0 0.0
        %6282 = vmatprep.subr.mxu0 0.0
        %6283 = vmatpush1.msra.mxu0 0.0
        %6284 = vmatprep.subr.mxu0 0.0
        %6285 = vmatpush1.msra.mxu0 0.0
        %6286 = vmatprep.subr.mxu0 0.0
        %6287 = vmatpush1.msra.mxu0 0.0
        %6288 = vmatprep.subr.mxu0 0.0
        %6289 = vmatpush1.msra.mxu0 0.0
        %6290 = vmatprep.subr.mxu0 0.0
        %6291 = vmatpush1.msra.mxu0 0.0
        %6292 = vmatprep.subr.mxu0 0.0
        %6293 = vmatpush1.msra.mxu0 0.0
        %6294 = vmatprep.subr.mxu0 0.0
        %6295 = vmatpush1.msra.mxu0 0.0
        %6296 = vmatprep.subr.mxu0 0.0
        %6297 = vmatpush1.msra.mxu0 0.0
        %6298 = vmatprep.subr.mxu0 0.0
        %6299 = vmatpush1.msra.mxu0 0.0
        %6300 = vmatprep.subr.mxu0 0.0
        %6301 = vmatpush1.msra.mxu0 0.0
        %6302 = vmatprep.mubr.f32.mxu0 0.0
        %v6303 = vand.u32 %v4454, 4294901760
        %6304 = vmatmul.mubr.f32.gmra.mrb[0].mxu0 %v6303
        %v6305 = vpop.f32.mrb[0].mxu0
        %v6306 = vadd.f32 %v6201, %v6305
        %v6307 = vpop.f32.mrb[0].mxu0
        %v6308 = vadd.f32 %v6203, %v6307
        %6309 = vmatprep.mubr.f32.mxu0 0.0
        %v6310 = vand.u32 %v4457, 4294901760
        %6311 = vmatmul.mubr.f32.gmra.mrb[0].mxu0 %v6310
        %v6312 = vpop.f32.mrb[0].mxu0
        %v6313 = vadd.f32 %v6210, %v6312
        %v6314 = vpop.f32.mrb[0].mxu0
        %v6315 = vadd.f32 %v6212, %v6314
        %6316 = vdwg.mxu0
        %v6317 = vand.u32 %v4445, 4294901760
        %6318 = vmatprep.subr.mxu0 %v6317
        %v6319 = vand.u32 %v4444, 4294901760
        %6320 = vmatpush1.msra.mxu0 %v6319
        %v6321 = vand.u32 %v4447, 4294901760
        %6322 = vmatprep.subr.mxu0 %v6321
        %v6323 = vand.u32 %v4446, 4294901760
        %6324 = vmatpush1.msra.mxu0 %v6323
        %v6325 = vand.u32 %v4449, 4294901760
        %6326 = vmatprep.subr.mxu0 %v6325
        %v6327 = vand.u32 %v4448, 4294901760
        %6328 = vmatpush1.msra.mxu0 %v6327
        %v6329 = vand.u32 %v4464, 4294901760
        %6330 = vmatprep.subr.mxu0 %v6329
        %v6331 = vand.u32 %v4461, 4294901760
        %6332 = vmatpush1.msra.mxu0 %v6331
        %6333 = vmatprep.subr.mxu0 0.0
        %6334 = vmatpush1.msra.mxu0 0.0
        %6335 = vmatprep.subr.mxu0 0.0
        %6336 = vmatpush1.msra.mxu0 0.0
        %6337 = vmatprep.subr.mxu0 0.0
        %6338 = vmatpush1.msra.mxu0 0.0
        %6339 = vmatprep.subr.mxu0 0.0
        %6340 = vmatpush1.msra.mxu0 0.0
        %6341 = vmatprep.subr.mxu0 0.0
        %6342 = vmatpush1.msra.mxu0 0.0
        %6343 = vmatprep.subr.mxu0 0.0
        %6344 = vmatpush1.msra.mxu0 0.0
        %6345 = vmatprep.subr.mxu0 0.0
        %6346 = vmatpush1.msra.mxu0 0.0
        %6347 = vmatprep.subr.mxu0 0.0
        %6348 = vmatpush1.msra.mxu0 0.0
        %6349 = vmatprep.subr.mxu0 0.0
        %6350 = vmatpush1.msra.mxu0 0.0
        %6351 = vmatprep.subr.mxu0 0.0
        %6352 = vmatpush1.msra.mxu0 0.0
        %6353 = vmatprep.subr.mxu0 0.0
        %6354 = vmatpush1.msra.mxu0 0.0
        %6355 = vmatprep.subr.mxu0 0.0
        %6356 = vmatpush1.msra.mxu0 0.0
        %6357 = vmatprep.subr.mxu0 0.0
        %6358 = vmatpush1.msra.mxu0 0.0
        %6359 = vmatprep.subr.mxu0 0.0
        %6360 = vmatpush1.msra.mxu0 0.0
        %6361 = vmatprep.subr.mxu0 0.0
        %6362 = vmatpush1.msra.mxu0 0.0
        %6363 = vmatprep.subr.mxu0 0.0
        %6364 = vmatpush1.msra.mxu0 0.0
        %6365 = vmatprep.subr.mxu0 0.0
        %6366 = vmatpush1.msra.mxu0 0.0
        %6367 = vmatprep.subr.mxu0 0.0
        %6368 = vmatpush1.msra.mxu0 0.0
        %6369 = vmatprep.subr.mxu0 0.0
        %6370 = vmatpush1.msra.mxu0 0.0
        %6371 = vmatprep.subr.mxu0 0.0
        %6372 = vmatpush1.msra.mxu0 0.0
        %6373 = vmatprep.subr.mxu0 0.0
        %6374 = vmatpush1.msra.mxu0 0.0
        %6375 = vmatprep.subr.mxu0 0.0
        %6376 = vmatpush1.msra.mxu0 0.0
        %6377 = vmatprep.subr.mxu0 0.0
        %6378 = vmatpush1.msra.mxu0 0.0
        %6379 = vmatprep.subr.mxu0 0.0
        %6380 = vmatpush1.msra.mxu0 0.0
        %6381 = vmatprep.subr.mxu0 0.0
        %6382 = vmatpush1.msra.mxu0 0.0
        %6383 = vmatprep.subr.mxu0 0.0
        %6384 = vmatpush1.msra.mxu0 0.0
        %6385 = vmatprep.subr.mxu0 0.0
        %6386 = vmatpush1.msra.mxu0 0.0
        %6387 = vmatprep.subr.mxu0 0.0
        %6388 = vmatpush1.msra.mxu0 0.0
        %6389 = vmatprep.mubr.f32.mxu0 0.0
        %v6390 = vand.u32 %v4454, 4294901760
        %6391 = vmatmul.mubr.f32.gmra.mrb[0].mxu0 %v6390
        %v6392 = vpop.f32.mrb[0].mxu0
        %v6393 = vadd.f32 %v6306, %v6392
        %v6394 = vpop.f32.mrb[0].mxu0
        %v6395 = vadd.f32 %v6308, %v6394
        %6396 = vmatprep.mubr.f32.mxu0 0.0
        %v6397 = vand.u32 %v4457, 4294901760
        %6398 = vmatmul.mubr.f32.gmra.mrb[0].mxu0 %v6397
        %v6399 = vpop.f32.mrb[0].mxu0
        %v6400 = vadd.f32 %v6313, %v6399
        %v6401 = vpop.f32.mrb[0].mxu0
        %v6402 = vadd.f32 %v6315, %v6401
        %6403 = vdwg.mxu0
        %v6404 = vmax.f32 %v6393, 0.0
        %v6405 = vmax.f32 %v6395, 0.0
        %v6406 = vmax.f32 %v6400, 0.0
        %v6407 = vmax.f32 %v6402, 0.0
        %6408 = vst [vmem:[%s325] sm:$0xff] %v6404
        %6409 = vst [vmem:[%s325 + $0x8] sm:$0xff] %v6405
        %6410 = vst [vmem:[%s325 + $0x10] sm:$0xff] %v6406
        %6411 = vst [vmem:[%s325 + $0x18] sm:$0xff] %v6407
        %s6412 = sand.u32 %s225, 1
        %s6413 = scalar_lea.sflag [#allocation4], %s6412
        %s6414 = sand.u32 %s225, 1
        %s6415 = smul.addr %s6414, 32
        %s6416 = scalar_lea.vmem [#allocation3], %s6415
        // Predicated region
        $region57: #{tpu_custom_call.1} parent=55 // pred_check
          %p6417 = pneg %p235
        $region58: #{tpu_custom_call.1} parent=55 // pred_check_branch
          %6419 = sbr.rel (%p6417) target = $region60
        $region59: #{tpu_custom_call.1} parent=55 // pred_region
          %s6421 = ssub.s32 512, 512
          %6422 = vsyncadd %s6413, %s6421
          %s6423 = smul.addr %s23, 4
          %s6424 = smul.addr %s6423, 128
          %s6425 = scalar_lea.hbm %s9, %s6424
          %s6426 = sshll.u32 %s6416, 4
          %s6427 = int_to_ptr.vmem [resolvable:$true] %s6426
          %6432 = dma.vmem_to_hbm [thread:$0]  %s6427, 512, %s6425, %s6413, 256, 256, 16
        $region60: #{tpu_custom_call.1} parent=55 // pred_fallthru
          _
      $region56: #{tpu_custom_call.1} parent=5 // pred_fallthru
        _
      %p6433 = scmp.le.s32.totalorder 2, %s18
      // Predicated region
      $region61: #{tpu_custom_call.1} parent=5 // pred_check
        %p6434 = pneg %p6433
      $region62: #{tpu_custom_call.1} parent=5 // pred_check_branch
        %6436 = sbr.rel (%p6434) target = $region64
      $region63: #{tpu_custom_call.1} parent=5 // pred_region
        %s6437 = ssub.s32 %s18, 2
        // Predicated region
        $region65: #{tpu_custom_call.1} parent=63 // pred_check
          %p6438 = pneg %p241
        $region66: #{tpu_custom_call.1} parent=63 // pred_check_branch
          %6440 = sbr.rel (%p6438) target = $region68
        $region67: #{tpu_custom_call.1} parent=63 // pred_region
          %s6441 = sand.u32 %s226, 1
          %s6442 = scalar_lea.sflag [#allocation4], %s6441
          %s6443 = sand.u32 %s226, 1
          %s6444 = smul.addr %s6443, 32
          %s6445 = scalar_lea.vmem [#allocation3], %s6444
          %6446 = dma.done %s6442, 512
        $region68: #{tpu_custom_call.1} parent=63 // pred_fallthru
          _
      $region64: #{tpu_custom_call.1} parent=5 // pred_fallthru
        _
    $region6: #{tpu_custom_call.1} parent=1 // loop_footer
      %s22 = sadd.s32 1, %s18
    $region7: #{tpu_custom_call.1} parent=1 // loop_footer_branch
      %17 = sbr.rel target = $region3
    $region8: #{tpu_custom_call.1} parent=1 // loop_exit
      _
    %6447 = vsyncpa [#allocation4], 1
    %s6448 = scalar_lea.sflag [#allocation4], 1
    %6449 = vsyncpa %s6448, 1

</llo_original>
